<compile_context>
chip_gen: v6e
topology: v6e:2x2x1
jax: 0.10.0
libtpu: 0.0.40
codegen_flags: <defaults>
</compile_context>

<pallas_src>
import jax
import jax.numpy as jnp
from jax.experimental import pallas as pl
from jax.experimental.pallas import tpu as pltpu


# ----------------------------------------------------------------------------
# Model / layout constants.
# ----------------------------------------------------------------------------
B, C0, H, W = 2, 4, 16, 16          # input NCHW
C1, C2, NOUT = 8, 8, 32             # conv1 out, conv2 out, linear out
KS = 3                              # 3x3 convs, pad=1
HP, WP = H + 2, W + 2               # zero-padded spatial
SLAB = HP * WP                      # 324 padded pixels per image
LW = B * SLAB                       # 648 "logical" columns (all images)


def _rup(x, m):
    return (x + m - 1) // m * m


# Activation frames: logical padded column j = b*SLAB + hp*WP + wp.
#   y1 frame : logical col j lives at frame col F_OFF + j   (width FW)
#   x  frame : logical col j lives at frame col X_BASE + j  (width XW)
# A conv tap (kh,kw) is a constant column shift (kh-1)*WP + (kw-1) in [-19,19];
# the margins guarantee every shifted window stays in-bounds.
F_OFF = 32                                            # >= WP+1 = 19
FW = _rup(F_OFF + LW + (WP + 1), 128)                 # 768
X_BASE = 2 * F_OFF                                    # 64  (X_BASE - F_OFF >= 19)
XW = _rup((X_BASE - F_OFF) + FW + (WP + 1), 128)      # 896
TAP0 = F_OFF                                          # shared tap slice base (=32)


# ----------------------------------------------------------------------------
# Fused Pallas kernel: conv1(+BN,ReLU) -> conv2(+ReLU) -> linear, all in VMEM.
# ----------------------------------------------------------------------------
def _fused_qmodel_kernel(xf_ref, w1_ref, b1_ref, w2_ref, b2_ref,
                         w3_hbm_ref, b3_ref, mask_ref, o_ref,
                         y1_ref, y2_ref, w3_vmem_ref, w3_sem):
    # Start the Linear-weight DMA now so it overlaps the conv compute.
    w3_copy = pltpu.make_async_copy(w3_hbm_ref, w3_vmem_ref, w3_sem)
    w3_copy.start()

    # ---- QuantModule 1: Conv(4->8) [BN folded, 8-bit fake-quant] + fused ReLU.
    acc1 = jnp.zeros((C1, FW), jnp.float32)
    for kh in range(KS):
        for kw in range(KS):
            s = TAP0 + (kh - 1) * WP + (kw - 1)
            xs = xf_ref[:, pl.ds(s, FW)]                       # (C0, FW) shifted view
            acc1 = acc1 + jnp.dot(w1_ref[kh * KS + kw], xs,
                                  preferred_element_type=jnp.float32)
    # bias + ReLU, then the interior mask zeroes conv-padding positions and the
    # frame margins, so y1 is directly conv2's zero-padded input frame.
    y1_ref[...] = jnp.maximum(acc1 + b1_ref[...], 0.0) * mask_ref[...]

    # ---- QuantModule 2: Conv(8->8) [4-bit fake-quant] + fused ReLU.
    acc2 = jnp.zeros((C2, LW), jnp.float32)
    for kh in range(KS):
        for kw in range(KS):
            s = TAP0 + (kh - 1) * WP + (kw - 1)
            ys = y1_ref[:, pl.ds(s, LW)]                       # (C1, LW) shifted view
            acc2 = acc2 + jnp.dot(w2_ref[kh * KS + kw], ys,
                                  preferred_element_type=jnp.float32)
    y2_ref[...] = jnp.maximum(acc2 + b2_ref[...], 0.0)

    # ---- QuantModule 3: Linear(2048 -> 32) [8-bit fake-quant], no activation.
    # The NCHW flatten and the removal of padding positions are folded into the
    # precomputed w3 map (zero rows at padding positions), so this is just a
    # per-(image, channel) (1,324)@(324,32) contraction accumulated in f32.
    w3_copy.wait()
    accs = [jnp.zeros((1, NOUT), jnp.float32) for _ in range(B)]
    for c in range(C2):
        w3c = w3_vmem_ref[c]                                   # (SLAB, NOUT)
        for b in range(B):
            yrow = y2_ref[pl.ds(c, 1), pl.ds(b * SLAB, SLAB)]  # (1, SLAB)
            accs[b] = accs[b] + jnp.dot(yrow, w3c,
                                        preferred_element_type=jnp.float32)
    for b in range(B):
        o_ref[pl.ds(b, 1), :] = accs[b] + b3_ref[...]


def _fused_forward(xf, w1k, b1v, w2k, b2v, w3m, b3v, maskf):
    def vmem():
        return pl.BlockSpec(memory_space=pltpu.MemorySpace.VMEM)

    return pl.pallas_call(
        _fused_qmodel_kernel,
        out_shape=jax.ShapeDtypeStruct((B, NOUT), jnp.float32),
        in_specs=[vmem(), vmem(), vmem(), vmem(), vmem(),
                  pl.BlockSpec(memory_space=pl.ANY),   # w3 map stays in HBM, DMA'd in-kernel
                  vmem(), vmem()],
        out_specs=vmem(),
        scratch_shapes=[
            pltpu.VMEM((C1, FW), jnp.float32),          # y1 padded frame (VMEM-resident)
            pltpu.VMEM((C2, LW), jnp.float32),          # y2
            pltpu.VMEM((C2, SLAB, NOUT), jnp.float32),  # w3 landing buffer
            pltpu.SemaphoreType.DMA,
        ],
    )(xf, w1k, b1v, w2k, b2v, w3m, b3v, maskf)


# ----------------------------------------------------------------------------
# One-time (hoisted) weight preprocessing: BN fold + fake quant + kernel layout.
# ----------------------------------------------------------------------------
def fold_bn_into_conv(w, b, gamma, beta, mean, var, eps=1e-5):
    scale = gamma / jnp.sqrt(var + eps)
    return w * scale[:, None, None, None], beta + (b - mean) * scale


def fake_quant_weight(w, n_bits):
    """Per-output-channel symmetric uniform fake quantization."""
    qmax = 2 ** (n_bits - 1) - 1
    flat = w.reshape(w.shape[0], -1)
    scale = jnp.maximum(jnp.max(jnp.abs(flat), axis=1) / qmax, 1e-8)
    q = jnp.clip(jnp.round(flat / scale[:, None]), -qmax - 1, qmax)
    return (q * scale[:, None]).reshape(w.shape)


def prepare_quant_params(params):
    w1, b1 = fold_bn_into_conv(params["w1"], params["b1"], params["bn_g"],
                               params["bn_b"], params["bn_m"], params["bn_v"])
    w1q = fake_quant_weight(w1, 8)              # first quant layer -> 8 bit
    w2q = fake_quant_weight(params["w2"], 4)    # middle layer      -> 4 bit
    w3q = fake_quant_weight(params["w3"], 8)    # last quant layer  -> 8 bit

    # Conv taps as (tap, Cout, Cin) so the kernel does (Cout,Cin)@(Cin,L).
    w1k = jnp.transpose(w1q, (2, 3, 0, 1)).reshape(KS * KS, C1, C0)
    w2k = jnp.transpose(w2q, (2, 3, 0, 1)).reshape(KS * KS, C2, C1)

    # Linear weight remapped to the kernel's padded-spatial layout:
    #   w3m[c, (h+1)*WP + (w+1), n] = w3q[n, c*H*W + h*W + w]; zero at padding rows.
    w3r = jnp.transpose(w3q.reshape(NOUT, C2, H, W), (1, 2, 3, 0))   # (C2,H,W,NOUT)
    w3m = jnp.zeros((C2, HP, WP, NOUT), jnp.float32)
    w3m = w3m.at[:, 1:H + 1, 1:W + 1, :].set(w3r)
    w3m = w3m.reshape(C2, SLAB, NOUT)

    # Interior mask over the y1 frame (zero at conv padding + frame margins).
    m2d = jnp.zeros((HP, WP), jnp.float32).at[1:H + 1, 1:W + 1].set(1.0)
    maskf = jnp.zeros((1, FW), jnp.float32)
    maskf = maskf.at[0, F_OFF:F_OFF + LW].set(jnp.tile(m2d.reshape(-1), B))

    return dict(
        w1k=w1k, b1v=b1.reshape(C1, 1),
        w2k=w2k, b2v=params["b2"].reshape(C2, 1),
        w3m=w3m, b3v=params["b3"].reshape(1, NOUT),
        maskf=maskf,
    )


def pack_input(x_nchw):
    """NCHW -> (C0, XW): channels on sublanes, zero-padded flat spatial on lanes."""
    xp = jnp.pad(x_nchw, ((0, 0), (0, 0), (1, 1), (1, 1)))            # (B,C0,HP,WP)
    xl = jnp.transpose(xp, (1, 0, 2, 3)).reshape(C0, LW)              # col = b*SLAB+hp*WP+wp
    return jnp.zeros((C0, XW), jnp.float32).at[:, X_BASE:X_BASE + LW].set(xl)


@jax.jit
def quant_model_forward(x_nchw, qp):
    xf = pack_input(x_nchw.astype(jnp.float32))
    return _fused_forward(xf, qp["w1k"], qp["b1v"], qp["w2k"], qp["b2v"],
                          qp["w3m"], qp["b3v"], qp["maskf"])


# ----------------------------------------------------------------------------
# Pure-JAX reference (sanity check of the fused Pallas path).
# ----------------------------------------------------------------------------
def reference_forward(x_nchw, params):
    w1, b1 = fold_bn_into_conv(params["w1"], params["b1"], params["bn_g"],
                               params["bn_b"], params["bn_m"], params["bn_v"])
    w1q = fake_quant_weight(w1, 8)
    w2q = fake_quant_weight(params["w2"], 4)
    w3q = fake_quant_weight(params["w3"], 8)

    def conv(x, w, b):
        y = jax.lax.conv_general_dilated(
            x, w, window_strides=(1, 1), padding="SAME",
            dimension_numbers=("NCHW", "OIHW", "NCHW"))
        return y + b[None, :, None, None]

    y = jnp.maximum(conv(x_nchw, w1q, b1), 0.0)
    y = jnp.maximum(conv(y, w2q, params["b2"]), 0.0)
    flat = y.reshape(y.shape[0], -1)
    return flat @ w3q.T + params["b3"]


# ----------------------------------------------------------------------------
if __name__ == "__main__":
    key = jax.random.PRNGKey(0)
    ks = jax.random.split(key, 10)

    params = {
        "w1": 0.1 * jax.random.normal(ks[0], (C1, C0, 3, 3), jnp.float32),
        "b1": 0.1 * jax.random.normal(ks[1], (C1,), jnp.float32),
        "bn_g": 1.0 + 0.1 * jax.random.normal(ks[2], (C1,), jnp.float32),
        "bn_b": 0.1 * jax.random.normal(ks[3], (C1,), jnp.float32),
        "bn_m": 0.05 * jax.random.normal(ks[4], (C1,), jnp.float32),
        "bn_v": jnp.abs(1.0 + 0.1 * jax.random.normal(ks[5], (C1,), jnp.float32)),
        "w2": 0.1 * jax.random.normal(ks[6], (C2, C1, 3, 3), jnp.float32),
        "b2": 0.1 * jax.random.normal(ks[7], (C2,), jnp.float32),
        "w3": 0.05 * jax.random.normal(ks[8], (NOUT, C2 * H * W), jnp.float32),
        "b3": 0.1 * jax.random.normal(ks[9], (NOUT,), jnp.float32),
    }

    x = jax.random.normal(key, (B, C0, H, W), jnp.float32)   # NCHW like PyTorch

    # One-time weight preprocessing (hoisted out of the forward path).
    qp = jax.block_until_ready(prepare_quant_params(params))

    out = jax.block_until_ready(quant_model_forward(x, qp))
    ref = jax.block_until_ready(reference_forward(x, params))

    assert out.shape == (B, NOUT), out.shape
    assert jnp.allclose(out, ref, rtol=1e-2, atol=1e-2), (
        float(jnp.max(jnp.abs(out - ref))))

    print("KERNEL_OK")
</pallas_src>

<mosaic_0001>
module attributes {stable_mosaic.version = 11 : i64} {
  func.func @_fused_qmodel_kernel(%arg0: memref<4x896xf32, #tpu.memory_space<vmem>>, %arg1: memref<9x8x4xf32, #tpu.memory_space<vmem>>, %arg2: memref<8x1xf32, #tpu.memory_space<vmem>>, %arg3: memref<9x8x8xf32, #tpu.memory_space<vmem>>, %arg4: memref<8x1xf32, #tpu.memory_space<vmem>>, %arg5: memref<8x324x32xf32, #tpu.memory_space<any>>, %arg6: memref<1x32xf32, #tpu.memory_space<vmem>>, %arg7: memref<1x768xf32, #tpu.memory_space<vmem>>, %arg8: memref<2x32xf32, #tpu.memory_space<vmem>>, %arg9: memref<8x768xf32, #tpu.memory_space<vmem>>, %arg10: memref<8x648xf32, #tpu.memory_space<vmem>>, %arg11: memref<8x324x32xf32, #tpu.memory_space<vmem>>, %arg12: memref<!tpu.dma_semaphore, #tpu.memory_space<semaphore_mem>>) attributes {dimension_semantics = [], scalar_prefetch = 0 : i64, scratch_operands = 4 : i64, tpu.core_type = #tpu.core_type<tc>} {
    tpu.enqueue_dma source(%arg5 : memref<8x324x32xf32, #tpu.memory_space<any>>) target(%arg11 : memref<8x324x32xf32, #tpu.memory_space<vmem>>) target_semaphore(%arg12 : memref<!tpu.dma_semaphore, #tpu.memory_space<semaphore_mem>>)
    %cst = arith.constant 0.000000e+00 : f32
    %0 = vector.broadcast %cst : f32 to vector<8x768xf32>
    %c0 = arith.constant 0 : index
    %c13 = arith.constant 13 : index
    %1 = vector.load %arg0[%c0, %c13] : memref<4x896xf32, #tpu.memory_space<vmem>>, vector<4x768xf32>
    %c0_0 = arith.constant 0 : index
    %c0_1 = arith.constant 0 : index
    %c0_2 = arith.constant 0 : index
    %2 = vector.load %arg1[%c0_0, %c0_1, %c0_2] : memref<9x8x4xf32, #tpu.memory_space<vmem>>, vector<1x8x4xf32>
    %3 = vector.shape_cast %2 : vector<1x8x4xf32> to vector<8x4xf32>
    %cst_3 = arith.constant dense<0.000000e+00> : vector<8x768xf32>
    %4 = tpu.matmul %3, %1, %cst_3 {dimension_numbers = #tpu.dot_dimension_numbers<[1], [0], [0], [1], [0, 0, 1, 1], [], []>} : vector<8x4xf32>, vector<4x768xf32>, vector<8x768xf32> -> vector<8x768xf32>
    %5 = arith.addf %0, %4 : vector<8x768xf32>
    %c0_4 = arith.constant 0 : index
    %c14 = arith.constant 14 : index
    %6 = vector.load %arg0[%c0_4, %c14] : memref<4x896xf32, #tpu.memory_space<vmem>>, vector<4x768xf32>
    %c1 = arith.constant 1 : index
    %c0_5 = arith.constant 0 : index
    %c0_6 = arith.constant 0 : index
    %7 = vector.load %arg1[%c1, %c0_5, %c0_6] : memref<9x8x4xf32, #tpu.memory_space<vmem>>, vector<1x8x4xf32>
    %8 = vector.shape_cast %7 : vector<1x8x4xf32> to vector<8x4xf32>
    %cst_7 = arith.constant dense<0.000000e+00> : vector<8x768xf32>
    %9 = tpu.matmul %8, %6, %cst_7 {dimension_numbers = #tpu.dot_dimension_numbers<[1], [0], [0], [1], [0, 0, 1, 1], [], []>} : vector<8x4xf32>, vector<4x768xf32>, vector<8x768xf32> -> vector<8x768xf32>
    %10 = arith.addf %5, %9 : vector<8x768xf32>
    %c0_8 = arith.constant 0 : index
    %c15 = arith.constant 15 : index
    %11 = vector.load %arg0[%c0_8, %c15] : memref<4x896xf32, #tpu.memory_space<vmem>>, vector<4x768xf32>
    %c2 = arith.constant 2 : index
    %c0_9 = arith.constant 0 : index
    %c0_10 = arith.constant 0 : index
    %12 = vector.load %arg1[%c2, %c0_9, %c0_10] : memref<9x8x4xf32, #tpu.memory_space<vmem>>, vector<1x8x4xf32>
    %13 = vector.shape_cast %12 : vector<1x8x4xf32> to vector<8x4xf32>
    %cst_11 = arith.constant dense<0.000000e+00> : vector<8x768xf32>
    %14 = tpu.matmul %13, %11, %cst_11 {dimension_numbers = #tpu.dot_dimension_numbers<[1], [0], [0], [1], [0, 0, 1, 1], [], []>} : vector<8x4xf32>, vector<4x768xf32>, vector<8x768xf32> -> vector<8x768xf32>
    %15 = arith.addf %10, %14 : vector<8x768xf32>
    %c0_12 = arith.constant 0 : index
    %c31 = arith.constant 31 : index
    %16 = vector.load %arg0[%c0_12, %c31] : memref<4x896xf32, #tpu.memory_space<vmem>>, vector<4x768xf32>
    %c3 = arith.constant 3 : index
    %c0_13 = arith.constant 0 : index
    %c0_14 = arith.constant 0 : index
    %17 = vector.load %arg1[%c3, %c0_13, %c0_14] : memref<9x8x4xf32, #tpu.memory_space<vmem>>, vector<1x8x4xf32>
    %18 = vector.shape_cast %17 : vector<1x8x4xf32> to vector<8x4xf32>
    %cst_15 = arith.constant dense<0.000000e+00> : vector<8x768xf32>
    %19 = tpu.matmul %18, %16, %cst_15 {dimension_numbers = #tpu.dot_dimension_numbers<[1], [0], [0], [1], [0, 0, 1, 1], [], []>} : vector<8x4xf32>, vector<4x768xf32>, vector<8x768xf32> -> vector<8x768xf32>
    %20 = arith.addf %15, %19 : vector<8x768xf32>
    %c0_16 = arith.constant 0 : index
    %c32 = arith.constant 32 : index
    %21 = vector.load %arg0[%c0_16, %c32] : memref<4x896xf32, #tpu.memory_space<vmem>>, vector<4x768xf32>
    %c4 = arith.constant 4 : index
    %c0_17 = arith.constant 0 : index
    %c0_18 = arith.constant 0 : index
    %22 = vector.load %arg1[%c4, %c0_17, %c0_18] : memref<9x8x4xf32, #tpu.memory_space<vmem>>, vector<1x8x4xf32>
    %23 = vector.shape_cast %22 : vector<1x8x4xf32> to vector<8x4xf32>
    %cst_19 = arith.constant dense<0.000000e+00> : vector<8x768xf32>
    %24 = tpu.matmul %23, %21, %cst_19 {dimension_numbers = #tpu.dot_dimension_numbers<[1], [0], [0], [1], [0, 0, 1, 1], [], []>} : vector<8x4xf32>, vector<4x768xf32>, vector<8x768xf32> -> vector<8x768xf32>
    %25 = arith.addf %20, %24 : vector<8x768xf32>
    %c0_20 = arith.constant 0 : index
    %c33 = arith.constant 33 : index
    %26 = vector.load %arg0[%c0_20, %c33] : memref<4x896xf32, #tpu.memory_space<vmem>>, vector<4x768xf32>
    %c5 = arith.constant 5 : index
    %c0_21 = arith.constant 0 : index
    %c0_22 = arith.constant 0 : index
    %27 = vector.load %arg1[%c5, %c0_21, %c0_22] : memref<9x8x4xf32, #tpu.memory_space<vmem>>, vector<1x8x4xf32>
    %28 = vector.shape_cast %27 : vector<1x8x4xf32> to vector<8x4xf32>
    %cst_23 = arith.constant dense<0.000000e+00> : vector<8x768xf32>
    %29 = tpu.matmul %28, %26, %cst_23 {dimension_numbers = #tpu.dot_dimension_numbers<[1], [0], [0], [1], [0, 0, 1, 1], [], []>} : vector<8x4xf32>, vector<4x768xf32>, vector<8x768xf32> -> vector<8x768xf32>
    %30 = arith.addf %25, %29 : vector<8x768xf32>
    %c0_24 = arith.constant 0 : index
    %c49 = arith.constant 49 : index
    %31 = vector.load %arg0[%c0_24, %c49] : memref<4x896xf32, #tpu.memory_space<vmem>>, vector<4x768xf32>
    %c6 = arith.constant 6 : index
    %c0_25 = arith.constant 0 : index
    %c0_26 = arith.constant 0 : index
    %32 = vector.load %arg1[%c6, %c0_25, %c0_26] : memref<9x8x4xf32, #tpu.memory_space<vmem>>, vector<1x8x4xf32>
    %33 = vector.shape_cast %32 : vector<1x8x4xf32> to vector<8x4xf32>
    %cst_27 = arith.constant dense<0.000000e+00> : vector<8x768xf32>
    %34 = tpu.matmul %33, %31, %cst_27 {dimension_numbers = #tpu.dot_dimension_numbers<[1], [0], [0], [1], [0, 0, 1, 1], [], []>} : vector<8x4xf32>, vector<4x768xf32>, vector<8x768xf32> -> vector<8x768xf32>
    %35 = arith.addf %30, %34 : vector<8x768xf32>
    %c0_28 = arith.constant 0 : index
    %c50 = arith.constant 50 : index
    %36 = vector.load %arg0[%c0_28, %c50] : memref<4x896xf32, #tpu.memory_space<vmem>>, vector<4x768xf32>
    %c7 = arith.constant 7 : index
    %c0_29 = arith.constant 0 : index
    %c0_30 = arith.constant 0 : index
    %37 = vector.load %arg1[%c7, %c0_29, %c0_30] : memref<9x8x4xf32, #tpu.memory_space<vmem>>, vector<1x8x4xf32>
    %38 = vector.shape_cast %37 : vector<1x8x4xf32> to vector<8x4xf32>
    %cst_31 = arith.constant dense<0.000000e+00> : vector<8x768xf32>
    %39 = tpu.matmul %38, %36, %cst_31 {dimension_numbers = #tpu.dot_dimension_numbers<[1], [0], [0], [1], [0, 0, 1, 1], [], []>} : vector<8x4xf32>, vector<4x768xf32>, vector<8x768xf32> -> vector<8x768xf32>
    %40 = arith.addf %35, %39 : vector<8x768xf32>
    %c0_32 = arith.constant 0 : index
    %c51 = arith.constant 51 : index
    %41 = vector.load %arg0[%c0_32, %c51] : memref<4x896xf32, #tpu.memory_space<vmem>>, vector<4x768xf32>
    %c8 = arith.constant 8 : index
    %c0_33 = arith.constant 0 : index
    %c0_34 = arith.constant 0 : index
    %42 = vector.load %arg1[%c8, %c0_33, %c0_34] : memref<9x8x4xf32, #tpu.memory_space<vmem>>, vector<1x8x4xf32>
    %43 = vector.shape_cast %42 : vector<1x8x4xf32> to vector<8x4xf32>
    %cst_35 = arith.constant dense<0.000000e+00> : vector<8x768xf32>
    %44 = tpu.matmul %43, %41, %cst_35 {dimension_numbers = #tpu.dot_dimension_numbers<[1], [0], [0], [1], [0, 0, 1, 1], [], []>} : vector<8x4xf32>, vector<4x768xf32>, vector<8x768xf32> -> vector<8x768xf32>
    %45 = arith.addf %40, %44 : vector<8x768xf32>
    %c0_36 = arith.constant 0 : index
    %c0_37 = arith.constant 0 : index
    %46 = vector.load %arg2[%c0_36, %c0_37] : memref<8x1xf32, #tpu.memory_space<vmem>>, vector<8x1xf32>
    %47 = vector.broadcast %46 : vector<8x1xf32> to vector<8x768xf32>
    %48 = arith.addf %45, %47 : vector<8x768xf32>
    %cst_38 = arith.constant 0.000000e+00 : f32
    %49 = vector.broadcast %cst_38 : f32 to vector<8x768xf32>
    %50 = arith.maximumf %48, %49 : vector<8x768xf32>
    %c0_39 = arith.constant 0 : index
    %c0_40 = arith.constant 0 : index
    %51 = vector.load %arg7[%c0_39, %c0_40] : memref<1x768xf32, #tpu.memory_space<vmem>>, vector<1x768xf32>
    %52 = vector.broadcast %51 : vector<1x768xf32> to vector<8x768xf32>
    %53 = arith.mulf %50, %52 : vector<8x768xf32>
    %c0_41 = arith.constant 0 : index
    %c0_42 = arith.constant 0 : index
    %54 = vector.load %arg9[%c0_41, %c0_42] : memref<8x768xf32, #tpu.memory_space<vmem>>, vector<8x768xf32>
    tpu.vector_store %arg9[%c0_41, %c0_42], %53 {strides = array<i32>} : memref<8x768xf32, #tpu.memory_space<vmem>>, vector<8x768xf32>,
    %cst_43 = arith.constant 0.000000e+00 : f32
    %55 = vector.broadcast %cst_43 : f32 to vector<8x648xf32>
    %c0_44 = arith.constant 0 : index
    %c13_45 = arith.constant 13 : index
    %56 = vector.load %arg9[%c0_44, %c13_45] : memref<8x768xf32, #tpu.memory_space<vmem>>, vector<8x648xf32>
    %c0_46 = arith.constant 0 : index
    %c0_47 = arith.constant 0 : index
    %c0_48 = arith.constant 0 : index
    %57 = vector.load %arg3[%c0_46, %c0_47, %c0_48] : memref<9x8x8xf32, #tpu.memory_space<vmem>>, vector<1x8x8xf32>
    %58 = vector.shape_cast %57 : vector<1x8x8xf32> to vector<8x8xf32>
    %cst_49 = arith.constant dense<0.000000e+00> : vector<8x648xf32>
    %59 = tpu.matmul %58, %56, %cst_49 {dimension_numbers = #tpu.dot_dimension_numbers<[1], [0], [0], [1], [0, 0, 1, 1], [], []>} : vector<8x8xf32>, vector<8x648xf32>, vector<8x648xf32> -> vector<8x648xf32>
    %60 = arith.addf %55, %59 : vector<8x648xf32>
    %c0_50 = arith.constant 0 : index
    %c14_51 = arith.constant 14 : index
    %61 = vector.load %arg9[%c0_50, %c14_51] : memref<8x768xf32, #tpu.memory_space<vmem>>, vector<8x648xf32>
    %c1_52 = arith.constant 1 : index
    %c0_53 = arith.constant 0 : index
    %c0_54 = arith.constant 0 : index
    %62 = vector.load %arg3[%c1_52, %c0_53, %c0_54] : memref<9x8x8xf32, #tpu.memory_space<vmem>>, vector<1x8x8xf32>
    %63 = vector.shape_cast %62 : vector<1x8x8xf32> to vector<8x8xf32>
    %cst_55 = arith.constant dense<0.000000e+00> : vector<8x648xf32>
    %64 = tpu.matmul %63, %61, %cst_55 {dimension_numbers = #tpu.dot_dimension_numbers<[1], [0], [0], [1], [0, 0, 1, 1], [], []>} : vector<8x8xf32>, vector<8x648xf32>, vector<8x648xf32> -> vector<8x648xf32>
    %65 = arith.addf %60, %64 : vector<8x648xf32>
    %c0_56 = arith.constant 0 : index
    %c15_57 = arith.constant 15 : index
    %66 = vector.load %arg9[%c0_56, %c15_57] : memref<8x768xf32, #tpu.memory_space<vmem>>, vector<8x648xf32>
    %c2_58 = arith.constant 2 : index
    %c0_59 = arith.constant 0 : index
    %c0_60 = arith.constant 0 : index
    %67 = vector.load %arg3[%c2_58, %c0_59, %c0_60] : memref<9x8x8xf32, #tpu.memory_space<vmem>>, vector<1x8x8xf32>
    %68 = vector.shape_cast %67 : vector<1x8x8xf32> to vector<8x8xf32>
    %cst_61 = arith.constant dense<0.000000e+00> : vector<8x648xf32>
    %69 = tpu.matmul %68, %66, %cst_61 {dimension_numbers = #tpu.dot_dimension_numbers<[1], [0], [0], [1], [0, 0, 1, 1], [], []>} : vector<8x8xf32>, vector<8x648xf32>, vector<8x648xf32> -> vector<8x648xf32>
    %70 = arith.addf %65, %69 : vector<8x648xf32>
    %c0_62 = arith.constant 0 : index
    %c31_63 = arith.constant 31 : index
    %71 = vector.load %arg9[%c0_62, %c31_63] : memref<8x768xf32, #tpu.memory_space<vmem>>, vector<8x648xf32>
    %c3_64 = arith.constant 3 : index
    %c0_65 = arith.constant 0 : index
    %c0_66 = arith.constant 0 : index
    %72 = vector.load %arg3[%c3_64, %c0_65, %c0_66] : memref<9x8x8xf32, #tpu.memory_space<vmem>>, vector<1x8x8xf32>
    %73 = vector.shape_cast %72 : vector<1x8x8xf32> to vector<8x8xf32>
    %cst_67 = arith.constant dense<0.000000e+00> : vector<8x648xf32>
    %74 = tpu.matmul %73, %71, %cst_67 {dimension_numbers = #tpu.dot_dimension_numbers<[1], [0], [0], [1], [0, 0, 1, 1], [], []>} : vector<8x8xf32>, vector<8x648xf32>, vector<8x648xf32> -> vector<8x648xf32>
    %75 = arith.addf %70, %74 : vector<8x648xf32>
    %c0_68 = arith.constant 0 : index
    %c32_69 = arith.constant 32 : index
    %76 = vector.load %arg9[%c0_68, %c32_69] : memref<8x768xf32, #tpu.memory_space<vmem>>, vector<8x648xf32>
    %c4_70 = arith.constant 4 : index
    %c0_71 = arith.constant 0 : index
    %c0_72 = arith.constant 0 : index
    %77 = vector.load %arg3[%c4_70, %c0_71, %c0_72] : memref<9x8x8xf32, #tpu.memory_space<vmem>>, vector<1x8x8xf32>
    %78 = vector.shape_cast %77 : vector<1x8x8xf32> to vector<8x8xf32>
    %cst_73 = arith.constant dense<0.000000e+00> : vector<8x648xf32>
    %79 = tpu.matmul %78, %76, %cst_73 {dimension_numbers = #tpu.dot_dimension_numbers<[1], [0], [0], [1], [0, 0, 1, 1], [], []>} : vector<8x8xf32>, vector<8x648xf32>, vector<8x648xf32> -> vector<8x648xf32>
    %80 = arith.addf %75, %79 : vector<8x648xf32>
    %c0_74 = arith.constant 0 : index
    %c33_75 = arith.constant 33 : index
    %81 = vector.load %arg9[%c0_74, %c33_75] : memref<8x768xf32, #tpu.memory_space<vmem>>, vector<8x648xf32>
    %c5_76 = arith.constant 5 : index
    %c0_77 = arith.constant 0 : index
    %c0_78 = arith.constant 0 : index
    %82 = vector.load %arg3[%c5_76, %c0_77, %c0_78] : memref<9x8x8xf32, #tpu.memory_space<vmem>>, vector<1x8x8xf32>
    %83 = vector.shape_cast %82 : vector<1x8x8xf32> to vector<8x8xf32>
    %cst_79 = arith.constant dense<0.000000e+00> : vector<8x648xf32>
    %84 = tpu.matmul %83, %81, %cst_79 {dimension_numbers = #tpu.dot_dimension_numbers<[1], [0], [0], [1], [0, 0, 1, 1], [], []>} : vector<8x8xf32>, vector<8x648xf32>, vector<8x648xf32> -> vector<8x648xf32>
    %85 = arith.addf %80, %84 : vector<8x648xf32>
    %c0_80 = arith.constant 0 : index
    %c49_81 = arith.constant 49 : index
    %86 = vector.load %arg9[%c0_80, %c49_81] : memref<8x768xf32, #tpu.memory_space<vmem>>, vector<8x648xf32>
    %c6_82 = arith.constant 6 : index
    %c0_83 = arith.constant 0 : index
    %c0_84 = arith.constant 0 : index
    %87 = vector.load %arg3[%c6_82, %c0_83, %c0_84] : memref<9x8x8xf32, #tpu.memory_space<vmem>>, vector<1x8x8xf32>
    %88 = vector.shape_cast %87 : vector<1x8x8xf32> to vector<8x8xf32>
    %cst_85 = arith.constant dense<0.000000e+00> : vector<8x648xf32>
    %89 = tpu.matmul %88, %86, %cst_85 {dimension_numbers = #tpu.dot_dimension_numbers<[1], [0], [0], [1], [0, 0, 1, 1], [], []>} : vector<8x8xf32>, vector<8x648xf32>, vector<8x648xf32> -> vector<8x648xf32>
    %90 = arith.addf %85, %89 : vector<8x648xf32>
    %c0_86 = arith.constant 0 : index
    %c50_87 = arith.constant 50 : index
    %91 = vector.load %arg9[%c0_86, %c50_87] : memref<8x768xf32, #tpu.memory_space<vmem>>, vector<8x648xf32>
    %c7_88 = arith.constant 7 : index
    %c0_89 = arith.constant 0 : index
    %c0_90 = arith.constant 0 : index
    %92 = vector.load %arg3[%c7_88, %c0_89, %c0_90] : memref<9x8x8xf32, #tpu.memory_space<vmem>>, vector<1x8x8xf32>
    %93 = vector.shape_cast %92 : vector<1x8x8xf32> to vector<8x8xf32>
    %cst_91 = arith.constant dense<0.000000e+00> : vector<8x648xf32>
    %94 = tpu.matmul %93, %91, %cst_91 {dimension_numbers = #tpu.dot_dimension_numbers<[1], [0], [0], [1], [0, 0, 1, 1], [], []>} : vector<8x8xf32>, vector<8x648xf32>, vector<8x648xf32> -> vector<8x648xf32>
    %95 = arith.addf %90, %94 : vector<8x648xf32>
    %c0_92 = arith.constant 0 : index
    %c51_93 = arith.constant 51 : index
    %96 = vector.load %arg9[%c0_92, %c51_93] : memref<8x768xf32, #tpu.memory_space<vmem>>, vector<8x648xf32>
    %c8_94 = arith.constant 8 : index
    %c0_95 = arith.constant 0 : index
    %c0_96 = arith.constant 0 : index
    %97 = vector.load %arg3[%c8_94, %c0_95, %c0_96] : memref<9x8x8xf32, #tpu.memory_space<vmem>>, vector<1x8x8xf32>
    %98 = vector.shape_cast %97 : vector<1x8x8xf32> to vector<8x8xf32>
    %cst_97 = arith.constant dense<0.000000e+00> : vector<8x648xf32>
    %99 = tpu.matmul %98, %96, %cst_97 {dimension_numbers = #tpu.dot_dimension_numbers<[1], [0], [0], [1], [0, 0, 1, 1], [], []>} : vector<8x8xf32>, vector<8x648xf32>, vector<8x648xf32> -> vector<8x648xf32>
    %100 = arith.addf %95, %99 : vector<8x648xf32>
    %c0_98 = arith.constant 0 : index
    %c0_99 = arith.constant 0 : index
    %101 = vector.load %arg4[%c0_98, %c0_99] : memref<8x1xf32, #tpu.memory_space<vmem>>, vector<8x1xf32>
    %102 = vector.broadcast %101 : vector<8x1xf32> to vector<8x648xf32>
    %103 = arith.addf %100, %102 : vector<8x648xf32>
    %cst_100 = arith.constant 0.000000e+00 : f32
    %104 = vector.broadcast %cst_100 : f32 to vector<8x648xf32>
    %105 = arith.maximumf %103, %104 : vector<8x648xf32>
    %c0_101 = arith.constant 0 : index
    %c0_102 = arith.constant 0 : index
    %106 = vector.load %arg10[%c0_101, %c0_102] : memref<8x648xf32, #tpu.memory_space<vmem>>, vector<8x648xf32>
    tpu.vector_store %arg10[%c0_101, %c0_102], %105 {strides = array<i32>} : memref<8x648xf32, #tpu.memory_space<vmem>>, vector<8x648xf32>,
    tpu.wait_dma2 semaphore(%arg12 : memref<!tpu.dma_semaphore, #tpu.memory_space<semaphore_mem>>) src(%arg5 : memref<8x324x32xf32, #tpu.memory_space<any>>) dst(%arg11 : memref<8x324x32xf32, #tpu.memory_space<vmem>>)
    %cst_103 = arith.constant 0.000000e+00 : f32
    %107 = vector.broadcast %cst_103 : f32 to vector<1x32xf32>
    %cst_104 = arith.constant 0.000000e+00 : f32
    %108 = vector.broadcast %cst_104 : f32 to vector<1x32xf32>
    %c0_105 = arith.constant 0 : index
    %c0_106 = arith.constant 0 : index
    %c0_107 = arith.constant 0 : index
    %109 = vector.load %arg11[%c0_105, %c0_106, %c0_107] : memref<8x324x32xf32, #tpu.memory_space<vmem>>, vector<1x324x32xf32>
    %110 = vector.shape_cast %109 : vector<1x324x32xf32> to vector<324x32xf32>
    %c0_108 = arith.constant 0 : index
    %c0_109 = arith.constant 0 : index
    %111 = vector.load %arg10[%c0_108, %c0_109] : memref<8x648xf32, #tpu.memory_space<vmem>>, vector<1x324xf32>
    %cst_110 = arith.constant dense<0.000000e+00> : vector<1x32xf32>
    %112 = tpu.matmul %111, %110, %cst_110 {dimension_numbers = #tpu.dot_dimension_numbers<[1], [0], [0], [1], [0, 0, 1, 1], [], []>} : vector<1x324xf32>, vector<324x32xf32>, vector<1x32xf32> -> vector<1x32xf32>
    %113 = arith.addf %107, %112 : vector<1x32xf32>
    %c0_111 = arith.constant 0 : index
    %c324 = arith.constant 324 : index
    %114 = vector.load %arg10[%c0_111, %c324] : memref<8x648xf32, #tpu.memory_space<vmem>>, vector<1x324xf32>
    %cst_112 = arith.constant dense<0.000000e+00> : vector<1x32xf32>
    %115 = tpu.matmul %114, %110, %cst_112 {dimension_numbers = #tpu.dot_dimension_numbers<[1], [0], [0], [1], [0, 0, 1, 1], [], []>} : vector<1x324xf32>, vector<324x32xf32>, vector<1x32xf32> -> vector<1x32xf32>
    %116 = arith.addf %108, %115 : vector<1x32xf32>
    %c1_113 = arith.constant 1 : index
    %c0_114 = arith.constant 0 : index
    %c0_115 = arith.constant 0 : index
    %117 = vector.load %arg11[%c1_113, %c0_114, %c0_115] : memref<8x324x32xf32, #tpu.memory_space<vmem>>, vector<1x324x32xf32>
    %118 = vector.shape_cast %117 : vector<1x324x32xf32> to vector<324x32xf32>
    %c1_116 = arith.constant 1 : index
    %c0_117 = arith.constant 0 : index
    %119 = vector.load %arg10[%c1_116, %c0_117] : memref<8x648xf32, #tpu.memory_space<vmem>>, vector<1x324xf32>
    %cst_118 = arith.constant dense<0.000000e+00> : vector<1x32xf32>
    %120 = tpu.matmul %119, %118, %cst_118 {dimension_numbers = #tpu.dot_dimension_numbers<[1], [0], [0], [1], [0, 0, 1, 1], [], []>} : vector<1x324xf32>, vector<324x32xf32>, vector<1x32xf32> -> vector<1x32xf32>
    %121 = arith.addf %113, %120 : vector<1x32xf32>
    %c1_119 = arith.constant 1 : index
    %c324_120 = arith.constant 324 : index
    %122 = vector.load %arg10[%c1_119, %c324_120] : memref<8x648xf32, #tpu.memory_space<vmem>>, vector<1x324xf32>
    %cst_121 = arith.constant dense<0.000000e+00> : vector<1x32xf32>
    %123 = tpu.matmul %122, %118, %cst_121 {dimension_numbers = #tpu.dot_dimension_numbers<[1], [0], [0], [1], [0, 0, 1, 1], [], []>} : vector<1x324xf32>, vector<324x32xf32>, vector<1x32xf32> -> vector<1x32xf32>
    %124 = arith.addf %116, %123 : vector<1x32xf32>
    %c2_122 = arith.constant 2 : index
    %c0_123 = arith.constant 0 : index
    %c0_124 = arith.constant 0 : index
    %125 = vector.load %arg11[%c2_122, %c0_123, %c0_124] : memref<8x324x32xf32, #tpu.memory_space<vmem>>, vector<1x324x32xf32>
    %126 = vector.shape_cast %125 : vector<1x324x32xf32> to vector<324x32xf32>
    %c2_125 = arith.constant 2 : index
    %c0_126 = arith.constant 0 : index
    %127 = vector.load %arg10[%c2_125, %c0_126] : memref<8x648xf32, #tpu.memory_space<vmem>>, vector<1x324xf32>
    %cst_127 = arith.constant dense<0.000000e+00> : vector<1x32xf32>
    %128 = tpu.matmul %127, %126, %cst_127 {dimension_numbers = #tpu.dot_dimension_numbers<[1], [0], [0], [1], [0, 0, 1, 1], [], []>} : vector<1x324xf32>, vector<324x32xf32>, vector<1x32xf32> -> vector<1x32xf32>
    %129 = arith.addf %121, %128 : vector<1x32xf32>
    %c2_128 = arith.constant 2 : index
    %c324_129 = arith.constant 324 : index
    %130 = vector.load %arg10[%c2_128, %c324_129] : memref<8x648xf32, #tpu.memory_space<vmem>>, vector<1x324xf32>
    %cst_130 = arith.constant dense<0.000000e+00> : vector<1x32xf32>
    %131 = tpu.matmul %130, %126, %cst_130 {dimension_numbers = #tpu.dot_dimension_numbers<[1], [0], [0], [1], [0, 0, 1, 1], [], []>} : vector<1x324xf32>, vector<324x32xf32>, vector<1x32xf32> -> vector<1x32xf32>
    %132 = arith.addf %124, %131 : vector<1x32xf32>
    %c3_131 = arith.constant 3 : index
    %c0_132 = arith.constant 0 : index
    %c0_133 = arith.constant 0 : index
    %133 = vector.load %arg11[%c3_131, %c0_132, %c0_133] : memref<8x324x32xf32, #tpu.memory_space<vmem>>, vector<1x324x32xf32>
    %134 = vector.shape_cast %133 : vector<1x324x32xf32> to vector<324x32xf32>
    %c3_134 = arith.constant 3 : index
    %c0_135 = arith.constant 0 : index
    %135 = vector.load %arg10[%c3_134, %c0_135] : memref<8x648xf32, #tpu.memory_space<vmem>>, vector<1x324xf32>
    %cst_136 = arith.constant dense<0.000000e+00> : vector<1x32xf32>
    %136 = tpu.matmul %135, %134, %cst_136 {dimension_numbers = #tpu.dot_dimension_numbers<[1], [0], [0], [1], [0, 0, 1, 1], [], []>} : vector<1x324xf32>, vector<324x32xf32>, vector<1x32xf32> -> vector<1x32xf32>
    %137 = arith.addf %129, %136 : vector<1x32xf32>
    %c3_137 = arith.constant 3 : index
    %c324_138 = arith.constant 324 : index
    %138 = vector.load %arg10[%c3_137, %c324_138] : memref<8x648xf32, #tpu.memory_space<vmem>>, vector<1x324xf32>
    %cst_139 = arith.constant dense<0.000000e+00> : vector<1x32xf32>
    %139 = tpu.matmul %138, %134, %cst_139 {dimension_numbers = #tpu.dot_dimension_numbers<[1], [0], [0], [1], [0, 0, 1, 1], [], []>} : vector<1x324xf32>, vector<324x32xf32>, vector<1x32xf32> -> vector<1x32xf32>
    %140 = arith.addf %132, %139 : vector<1x32xf32>
    %c4_140 = arith.constant 4 : index
    %c0_141 = arith.constant 0 : index
    %c0_142 = arith.constant 0 : index
    %141 = vector.load %arg11[%c4_140, %c0_141, %c0_142] : memref<8x324x32xf32, #tpu.memory_space<vmem>>, vector<1x324x32xf32>
    %142 = vector.shape_cast %141 : vector<1x324x32xf32> to vector<324x32xf32>
    %c4_143 = arith.constant 4 : index
    %c0_144 = arith.constant 0 : index
    %143 = vector.load %arg10[%c4_143, %c0_144] : memref<8x648xf32, #tpu.memory_space<vmem>>, vector<1x324xf32>
    %cst_145 = arith.constant dense<0.000000e+00> : vector<1x32xf32>
    %144 = tpu.matmul %143, %142, %cst_145 {dimension_numbers = #tpu.dot_dimension_numbers<[1], [0], [0], [1], [0, 0, 1, 1], [], []>} : vector<1x324xf32>, vector<324x32xf32>, vector<1x32xf32> -> vector<1x32xf32>
    %145 = arith.addf %137, %144 : vector<1x32xf32>
    %c4_146 = arith.constant 4 : index
    %c324_147 = arith.constant 324 : index
    %146 = vector.load %arg10[%c4_146, %c324_147] : memref<8x648xf32, #tpu.memory_space<vmem>>, vector<1x324xf32>
    %cst_148 = arith.constant dense<0.000000e+00> : vector<1x32xf32>
    %147 = tpu.matmul %146, %142, %cst_148 {dimension_numbers = #tpu.dot_dimension_numbers<[1], [0], [0], [1], [0, 0, 1, 1], [], []>} : vector<1x324xf32>, vector<324x32xf32>, vector<1x32xf32> -> vector<1x32xf32>
    %148 = arith.addf %140, %147 : vector<1x32xf32>
    %c5_149 = arith.constant 5 : index
    %c0_150 = arith.constant 0 : index
    %c0_151 = arith.constant 0 : index
    %149 = vector.load %arg11[%c5_149, %c0_150, %c0_151] : memref<8x324x32xf32, #tpu.memory_space<vmem>>, vector<1x324x32xf32>
    %150 = vector.shape_cast %149 : vector<1x324x32xf32> to vector<324x32xf32>
    %c5_152 = arith.constant 5 : index
    %c0_153 = arith.constant 0 : index
    %151 = vector.load %arg10[%c5_152, %c0_153] : memref<8x648xf32, #tpu.memory_space<vmem>>, vector<1x324xf32>
    %cst_154 = arith.constant dense<0.000000e+00> : vector<1x32xf32>
    %152 = tpu.matmul %151, %150, %cst_154 {dimension_numbers = #tpu.dot_dimension_numbers<[1], [0], [0], [1], [0, 0, 1, 1], [], []>} : vector<1x324xf32>, vector<324x32xf32>, vector<1x32xf32> -> vector<1x32xf32>
    %153 = arith.addf %145, %152 : vector<1x32xf32>
    %c5_155 = arith.constant 5 : index
    %c324_156 = arith.constant 324 : index
    %154 = vector.load %arg10[%c5_155, %c324_156] : memref<8x648xf32, #tpu.memory_space<vmem>>, vector<1x324xf32>
    %cst_157 = arith.constant dense<0.000000e+00> : vector<1x32xf32>
    %155 = tpu.matmul %154, %150, %cst_157 {dimension_numbers = #tpu.dot_dimension_numbers<[1], [0], [0], [1], [0, 0, 1, 1], [], []>} : vector<1x324xf32>, vector<324x32xf32>, vector<1x32xf32> -> vector<1x32xf32>
    %156 = arith.addf %148, %155 : vector<1x32xf32>
    %c6_158 = arith.constant 6 : index
    %c0_159 = arith.constant 0 : index
    %c0_160 = arith.constant 0 : index
    %157 = vector.load %arg11[%c6_158, %c0_159, %c0_160] : memref<8x324x32xf32, #tpu.memory_space<vmem>>, vector<1x324x32xf32>
    %158 = vector.shape_cast %157 : vector<1x324x32xf32> to vector<324x32xf32>
    %c6_161 = arith.constant 6 : index
    %c0_162 = arith.constant 0 : index
    %159 = vector.load %arg10[%c6_161, %c0_162] : memref<8x648xf32, #tpu.memory_space<vmem>>, vector<1x324xf32>
    %cst_163 = arith.constant dense<0.000000e+00> : vector<1x32xf32>
    %160 = tpu.matmul %159, %158, %cst_163 {dimension_numbers = #tpu.dot_dimension_numbers<[1], [0], [0], [1], [0, 0, 1, 1], [], []>} : vector<1x324xf32>, vector<324x32xf32>, vector<1x32xf32> -> vector<1x32xf32>
    %161 = arith.addf %153, %160 : vector<1x32xf32>
    %c6_164 = arith.constant 6 : index
    %c324_165 = arith.constant 324 : index
    %162 = vector.load %arg10[%c6_164, %c324_165] : memref<8x648xf32, #tpu.memory_space<vmem>>, vector<1x324xf32>
    %cst_166 = arith.constant dense<0.000000e+00> : vector<1x32xf32>
    %163 = tpu.matmul %162, %158, %cst_166 {dimension_numbers = #tpu.dot_dimension_numbers<[1], [0], [0], [1], [0, 0, 1, 1], [], []>} : vector<1x324xf32>, vector<324x32xf32>, vector<1x32xf32> -> vector<1x32xf32>
    %164 = arith.addf %156, %163 : vector<1x32xf32>
    %c7_167 = arith.constant 7 : index
    %c0_168 = arith.constant 0 : index
    %c0_169 = arith.constant 0 : index
    %165 = vector.load %arg11[%c7_167, %c0_168, %c0_169] : memref<8x324x32xf32, #tpu.memory_space<vmem>>, vector<1x324x32xf32>
    %166 = vector.shape_cast %165 : vector<1x324x32xf32> to vector<324x32xf32>
    %c7_170 = arith.constant 7 : index
    %c0_171 = arith.constant 0 : index
    %167 = vector.load %arg10[%c7_170, %c0_171] : memref<8x648xf32, #tpu.memory_space<vmem>>, vector<1x324xf32>
    %cst_172 = arith.constant dense<0.000000e+00> : vector<1x32xf32>
    %168 = tpu.matmul %167, %166, %cst_172 {dimension_numbers = #tpu.dot_dimension_numbers<[1], [0], [0], [1], [0, 0, 1, 1], [], []>} : vector<1x324xf32>, vector<324x32xf32>, vector<1x32xf32> -> vector<1x32xf32>
    %169 = arith.addf %161, %168 : vector<1x32xf32>
    %c7_173 = arith.constant 7 : index
    %c324_174 = arith.constant 324 : index
    %170 = vector.load %arg10[%c7_173, %c324_174] : memref<8x648xf32, #tpu.memory_space<vmem>>, vector<1x324xf32>
    %cst_175 = arith.constant dense<0.000000e+00> : vector<1x32xf32>
    %171 = tpu.matmul %170, %166, %cst_175 {dimension_numbers = #tpu.dot_dimension_numbers<[1], [0], [0], [1], [0, 0, 1, 1], [], []>} : vector<1x324xf32>, vector<324x32xf32>, vector<1x32xf32> -> vector<1x32xf32>
    %172 = arith.addf %164, %171 : vector<1x32xf32>
    %c0_176 = arith.constant 0 : index
    %c0_177 = arith.constant 0 : index
    %173 = vector.load %arg6[%c0_176, %c0_177] : memref<1x32xf32, #tpu.memory_space<vmem>>, vector<1x32xf32>
    %174 = arith.addf %169, %173 : vector<1x32xf32>
    %c0_178 = arith.constant 0 : index
    %c0_179 = arith.constant 0 : index
    %175 = vector.load %arg8[%c0_178, %c0_179] : memref<2x32xf32, #tpu.memory_space<vmem>>, vector<1x32xf32>
    tpu.vector_store %arg8[%c0_178, %c0_179], %174 {strides = array<i32>} : memref<2x32xf32, #tpu.memory_space<vmem>>, vector<1x32xf32>,
    %c0_180 = arith.constant 0 : index
    %c0_181 = arith.constant 0 : index
    %176 = vector.load %arg6[%c0_180, %c0_181] : memref<1x32xf32, #tpu.memory_space<vmem>>, vector<1x32xf32>
    %177 = arith.addf %172, %176 : vector<1x32xf32>
    %c1_182 = arith.constant 1 : index
    %c0_183 = arith.constant 0 : index
    %178 = vector.load %arg8[%c1_182, %c0_183] : memref<2x32xf32, #tpu.memory_space<vmem>>, vector<1x32xf32>
    tpu.vector_store %arg8[%c1_182, %c0_183], %177 {strides = array<i32>} : memref<2x32xf32, #tpu.memory_space<vmem>>, vector<1x32xf32>,
    return
  }
}

</mosaic_0001>

<llo_original>
// kernel: quant_model_forward.1
$region0: #{quant_model_forward.1}
  #allocation0 [shape = 'u32[]', space=smem, size = 0x4, offset = 0x4, fixed_abs, tag = 'smem constant byte address 0x4 - core index']
  #allocation1 [shape = 'u32[144,128]{1,0:T(1,128)}', space=vmem, size = 0x12000, scoped, tag = 'internal scratch']
  #allocation2 [shape = 'f32[8,768]{1,0:T(8,128)}', space=vmem, size = 0x6000, scoped, tag = 'scratch operand']
  #allocation3 [shape = 'f32[8,648]{1,0:T(8,128)}', space=vmem, size = 0x6000, scoped, tag = 'scratch operand']
  #allocation4 [shape = 'f32[8,324,32]{2,1,0:T(8,128)}', space=vmem, size = 0x148000, scoped, tag = 'scratch operand']
  #allocation5 [shape = 's32[1]{0}', space=sflag, size = 0x4, scoped, tag = 'scratch operand']
  #allocation8 [shape = 's32[]', space=sflag, size = 0x4, offset = 0, fixed_abs, tag = 'sflag constant byte address 0x0 - dummy sync flag']
  %s0 = inlined_call_operand.vmem [shape: f32[4,896], index: 0, kind: input, shape index: {}]
  %s1 = inlined_call_operand.vmem [shape: f32[9,8,4], index: 1, kind: input, shape index: {}]
  %s2 = inlined_call_operand.vmem [shape: f32[8,1], index: 2, kind: input, shape index: {}]
  %s3 = inlined_call_operand.vmem [shape: f32[9,8,8], index: 3, kind: input, shape index: {}]
  %s4 = inlined_call_operand.vmem [shape: f32[8,1], index: 4, kind: input, shape index: {}]
  %s5 = inlined_call_operand.vmem [shape: f32[8,324,32], index: 5, kind: input, shape index: {}]
  %s6 = inlined_call_operand.vmem [shape: f32[1,32], index: 6, kind: input, shape index: {}]
  %s7 = inlined_call_operand.vmem [shape: f32[1,768], index: 7, kind: input, shape index: {}]
  %s8 = inlined_call_operand.hbm [shape: f32[2,32], index: 8, kind: output, shape index: {}]
  %s9 = sld [smem:[#allocation0]]
  $region75: #{quant_model_forward.1} parent=0
    _
  %s11 = ssub.s32 1, %s9
  %s12 = scalar_select 0, %s11, %s9
  $region1: #{quant_model_forward.1} parent=0
    #allocation6 [shape = 'u8[1024]{0}', space=vmem, size = 0x400, scoped, tag = 'output window, operand 0, single buffered']
    #allocation7 [shape = 's32[1]{0}', space=sflag, size = 0x4, scoped, tag = 'scoped memory for quant_model_forward.1']
    %13 = vsyncpa [#allocation7], 0
    // Predicated region
    $region2: #{quant_model_forward.1} parent=1 // pred_check
      _
    $region3: #{quant_model_forward.1} parent=1 // pred_check_branch
      %15 = sbr.rel (0) target = $region5
    $region4: #{quant_model_forward.1} parent=1 // pred_region
      _
    $region5: #{quant_model_forward.1} parent=1 // pred_fallthru
      _
    // Predicated region
    $region6: #{quant_model_forward.1} parent=1 // pred_check
      _
    $region7: #{quant_model_forward.1} parent=1 // pred_check_branch
      %17 = sbr.rel (0) target = $region9
    $region8: #{quant_model_forward.1} parent=1 // pred_region
      _
    $region9: #{quant_model_forward.1} parent=1 // pred_fallthru
      _
    // Predicated region
    $region10: #{quant_model_forward.1} parent=1 // pred_check
      _
    $region11: #{quant_model_forward.1} parent=1 // pred_check_branch
      %19 = sbr.rel (0) target = $region13
    $region12: #{quant_model_forward.1} parent=1 // pred_region
      _
    $region13: #{quant_model_forward.1} parent=1 // pred_fallthru
      _
    // Predicated region
    $region14: #{quant_model_forward.1} parent=1 // pred_check
      _
    $region15: #{quant_model_forward.1} parent=1 // pred_check_branch
      %21 = sbr.rel (0) target = $region17
    $region16: #{quant_model_forward.1} parent=1 // pred_region
      _
    $region17: #{quant_model_forward.1} parent=1 // pred_fallthru
      _
    // Predicated region
    $region18: #{quant_model_forward.1} parent=1 // pred_check
      _
    $region19: #{quant_model_forward.1} parent=1 // pred_check_branch
      %23 = sbr.rel (0) target = $region21
    $region20: #{quant_model_forward.1} parent=1 // pred_region
      _
    $region21: #{quant_model_forward.1} parent=1 // pred_fallthru
      _
    // Predicated region
    $region22: #{quant_model_forward.1} parent=1 // pred_check
      _
    $region23: #{quant_model_forward.1} parent=1 // pred_check_branch
      %25 = sbr.rel (0) target = $region25
    $region24: #{quant_model_forward.1} parent=1 // pred_region
      _
    $region25: #{quant_model_forward.1} parent=1 // pred_fallthru
      _
    // Predicated region
    $region26: #{quant_model_forward.1} parent=1 // pred_check
      _
    $region27: #{quant_model_forward.1} parent=1 // pred_check_branch
      %27 = sbr.rel (0) target = $region29
    $region28: #{quant_model_forward.1} parent=1 // pred_region
      _
    $region29: #{quant_model_forward.1} parent=1 // pred_fallthru
      _
    %p29 = scmp.lt.u32.totalorder 324, 8
    %p30 = pneg %p29
    // Predicated region
    $region30: #{quant_model_forward.1} parent=1 // pred_check
      _
    $region31: #{quant_model_forward.1} parent=1 // pred_check_branch
      %32 = sbr.rel (%p29) target = $region33
    $region32: #{quant_model_forward.1} parent=1 // pred_region
      %s62 = sand.u32 324, 7
      %p63 = scmp.eq.s32.totalorder %s62, 0
      %p64 = pneg %p63
      // Predicated region
      $region45: #{quant_model_forward.1} parent=32 // pred_check
        _
      $region46: #{quant_model_forward.1} parent=32 // pred_check_branch
        %66 = sbr.rel (%p63) target = $region48
      $region47: #{quant_model_forward.1} parent=32 // pred_region
        %s67 = sand.u32 324, 7
        %s68 = ssub.s32 324, %s67
        %s69 = scalar_lea.vmem %s5, %s68
        %s70 = ssub.s32 324, %s67
        %s71 = scalar_lea.vmem [#allocation4], %s70
        loop: start=0, step=1, limit=1
        $region49: #{quant_model_forward.1} parent=47 // loop_pre_header
          _
        $region50: #{quant_model_forward.1} parent=47 // loop_header
          %s73 = sphi 0, %s77
          %p74 = scmp.ge.s32.totalorder %s73, 1
          %s78 = sphi %s5, %s5
          %s79 = sphi [#allocation4], [#allocation4]
        $region51: #{quant_model_forward.1} parent=47 // loop_header_branch
          %76 = sbr.rel (%p74) target = $region55
        $region52: #{quant_model_forward.1} parent=47 // loop_body
          %v80 = vld [vmem:[%s78] sm:$0xff]
          %81 = vst [vmem:[%s79] sm:$0xff] %v80
          %v82 = vld [vmem:[%s78 + $0x8] sm:$0xff]
          %83 = vst [vmem:[%s79 + $0x8] sm:$0xff] %v82
          %v84 = vld [vmem:[%s78 + $0x10] sm:$0xff]
          %85 = vst [vmem:[%s79 + $0x10] sm:$0xff] %v84
          %v86 = vld [vmem:[%s78 + $0x18] sm:$0xff]
          %87 = vst [vmem:[%s79 + $0x18] sm:$0xff] %v86
          %v88 = vld [vmem:[%s78 + $0x20] sm:$0xff]
          %89 = vst [vmem:[%s79 + $0x20] sm:$0xff] %v88
          %v90 = vld [vmem:[%s78 + $0x28] sm:$0xff]
          %91 = vst [vmem:[%s79 + $0x28] sm:$0xff] %v90
          %v92 = vld [vmem:[%s78 + $0x30] sm:$0xff]
          %93 = vst [vmem:[%s79 + $0x30] sm:$0xff] %v92
          %v94 = vld [vmem:[%s78 + $0x38] sm:$0xff]
          %95 = vst [vmem:[%s79 + $0x38] sm:$0xff] %v94
          %v96 = vld [vmem:[%s78 + $0x40] sm:$0xff]
          %97 = vst [vmem:[%s79 + $0x40] sm:$0xff] %v96
          %v98 = vld [vmem:[%s78 + $0x48] sm:$0xff]
          %99 = vst [vmem:[%s79 + $0x48] sm:$0xff] %v98
          %v100 = vld [vmem:[%s78 + $0x50] sm:$0xff]
          %101 = vst [vmem:[%s79 + $0x50] sm:$0xff] %v100
          %v102 = vld [vmem:[%s78 + $0x58] sm:$0xff]
          %103 = vst [vmem:[%s79 + $0x58] sm:$0xff] %v102
          %v104 = vld [vmem:[%s78 + $0x60] sm:$0xff]
          %105 = vst [vmem:[%s79 + $0x60] sm:$0xff] %v104
          %v106 = vld [vmem:[%s78 + $0x68] sm:$0xff]
          %107 = vst [vmem:[%s79 + $0x68] sm:$0xff] %v106
          %v108 = vld [vmem:[%s78 + $0x70] sm:$0xff]
          %109 = vst [vmem:[%s79 + $0x70] sm:$0xff] %v108
          %v110 = vld [vmem:[%s78 + $0x78] sm:$0xff]
          %111 = vst [vmem:[%s79 + $0x78] sm:$0xff] %v110
          %v112 = vld [vmem:[%s78 + $0x80] sm:$0xff]
          %113 = vst [vmem:[%s79 + $0x80] sm:$0xff] %v112
          %v114 = vld [vmem:[%s78 + $0x88] sm:$0xff]
          %115 = vst [vmem:[%s79 + $0x88] sm:$0xff] %v114
          %v116 = vld [vmem:[%s78 + $0x90] sm:$0xff]
          %117 = vst [vmem:[%s79 + $0x90] sm:$0xff] %v116
          %v118 = vld [vmem:[%s78 + $0x98] sm:$0xff]
          %119 = vst [vmem:[%s79 + $0x98] sm:$0xff] %v118
          %v120 = vld [vmem:[%s78 + $0xa0] sm:$0xff]
          %121 = vst [vmem:[%s79 + $0xa0] sm:$0xff] %v120
          %v122 = vld [vmem:[%s78 + $0xa8] sm:$0xff]
          %123 = vst [vmem:[%s79 + $0xa8] sm:$0xff] %v122
          %v124 = vld [vmem:[%s78 + $0xb0] sm:$0xff]
          %125 = vst [vmem:[%s79 + $0xb0] sm:$0xff] %v124
          %v126 = vld [vmem:[%s78 + $0xb8] sm:$0xff]
          %127 = vst [vmem:[%s79 + $0xb8] sm:$0xff] %v126
          %v128 = vld [vmem:[%s78 + $0xc0] sm:$0xff]
          %129 = vst [vmem:[%s79 + $0xc0] sm:$0xff] %v128
          %v130 = vld [vmem:[%s78 + $0xc8] sm:$0xff]
          %131 = vst [vmem:[%s79 + $0xc8] sm:$0xff] %v130
          %v132 = vld [vmem:[%s78 + $0xd0] sm:$0xff]
          %133 = vst [vmem:[%s79 + $0xd0] sm:$0xff] %v132
          %v134 = vld [vmem:[%s78 + $0xd8] sm:$0xff]
          %135 = vst [vmem:[%s79 + $0xd8] sm:$0xff] %v134
          %v136 = vld [vmem:[%s78 + $0xe0] sm:$0xff]
          %137 = vst [vmem:[%s79 + $0xe0] sm:$0xff] %v136
          %v138 = vld [vmem:[%s78 + $0xe8] sm:$0xff]
          %139 = vst [vmem:[%s79 + $0xe8] sm:$0xff] %v138
          %v140 = vld [vmem:[%s78 + $0xf0] sm:$0xff]
          %141 = vst [vmem:[%s79 + $0xf0] sm:$0xff] %v140
          %v142 = vld [vmem:[%s78 + $0xf8] sm:$0xff]
          %143 = vst [vmem:[%s79 + $0xf8] sm:$0xff] %v142
          %v144 = vld [vmem:[%s78 + $0x100] sm:$0xff]
          %145 = vst [vmem:[%s79 + $0x100] sm:$0xff] %v144
          %v146 = vld [vmem:[%s78 + $0x108] sm:$0xff]
          %147 = vst [vmem:[%s79 + $0x108] sm:$0xff] %v146
          %v148 = vld [vmem:[%s78 + $0x110] sm:$0xff]
          %149 = vst [vmem:[%s79 + $0x110] sm:$0xff] %v148
          %v150 = vld [vmem:[%s78 + $0x118] sm:$0xff]
          %151 = vst [vmem:[%s79 + $0x118] sm:$0xff] %v150
          %v152 = vld [vmem:[%s78 + $0x120] sm:$0xff]
          %153 = vst [vmem:[%s79 + $0x120] sm:$0xff] %v152
          %v154 = vld [vmem:[%s78 + $0x128] sm:$0xff]
          %155 = vst [vmem:[%s79 + $0x128] sm:$0xff] %v154
          %v156 = vld [vmem:[%s78 + $0x130] sm:$0xff]
          %157 = vst [vmem:[%s79 + $0x130] sm:$0xff] %v156
          %v158 = vld [vmem:[%s78 + $0x138] sm:$0xff]
          %159 = vst [vmem:[%s79 + $0x138] sm:$0xff] %v158
          %v160 = vld [vmem:[%s78 + $0x148] sm:$0xff]
          %161 = vst [vmem:[%s79 + $0x148] sm:$0xff] %v160
          %v162 = vld [vmem:[%s78 + $0x150] sm:$0xff]
          %163 = vst [vmem:[%s79 + $0x150] sm:$0xff] %v162
          %v164 = vld [vmem:[%s78 + $0x158] sm:$0xff]
          %165 = vst [vmem:[%s79 + $0x158] sm:$0xff] %v164
          %v166 = vld [vmem:[%s78 + $0x160] sm:$0xff]
          %167 = vst [vmem:[%s79 + $0x160] sm:$0xff] %v166
          %v168 = vld [vmem:[%s78 + $0x168] sm:$0xff]
          %169 = vst [vmem:[%s79 + $0x168] sm:$0xff] %v168
          %v170 = vld [vmem:[%s78 + $0x170] sm:$0xff]
          %171 = vst [vmem:[%s79 + $0x170] sm:$0xff] %v170
          %v172 = vld [vmem:[%s78 + $0x178] sm:$0xff]
          %173 = vst [vmem:[%s79 + $0x178] sm:$0xff] %v172
          %v174 = vld [vmem:[%s78 + $0x180] sm:$0xff]
          %175 = vst [vmem:[%s79 + $0x180] sm:$0xff] %v174
          %v176 = vld [vmem:[%s78 + $0x188] sm:$0xff]
          %177 = vst [vmem:[%s79 + $0x188] sm:$0xff] %v176
          %v178 = vld [vmem:[%s78 + $0x190] sm:$0xff]
          %179 = vst [vmem:[%s79 + $0x190] sm:$0xff] %v178
          %v180 = vld [vmem:[%s78 + $0x198] sm:$0xff]
          %181 = vst [vmem:[%s79 + $0x198] sm:$0xff] %v180
          %v182 = vld [vmem:[%s78 + $0x1a0] sm:$0xff]
          %183 = vst [vmem:[%s79 + $0x1a0] sm:$0xff] %v182
          %v184 = vld [vmem:[%s78 + $0x1a8] sm:$0xff]
          %185 = vst [vmem:[%s79 + $0x1a8] sm:$0xff] %v184
          %v186 = vld [vmem:[%s78 + $0x1b0] sm:$0xff]
          %187 = vst [vmem:[%s79 + $0x1b0] sm:$0xff] %v186
          %v188 = vld [vmem:[%s78 + $0x1b8] sm:$0xff]
          %189 = vst [vmem:[%s79 + $0x1b8] sm:$0xff] %v188
          %v190 = vld [vmem:[%s78 + $0x1c0] sm:$0xff]
          %191 = vst [vmem:[%s79 + $0x1c0] sm:$0xff] %v190
          %v192 = vld [vmem:[%s78 + $0x1c8] sm:$0xff]
          %193 = vst [vmem:[%s79 + $0x1c8] sm:$0xff] %v192
          %v194 = vld [vmem:[%s78 + $0x1d0] sm:$0xff]
          %195 = vst [vmem:[%s79 + $0x1d0] sm:$0xff] %v194
          %v196 = vld [vmem:[%s78 + $0x1d8] sm:$0xff]
          %197 = vst [vmem:[%s79 + $0x1d8] sm:$0xff] %v196
          %v198 = vld [vmem:[%s78 + $0x1e0] sm:$0xff]
          %199 = vst [vmem:[%s79 + $0x1e0] sm:$0xff] %v198
          %v200 = vld [vmem:[%s78 + $0x1e8] sm:$0xff]
          %201 = vst [vmem:[%s79 + $0x1e8] sm:$0xff] %v200
          %v202 = vld [vmem:[%s78 + $0x1f0] sm:$0xff]
          %203 = vst [vmem:[%s79 + $0x1f0] sm:$0xff] %v202
          %v204 = vld [vmem:[%s78 + $0x1f8] sm:$0xff]
          %205 = vst [vmem:[%s79 + $0x1f8] sm:$0xff] %v204
          %v206 = vld [vmem:[%s78 + $0x200] sm:$0xff]
          %207 = vst [vmem:[%s79 + $0x200] sm:$0xff] %v206
          %v208 = vld [vmem:[%s78 + $0x208] sm:$0xff]
          %209 = vst [vmem:[%s79 + $0x208] sm:$0xff] %v208
          %v210 = vld [vmem:[%s78 + $0x210] sm:$0xff]
          %211 = vst [vmem:[%s79 + $0x210] sm:$0xff] %v210
          %v212 = vld [vmem:[%s78 + $0x218] sm:$0xff]
          %213 = vst [vmem:[%s79 + $0x218] sm:$0xff] %v212
          %v214 = vld [vmem:[%s78 + $0x220] sm:$0xff]
          %215 = vst [vmem:[%s79 + $0x220] sm:$0xff] %v214
          %v216 = vld [vmem:[%s78 + $0x228] sm:$0xff]
          %217 = vst [vmem:[%s79 + $0x228] sm:$0xff] %v216
          %v218 = vld [vmem:[%s78 + $0x230] sm:$0xff]
          %219 = vst [vmem:[%s79 + $0x230] sm:$0xff] %v218
          %v220 = vld [vmem:[%s78 + $0x238] sm:$0xff]
          %221 = vst [vmem:[%s79 + $0x238] sm:$0xff] %v220
          %v222 = vld [vmem:[%s78 + $0x240] sm:$0xff]
          %223 = vst [vmem:[%s79 + $0x240] sm:$0xff] %v222
          %v224 = vld [vmem:[%s78 + $0x248] sm:$0xff]
          %225 = vst [vmem:[%s79 + $0x248] sm:$0xff] %v224
          %v226 = vld [vmem:[%s78 + $0x250] sm:$0xff]
          %227 = vst [vmem:[%s79 + $0x250] sm:$0xff] %v226
          %v228 = vld [vmem:[%s78 + $0x258] sm:$0xff]
          %229 = vst [vmem:[%s79 + $0x258] sm:$0xff] %v228
          %v230 = vld [vmem:[%s78 + $0x260] sm:$0xff]
          %231 = vst [vmem:[%s79 + $0x260] sm:$0xff] %v230
          %v232 = vld [vmem:[%s78 + $0x268] sm:$0xff]
          %233 = vst [vmem:[%s79 + $0x268] sm:$0xff] %v232
          %v234 = vld [vmem:[%s78 + $0x270] sm:$0xff]
          %235 = vst [vmem:[%s79 + $0x270] sm:$0xff] %v234
          %v236 = vld [vmem:[%s78 + $0x278] sm:$0xff]
          %237 = vst [vmem:[%s79 + $0x278] sm:$0xff] %v236
          %v238 = vld [vmem:[%s78 + $0x280] sm:$0xff]
          %239 = vst [vmem:[%s79 + $0x280] sm:$0xff] %v238
          %v240 = vld [vmem:[%s78 + $0x290] sm:$0xff]
          %241 = vst [vmem:[%s79 + $0x290] sm:$0xff] %v240
          %v242 = vld [vmem:[%s78 + $0x298] sm:$0xff]
          %243 = vst [vmem:[%s79 + $0x298] sm:$0xff] %v242
          %v244 = vld [vmem:[%s78 + $0x2a0] sm:$0xff]
          %245 = vst [vmem:[%s79 + $0x2a0] sm:$0xff] %v244
          %v246 = vld [vmem:[%s78 + $0x2a8] sm:$0xff]
          %247 = vst [vmem:[%s79 + $0x2a8] sm:$0xff] %v246
          %v248 = vld [vmem:[%s78 + $0x2b0] sm:$0xff]
          %249 = vst [vmem:[%s79 + $0x2b0] sm:$0xff] %v248
          %v250 = vld [vmem:[%s78 + $0x2b8] sm:$0xff]
          %251 = vst [vmem:[%s79 + $0x2b8] sm:$0xff] %v250
          %v252 = vld [vmem:[%s78 + $0x2c0] sm:$0xff]
          %253 = vst [vmem:[%s79 + $0x2c0] sm:$0xff] %v252
          %v254 = vld [vmem:[%s78 + $0x2c8] sm:$0xff]
          %255 = vst [vmem:[%s79 + $0x2c8] sm:$0xff] %v254
          %v256 = vld [vmem:[%s78 + $0x2d0] sm:$0xff]
          %257 = vst [vmem:[%s79 + $0x2d0] sm:$0xff] %v256
          %v258 = vld [vmem:[%s78 + $0x2d8] sm:$0xff]
          %259 = vst [vmem:[%s79 + $0x2d8] sm:$0xff] %v258
          %v260 = vld [vmem:[%s78 + $0x2e0] sm:$0xff]
          %261 = vst [vmem:[%s79 + $0x2e0] sm:$0xff] %v260
          %v262 = vld [vmem:[%s78 + $0x2e8] sm:$0xff]
          %263 = vst [vmem:[%s79 + $0x2e8] sm:$0xff] %v262
          %v264 = vld [vmem:[%s78 + $0x2f0] sm:$0xff]
          %265 = vst [vmem:[%s79 + $0x2f0] sm:$0xff] %v264
          %v266 = vld [vmem:[%s78 + $0x2f8] sm:$0xff]
          %267 = vst [vmem:[%s79 + $0x2f8] sm:$0xff] %v266
          %v268 = vld [vmem:[%s78 + $0x300] sm:$0xff]
          %269 = vst [vmem:[%s79 + $0x300] sm:$0xff] %v268
          %v270 = vld [vmem:[%s78 + $0x308] sm:$0xff]
          %271 = vst [vmem:[%s79 + $0x308] sm:$0xff] %v270
          %v272 = vld [vmem:[%s78 + $0x310] sm:$0xff]
          %273 = vst [vmem:[%s79 + $0x310] sm:$0xff] %v272
          %v274 = vld [vmem:[%s78 + $0x318] sm:$0xff]
          %275 = vst [vmem:[%s79 + $0x318] sm:$0xff] %v274
          %v276 = vld [vmem:[%s78 + $0x320] sm:$0xff]
          %277 = vst [vmem:[%s79 + $0x320] sm:$0xff] %v276
          %v278 = vld [vmem:[%s78 + $0x328] sm:$0xff]
          %279 = vst [vmem:[%s79 + $0x328] sm:$0xff] %v278
          %v280 = vld [vmem:[%s78 + $0x330] sm:$0xff]
          %281 = vst [vmem:[%s79 + $0x330] sm:$0xff] %v280
          %v282 = vld [vmem:[%s78 + $0x338] sm:$0xff]
          %283 = vst [vmem:[%s79 + $0x338] sm:$0xff] %v282
          %v284 = vld [vmem:[%s78 + $0x340] sm:$0xff]
          %285 = vst [vmem:[%s79 + $0x340] sm:$0xff] %v284
          %v286 = vld [vmem:[%s78 + $0x348] sm:$0xff]
          %287 = vst [vmem:[%s79 + $0x348] sm:$0xff] %v286
          %v288 = vld [vmem:[%s78 + $0x350] sm:$0xff]
          %289 = vst [vmem:[%s79 + $0x350] sm:$0xff] %v288
          %v290 = vld [vmem:[%s78 + $0x358] sm:$0xff]
          %291 = vst [vmem:[%s79 + $0x358] sm:$0xff] %v290
          %v292 = vld [vmem:[%s78 + $0x360] sm:$0xff]
          %293 = vst [vmem:[%s79 + $0x360] sm:$0xff] %v292
          %v294 = vld [vmem:[%s78 + $0x368] sm:$0xff]
          %295 = vst [vmem:[%s79 + $0x368] sm:$0xff] %v294
          %v296 = vld [vmem:[%s78 + $0x370] sm:$0xff]
          %297 = vst [vmem:[%s79 + $0x370] sm:$0xff] %v296
          %v298 = vld [vmem:[%s78 + $0x378] sm:$0xff]
          %299 = vst [vmem:[%s79 + $0x378] sm:$0xff] %v298
          %v300 = vld [vmem:[%s78 + $0x380] sm:$0xff]
          %301 = vst [vmem:[%s79 + $0x380] sm:$0xff] %v300
          %v302 = vld [vmem:[%s78 + $0x388] sm:$0xff]
          %303 = vst [vmem:[%s79 + $0x388] sm:$0xff] %v302
          %v304 = vld [vmem:[%s78 + $0x390] sm:$0xff]
          %305 = vst [vmem:[%s79 + $0x390] sm:$0xff] %v304
          %v306 = vld [vmem:[%s78 + $0x398] sm:$0xff]
          %307 = vst [vmem:[%s79 + $0x398] sm:$0xff] %v306
          %v308 = vld [vmem:[%s78 + $0x3a0] sm:$0xff]
          %309 = vst [vmem:[%s79 + $0x3a0] sm:$0xff] %v308
          %v310 = vld [vmem:[%s78 + $0x3a8] sm:$0xff]
          %311 = vst [vmem:[%s79 + $0x3a8] sm:$0xff] %v310
          %v312 = vld [vmem:[%s78 + $0x3b0] sm:$0xff]
          %313 = vst [vmem:[%s79 + $0x3b0] sm:$0xff] %v312
          %v314 = vld [vmem:[%s78 + $0x3b8] sm:$0xff]
          %315 = vst [vmem:[%s79 + $0x3b8] sm:$0xff] %v314
          %v316 = vld [vmem:[%s78 + $0x3c0] sm:$0xff]
          %317 = vst [vmem:[%s79 + $0x3c0] sm:$0xff] %v316
          %v318 = vld [vmem:[%s78 + $0x3c8] sm:$0xff]
          %319 = vst [vmem:[%s79 + $0x3c8] sm:$0xff] %v318
          %v320 = vld [vmem:[%s78 + $0x3d8] sm:$0xff]
          %321 = vst [vmem:[%s79 + $0x3d8] sm:$0xff] %v320
          %v322 = vld [vmem:[%s78 + $0x3e0] sm:$0xff]
          %323 = vst [vmem:[%s79 + $0x3e0] sm:$0xff] %v322
          %v324 = vld [vmem:[%s78 + $0x3e8] sm:$0xff]
          %325 = vst [vmem:[%s79 + $0x3e8] sm:$0xff] %v324
          %v326 = vld [vmem:[%s78 + $0x3f0] sm:$0xff]
          %327 = vst [vmem:[%s79 + $0x3f0] sm:$0xff] %v326
          %v328 = vld [vmem:[%s78 + $0x3f8] sm:$0xff]
          %329 = vst [vmem:[%s79 + $0x3f8] sm:$0xff] %v328
          %v330 = vld [vmem:[%s78 + $0x400] sm:$0xff]
          %331 = vst [vmem:[%s79 + $0x400] sm:$0xff] %v330
          %v332 = vld [vmem:[%s78 + $0x408] sm:$0xff]
          %333 = vst [vmem:[%s79 + $0x408] sm:$0xff] %v332
          %v334 = vld [vmem:[%s78 + $0x410] sm:$0xff]
          %335 = vst [vmem:[%s79 + $0x410] sm:$0xff] %v334
          %v336 = vld [vmem:[%s78 + $0x418] sm:$0xff]
          %337 = vst [vmem:[%s79 + $0x418] sm:$0xff] %v336
          %v338 = vld [vmem:[%s78 + $0x420] sm:$0xff]
          %339 = vst [vmem:[%s79 + $0x420] sm:$0xff] %v338
          %v340 = vld [vmem:[%s78 + $0x428] sm:$0xff]
          %341 = vst [vmem:[%s79 + $0x428] sm:$0xff] %v340
          %v342 = vld [vmem:[%s78 + $0x430] sm:$0xff]
          %343 = vst [vmem:[%s79 + $0x430] sm:$0xff] %v342
          %v344 = vld [vmem:[%s78 + $0x438] sm:$0xff]
          %345 = vst [vmem:[%s79 + $0x438] sm:$0xff] %v344
          %v346 = vld [vmem:[%s78 + $0x440] sm:$0xff]
          %347 = vst [vmem:[%s79 + $0x440] sm:$0xff] %v346
          %v348 = vld [vmem:[%s78 + $0x448] sm:$0xff]
          %349 = vst [vmem:[%s79 + $0x448] sm:$0xff] %v348
          %v350 = vld [vmem:[%s78 + $0x450] sm:$0xff]
          %351 = vst [vmem:[%s79 + $0x450] sm:$0xff] %v350
          %v352 = vld [vmem:[%s78 + $0x458] sm:$0xff]
          %353 = vst [vmem:[%s79 + $0x458] sm:$0xff] %v352
          %v354 = vld [vmem:[%s78 + $0x460] sm:$0xff]
          %355 = vst [vmem:[%s79 + $0x460] sm:$0xff] %v354
          %v356 = vld [vmem:[%s78 + $0x468] sm:$0xff]
          %357 = vst [vmem:[%s79 + $0x468] sm:$0xff] %v356
          %v358 = vld [vmem:[%s78 + $0x470] sm:$0xff]
          %359 = vst [vmem:[%s79 + $0x470] sm:$0xff] %v358
          %v360 = vld [vmem:[%s78 + $0x478] sm:$0xff]
          %361 = vst [vmem:[%s79 + $0x478] sm:$0xff] %v360
          %v362 = vld [vmem:[%s78 + $0x480] sm:$0xff]
          %363 = vst [vmem:[%s79 + $0x480] sm:$0xff] %v362
          %v364 = vld [vmem:[%s78 + $0x488] sm:$0xff]
          %365 = vst [vmem:[%s79 + $0x488] sm:$0xff] %v364
          %v366 = vld [vmem:[%s78 + $0x490] sm:$0xff]
          %367 = vst [vmem:[%s79 + $0x490] sm:$0xff] %v366
          %v368 = vld [vmem:[%s78 + $0x498] sm:$0xff]
          %369 = vst [vmem:[%s79 + $0x498] sm:$0xff] %v368
          %v370 = vld [vmem:[%s78 + $0x4a0] sm:$0xff]
          %371 = vst [vmem:[%s79 + $0x4a0] sm:$0xff] %v370
          %v372 = vld [vmem:[%s78 + $0x4a8] sm:$0xff]
          %373 = vst [vmem:[%s79 + $0x4a8] sm:$0xff] %v372
          %v374 = vld [vmem:[%s78 + $0x4b0] sm:$0xff]
          %375 = vst [vmem:[%s79 + $0x4b0] sm:$0xff] %v374
          %v376 = vld [vmem:[%s78 + $0x4b8] sm:$0xff]
          %377 = vst [vmem:[%s79 + $0x4b8] sm:$0xff] %v376
          %v378 = vld [vmem:[%s78 + $0x4c0] sm:$0xff]
          %379 = vst [vmem:[%s79 + $0x4c0] sm:$0xff] %v378
          %v380 = vld [vmem:[%s78 + $0x4c8] sm:$0xff]
          %381 = vst [vmem:[%s79 + $0x4c8] sm:$0xff] %v380
          %v382 = vld [vmem:[%s78 + $0x4d0] sm:$0xff]
          %383 = vst [vmem:[%s79 + $0x4d0] sm:$0xff] %v382
          %v384 = vld [vmem:[%s78 + $0x4d8] sm:$0xff]
          %385 = vst [vmem:[%s79 + $0x4d8] sm:$0xff] %v384
          %v386 = vld [vmem:[%s78 + $0x4e0] sm:$0xff]
          %387 = vst [vmem:[%s79 + $0x4e0] sm:$0xff] %v386
          %v388 = vld [vmem:[%s78 + $0x4e8] sm:$0xff]
          %389 = vst [vmem:[%s79 + $0x4e8] sm:$0xff] %v388
          %v390 = vld [vmem:[%s78 + $0x4f0] sm:$0xff]
          %391 = vst [vmem:[%s79 + $0x4f0] sm:$0xff] %v390
          %v392 = vld [vmem:[%s78 + $0x4f8] sm:$0xff]
          %393 = vst [vmem:[%s79 + $0x4f8] sm:$0xff] %v392
          %v394 = vld [vmem:[%s78 + $0x500] sm:$0xff]
          %395 = vst [vmem:[%s79 + $0x500] sm:$0xff] %v394
          %v396 = vld [vmem:[%s78 + $0x508] sm:$0xff]
          %397 = vst [vmem:[%s79 + $0x508] sm:$0xff] %v396
          %v398 = vld [vmem:[%s78 + $0x510] sm:$0xff]
          %399 = vst [vmem:[%s79 + $0x510] sm:$0xff] %v398
          %v400 = vld [vmem:[%s78 + $0x520] sm:$0xff]
          %401 = vst [vmem:[%s79 + $0x520] sm:$0xff] %v400
          %v402 = vld [vmem:[%s78 + $0x528] sm:$0xff]
          %403 = vst [vmem:[%s79 + $0x528] sm:$0xff] %v402
          %v404 = vld [vmem:[%s78 + $0x530] sm:$0xff]
          %405 = vst [vmem:[%s79 + $0x530] sm:$0xff] %v404
          %v406 = vld [vmem:[%s78 + $0x538] sm:$0xff]
          %407 = vst [vmem:[%s79 + $0x538] sm:$0xff] %v406
          %v408 = vld [vmem:[%s78 + $0x540] sm:$0xff]
          %409 = vst [vmem:[%s79 + $0x540] sm:$0xff] %v408
          %v410 = vld [vmem:[%s78 + $0x548] sm:$0xff]
          %411 = vst [vmem:[%s79 + $0x548] sm:$0xff] %v410
          %v412 = vld [vmem:[%s78 + $0x550] sm:$0xff]
          %413 = vst [vmem:[%s79 + $0x550] sm:$0xff] %v412
          %v414 = vld [vmem:[%s78 + $0x558] sm:$0xff]
          %415 = vst [vmem:[%s79 + $0x558] sm:$0xff] %v414
          %v416 = vld [vmem:[%s78 + $0x560] sm:$0xff]
          %417 = vst [vmem:[%s79 + $0x560] sm:$0xff] %v416
          %v418 = vld [vmem:[%s78 + $0x568] sm:$0xff]
          %419 = vst [vmem:[%s79 + $0x568] sm:$0xff] %v418
          %v420 = vld [vmem:[%s78 + $0x570] sm:$0xff]
          %421 = vst [vmem:[%s79 + $0x570] sm:$0xff] %v420
          %v422 = vld [vmem:[%s78 + $0x578] sm:$0xff]
          %423 = vst [vmem:[%s79 + $0x578] sm:$0xff] %v422
          %v424 = vld [vmem:[%s78 + $0x580] sm:$0xff]
          %425 = vst [vmem:[%s79 + $0x580] sm:$0xff] %v424
          %v426 = vld [vmem:[%s78 + $0x588] sm:$0xff]
          %427 = vst [vmem:[%s79 + $0x588] sm:$0xff] %v426
          %v428 = vld [vmem:[%s78 + $0x590] sm:$0xff]
          %429 = vst [vmem:[%s79 + $0x590] sm:$0xff] %v428
          %v430 = vld [vmem:[%s78 + $0x598] sm:$0xff]
          %431 = vst [vmem:[%s79 + $0x598] sm:$0xff] %v430
          %v432 = vld [vmem:[%s78 + $0x5a0] sm:$0xff]
          %433 = vst [vmem:[%s79 + $0x5a0] sm:$0xff] %v432
          %v434 = vld [vmem:[%s78 + $0x5a8] sm:$0xff]
          %435 = vst [vmem:[%s79 + $0x5a8] sm:$0xff] %v434
          %v436 = vld [vmem:[%s78 + $0x5b0] sm:$0xff]
          %437 = vst [vmem:[%s79 + $0x5b0] sm:$0xff] %v436
          %v438 = vld [vmem:[%s78 + $0x5b8] sm:$0xff]
          %439 = vst [vmem:[%s79 + $0x5b8] sm:$0xff] %v438
          %v440 = vld [vmem:[%s78 + $0x5c0] sm:$0xff]
          %441 = vst [vmem:[%s79 + $0x5c0] sm:$0xff] %v440
          %v442 = vld [vmem:[%s78 + $0x5c8] sm:$0xff]
          %443 = vst [vmem:[%s79 + $0x5c8] sm:$0xff] %v442
          %v444 = vld [vmem:[%s78 + $0x5d0] sm:$0xff]
          %445 = vst [vmem:[%s79 + $0x5d0] sm:$0xff] %v444
          %v446 = vld [vmem:[%s78 + $0x5d8] sm:$0xff]
          %447 = vst [vmem:[%s79 + $0x5d8] sm:$0xff] %v446
          %v448 = vld [vmem:[%s78 + $0x5e0] sm:$0xff]
          %449 = vst [vmem:[%s79 + $0x5e0] sm:$0xff] %v448
          %v450 = vld [vmem:[%s78 + $0x5e8] sm:$0xff]
          %451 = vst [vmem:[%s79 + $0x5e8] sm:$0xff] %v450
          %v452 = vld [vmem:[%s78 + $0x5f0] sm:$0xff]
          %453 = vst [vmem:[%s79 + $0x5f0] sm:$0xff] %v452
          %v454 = vld [vmem:[%s78 + $0x5f8] sm:$0xff]
          %455 = vst [vmem:[%s79 + $0x5f8] sm:$0xff] %v454
          %v456 = vld [vmem:[%s78 + $0x600] sm:$0xff]
          %457 = vst [vmem:[%s79 + $0x600] sm:$0xff] %v456
          %v458 = vld [vmem:[%s78 + $0x608] sm:$0xff]
          %459 = vst [vmem:[%s79 + $0x608] sm:$0xff] %v458
          %v460 = vld [vmem:[%s78 + $0x610] sm:$0xff]
          %461 = vst [vmem:[%s79 + $0x610] sm:$0xff] %v460
          %v462 = vld [vmem:[%s78 + $0x618] sm:$0xff]
          %463 = vst [vmem:[%s79 + $0x618] sm:$0xff] %v462
          %v464 = vld [vmem:[%s78 + $0x620] sm:$0xff]
          %465 = vst [vmem:[%s79 + $0x620] sm:$0xff] %v464
          %v466 = vld [vmem:[%s78 + $0x628] sm:$0xff]
          %467 = vst [vmem:[%s79 + $0x628] sm:$0xff] %v466
          %v468 = vld [vmem:[%s78 + $0x630] sm:$0xff]
          %469 = vst [vmem:[%s79 + $0x630] sm:$0xff] %v468
          %v470 = vld [vmem:[%s78 + $0x638] sm:$0xff]
          %471 = vst [vmem:[%s79 + $0x638] sm:$0xff] %v470
          %v472 = vld [vmem:[%s78 + $0x640] sm:$0xff]
          %473 = vst [vmem:[%s79 + $0x640] sm:$0xff] %v472
          %v474 = vld [vmem:[%s78 + $0x648] sm:$0xff]
          %475 = vst [vmem:[%s79 + $0x648] sm:$0xff] %v474
          %v476 = vld [vmem:[%s78 + $0x650] sm:$0xff]
          %477 = vst [vmem:[%s79 + $0x650] sm:$0xff] %v476
          %v478 = vld [vmem:[%s78 + $0x658] sm:$0xff]
          %479 = vst [vmem:[%s79 + $0x658] sm:$0xff] %v478
          %v480 = vld [vmem:[%s78 + $0x668] sm:$0xff]
          %481 = vst [vmem:[%s79 + $0x668] sm:$0xff] %v480
          %v482 = vld [vmem:[%s78 + $0x670] sm:$0xff]
          %483 = vst [vmem:[%s79 + $0x670] sm:$0xff] %v482
          %v484 = vld [vmem:[%s78 + $0x678] sm:$0xff]
          %485 = vst [vmem:[%s79 + $0x678] sm:$0xff] %v484
          %v486 = vld [vmem:[%s78 + $0x680] sm:$0xff]
          %487 = vst [vmem:[%s79 + $0x680] sm:$0xff] %v486
          %v488 = vld [vmem:[%s78 + $0x688] sm:$0xff]
          %489 = vst [vmem:[%s79 + $0x688] sm:$0xff] %v488
          %v490 = vld [vmem:[%s78 + $0x690] sm:$0xff]
          %491 = vst [vmem:[%s79 + $0x690] sm:$0xff] %v490
          %v492 = vld [vmem:[%s78 + $0x698] sm:$0xff]
          %493 = vst [vmem:[%s79 + $0x698] sm:$0xff] %v492
          %v494 = vld [vmem:[%s78 + $0x6a0] sm:$0xff]
          %495 = vst [vmem:[%s79 + $0x6a0] sm:$0xff] %v494
          %v496 = vld [vmem:[%s78 + $0x6a8] sm:$0xff]
          %497 = vst [vmem:[%s79 + $0x6a8] sm:$0xff] %v496
          %v498 = vld [vmem:[%s78 + $0x6b0] sm:$0xff]
          %499 = vst [vmem:[%s79 + $0x6b0] sm:$0xff] %v498
          %v500 = vld [vmem:[%s78 + $0x6b8] sm:$0xff]
          %501 = vst [vmem:[%s79 + $0x6b8] sm:$0xff] %v500
          %v502 = vld [vmem:[%s78 + $0x6c0] sm:$0xff]
          %503 = vst [vmem:[%s79 + $0x6c0] sm:$0xff] %v502
          %v504 = vld [vmem:[%s78 + $0x6c8] sm:$0xff]
          %505 = vst [vmem:[%s79 + $0x6c8] sm:$0xff] %v504
          %v506 = vld [vmem:[%s78 + $0x6d0] sm:$0xff]
          %507 = vst [vmem:[%s79 + $0x6d0] sm:$0xff] %v506
          %v508 = vld [vmem:[%s78 + $0x6d8] sm:$0xff]
          %509 = vst [vmem:[%s79 + $0x6d8] sm:$0xff] %v508
          %v510 = vld [vmem:[%s78 + $0x6e0] sm:$0xff]
          %511 = vst [vmem:[%s79 + $0x6e0] sm:$0xff] %v510
          %v512 = vld [vmem:[%s78 + $0x6e8] sm:$0xff]
          %513 = vst [vmem:[%s79 + $0x6e8] sm:$0xff] %v512
          %v514 = vld [vmem:[%s78 + $0x6f0] sm:$0xff]
          %515 = vst [vmem:[%s79 + $0x6f0] sm:$0xff] %v514
          %v516 = vld [vmem:[%s78 + $0x6f8] sm:$0xff]
          %517 = vst [vmem:[%s79 + $0x6f8] sm:$0xff] %v516
          %v518 = vld [vmem:[%s78 + $0x700] sm:$0xff]
          %519 = vst [vmem:[%s79 + $0x700] sm:$0xff] %v518
          %v520 = vld [vmem:[%s78 + $0x708] sm:$0xff]
          %521 = vst [vmem:[%s79 + $0x708] sm:$0xff] %v520
          %v522 = vld [vmem:[%s78 + $0x710] sm:$0xff]
          %523 = vst [vmem:[%s79 + $0x710] sm:$0xff] %v522
          %v524 = vld [vmem:[%s78 + $0x718] sm:$0xff]
          %525 = vst [vmem:[%s79 + $0x718] sm:$0xff] %v524
          %v526 = vld [vmem:[%s78 + $0x720] sm:$0xff]
          %527 = vst [vmem:[%s79 + $0x720] sm:$0xff] %v526
          %v528 = vld [vmem:[%s78 + $0x728] sm:$0xff]
          %529 = vst [vmem:[%s79 + $0x728] sm:$0xff] %v528
          %v530 = vld [vmem:[%s78 + $0x730] sm:$0xff]
          %531 = vst [vmem:[%s79 + $0x730] sm:$0xff] %v530
          %v532 = vld [vmem:[%s78 + $0x738] sm:$0xff]
          %533 = vst [vmem:[%s79 + $0x738] sm:$0xff] %v532
          %v534 = vld [vmem:[%s78 + $0x740] sm:$0xff]
          %535 = vst [vmem:[%s79 + $0x740] sm:$0xff] %v534
          %v536 = vld [vmem:[%s78 + $0x748] sm:$0xff]
          %537 = vst [vmem:[%s79 + $0x748] sm:$0xff] %v536
          %v538 = vld [vmem:[%s78 + $0x750] sm:$0xff]
          %539 = vst [vmem:[%s79 + $0x750] sm:$0xff] %v538
          %v540 = vld [vmem:[%s78 + $0x758] sm:$0xff]
          %541 = vst [vmem:[%s79 + $0x758] sm:$0xff] %v540
          %v542 = vld [vmem:[%s78 + $0x760] sm:$0xff]
          %543 = vst [vmem:[%s79 + $0x760] sm:$0xff] %v542
          %v544 = vld [vmem:[%s78 + $0x768] sm:$0xff]
          %545 = vst [vmem:[%s79 + $0x768] sm:$0xff] %v544
          %v546 = vld [vmem:[%s78 + $0x770] sm:$0xff]
          %547 = vst [vmem:[%s79 + $0x770] sm:$0xff] %v546
          %v548 = vld [vmem:[%s78 + $0x778] sm:$0xff]
          %549 = vst [vmem:[%s79 + $0x778] sm:$0xff] %v548
          %v550 = vld [vmem:[%s78 + $0x780] sm:$0xff]
          %551 = vst [vmem:[%s79 + $0x780] sm:$0xff] %v550
          %v552 = vld [vmem:[%s78 + $0x788] sm:$0xff]
          %553 = vst [vmem:[%s79 + $0x788] sm:$0xff] %v552
          %v554 = vld [vmem:[%s78 + $0x790] sm:$0xff]
          %555 = vst [vmem:[%s79 + $0x790] sm:$0xff] %v554
          %v556 = vld [vmem:[%s78 + $0x798] sm:$0xff]
          %557 = vst [vmem:[%s79 + $0x798] sm:$0xff] %v556
          %v558 = vld [vmem:[%s78 + $0x7a0] sm:$0xff]
          %559 = vst [vmem:[%s79 + $0x7a0] sm:$0xff] %v558
          %v560 = vld [vmem:[%s78 + $0x7b0] sm:$0xff]
          %561 = vst [vmem:[%s79 + $0x7b0] sm:$0xff] %v560
          %v562 = vld [vmem:[%s78 + $0x7b8] sm:$0xff]
          %563 = vst [vmem:[%s79 + $0x7b8] sm:$0xff] %v562
          %v564 = vld [vmem:[%s78 + $0x7c0] sm:$0xff]
          %565 = vst [vmem:[%s79 + $0x7c0] sm:$0xff] %v564
          %v566 = vld [vmem:[%s78 + $0x7c8] sm:$0xff]
          %567 = vst [vmem:[%s79 + $0x7c8] sm:$0xff] %v566
          %v568 = vld [vmem:[%s78 + $0x7d0] sm:$0xff]
          %569 = vst [vmem:[%s79 + $0x7d0] sm:$0xff] %v568
          %v570 = vld [vmem:[%s78 + $0x7d8] sm:$0xff]
          %571 = vst [vmem:[%s79 + $0x7d8] sm:$0xff] %v570
          %v572 = vld [vmem:[%s78 + $0x7e0] sm:$0xff]
          %573 = vst [vmem:[%s79 + $0x7e0] sm:$0xff] %v572
          %v574 = vld [vmem:[%s78 + $0x7e8] sm:$0xff]
          %575 = vst [vmem:[%s79 + $0x7e8] sm:$0xff] %v574
          %v576 = vld [vmem:[%s78 + $0x7f0] sm:$0xff]
          %577 = vst [vmem:[%s79 + $0x7f0] sm:$0xff] %v576
          %v578 = vld [vmem:[%s78 + $0x7f8] sm:$0xff]
          %579 = vst [vmem:[%s79 + $0x7f8] sm:$0xff] %v578
          %v580 = vld [vmem:[%s78 + $0x800] sm:$0xff]
          %581 = vst [vmem:[%s79 + $0x800] sm:$0xff] %v580
          %v582 = vld [vmem:[%s78 + $0x808] sm:$0xff]
          %583 = vst [vmem:[%s79 + $0x808] sm:$0xff] %v582
          %v584 = vld [vmem:[%s78 + $0x810] sm:$0xff]
          %585 = vst [vmem:[%s79 + $0x810] sm:$0xff] %v584
          %v586 = vld [vmem:[%s78 + $0x818] sm:$0xff]
          %587 = vst [vmem:[%s79 + $0x818] sm:$0xff] %v586
          %v588 = vld [vmem:[%s78 + $0x820] sm:$0xff]
          %589 = vst [vmem:[%s79 + $0x820] sm:$0xff] %v588
          %v590 = vld [vmem:[%s78 + $0x828] sm:$0xff]
          %591 = vst [vmem:[%s79 + $0x828] sm:$0xff] %v590
          %v592 = vld [vmem:[%s78 + $0x830] sm:$0xff]
          %593 = vst [vmem:[%s79 + $0x830] sm:$0xff] %v592
          %v594 = vld [vmem:[%s78 + $0x838] sm:$0xff]
          %595 = vst [vmem:[%s79 + $0x838] sm:$0xff] %v594
          %v596 = vld [vmem:[%s78 + $0x840] sm:$0xff]
          %597 = vst [vmem:[%s79 + $0x840] sm:$0xff] %v596
          %v598 = vld [vmem:[%s78 + $0x848] sm:$0xff]
          %599 = vst [vmem:[%s79 + $0x848] sm:$0xff] %v598
          %v600 = vld [vmem:[%s78 + $0x850] sm:$0xff]
          %601 = vst [vmem:[%s79 + $0x850] sm:$0xff] %v600
          %v602 = vld [vmem:[%s78 + $0x858] sm:$0xff]
          %603 = vst [vmem:[%s79 + $0x858] sm:$0xff] %v602
          %v604 = vld [vmem:[%s78 + $0x860] sm:$0xff]
          %605 = vst [vmem:[%s79 + $0x860] sm:$0xff] %v604
          %v606 = vld [vmem:[%s78 + $0x868] sm:$0xff]
          %607 = vst [vmem:[%s79 + $0x868] sm:$0xff] %v606
          %v608 = vld [vmem:[%s78 + $0x870] sm:$0xff]
          %609 = vst [vmem:[%s79 + $0x870] sm:$0xff] %v608
          %v610 = vld [vmem:[%s78 + $0x878] sm:$0xff]
          %611 = vst [vmem:[%s79 + $0x878] sm:$0xff] %v610
          %v612 = vld [vmem:[%s78 + $0x880] sm:$0xff]
          %613 = vst [vmem:[%s79 + $0x880] sm:$0xff] %v612
          %v614 = vld [vmem:[%s78 + $0x888] sm:$0xff]
          %615 = vst [vmem:[%s79 + $0x888] sm:$0xff] %v614
          %v616 = vld [vmem:[%s78 + $0x890] sm:$0xff]
          %617 = vst [vmem:[%s79 + $0x890] sm:$0xff] %v616
          %v618 = vld [vmem:[%s78 + $0x898] sm:$0xff]
          %619 = vst [vmem:[%s79 + $0x898] sm:$0xff] %v618
          %v620 = vld [vmem:[%s78 + $0x8a0] sm:$0xff]
          %621 = vst [vmem:[%s79 + $0x8a0] sm:$0xff] %v620
          %v622 = vld [vmem:[%s78 + $0x8a8] sm:$0xff]
          %623 = vst [vmem:[%s79 + $0x8a8] sm:$0xff] %v622
          %v624 = vld [vmem:[%s78 + $0x8b0] sm:$0xff]
          %625 = vst [vmem:[%s79 + $0x8b0] sm:$0xff] %v624
          %v626 = vld [vmem:[%s78 + $0x8b8] sm:$0xff]
          %627 = vst [vmem:[%s79 + $0x8b8] sm:$0xff] %v626
          %v628 = vld [vmem:[%s78 + $0x8c0] sm:$0xff]
          %629 = vst [vmem:[%s79 + $0x8c0] sm:$0xff] %v628
          %v630 = vld [vmem:[%s78 + $0x8c8] sm:$0xff]
          %631 = vst [vmem:[%s79 + $0x8c8] sm:$0xff] %v630
          %v632 = vld [vmem:[%s78 + $0x8d0] sm:$0xff]
          %633 = vst [vmem:[%s79 + $0x8d0] sm:$0xff] %v632
          %v634 = vld [vmem:[%s78 + $0x8d8] sm:$0xff]
          %635 = vst [vmem:[%s79 + $0x8d8] sm:$0xff] %v634
          %v636 = vld [vmem:[%s78 + $0x8e0] sm:$0xff]
          %637 = vst [vmem:[%s79 + $0x8e0] sm:$0xff] %v636
          %v638 = vld [vmem:[%s78 + $0x8e8] sm:$0xff]
          %639 = vst [vmem:[%s79 + $0x8e8] sm:$0xff] %v638
          %v640 = vld [vmem:[%s78 + $0x8f8] sm:$0xff]
          %641 = vst [vmem:[%s79 + $0x8f8] sm:$0xff] %v640
          %v642 = vld [vmem:[%s78 + $0x900] sm:$0xff]
          %643 = vst [vmem:[%s79 + $0x900] sm:$0xff] %v642
          %v644 = vld [vmem:[%s78 + $0x908] sm:$0xff]
          %645 = vst [vmem:[%s79 + $0x908] sm:$0xff] %v644
          %v646 = vld [vmem:[%s78 + $0x910] sm:$0xff]
          %647 = vst [vmem:[%s79 + $0x910] sm:$0xff] %v646
          %v648 = vld [vmem:[%s78 + $0x918] sm:$0xff]
          %649 = vst [vmem:[%s79 + $0x918] sm:$0xff] %v648
          %v650 = vld [vmem:[%s78 + $0x920] sm:$0xff]
          %651 = vst [vmem:[%s79 + $0x920] sm:$0xff] %v650
          %v652 = vld [vmem:[%s78 + $0x928] sm:$0xff]
          %653 = vst [vmem:[%s79 + $0x928] sm:$0xff] %v652
          %v654 = vld [vmem:[%s78 + $0x930] sm:$0xff]
          %655 = vst [vmem:[%s79 + $0x930] sm:$0xff] %v654
          %v656 = vld [vmem:[%s78 + $0x938] sm:$0xff]
          %657 = vst [vmem:[%s79 + $0x938] sm:$0xff] %v656
          %v658 = vld [vmem:[%s78 + $0x940] sm:$0xff]
          %659 = vst [vmem:[%s79 + $0x940] sm:$0xff] %v658
          %v660 = vld [vmem:[%s78 + $0x948] sm:$0xff]
          %661 = vst [vmem:[%s79 + $0x948] sm:$0xff] %v660
          %v662 = vld [vmem:[%s78 + $0x950] sm:$0xff]
          %663 = vst [vmem:[%s79 + $0x950] sm:$0xff] %v662
          %v664 = vld [vmem:[%s78 + $0x958] sm:$0xff]
          %665 = vst [vmem:[%s79 + $0x958] sm:$0xff] %v664
          %v666 = vld [vmem:[%s78 + $0x960] sm:$0xff]
          %667 = vst [vmem:[%s79 + $0x960] sm:$0xff] %v666
          %v668 = vld [vmem:[%s78 + $0x968] sm:$0xff]
          %669 = vst [vmem:[%s79 + $0x968] sm:$0xff] %v668
          %v670 = vld [vmem:[%s78 + $0x970] sm:$0xff]
          %671 = vst [vmem:[%s79 + $0x970] sm:$0xff] %v670
          %v672 = vld [vmem:[%s78 + $0x978] sm:$0xff]
          %673 = vst [vmem:[%s79 + $0x978] sm:$0xff] %v672
          %v674 = vld [vmem:[%s78 + $0x980] sm:$0xff]
          %675 = vst [vmem:[%s79 + $0x980] sm:$0xff] %v674
          %v676 = vld [vmem:[%s78 + $0x988] sm:$0xff]
          %677 = vst [vmem:[%s79 + $0x988] sm:$0xff] %v676
          %v678 = vld [vmem:[%s78 + $0x990] sm:$0xff]
          %679 = vst [vmem:[%s79 + $0x990] sm:$0xff] %v678
          %v680 = vld [vmem:[%s78 + $0x998] sm:$0xff]
          %681 = vst [vmem:[%s79 + $0x998] sm:$0xff] %v680
          %v682 = vld [vmem:[%s78 + $0x9a0] sm:$0xff]
          %683 = vst [vmem:[%s79 + $0x9a0] sm:$0xff] %v682
          %v684 = vld [vmem:[%s78 + $0x9a8] sm:$0xff]
          %685 = vst [vmem:[%s79 + $0x9a8] sm:$0xff] %v684
          %v686 = vld [vmem:[%s78 + $0x9b0] sm:$0xff]
          %687 = vst [vmem:[%s79 + $0x9b0] sm:$0xff] %v686
          %v688 = vld [vmem:[%s78 + $0x9b8] sm:$0xff]
          %689 = vst [vmem:[%s79 + $0x9b8] sm:$0xff] %v688
          %v690 = vld [vmem:[%s78 + $0x9c0] sm:$0xff]
          %691 = vst [vmem:[%s79 + $0x9c0] sm:$0xff] %v690
          %v692 = vld [vmem:[%s78 + $0x9c8] sm:$0xff]
          %693 = vst [vmem:[%s79 + $0x9c8] sm:$0xff] %v692
          %v694 = vld [vmem:[%s78 + $0x9d0] sm:$0xff]
          %695 = vst [vmem:[%s79 + $0x9d0] sm:$0xff] %v694
          %v696 = vld [vmem:[%s78 + $0x9d8] sm:$0xff]
          %697 = vst [vmem:[%s79 + $0x9d8] sm:$0xff] %v696
          %v698 = vld [vmem:[%s78 + $0x9e0] sm:$0xff]
          %699 = vst [vmem:[%s79 + $0x9e0] sm:$0xff] %v698
          %v700 = vld [vmem:[%s78 + $0x9e8] sm:$0xff]
          %701 = vst [vmem:[%s79 + $0x9e8] sm:$0xff] %v700
          %v702 = vld [vmem:[%s78 + $0x9f0] sm:$0xff]
          %703 = vst [vmem:[%s79 + $0x9f0] sm:$0xff] %v702
          %v704 = vld [vmem:[%s78 + $0x9f8] sm:$0xff]
          %705 = vst [vmem:[%s79 + $0x9f8] sm:$0xff] %v704
          %v706 = vld [vmem:[%s78 + $0xa00] sm:$0xff]
          %707 = vst [vmem:[%s79 + $0xa00] sm:$0xff] %v706
          %v708 = vld [vmem:[%s78 + $0xa08] sm:$0xff]
          %709 = vst [vmem:[%s79 + $0xa08] sm:$0xff] %v708
          %v710 = vld [vmem:[%s78 + $0xa10] sm:$0xff]
          %711 = vst [vmem:[%s79 + $0xa10] sm:$0xff] %v710
          %v712 = vld [vmem:[%s78 + $0xa18] sm:$0xff]
          %713 = vst [vmem:[%s79 + $0xa18] sm:$0xff] %v712
          %v714 = vld [vmem:[%s78 + $0xa20] sm:$0xff]
          %715 = vst [vmem:[%s79 + $0xa20] sm:$0xff] %v714
          %v716 = vld [vmem:[%s78 + $0xa28] sm:$0xff]
          %717 = vst [vmem:[%s79 + $0xa28] sm:$0xff] %v716
          %v718 = vld [vmem:[%s78 + $0xa30] sm:$0xff]
          %719 = vst [vmem:[%s79 + $0xa30] sm:$0xff] %v718
        $region53: #{quant_model_forward.1} parent=47 // loop_footer
          %s77 = sadd.s32 1, %s73
        $region54: #{quant_model_forward.1} parent=47 // loop_footer_branch
          %72 = sbr.rel target = $region50
        $region55: #{quant_model_forward.1} parent=47 // loop_exit
          _
        %s720 = sshll.u32 1, %s67
        %s721 = ssub.s32 %s720, 1
        loop: start=0, step=1, limit=1
        $region56: #{quant_model_forward.1} parent=47 // loop_pre_header
          _
        $region57: #{quant_model_forward.1} parent=47 // loop_header
          %s723 = sphi 0, %s727
          %p724 = scmp.ge.s32.totalorder %s723, 1
          %s728 = sphi %s69, %s69
          %s729 = sphi %s71, %s71
        $region58: #{quant_model_forward.1} parent=47 // loop_header_branch
          %726 = sbr.rel (%p724) target = $region62
        $region59: #{quant_model_forward.1} parent=47 // loop_body
          %v730 = vld [vmem:[%s728] sm:%s721]
          %731 = vst [vmem:[%s729] sm:%s721] %v730
          %v732 = vld [vmem:[%s728 + $0x148] sm:%s721]
          %733 = vst [vmem:[%s729 + $0x148] sm:%s721] %v732
          %v734 = vld [vmem:[%s728 + $0x290] sm:%s721]
          %735 = vst [vmem:[%s729 + $0x290] sm:%s721] %v734
          %v736 = vld [vmem:[%s728 + $0x3d8] sm:%s721]
          %737 = vst [vmem:[%s729 + $0x3d8] sm:%s721] %v736
          %v738 = vld [vmem:[%s728 + $0x520] sm:%s721]
          %739 = vst [vmem:[%s729 + $0x520] sm:%s721] %v738
          %v740 = vld [vmem:[%s728 + $0x668] sm:%s721]
          %741 = vst [vmem:[%s729 + $0x668] sm:%s721] %v740
          %v742 = vld [vmem:[%s728 + $0x7b0] sm:%s721]
          %743 = vst [vmem:[%s729 + $0x7b0] sm:%s721] %v742
          %v744 = vld [vmem:[%s728 + $0x8f8] sm:%s721]
          %745 = vst [vmem:[%s729 + $0x8f8] sm:%s721] %v744
        $region60: #{quant_model_forward.1} parent=47 // loop_footer
          %s727 = sadd.s32 1, %s723
        $region61: #{quant_model_forward.1} parent=47 // loop_footer_branch
          %722 = sbr.rel target = $region57
        $region62: #{quant_model_forward.1} parent=47 // loop_exit
          _
      $region48: #{quant_model_forward.1} parent=32 // pred_fallthru
        _
    $region33: #{quant_model_forward.1} parent=1 // pred_fallthru
      _
    // Predicated region
    $region34: #{quant_model_forward.1} parent=1 // pred_check
      %p33 = pneg %p29
    $region35: #{quant_model_forward.1} parent=1 // pred_check_branch
      %35 = sbr.rel (%p33) target = $region37
    $region36: #{quant_model_forward.1} parent=1 // pred_region
      %s36 = sshll.u32 1, 324
      %s37 = ssub.s32 %s36, 1
      loop: start=0, step=1, limit=1
      $region38: #{quant_model_forward.1} parent=36 // loop_pre_header
        _
      $region39: #{quant_model_forward.1} parent=36 // loop_header
        %s39 = sphi 0, %s43
        %p40 = scmp.ge.s32.totalorder %s39, 1
        %s44 = sphi %s5, %s5
        %s45 = sphi [#allocation4], [#allocation4]
      $region40: #{quant_model_forward.1} parent=36 // loop_header_branch
        %42 = sbr.rel (%p40) target = $region44
      $region41: #{quant_model_forward.1} parent=36 // loop_body
        %v46 = vld [vmem:[%s44] sm:%s37]
        %47 = vst [vmem:[%s45] sm:%s37] %v46
        %v48 = vld [vmem:[%s44 + $0x148] sm:%s37]
        %49 = vst [vmem:[%s45 + $0x148] sm:%s37] %v48
        %v50 = vld [vmem:[%s44 + $0x290] sm:%s37]
        %51 = vst [vmem:[%s45 + $0x290] sm:%s37] %v50
        %v52 = vld [vmem:[%s44 + $0x3d8] sm:%s37]
        %53 = vst [vmem:[%s45 + $0x3d8] sm:%s37] %v52
        %v54 = vld [vmem:[%s44 + $0x520] sm:%s37]
        %55 = vst [vmem:[%s45 + $0x520] sm:%s37] %v54
        %v56 = vld [vmem:[%s44 + $0x668] sm:%s37]
        %57 = vst [vmem:[%s45 + $0x668] sm:%s37] %v56
        %v58 = vld [vmem:[%s44 + $0x7b0] sm:%s37]
        %59 = vst [vmem:[%s45 + $0x7b0] sm:%s37] %v58
        %v60 = vld [vmem:[%s44 + $0x8f8] sm:%s37]
        %61 = vst [vmem:[%s45 + $0x8f8] sm:%s37] %v60
      $region42: #{quant_model_forward.1} parent=36 // loop_footer
        %s43 = sadd.s32 1, %s39
      $region43: #{quant_model_forward.1} parent=36 // loop_footer_branch
        %38 = sbr.rel target = $region39
      $region44: #{quant_model_forward.1} parent=36 // loop_exit
        _
    $region37: #{quant_model_forward.1} parent=1 // pred_fallthru
      _
    // Predicated region
    $region63: #{quant_model_forward.1} parent=1 // pred_check
      _
    $region64: #{quant_model_forward.1} parent=1 // pred_check_branch
      %748 = sbr.rel (0) target = $region66
    $region65: #{quant_model_forward.1} parent=1 // pred_region
      %749 = vsyncadd [#allocation5], 41472
    $region66: #{quant_model_forward.1} parent=1 // pred_fallthru
      _
    %v750 = vld [vmem:[%s0] sm:$0xff]
    %v751 = vld [vmem:[%s0 + $0x8] sm:$0xff]
    %v752 = vld [vmem:[%s0 + $0x10] sm:$0xff]
    %v753 = vld [vmem:[%s0 + $0x18] sm:$0xf]
    %v754 = vld [vmem:[%s1] sm:$0xff]
    %s755 = scalar_lea.vmem %s1, 8
    %v756 = vld [vmem:[%s755] sm:$0xff]
    %v761 = vcombine.high %v750, %v750
    %v762 = vcombine.high %v751, %v751
    %v763 = vcombine.high %v752, %v752
    %764 = vrot.lane.b32.xlu0 %v750, 114
    %v765 = vpop.permute.xlu0 %764
    %766 = vrot.lane.b32.xlu0 %v761, 114
    %v767 = vpop.permute.xlu0 %766
    %768 = vrot.lane.b32.xlu0 %v751, 114
    %v769 = vpop.permute.xlu0 %768
    %770 = vrot.lane.b32.xlu0 %v762, 114
    %v771 = vpop.permute.xlu0 %770
    %772 = vrot.lane.b32.xlu0 %v752, 114
    %v773 = vpop.permute.xlu0 %772
    %774 = vrot.lane.b32.xlu0 %v763, 114
    %v775 = vpop.permute.xlu0 %774
    %776 = vrot.lane.b32.xlu0 %v753, 114
    %v777 = vpop.permute.xlu0 %776
    %vm778 = vcmask 932864
    %v779 = vsel %vm778, %v765, %v767
    %v780 = vsel %vm778, %v767, %v769
    %v781 = vsel %vm778, %v769, %v771
    %v782 = vsel %vm778, %v771, %v773
    %v783 = vsel %vm778, %v773, %v775
    %v784 = vsel %vm778, %v775, %v777
    %vm785 = vcmask 31744
    %v787 = vsel %vm785, %v756, 0
    %vm789 = vcmask 1043456
    %v790 = vsel %vm789, %v779, 0
    %v792 = vsel %vm789, %v780, 0
    %v794 = vsel %vm789, %v781, 0
    %v796 = vsel %vm789, %v782, 0
    %v798 = vsel %vm789, %v783, 0
    %v800 = vsel %vm789, %v784, 0
    %802 = vmatprep.subr.mxu0 0.0
    %803 = vmatpush1.msra.mxu0 0.0
    %804 = vmatprep.subr.mxu0 0.0
    %805 = vmatpush1.msra.mxu0 0.0
    %806 = vmatprep.subr.mxu0 0.0
    %807 = vmatpush1.msra.mxu0 0.0
    %808 = vmatprep.subr.mxu0 0.0
    %809 = vmatpush1.msra.mxu0 0.0
    %810 = vmatprep.subr.mxu0 0.0
    %811 = vmatpush1.msra.mxu0 0.0
    %812 = vmatprep.subr.mxu0 0.0
    %813 = vmatpush1.msra.mxu0 0.0
    %814 = vmatprep.subr.mxu0 0.0
    %815 = vmatpush1.msra.mxu0 0.0
    %816 = vmatprep.subr.mxu0 0.0
    %817 = vmatpush1.msra.mxu0 0.0
    %818 = vmatprep.subr.mxu0 0.0
    %819 = vmatpush1.msra.mxu0 0.0
    %820 = vmatprep.subr.mxu0 0.0
    %821 = vmatpush1.msra.mxu0 0.0
    %822 = vmatprep.subr.mxu0 0.0
    %823 = vmatpush1.msra.mxu0 0.0
    %824 = vmatprep.subr.mxu0 0.0
    %825 = vmatpush1.msra.mxu0 0.0
    %826 = vmatprep.subr.mxu0 0.0
    %827 = vmatpush1.msra.mxu0 0.0
    %828 = vmatprep.subr.mxu0 0.0
    %829 = vmatpush1.msra.mxu0 0.0
    %830 = vmatprep.subr.mxu0 0.0
    %831 = vmatpush1.msra.mxu0 0.0
    %832 = vmatprep.subr.mxu0 %v792
    %833 = vmatpush1.msra.mxu0 %v790
    %834 = vmatprep.subr.mxu0 0.0
    %835 = vmatpush2.msra.mxu0 0.0
    %836 = vmatprep.subr.mxu0 0.0
    %837 = vmatpush2.msra.mxu0 0.0
    %838 = vmatprep.subr.mxu0 0.0
    %839 = vmatpush2.msra.mxu0 0.0
    %840 = vmatprep.subr.mxu0 0.0
    %841 = vmatpush2.msra.mxu0 0.0
    %842 = vmatprep.subr.mxu0 0.0
    %843 = vmatpush2.msra.mxu0 0.0
    %844 = vmatprep.subr.mxu0 0.0
    %845 = vmatpush2.msra.mxu0 0.0
    %846 = vmatprep.subr.mxu0 0.0
    %847 = vmatpush2.msra.mxu0 0.0
    %848 = vmatprep.subr.mxu0 0.0
    %849 = vmatpush2.msra.mxu0 0.0
    %850 = vmatprep.subr.mxu0 0.0
    %851 = vmatpush2.msra.mxu0 0.0
    %852 = vmatprep.subr.mxu0 0.0
    %853 = vmatpush2.msra.mxu0 0.0
    %854 = vmatprep.subr.mxu0 0.0
    %855 = vmatpush2.msra.mxu0 0.0
    %856 = vmatprep.subr.mxu0 0.0
    %857 = vmatpush2.msra.mxu0 0.0
    %858 = vmatprep.subr.mxu0 0.0
    %859 = vmatpush2.msra.mxu0 0.0
    %860 = vmatprep.subr.mxu0 0.0
    %861 = vmatpush2.msra.mxu0 0.0
    %862 = vmatprep.subr.mxu0 0.0
    %863 = vmatpush2.msra.mxu0 0.0
    %864 = vmatprep.subr.mxu0 0.0
    %865 = vmatpush2.msra.mxu0 0.0
    %866 = vmatprep.mubr.f32.mxu0 0.0
    %867 = vmatmul.mubr.f32.gmra.mxu0 %v787
    %v868 = vpop.f32.mrf.mxu0
    %v869 = vadd.f32 0.0, %v868
    %v870 = vpop.f32.mrf.mxu0
    %v871 = vadd.f32 0.0, %v870
    %872 = vdwg.mxu0
    %873 = vmatprep.subr.mxu0 0.0
    %874 = vmatpush1.msra.mxu0 0.0
    %875 = vmatprep.subr.mxu0 0.0
    %876 = vmatpush1.msra.mxu0 0.0
    %877 = vmatprep.subr.mxu0 0.0
    %878 = vmatpush1.msra.mxu0 0.0
    %879 = vmatprep.subr.mxu0 0.0
    %880 = vmatpush1.msra.mxu0 0.0
    %881 = vmatprep.subr.mxu0 0.0
    %882 = vmatpush1.msra.mxu0 0.0
    %883 = vmatprep.subr.mxu0 0.0
    %884 = vmatpush1.msra.mxu0 0.0
    %885 = vmatprep.subr.mxu0 0.0
    %886 = vmatpush1.msra.mxu0 0.0
    %887 = vmatprep.subr.mxu0 0.0
    %888 = vmatpush1.msra.mxu0 0.0
    %889 = vmatprep.subr.mxu0 0.0
    %890 = vmatpush1.msra.mxu0 0.0
    %891 = vmatprep.subr.mxu0 0.0
    %892 = vmatpush1.msra.mxu0 0.0
    %893 = vmatprep.subr.mxu0 0.0
    %894 = vmatpush1.msra.mxu0 0.0
    %895 = vmatprep.subr.mxu0 0.0
    %896 = vmatpush1.msra.mxu0 0.0
    %897 = vmatprep.subr.mxu0 0.0
    %898 = vmatpush1.msra.mxu0 0.0
    %899 = vmatprep.subr.mxu0 0.0
    %900 = vmatpush1.msra.mxu0 0.0
    %901 = vmatprep.subr.mxu0 0.0
    %902 = vmatpush1.msra.mxu0 0.0
    %903 = vmatprep.subr.mxu0 %v796
    %904 = vmatpush1.msra.mxu0 %v794
    %905 = vmatprep.subr.mxu0 0.0
    %906 = vmatpush2.msra.mxu0 0.0
    %907 = vmatprep.subr.mxu0 0.0
    %908 = vmatpush2.msra.mxu0 0.0
    %909 = vmatprep.subr.mxu0 0.0
    %910 = vmatpush2.msra.mxu0 0.0
    %911 = vmatprep.subr.mxu0 0.0
    %912 = vmatpush2.msra.mxu0 0.0
    %913 = vmatprep.subr.mxu0 0.0
    %914 = vmatpush2.msra.mxu0 0.0
    %915 = vmatprep.subr.mxu0 0.0
    %916 = vmatpush2.msra.mxu0 0.0
    %917 = vmatprep.subr.mxu0 0.0
    %918 = vmatpush2.msra.mxu0 0.0
    %919 = vmatprep.subr.mxu0 0.0
    %920 = vmatpush2.msra.mxu0 0.0
    %921 = vmatprep.subr.mxu0 0.0
    %922 = vmatpush2.msra.mxu0 0.0
    %923 = vmatprep.subr.mxu0 0.0
    %924 = vmatpush2.msra.mxu0 0.0
    %925 = vmatprep.subr.mxu0 0.0
    %926 = vmatpush2.msra.mxu0 0.0
    %927 = vmatprep.subr.mxu0 0.0
    %928 = vmatpush2.msra.mxu0 0.0
    %929 = vmatprep.subr.mxu0 0.0
    %930 = vmatpush2.msra.mxu0 0.0
    %931 = vmatprep.subr.mxu0 0.0
    %932 = vmatpush2.msra.mxu0 0.0
    %933 = vmatprep.subr.mxu0 0.0
    %934 = vmatpush2.msra.mxu0 0.0
    %935 = vmatprep.subr.mxu0 0.0
    %936 = vmatpush2.msra.mxu0 0.0
    %937 = vmatprep.mubr.f32.mxu0 0.0
    %938 = vmatmul.mubr.f32.gmra.mxu0 %v787
    %v939 = vpop.f32.mrf.mxu0
    %v940 = vadd.f32 0.0, %v939
    %v941 = vpop.f32.mrf.mxu0
    %v942 = vadd.f32 0.0, %v941
    %943 = vdwg.mxu0
    %944 = vmatprep.subr.mxu0 0.0
    %945 = vmatpush1.msra.mxu0 0.0
    %946 = vmatprep.subr.mxu0 0.0
    %947 = vmatpush1.msra.mxu0 0.0
    %948 = vmatprep.subr.mxu0 0.0
    %949 = vmatpush1.msra.mxu0 0.0
    %950 = vmatprep.subr.mxu0 0.0
    %951 = vmatpush1.msra.mxu0 0.0
    %952 = vmatprep.subr.mxu0 0.0
    %953 = vmatpush1.msra.mxu0 0.0
    %954 = vmatprep.subr.mxu0 0.0
    %955 = vmatpush1.msra.mxu0 0.0
    %956 = vmatprep.subr.mxu0 0.0
    %957 = vmatpush1.msra.mxu0 0.0
    %958 = vmatprep.subr.mxu0 0.0
    %959 = vmatpush1.msra.mxu0 0.0
    %960 = vmatprep.subr.mxu0 0.0
    %961 = vmatpush1.msra.mxu0 0.0
    %962 = vmatprep.subr.mxu0 0.0
    %963 = vmatpush1.msra.mxu0 0.0
    %964 = vmatprep.subr.mxu0 0.0
    %965 = vmatpush1.msra.mxu0 0.0
    %966 = vmatprep.subr.mxu0 0.0
    %967 = vmatpush1.msra.mxu0 0.0
    %968 = vmatprep.subr.mxu0 0.0
    %969 = vmatpush1.msra.mxu0 0.0
    %970 = vmatprep.subr.mxu0 0.0
    %971 = vmatpush1.msra.mxu0 0.0
    %972 = vmatprep.subr.mxu0 0.0
    %973 = vmatpush1.msra.mxu0 0.0
    %974 = vmatprep.subr.mxu0 %v800
    %975 = vmatpush1.msra.mxu0 %v798
    %976 = vmatprep.subr.mxu0 0.0
    %977 = vmatpush2.msra.mxu0 0.0
    %978 = vmatprep.subr.mxu0 0.0
    %979 = vmatpush2.msra.mxu0 0.0
    %980 = vmatprep.subr.mxu0 0.0
    %981 = vmatpush2.msra.mxu0 0.0
    %982 = vmatprep.subr.mxu0 0.0
    %983 = vmatpush2.msra.mxu0 0.0
    %984 = vmatprep.subr.mxu0 0.0
    %985 = vmatpush2.msra.mxu0 0.0
    %986 = vmatprep.subr.mxu0 0.0
    %987 = vmatpush2.msra.mxu0 0.0
    %988 = vmatprep.subr.mxu0 0.0
    %989 = vmatpush2.msra.mxu0 0.0
    %990 = vmatprep.subr.mxu0 0.0
    %991 = vmatpush2.msra.mxu0 0.0
    %992 = vmatprep.subr.mxu0 0.0
    %993 = vmatpush2.msra.mxu0 0.0
    %994 = vmatprep.subr.mxu0 0.0
    %995 = vmatpush2.msra.mxu0 0.0
    %996 = vmatprep.subr.mxu0 0.0
    %997 = vmatpush2.msra.mxu0 0.0
    %998 = vmatprep.subr.mxu0 0.0
    %999 = vmatpush2.msra.mxu0 0.0
    %1000 = vmatprep.subr.mxu0 0.0
    %1001 = vmatpush2.msra.mxu0 0.0
    %1002 = vmatprep.subr.mxu0 0.0
    %1003 = vmatpush2.msra.mxu0 0.0
    %1004 = vmatprep.subr.mxu0 0.0
    %1005 = vmatpush2.msra.mxu0 0.0
    %1006 = vmatprep.subr.mxu0 0.0
    %1007 = vmatpush2.msra.mxu0 0.0
    %1008 = vmatprep.mubr.f32.mxu0 0.0
    %1009 = vmatmul.mubr.f32.gmra.mxu0 %v787
    %v1010 = vpop.f32.mrf.mxu0
    %v1011 = vadd.f32 0.0, %v1010
    %v1012 = vpop.f32.mrf.mxu0
    %v1013 = vadd.f32 0.0, %v1012
    %1014 = vdwg.mxu0
    %1015 = vrot.lane.b32.xlu0 %v750, 115
    %v1016 = vpop.permute.xlu0 %1015
    %1017 = vrot.lane.b32.xlu0 %v761, 115
    %v1018 = vpop.permute.xlu0 %1017
    %1019 = vrot.lane.b32.xlu0 %v751, 115
    %v1020 = vpop.permute.xlu0 %1019
    %1021 = vrot.lane.b32.xlu0 %v762, 115
    %v1022 = vpop.permute.xlu0 %1021
    %1023 = vrot.lane.b32.xlu0 %v752, 115
    %v1024 = vpop.permute.xlu0 %1023
    %1025 = vrot.lane.b32.xlu0 %v763, 115
    %v1026 = vpop.permute.xlu0 %1025
    %1027 = vrot.lane.b32.xlu0 %v753, 115
    %v1028 = vpop.permute.xlu0 %1027
    %vm1029 = vcmask 941056
    %v1030 = vsel %vm1029, %v1016, %v1018
    %v1031 = vsel %vm1029, %v1018, %v1020
    %v1032 = vsel %vm1029, %v1020, %v1022
    %v1033 = vsel %vm1029, %v1022, %v1024
    %v1034 = vsel %vm1029, %v1024, %v1026
    %v1035 = vsel %vm1029, %v1026, %v1028
    %v1037 = vsel %vm785, %v754, 0
    %v1039 = vsel %vm789, %v1030, 0
    %v1041 = vsel %vm789, %v1031, 0
    %v1043 = vsel %vm789, %v1032, 0
    %v1045 = vsel %vm789, %v1033, 0
    %v1047 = vsel %vm789, %v1034, 0
    %v1049 = vsel %vm789, %v1035, 0
    %1051 = vmatprep.subr.mxu0 0.0
    %1052 = vmatpush1.msra.mxu0 0.0
    %1053 = vmatprep.subr.mxu0 0.0
    %1054 = vmatpush1.msra.mxu0 0.0
    %1055 = vmatprep.subr.mxu0 0.0
    %1056 = vmatpush1.msra.mxu0 0.0
    %1057 = vmatprep.subr.mxu0 0.0
    %1058 = vmatpush1.msra.mxu0 0.0
    %1059 = vmatprep.subr.mxu0 0.0
    %1060 = vmatpush1.msra.mxu0 0.0
    %1061 = vmatprep.subr.mxu0 0.0
    %1062 = vmatpush1.msra.mxu0 0.0
    %1063 = vmatprep.subr.mxu0 0.0
    %1064 = vmatpush1.msra.mxu0 0.0
    %1065 = vmatprep.subr.mxu0 0.0
    %1066 = vmatpush1.msra.mxu0 0.0
    %1067 = vmatprep.subr.mxu0 0.0
    %1068 = vmatpush1.msra.mxu0 0.0
    %1069 = vmatprep.subr.mxu0 0.0
    %1070 = vmatpush1.msra.mxu0 0.0
    %1071 = vmatprep.subr.mxu0 0.0
    %1072 = vmatpush1.msra.mxu0 0.0
    %1073 = vmatprep.subr.mxu0 0.0
    %1074 = vmatpush1.msra.mxu0 0.0
    %1075 = vmatprep.subr.mxu0 0.0
    %1076 = vmatpush1.msra.mxu0 0.0
    %1077 = vmatprep.subr.mxu0 0.0
    %1078 = vmatpush1.msra.mxu0 0.0
    %1079 = vmatprep.subr.mxu0 0.0
    %1080 = vmatpush1.msra.mxu0 0.0
    %1081 = vmatprep.subr.mxu0 %v1041
    %1082 = vmatpush1.msra.mxu0 %v1039
    %1083 = vmatprep.subr.mxu0 0.0
    %1084 = vmatpush2.msra.mxu0 0.0
    %1085 = vmatprep.subr.mxu0 0.0
    %1086 = vmatpush2.msra.mxu0 0.0
    %1087 = vmatprep.subr.mxu0 0.0
    %1088 = vmatpush2.msra.mxu0 0.0
    %1089 = vmatprep.subr.mxu0 0.0
    %1090 = vmatpush2.msra.mxu0 0.0
    %1091 = vmatprep.subr.mxu0 0.0
    %1092 = vmatpush2.msra.mxu0 0.0
    %1093 = vmatprep.subr.mxu0 0.0
    %1094 = vmatpush2.msra.mxu0 0.0
    %1095 = vmatprep.subr.mxu0 0.0
    %1096 = vmatpush2.msra.mxu0 0.0
    %1097 = vmatprep.subr.mxu0 0.0
    %1098 = vmatpush2.msra.mxu0 0.0
    %1099 = vmatprep.subr.mxu0 0.0
    %1100 = vmatpush2.msra.mxu0 0.0
    %1101 = vmatprep.subr.mxu0 0.0
    %1102 = vmatpush2.msra.mxu0 0.0
    %1103 = vmatprep.subr.mxu0 0.0
    %1104 = vmatpush2.msra.mxu0 0.0
    %1105 = vmatprep.subr.mxu0 0.0
    %1106 = vmatpush2.msra.mxu0 0.0
    %1107 = vmatprep.subr.mxu0 0.0
    %1108 = vmatpush2.msra.mxu0 0.0
    %1109 = vmatprep.subr.mxu0 0.0
    %1110 = vmatpush2.msra.mxu0 0.0
    %1111 = vmatprep.subr.mxu0 0.0
    %1112 = vmatpush2.msra.mxu0 0.0
    %1113 = vmatprep.subr.mxu0 0.0
    %1114 = vmatpush2.msra.mxu0 0.0
    %1115 = vmatprep.mubr.f32.mxu0 0.0
    %1116 = vmatmul.mubr.f32.gmra.mxu0 %v1037
    %v1117 = vpop.f32.mrf.mxu0
    %v1118 = vadd.f32 %v869, %v1117
    %v1119 = vpop.f32.mrf.mxu0
    %v1120 = vadd.f32 %v871, %v1119
    %1121 = vdwg.mxu0
    %1122 = vmatprep.subr.mxu0 0.0
    %1123 = vmatpush1.msra.mxu0 0.0
    %1124 = vmatprep.subr.mxu0 0.0
    %1125 = vmatpush1.msra.mxu0 0.0
    %1126 = vmatprep.subr.mxu0 0.0
    %1127 = vmatpush1.msra.mxu0 0.0
    %1128 = vmatprep.subr.mxu0 0.0
    %1129 = vmatpush1.msra.mxu0 0.0
    %1130 = vmatprep.subr.mxu0 0.0
    %1131 = vmatpush1.msra.mxu0 0.0
    %1132 = vmatprep.subr.mxu0 0.0
    %1133 = vmatpush1.msra.mxu0 0.0
    %1134 = vmatprep.subr.mxu0 0.0
    %1135 = vmatpush1.msra.mxu0 0.0
    %1136 = vmatprep.subr.mxu0 0.0
    %1137 = vmatpush1.msra.mxu0 0.0
    %1138 = vmatprep.subr.mxu0 0.0
    %1139 = vmatpush1.msra.mxu0 0.0
    %1140 = vmatprep.subr.mxu0 0.0
    %1141 = vmatpush1.msra.mxu0 0.0
    %1142 = vmatprep.subr.mxu0 0.0
    %1143 = vmatpush1.msra.mxu0 0.0
    %1144 = vmatprep.subr.mxu0 0.0
    %1145 = vmatpush1.msra.mxu0 0.0
    %1146 = vmatprep.subr.mxu0 0.0
    %1147 = vmatpush1.msra.mxu0 0.0
    %1148 = vmatprep.subr.mxu0 0.0
    %1149 = vmatpush1.msra.mxu0 0.0
    %1150 = vmatprep.subr.mxu0 0.0
    %1151 = vmatpush1.msra.mxu0 0.0
    %1152 = vmatprep.subr.mxu0 %v1045
    %1153 = vmatpush1.msra.mxu0 %v1043
    %1154 = vmatprep.subr.mxu0 0.0
    %1155 = vmatpush2.msra.mxu0 0.0
    %1156 = vmatprep.subr.mxu0 0.0
    %1157 = vmatpush2.msra.mxu0 0.0
    %1158 = vmatprep.subr.mxu0 0.0
    %1159 = vmatpush2.msra.mxu0 0.0
    %1160 = vmatprep.subr.mxu0 0.0
    %1161 = vmatpush2.msra.mxu0 0.0
    %1162 = vmatprep.subr.mxu0 0.0
    %1163 = vmatpush2.msra.mxu0 0.0
    %1164 = vmatprep.subr.mxu0 0.0
    %1165 = vmatpush2.msra.mxu0 0.0
    %1166 = vmatprep.subr.mxu0 0.0
    %1167 = vmatpush2.msra.mxu0 0.0
    %1168 = vmatprep.subr.mxu0 0.0
    %1169 = vmatpush2.msra.mxu0 0.0
    %1170 = vmatprep.subr.mxu0 0.0
    %1171 = vmatpush2.msra.mxu0 0.0
    %1172 = vmatprep.subr.mxu0 0.0
    %1173 = vmatpush2.msra.mxu0 0.0
    %1174 = vmatprep.subr.mxu0 0.0
    %1175 = vmatpush2.msra.mxu0 0.0
    %1176 = vmatprep.subr.mxu0 0.0
    %1177 = vmatpush2.msra.mxu0 0.0
    %1178 = vmatprep.subr.mxu0 0.0
    %1179 = vmatpush2.msra.mxu0 0.0
    %1180 = vmatprep.subr.mxu0 0.0
    %1181 = vmatpush2.msra.mxu0 0.0
    %1182 = vmatprep.subr.mxu0 0.0
    %1183 = vmatpush2.msra.mxu0 0.0
    %1184 = vmatprep.subr.mxu0 0.0
    %1185 = vmatpush2.msra.mxu0 0.0
    %1186 = vmatprep.mubr.f32.mxu0 0.0
    %1187 = vmatmul.mubr.f32.gmra.mxu0 %v1037
    %v1188 = vpop.f32.mrf.mxu0
    %v1189 = vadd.f32 %v940, %v1188
    %v1190 = vpop.f32.mrf.mxu0
    %v1191 = vadd.f32 %v942, %v1190
    %1192 = vdwg.mxu0
    %1193 = vmatprep.subr.mxu0 0.0
    %1194 = vmatpush1.msra.mxu0 0.0
    %1195 = vmatprep.subr.mxu0 0.0
    %1196 = vmatpush1.msra.mxu0 0.0
    %1197 = vmatprep.subr.mxu0 0.0
    %1198 = vmatpush1.msra.mxu0 0.0
    %1199 = vmatprep.subr.mxu0 0.0
    %1200 = vmatpush1.msra.mxu0 0.0
    %1201 = vmatprep.subr.mxu0 0.0
    %1202 = vmatpush1.msra.mxu0 0.0
    %1203 = vmatprep.subr.mxu0 0.0
    %1204 = vmatpush1.msra.mxu0 0.0
    %1205 = vmatprep.subr.mxu0 0.0
    %1206 = vmatpush1.msra.mxu0 0.0
    %1207 = vmatprep.subr.mxu0 0.0
    %1208 = vmatpush1.msra.mxu0 0.0
    %1209 = vmatprep.subr.mxu0 0.0
    %1210 = vmatpush1.msra.mxu0 0.0
    %1211 = vmatprep.subr.mxu0 0.0
    %1212 = vmatpush1.msra.mxu0 0.0
    %1213 = vmatprep.subr.mxu0 0.0
    %1214 = vmatpush1.msra.mxu0 0.0
    %1215 = vmatprep.subr.mxu0 0.0
    %1216 = vmatpush1.msra.mxu0 0.0
    %1217 = vmatprep.subr.mxu0 0.0
    %1218 = vmatpush1.msra.mxu0 0.0
    %1219 = vmatprep.subr.mxu0 0.0
    %1220 = vmatpush1.msra.mxu0 0.0
    %1221 = vmatprep.subr.mxu0 0.0
    %1222 = vmatpush1.msra.mxu0 0.0
    %1223 = vmatprep.subr.mxu0 %v1049
    %1224 = vmatpush1.msra.mxu0 %v1047
    %1225 = vmatprep.subr.mxu0 0.0
    %1226 = vmatpush2.msra.mxu0 0.0
    %1227 = vmatprep.subr.mxu0 0.0
    %1228 = vmatpush2.msra.mxu0 0.0
    %1229 = vmatprep.subr.mxu0 0.0
    %1230 = vmatpush2.msra.mxu0 0.0
    %1231 = vmatprep.subr.mxu0 0.0
    %1232 = vmatpush2.msra.mxu0 0.0
    %1233 = vmatprep.subr.mxu0 0.0
    %1234 = vmatpush2.msra.mxu0 0.0
    %1235 = vmatprep.subr.mxu0 0.0
    %1236 = vmatpush2.msra.mxu0 0.0
    %1237 = vmatprep.subr.mxu0 0.0
    %1238 = vmatpush2.msra.mxu0 0.0
    %1239 = vmatprep.subr.mxu0 0.0
    %1240 = vmatpush2.msra.mxu0 0.0
    %1241 = vmatprep.subr.mxu0 0.0
    %1242 = vmatpush2.msra.mxu0 0.0
    %1243 = vmatprep.subr.mxu0 0.0
    %1244 = vmatpush2.msra.mxu0 0.0
    %1245 = vmatprep.subr.mxu0 0.0
    %1246 = vmatpush2.msra.mxu0 0.0
    %1247 = vmatprep.subr.mxu0 0.0
    %1248 = vmatpush2.msra.mxu0 0.0
    %1249 = vmatprep.subr.mxu0 0.0
    %1250 = vmatpush2.msra.mxu0 0.0
    %1251 = vmatprep.subr.mxu0 0.0
    %1252 = vmatpush2.msra.mxu0 0.0
    %1253 = vmatprep.subr.mxu0 0.0
    %1254 = vmatpush2.msra.mxu0 0.0
    %1255 = vmatprep.subr.mxu0 0.0
    %1256 = vmatpush2.msra.mxu0 0.0
    %1257 = vmatprep.mubr.f32.mxu0 0.0
    %1258 = vmatmul.mubr.f32.gmra.mxu0 %v1037
    %v1259 = vpop.f32.mrf.mxu0
    %v1260 = vadd.f32 %v1011, %v1259
    %v1261 = vpop.f32.mrf.mxu0
    %v1262 = vadd.f32 %v1013, %v1261
    %1263 = vdwg.mxu0
    %v1264 = vld [vmem:[%s0] sm:$0xff]
    %v1265 = vld [vmem:[%s0 + $0x8] sm:$0xff]
    %v1266 = vld [vmem:[%s0 + $0x10] sm:$0xff]
    %v1267 = vld [vmem:[%s0 + $0x18] sm:$0xf]
    %s1268 = scalar_lea.vmem %s1, 16
    %v1269 = vld [vmem:[%s1268] sm:$0xff]
    %v1274 = vcombine.high %v1264, %v1264
    %v1275 = vcombine.high %v1265, %v1265
    %v1276 = vcombine.high %v1266, %v1266
    %1277 = vrot.lane.b32.xlu0 %v1264, 113
    %v1278 = vpop.permute.xlu0 %1277
    %1279 = vrot.lane.b32.xlu0 %v1274, 113
    %v1280 = vpop.permute.xlu0 %1279
    %1281 = vrot.lane.b32.xlu0 %v1265, 113
    %v1282 = vpop.permute.xlu0 %1281
    %1283 = vrot.lane.b32.xlu0 %v1275, 113
    %v1284 = vpop.permute.xlu0 %1283
    %1285 = vrot.lane.b32.xlu0 %v1266, 113
    %v1286 = vpop.permute.xlu0 %1285
    %1287 = vrot.lane.b32.xlu0 %v1276, 113
    %v1288 = vpop.permute.xlu0 %1287
    %1289 = vrot.lane.b32.xlu0 %v1267, 113
    %v1290 = vpop.permute.xlu0 %1289
    %vm1291 = vcmask 924672
    %v1292 = vsel %vm1291, %v1278, %v1280
    %v1293 = vsel %vm1291, %v1280, %v1282
    %v1294 = vsel %vm1291, %v1282, %v1284
    %v1295 = vsel %vm1291, %v1284, %v1286
    %v1296 = vsel %vm1291, %v1286, %v1288
    %v1297 = vsel %vm1291, %v1288, %v1290
    %v1299 = vsel %vm785, %v1269, 0
    %v1301 = vsel %vm789, %v1292, 0
    %v1303 = vsel %vm789, %v1293, 0
    %v1305 = vsel %vm789, %v1294, 0
    %v1307 = vsel %vm789, %v1295, 0
    %v1309 = vsel %vm789, %v1296, 0
    %v1311 = vsel %vm789, %v1297, 0
    %1313 = vmatprep.subr.mxu0 0.0
    %1314 = vmatpush1.msra.mxu0 0.0
    %1315 = vmatprep.subr.mxu0 0.0
    %1316 = vmatpush1.msra.mxu0 0.0
    %1317 = vmatprep.subr.mxu0 0.0
    %1318 = vmatpush1.msra.mxu0 0.0
    %1319 = vmatprep.subr.mxu0 0.0
    %1320 = vmatpush1.msra.mxu0 0.0
    %1321 = vmatprep.subr.mxu0 0.0
    %1322 = vmatpush1.msra.mxu0 0.0
    %1323 = vmatprep.subr.mxu0 0.0
    %1324 = vmatpush1.msra.mxu0 0.0
    %1325 = vmatprep.subr.mxu0 0.0
    %1326 = vmatpush1.msra.mxu0 0.0
    %1327 = vmatprep.subr.mxu0 0.0
    %1328 = vmatpush1.msra.mxu0 0.0
    %1329 = vmatprep.subr.mxu0 0.0
    %1330 = vmatpush1.msra.mxu0 0.0
    %1331 = vmatprep.subr.mxu0 0.0
    %1332 = vmatpush1.msra.mxu0 0.0
    %1333 = vmatprep.subr.mxu0 0.0
    %1334 = vmatpush1.msra.mxu0 0.0
    %1335 = vmatprep.subr.mxu0 0.0
    %1336 = vmatpush1.msra.mxu0 0.0
    %1337 = vmatprep.subr.mxu0 0.0
    %1338 = vmatpush1.msra.mxu0 0.0
    %1339 = vmatprep.subr.mxu0 0.0
    %1340 = vmatpush1.msra.mxu0 0.0
    %1341 = vmatprep.subr.mxu0 0.0
    %1342 = vmatpush1.msra.mxu0 0.0
    %1343 = vmatprep.subr.mxu0 %v1303
    %1344 = vmatpush1.msra.mxu0 %v1301
    %1345 = vmatprep.subr.mxu0 0.0
    %1346 = vmatpush2.msra.mxu0 0.0
    %1347 = vmatprep.subr.mxu0 0.0
    %1348 = vmatpush2.msra.mxu0 0.0
    %1349 = vmatprep.subr.mxu0 0.0
    %1350 = vmatpush2.msra.mxu0 0.0
    %1351 = vmatprep.subr.mxu0 0.0
    %1352 = vmatpush2.msra.mxu0 0.0
    %1353 = vmatprep.subr.mxu0 0.0
    %1354 = vmatpush2.msra.mxu0 0.0
    %1355 = vmatprep.subr.mxu0 0.0
    %1356 = vmatpush2.msra.mxu0 0.0
    %1357 = vmatprep.subr.mxu0 0.0
    %1358 = vmatpush2.msra.mxu0 0.0
    %1359 = vmatprep.subr.mxu0 0.0
    %1360 = vmatpush2.msra.mxu0 0.0
    %1361 = vmatprep.subr.mxu0 0.0
    %1362 = vmatpush2.msra.mxu0 0.0
    %1363 = vmatprep.subr.mxu0 0.0
    %1364 = vmatpush2.msra.mxu0 0.0
    %1365 = vmatprep.subr.mxu0 0.0
    %1366 = vmatpush2.msra.mxu0 0.0
    %1367 = vmatprep.subr.mxu0 0.0
    %1368 = vmatpush2.msra.mxu0 0.0
    %1369 = vmatprep.subr.mxu0 0.0
    %1370 = vmatpush2.msra.mxu0 0.0
    %1371 = vmatprep.subr.mxu0 0.0
    %1372 = vmatpush2.msra.mxu0 0.0
    %1373 = vmatprep.subr.mxu0 0.0
    %1374 = vmatpush2.msra.mxu0 0.0
    %1375 = vmatprep.subr.mxu0 0.0
    %1376 = vmatpush2.msra.mxu0 0.0
    %1377 = vmatprep.mubr.f32.mxu0 0.0
    %1378 = vmatmul.mubr.f32.gmra.mxu0 %v1299
    %v1379 = vpop.f32.mrf.mxu0
    %v1380 = vadd.f32 0.0, %v1379
    %v1381 = vpop.f32.mrf.mxu0
    %v1382 = vadd.f32 0.0, %v1381
    %1383 = vdwg.mxu0
    %1384 = vmatprep.subr.mxu0 0.0
    %1385 = vmatpush1.msra.mxu0 0.0
    %1386 = vmatprep.subr.mxu0 0.0
    %1387 = vmatpush1.msra.mxu0 0.0
    %1388 = vmatprep.subr.mxu0 0.0
    %1389 = vmatpush1.msra.mxu0 0.0
    %1390 = vmatprep.subr.mxu0 0.0
    %1391 = vmatpush1.msra.mxu0 0.0
    %1392 = vmatprep.subr.mxu0 0.0
    %1393 = vmatpush1.msra.mxu0 0.0
    %1394 = vmatprep.subr.mxu0 0.0
    %1395 = vmatpush1.msra.mxu0 0.0
    %1396 = vmatprep.subr.mxu0 0.0
    %1397 = vmatpush1.msra.mxu0 0.0
    %1398 = vmatprep.subr.mxu0 0.0
    %1399 = vmatpush1.msra.mxu0 0.0
    %1400 = vmatprep.subr.mxu0 0.0
    %1401 = vmatpush1.msra.mxu0 0.0
    %1402 = vmatprep.subr.mxu0 0.0
    %1403 = vmatpush1.msra.mxu0 0.0
    %1404 = vmatprep.subr.mxu0 0.0
    %1405 = vmatpush1.msra.mxu0 0.0
    %1406 = vmatprep.subr.mxu0 0.0
    %1407 = vmatpush1.msra.mxu0 0.0
    %1408 = vmatprep.subr.mxu0 0.0
    %1409 = vmatpush1.msra.mxu0 0.0
    %1410 = vmatprep.subr.mxu0 0.0
    %1411 = vmatpush1.msra.mxu0 0.0
    %1412 = vmatprep.subr.mxu0 0.0
    %1413 = vmatpush1.msra.mxu0 0.0
    %1414 = vmatprep.subr.mxu0 %v1307
    %1415 = vmatpush1.msra.mxu0 %v1305
    %1416 = vmatprep.subr.mxu0 0.0
    %1417 = vmatpush2.msra.mxu0 0.0
    %1418 = vmatprep.subr.mxu0 0.0
    %1419 = vmatpush2.msra.mxu0 0.0
    %1420 = vmatprep.subr.mxu0 0.0
    %1421 = vmatpush2.msra.mxu0 0.0
    %1422 = vmatprep.subr.mxu0 0.0
    %1423 = vmatpush2.msra.mxu0 0.0
    %1424 = vmatprep.subr.mxu0 0.0
    %1425 = vmatpush2.msra.mxu0 0.0
    %1426 = vmatprep.subr.mxu0 0.0
    %1427 = vmatpush2.msra.mxu0 0.0
    %1428 = vmatprep.subr.mxu0 0.0
    %1429 = vmatpush2.msra.mxu0 0.0
    %1430 = vmatprep.subr.mxu0 0.0
    %1431 = vmatpush2.msra.mxu0 0.0
    %1432 = vmatprep.subr.mxu0 0.0
    %1433 = vmatpush2.msra.mxu0 0.0
    %1434 = vmatprep.subr.mxu0 0.0
    %1435 = vmatpush2.msra.mxu0 0.0
    %1436 = vmatprep.subr.mxu0 0.0
    %1437 = vmatpush2.msra.mxu0 0.0
    %1438 = vmatprep.subr.mxu0 0.0
    %1439 = vmatpush2.msra.mxu0 0.0
    %1440 = vmatprep.subr.mxu0 0.0
    %1441 = vmatpush2.msra.mxu0 0.0
    %1442 = vmatprep.subr.mxu0 0.0
    %1443 = vmatpush2.msra.mxu0 0.0
    %1444 = vmatprep.subr.mxu0 0.0
    %1445 = vmatpush2.msra.mxu0 0.0
    %1446 = vmatprep.subr.mxu0 0.0
    %1447 = vmatpush2.msra.mxu0 0.0
    %1448 = vmatprep.mubr.f32.mxu0 0.0
    %1449 = vmatmul.mubr.f32.gmra.mxu0 %v1299
    %v1450 = vpop.f32.mrf.mxu0
    %v1451 = vadd.f32 0.0, %v1450
    %v1452 = vpop.f32.mrf.mxu0
    %v1453 = vadd.f32 0.0, %v1452
    %1454 = vdwg.mxu0
    %1455 = vmatprep.subr.mxu0 0.0
    %1456 = vmatpush1.msra.mxu0 0.0
    %1457 = vmatprep.subr.mxu0 0.0
    %1458 = vmatpush1.msra.mxu0 0.0
    %1459 = vmatprep.subr.mxu0 0.0
    %1460 = vmatpush1.msra.mxu0 0.0
    %1461 = vmatprep.subr.mxu0 0.0
    %1462 = vmatpush1.msra.mxu0 0.0
    %1463 = vmatprep.subr.mxu0 0.0
    %1464 = vmatpush1.msra.mxu0 0.0
    %1465 = vmatprep.subr.mxu0 0.0
    %1466 = vmatpush1.msra.mxu0 0.0
    %1467 = vmatprep.subr.mxu0 0.0
    %1468 = vmatpush1.msra.mxu0 0.0
    %1469 = vmatprep.subr.mxu0 0.0
    %1470 = vmatpush1.msra.mxu0 0.0
    %1471 = vmatprep.subr.mxu0 0.0
    %1472 = vmatpush1.msra.mxu0 0.0
    %1473 = vmatprep.subr.mxu0 0.0
    %1474 = vmatpush1.msra.mxu0 0.0
    %1475 = vmatprep.subr.mxu0 0.0
    %1476 = vmatpush1.msra.mxu0 0.0
    %1477 = vmatprep.subr.mxu0 0.0
    %1478 = vmatpush1.msra.mxu0 0.0
    %1479 = vmatprep.subr.mxu0 0.0
    %1480 = vmatpush1.msra.mxu0 0.0
    %1481 = vmatprep.subr.mxu0 0.0
    %1482 = vmatpush1.msra.mxu0 0.0
    %1483 = vmatprep.subr.mxu0 0.0
    %1484 = vmatpush1.msra.mxu0 0.0
    %1485 = vmatprep.subr.mxu0 %v1311
    %1486 = vmatpush1.msra.mxu0 %v1309
    %1487 = vmatprep.subr.mxu0 0.0
    %1488 = vmatpush2.msra.mxu0 0.0
    %1489 = vmatprep.subr.mxu0 0.0
    %1490 = vmatpush2.msra.mxu0 0.0
    %1491 = vmatprep.subr.mxu0 0.0
    %1492 = vmatpush2.msra.mxu0 0.0
    %1493 = vmatprep.subr.mxu0 0.0
    %1494 = vmatpush2.msra.mxu0 0.0
    %1495 = vmatprep.subr.mxu0 0.0
    %1496 = vmatpush2.msra.mxu0 0.0
    %1497 = vmatprep.subr.mxu0 0.0
    %1498 = vmatpush2.msra.mxu0 0.0
    %1499 = vmatprep.subr.mxu0 0.0
    %1500 = vmatpush2.msra.mxu0 0.0
    %1501 = vmatprep.subr.mxu0 0.0
    %1502 = vmatpush2.msra.mxu0 0.0
    %1503 = vmatprep.subr.mxu0 0.0
    %1504 = vmatpush2.msra.mxu0 0.0
    %1505 = vmatprep.subr.mxu0 0.0
    %1506 = vmatpush2.msra.mxu0 0.0
    %1507 = vmatprep.subr.mxu0 0.0
    %1508 = vmatpush2.msra.mxu0 0.0
    %1509 = vmatprep.subr.mxu0 0.0
    %1510 = vmatpush2.msra.mxu0 0.0
    %1511 = vmatprep.subr.mxu0 0.0
    %1512 = vmatpush2.msra.mxu0 0.0
    %1513 = vmatprep.subr.mxu0 0.0
    %1514 = vmatpush2.msra.mxu0 0.0
    %1515 = vmatprep.subr.mxu0 0.0
    %1516 = vmatpush2.msra.mxu0 0.0
    %1517 = vmatprep.subr.mxu0 0.0
    %1518 = vmatpush2.msra.mxu0 0.0
    %1519 = vmatprep.mubr.f32.mxu0 0.0
    %1520 = vmatmul.mubr.f32.gmra.mxu0 %v1299
    %v1521 = vpop.f32.mrf.mxu0
    %v1522 = vadd.f32 0.0, %v1521
    %v1523 = vpop.f32.mrf.mxu0
    %v1524 = vadd.f32 0.0, %v1523
    %1525 = vdwg.mxu0
    %v1526 = vadd.f32 %v1118, %v1380
    %v1527 = vadd.f32 %v1120, %v1382
    %v1528 = vadd.f32 %v1189, %v1451
    %v1529 = vadd.f32 %v1191, %v1453
    %v1530 = vadd.f32 %v1260, %v1522
    %v1531 = vadd.f32 %v1262, %v1524
    %v1532 = vld [vmem:[%s0] sm:$0xff]
    %v1533 = vld [vmem:[%s0 + $0x8] sm:$0xff]
    %v1534 = vld [vmem:[%s0 + $0x10] sm:$0xff]
    %v1535 = vld [vmem:[%s0 + $0x18] sm:$0xf]
    %s1536 = scalar_lea.vmem %s1, 24
    %v1537 = vld [vmem:[%s1536] sm:$0xff]
    %v1542 = vcombine.high %v1532, %v1532
    %v1543 = vcombine.high %v1533, %v1533
    %v1544 = vcombine.high %v1534, %v1534
    %1545 = vrot.lane.b32.xlu0 %v1532, 97
    %v1546 = vpop.permute.xlu0 %1545
    %1547 = vrot.lane.b32.xlu0 %v1542, 97
    %v1548 = vpop.permute.xlu0 %1547
    %1549 = vrot.lane.b32.xlu0 %v1533, 97
    %v1550 = vpop.permute.xlu0 %1549
    %1551 = vrot.lane.b32.xlu0 %v1543, 97
    %v1552 = vpop.permute.xlu0 %1551
    %1553 = vrot.lane.b32.xlu0 %v1534, 97
    %v1554 = vpop.permute.xlu0 %1553
    %1555 = vrot.lane.b32.xlu0 %v1544, 97
    %v1556 = vpop.permute.xlu0 %1555
    %1557 = vrot.lane.b32.xlu0 %v1535, 97
    %v1558 = vpop.permute.xlu0 %1557
    %vm1559 = vcmask 793600
    %v1560 = vsel %vm1559, %v1546, %v1548
    %v1561 = vsel %vm1559, %v1548, %v1550
    %v1562 = vsel %vm1559, %v1550, %v1552
    %v1563 = vsel %vm1559, %v1552, %v1554
    %v1564 = vsel %vm1559, %v1554, %v1556
    %v1565 = vsel %vm1559, %v1556, %v1558
    %v1567 = vsel %vm785, %v1537, 0
    %v1569 = vsel %vm789, %v1560, 0
    %v1571 = vsel %vm789, %v1561, 0
    %v1573 = vsel %vm789, %v1562, 0
    %v1575 = vsel %vm789, %v1563, 0
    %v1577 = vsel %vm789, %v1564, 0
    %v1579 = vsel %vm789, %v1565, 0
    %1581 = vmatprep.subr.mxu0 0.0
    %1582 = vmatpush1.msra.mxu0 0.0
    %1583 = vmatprep.subr.mxu0 0.0
    %1584 = vmatpush1.msra.mxu0 0.0
    %1585 = vmatprep.subr.mxu0 0.0
    %1586 = vmatpush1.msra.mxu0 0.0
    %1587 = vmatprep.subr.mxu0 0.0
    %1588 = vmatpush1.msra.mxu0 0.0
    %1589 = vmatprep.subr.mxu0 0.0
    %1590 = vmatpush1.msra.mxu0 0.0
    %1591 = vmatprep.subr.mxu0 0.0
    %1592 = vmatpush1.msra.mxu0 0.0
    %1593 = vmatprep.subr.mxu0 0.0
    %1594 = vmatpush1.msra.mxu0 0.0
    %1595 = vmatprep.subr.mxu0 0.0
    %1596 = vmatpush1.msra.mxu0 0.0
    %1597 = vmatprep.subr.mxu0 0.0
    %1598 = vmatpush1.msra.mxu0 0.0
    %1599 = vmatprep.subr.mxu0 0.0
    %1600 = vmatpush1.msra.mxu0 0.0
    %1601 = vmatprep.subr.mxu0 0.0
    %1602 = vmatpush1.msra.mxu0 0.0
    %1603 = vmatprep.subr.mxu0 0.0
    %1604 = vmatpush1.msra.mxu0 0.0
    %1605 = vmatprep.subr.mxu0 0.0
    %1606 = vmatpush1.msra.mxu0 0.0
    %1607 = vmatprep.subr.mxu0 0.0
    %1608 = vmatpush1.msra.mxu0 0.0
    %1609 = vmatprep.subr.mxu0 0.0
    %1610 = vmatpush1.msra.mxu0 0.0
    %1611 = vmatprep.subr.mxu0 %v1571
    %1612 = vmatpush1.msra.mxu0 %v1569
    %1613 = vmatprep.subr.mxu0 0.0
    %1614 = vmatpush2.msra.mxu0 0.0
    %1615 = vmatprep.subr.mxu0 0.0
    %1616 = vmatpush2.msra.mxu0 0.0
    %1617 = vmatprep.subr.mxu0 0.0
    %1618 = vmatpush2.msra.mxu0 0.0
    %1619 = vmatprep.subr.mxu0 0.0
    %1620 = vmatpush2.msra.mxu0 0.0
    %1621 = vmatprep.subr.mxu0 0.0
    %1622 = vmatpush2.msra.mxu0 0.0
    %1623 = vmatprep.subr.mxu0 0.0
    %1624 = vmatpush2.msra.mxu0 0.0
    %1625 = vmatprep.subr.mxu0 0.0
    %1626 = vmatpush2.msra.mxu0 0.0
    %1627 = vmatprep.subr.mxu0 0.0
    %1628 = vmatpush2.msra.mxu0 0.0
    %1629 = vmatprep.subr.mxu0 0.0
    %1630 = vmatpush2.msra.mxu0 0.0
    %1631 = vmatprep.subr.mxu0 0.0
    %1632 = vmatpush2.msra.mxu0 0.0
    %1633 = vmatprep.subr.mxu0 0.0
    %1634 = vmatpush2.msra.mxu0 0.0
    %1635 = vmatprep.subr.mxu0 0.0
    %1636 = vmatpush2.msra.mxu0 0.0
    %1637 = vmatprep.subr.mxu0 0.0
    %1638 = vmatpush2.msra.mxu0 0.0
    %1639 = vmatprep.subr.mxu0 0.0
    %1640 = vmatpush2.msra.mxu0 0.0
    %1641 = vmatprep.subr.mxu0 0.0
    %1642 = vmatpush2.msra.mxu0 0.0
    %1643 = vmatprep.subr.mxu0 0.0
    %1644 = vmatpush2.msra.mxu0 0.0
    %1645 = vmatprep.mubr.f32.mxu0 0.0
    %1646 = vmatmul.mubr.f32.gmra.mxu0 %v1567
    %v1647 = vpop.f32.mrf.mxu0
    %v1648 = vadd.f32 0.0, %v1647
    %v1649 = vpop.f32.mrf.mxu0
    %v1650 = vadd.f32 0.0, %v1649
    %1651 = vdwg.mxu0
    %1652 = vmatprep.subr.mxu0 0.0
    %1653 = vmatpush1.msra.mxu0 0.0
    %1654 = vmatprep.subr.mxu0 0.0
    %1655 = vmatpush1.msra.mxu0 0.0
    %1656 = vmatprep.subr.mxu0 0.0
    %1657 = vmatpush1.msra.mxu0 0.0
    %1658 = vmatprep.subr.mxu0 0.0
    %1659 = vmatpush1.msra.mxu0 0.0
    %1660 = vmatprep.subr.mxu0 0.0
    %1661 = vmatpush1.msra.mxu0 0.0
    %1662 = vmatprep.subr.mxu0 0.0
    %1663 = vmatpush1.msra.mxu0 0.0
    %1664 = vmatprep.subr.mxu0 0.0
    %1665 = vmatpush1.msra.mxu0 0.0
    %1666 = vmatprep.subr.mxu0 0.0
    %1667 = vmatpush1.msra.mxu0 0.0
    %1668 = vmatprep.subr.mxu0 0.0
    %1669 = vmatpush1.msra.mxu0 0.0
    %1670 = vmatprep.subr.mxu0 0.0
    %1671 = vmatpush1.msra.mxu0 0.0
    %1672 = vmatprep.subr.mxu0 0.0
    %1673 = vmatpush1.msra.mxu0 0.0
    %1674 = vmatprep.subr.mxu0 0.0
    %1675 = vmatpush1.msra.mxu0 0.0
    %1676 = vmatprep.subr.mxu0 0.0
    %1677 = vmatpush1.msra.mxu0 0.0
    %1678 = vmatprep.subr.mxu0 0.0
    %1679 = vmatpush1.msra.mxu0 0.0
    %1680 = vmatprep.subr.mxu0 0.0
    %1681 = vmatpush1.msra.mxu0 0.0
    %1682 = vmatprep.subr.mxu0 %v1575
    %1683 = vmatpush1.msra.mxu0 %v1573
    %1684 = vmatprep.subr.mxu0 0.0
    %1685 = vmatpush2.msra.mxu0 0.0
    %1686 = vmatprep.subr.mxu0 0.0
    %1687 = vmatpush2.msra.mxu0 0.0
    %1688 = vmatprep.subr.mxu0 0.0
    %1689 = vmatpush2.msra.mxu0 0.0
    %1690 = vmatprep.subr.mxu0 0.0
    %1691 = vmatpush2.msra.mxu0 0.0
    %1692 = vmatprep.subr.mxu0 0.0
    %1693 = vmatpush2.msra.mxu0 0.0
    %1694 = vmatprep.subr.mxu0 0.0
    %1695 = vmatpush2.msra.mxu0 0.0
    %1696 = vmatprep.subr.mxu0 0.0
    %1697 = vmatpush2.msra.mxu0 0.0
    %1698 = vmatprep.subr.mxu0 0.0
    %1699 = vmatpush2.msra.mxu0 0.0
    %1700 = vmatprep.subr.mxu0 0.0
    %1701 = vmatpush2.msra.mxu0 0.0
    %1702 = vmatprep.subr.mxu0 0.0
    %1703 = vmatpush2.msra.mxu0 0.0
    %1704 = vmatprep.subr.mxu0 0.0
    %1705 = vmatpush2.msra.mxu0 0.0
    %1706 = vmatprep.subr.mxu0 0.0
    %1707 = vmatpush2.msra.mxu0 0.0
    %1708 = vmatprep.subr.mxu0 0.0
    %1709 = vmatpush2.msra.mxu0 0.0
    %1710 = vmatprep.subr.mxu0 0.0
    %1711 = vmatpush2.msra.mxu0 0.0
    %1712 = vmatprep.subr.mxu0 0.0
    %1713 = vmatpush2.msra.mxu0 0.0
    %1714 = vmatprep.subr.mxu0 0.0
    %1715 = vmatpush2.msra.mxu0 0.0
    %1716 = vmatprep.mubr.f32.mxu0 0.0
    %1717 = vmatmul.mubr.f32.gmra.mxu0 %v1567
    %v1718 = vpop.f32.mrf.mxu0
    %v1719 = vadd.f32 0.0, %v1718
    %v1720 = vpop.f32.mrf.mxu0
    %v1721 = vadd.f32 0.0, %v1720
    %1722 = vdwg.mxu0
    %1723 = vmatprep.subr.mxu0 0.0
    %1724 = vmatpush1.msra.mxu0 0.0
    %1725 = vmatprep.subr.mxu0 0.0
    %1726 = vmatpush1.msra.mxu0 0.0
    %1727 = vmatprep.subr.mxu0 0.0
    %1728 = vmatpush1.msra.mxu0 0.0
    %1729 = vmatprep.subr.mxu0 0.0
    %1730 = vmatpush1.msra.mxu0 0.0
    %1731 = vmatprep.subr.mxu0 0.0
    %1732 = vmatpush1.msra.mxu0 0.0
    %1733 = vmatprep.subr.mxu0 0.0
    %1734 = vmatpush1.msra.mxu0 0.0
    %1735 = vmatprep.subr.mxu0 0.0
    %1736 = vmatpush1.msra.mxu0 0.0
    %1737 = vmatprep.subr.mxu0 0.0
    %1738 = vmatpush1.msra.mxu0 0.0
    %1739 = vmatprep.subr.mxu0 0.0
    %1740 = vmatpush1.msra.mxu0 0.0
    %1741 = vmatprep.subr.mxu0 0.0
    %1742 = vmatpush1.msra.mxu0 0.0
    %1743 = vmatprep.subr.mxu0 0.0
    %1744 = vmatpush1.msra.mxu0 0.0
    %1745 = vmatprep.subr.mxu0 0.0
    %1746 = vmatpush1.msra.mxu0 0.0
    %1747 = vmatprep.subr.mxu0 0.0
    %1748 = vmatpush1.msra.mxu0 0.0
    %1749 = vmatprep.subr.mxu0 0.0
    %1750 = vmatpush1.msra.mxu0 0.0
    %1751 = vmatprep.subr.mxu0 0.0
    %1752 = vmatpush1.msra.mxu0 0.0
    %1753 = vmatprep.subr.mxu0 %v1579
    %1754 = vmatpush1.msra.mxu0 %v1577
    %1755 = vmatprep.subr.mxu0 0.0
    %1756 = vmatpush2.msra.mxu0 0.0
    %1757 = vmatprep.subr.mxu0 0.0
    %1758 = vmatpush2.msra.mxu0 0.0
    %1759 = vmatprep.subr.mxu0 0.0
    %1760 = vmatpush2.msra.mxu0 0.0
    %1761 = vmatprep.subr.mxu0 0.0
    %1762 = vmatpush2.msra.mxu0 0.0
    %1763 = vmatprep.subr.mxu0 0.0
    %1764 = vmatpush2.msra.mxu0 0.0
    %1765 = vmatprep.subr.mxu0 0.0
    %1766 = vmatpush2.msra.mxu0 0.0
    %1767 = vmatprep.subr.mxu0 0.0
    %1768 = vmatpush2.msra.mxu0 0.0
    %1769 = vmatprep.subr.mxu0 0.0
    %1770 = vmatpush2.msra.mxu0 0.0
    %1771 = vmatprep.subr.mxu0 0.0
    %1772 = vmatpush2.msra.mxu0 0.0
    %1773 = vmatprep.subr.mxu0 0.0
    %1774 = vmatpush2.msra.mxu0 0.0
    %1775 = vmatprep.subr.mxu0 0.0
    %1776 = vmatpush2.msra.mxu0 0.0
    %1777 = vmatprep.subr.mxu0 0.0
    %1778 = vmatpush2.msra.mxu0 0.0
    %1779 = vmatprep.subr.mxu0 0.0
    %1780 = vmatpush2.msra.mxu0 0.0
    %1781 = vmatprep.subr.mxu0 0.0
    %1782 = vmatpush2.msra.mxu0 0.0
    %1783 = vmatprep.subr.mxu0 0.0
    %1784 = vmatpush2.msra.mxu0 0.0
    %1785 = vmatprep.subr.mxu0 0.0
    %1786 = vmatpush2.msra.mxu0 0.0
    %1787 = vmatprep.mubr.f32.mxu0 0.0
    %1788 = vmatmul.mubr.f32.gmra.mxu0 %v1567
    %v1789 = vpop.f32.mrf.mxu0
    %v1790 = vadd.f32 0.0, %v1789
    %v1791 = vpop.f32.mrf.mxu0
    %v1792 = vadd.f32 0.0, %v1791
    %1793 = vdwg.mxu0
    %v1794 = vadd.f32 %v1526, %v1648
    %v1795 = vadd.f32 %v1527, %v1650
    %v1796 = vadd.f32 %v1528, %v1719
    %v1797 = vadd.f32 %v1529, %v1721
    %v1798 = vadd.f32 %v1530, %v1790
    %v1799 = vadd.f32 %v1531, %v1792
    %v1800 = vld [vmem:[%s0] sm:$0xff]
    %v1801 = vld [vmem:[%s0 + $0x8] sm:$0xff]
    %v1802 = vld [vmem:[%s0 + $0x10] sm:$0xff]
    %v1803 = vld [vmem:[%s0 + $0x18] sm:$0xf]
    %s1804 = scalar_lea.vmem %s1, 32
    %v1805 = vld [vmem:[%s1804] sm:$0xff]
    %v1810 = vcombine.high %v1800, %v1800
    %v1811 = vcombine.high %v1801, %v1801
    %v1812 = vcombine.high %v1802, %v1802
    %1813 = vrot.lane.b32.xlu0 %v1800, 96
    %v1814 = vpop.permute.xlu0 %1813
    %1815 = vrot.lane.b32.xlu0 %v1810, 96
    %v1816 = vpop.permute.xlu0 %1815
    %1817 = vrot.lane.b32.xlu0 %v1801, 96
    %v1818 = vpop.permute.xlu0 %1817
    %1819 = vrot.lane.b32.xlu0 %v1811, 96
    %v1820 = vpop.permute.xlu0 %1819
    %1821 = vrot.lane.b32.xlu0 %v1802, 96
    %v1822 = vpop.permute.xlu0 %1821
    %1823 = vrot.lane.b32.xlu0 %v1812, 96
    %v1824 = vpop.permute.xlu0 %1823
    %1825 = vrot.lane.b32.xlu0 %v1803, 96
    %v1826 = vpop.permute.xlu0 %1825
    %vm1827 = vcmask 785408
    %v1828 = vsel %vm1827, %v1814, %v1816
    %v1829 = vsel %vm1827, %v1816, %v1818
    %v1830 = vsel %vm1827, %v1818, %v1820
    %v1831 = vsel %vm1827, %v1820, %v1822
    %v1832 = vsel %vm1827, %v1822, %v1824
    %v1833 = vsel %vm1827, %v1824, %v1826
    %v1835 = vsel %vm785, %v1805, 0
    %v1837 = vsel %vm789, %v1828, 0
    %v1839 = vsel %vm789, %v1829, 0
    %v1841 = vsel %vm789, %v1830, 0
    %v1843 = vsel %vm789, %v1831, 0
    %v1845 = vsel %vm789, %v1832, 0
    %v1847 = vsel %vm789, %v1833, 0
    %1849 = vmatprep.subr.mxu0 0.0
    %1850 = vmatpush1.msra.mxu0 0.0
    %1851 = vmatprep.subr.mxu0 0.0
    %1852 = vmatpush1.msra.mxu0 0.0
    %1853 = vmatprep.subr.mxu0 0.0
    %1854 = vmatpush1.msra.mxu0 0.0
    %1855 = vmatprep.subr.mxu0 0.0
    %1856 = vmatpush1.msra.mxu0 0.0
    %1857 = vmatprep.subr.mxu0 0.0
    %1858 = vmatpush1.msra.mxu0 0.0
    %1859 = vmatprep.subr.mxu0 0.0
    %1860 = vmatpush1.msra.mxu0 0.0
    %1861 = vmatprep.subr.mxu0 0.0
    %1862 = vmatpush1.msra.mxu0 0.0
    %1863 = vmatprep.subr.mxu0 0.0
    %1864 = vmatpush1.msra.mxu0 0.0
    %1865 = vmatprep.subr.mxu0 0.0
    %1866 = vmatpush1.msra.mxu0 0.0
    %1867 = vmatprep.subr.mxu0 0.0
    %1868 = vmatpush1.msra.mxu0 0.0
    %1869 = vmatprep.subr.mxu0 0.0
    %1870 = vmatpush1.msra.mxu0 0.0
    %1871 = vmatprep.subr.mxu0 0.0
    %1872 = vmatpush1.msra.mxu0 0.0
    %1873 = vmatprep.subr.mxu0 0.0
    %1874 = vmatpush1.msra.mxu0 0.0
    %1875 = vmatprep.subr.mxu0 0.0
    %1876 = vmatpush1.msra.mxu0 0.0
    %1877 = vmatprep.subr.mxu0 0.0
    %1878 = vmatpush1.msra.mxu0 0.0
    %1879 = vmatprep.subr.mxu0 %v1839
    %1880 = vmatpush1.msra.mxu0 %v1837
    %1881 = vmatprep.subr.mxu0 0.0
    %1882 = vmatpush2.msra.mxu0 0.0
    %1883 = vmatprep.subr.mxu0 0.0
    %1884 = vmatpush2.msra.mxu0 0.0
    %1885 = vmatprep.subr.mxu0 0.0
    %1886 = vmatpush2.msra.mxu0 0.0
    %1887 = vmatprep.subr.mxu0 0.0
    %1888 = vmatpush2.msra.mxu0 0.0
    %1889 = vmatprep.subr.mxu0 0.0
    %1890 = vmatpush2.msra.mxu0 0.0
    %1891 = vmatprep.subr.mxu0 0.0
    %1892 = vmatpush2.msra.mxu0 0.0
    %1893 = vmatprep.subr.mxu0 0.0
    %1894 = vmatpush2.msra.mxu0 0.0
    %1895 = vmatprep.subr.mxu0 0.0
    %1896 = vmatpush2.msra.mxu0 0.0
    %1897 = vmatprep.subr.mxu0 0.0
    %1898 = vmatpush2.msra.mxu0 0.0
    %1899 = vmatprep.subr.mxu0 0.0
    %1900 = vmatpush2.msra.mxu0 0.0
    %1901 = vmatprep.subr.mxu0 0.0
    %1902 = vmatpush2.msra.mxu0 0.0
    %1903 = vmatprep.subr.mxu0 0.0
    %1904 = vmatpush2.msra.mxu0 0.0
    %1905 = vmatprep.subr.mxu0 0.0
    %1906 = vmatpush2.msra.mxu0 0.0
    %1907 = vmatprep.subr.mxu0 0.0
    %1908 = vmatpush2.msra.mxu0 0.0
    %1909 = vmatprep.subr.mxu0 0.0
    %1910 = vmatpush2.msra.mxu0 0.0
    %1911 = vmatprep.subr.mxu0 0.0
    %1912 = vmatpush2.msra.mxu0 0.0
    %1913 = vmatprep.mubr.f32.mxu0 0.0
    %1914 = vmatmul.mubr.f32.gmra.mxu0 %v1835
    %v1915 = vpop.f32.mrf.mxu0
    %v1916 = vadd.f32 0.0, %v1915
    %v1917 = vpop.f32.mrf.mxu0
    %v1918 = vadd.f32 0.0, %v1917
    %1919 = vdwg.mxu0
    %1920 = vmatprep.subr.mxu0 0.0
    %1921 = vmatpush1.msra.mxu0 0.0
    %1922 = vmatprep.subr.mxu0 0.0
    %1923 = vmatpush1.msra.mxu0 0.0
    %1924 = vmatprep.subr.mxu0 0.0
    %1925 = vmatpush1.msra.mxu0 0.0
    %1926 = vmatprep.subr.mxu0 0.0
    %1927 = vmatpush1.msra.mxu0 0.0
    %1928 = vmatprep.subr.mxu0 0.0
    %1929 = vmatpush1.msra.mxu0 0.0
    %1930 = vmatprep.subr.mxu0 0.0
    %1931 = vmatpush1.msra.mxu0 0.0
    %1932 = vmatprep.subr.mxu0 0.0
    %1933 = vmatpush1.msra.mxu0 0.0
    %1934 = vmatprep.subr.mxu0 0.0
    %1935 = vmatpush1.msra.mxu0 0.0
    %1936 = vmatprep.subr.mxu0 0.0
    %1937 = vmatpush1.msra.mxu0 0.0
    %1938 = vmatprep.subr.mxu0 0.0
    %1939 = vmatpush1.msra.mxu0 0.0
    %1940 = vmatprep.subr.mxu0 0.0
    %1941 = vmatpush1.msra.mxu0 0.0
    %1942 = vmatprep.subr.mxu0 0.0
    %1943 = vmatpush1.msra.mxu0 0.0
    %1944 = vmatprep.subr.mxu0 0.0
    %1945 = vmatpush1.msra.mxu0 0.0
    %1946 = vmatprep.subr.mxu0 0.0
    %1947 = vmatpush1.msra.mxu0 0.0
    %1948 = vmatprep.subr.mxu0 0.0
    %1949 = vmatpush1.msra.mxu0 0.0
    %1950 = vmatprep.subr.mxu0 %v1843
    %1951 = vmatpush1.msra.mxu0 %v1841
    %1952 = vmatprep.subr.mxu0 0.0
    %1953 = vmatpush2.msra.mxu0 0.0
    %1954 = vmatprep.subr.mxu0 0.0
    %1955 = vmatpush2.msra.mxu0 0.0
    %1956 = vmatprep.subr.mxu0 0.0
    %1957 = vmatpush2.msra.mxu0 0.0
    %1958 = vmatprep.subr.mxu0 0.0
    %1959 = vmatpush2.msra.mxu0 0.0
    %1960 = vmatprep.subr.mxu0 0.0
    %1961 = vmatpush2.msra.mxu0 0.0
    %1962 = vmatprep.subr.mxu0 0.0
    %1963 = vmatpush2.msra.mxu0 0.0
    %1964 = vmatprep.subr.mxu0 0.0
    %1965 = vmatpush2.msra.mxu0 0.0
    %1966 = vmatprep.subr.mxu0 0.0
    %1967 = vmatpush2.msra.mxu0 0.0
    %1968 = vmatprep.subr.mxu0 0.0
    %1969 = vmatpush2.msra.mxu0 0.0
    %1970 = vmatprep.subr.mxu0 0.0
    %1971 = vmatpush2.msra.mxu0 0.0
    %1972 = vmatprep.subr.mxu0 0.0
    %1973 = vmatpush2.msra.mxu0 0.0
    %1974 = vmatprep.subr.mxu0 0.0
    %1975 = vmatpush2.msra.mxu0 0.0
    %1976 = vmatprep.subr.mxu0 0.0
    %1977 = vmatpush2.msra.mxu0 0.0
    %1978 = vmatprep.subr.mxu0 0.0
    %1979 = vmatpush2.msra.mxu0 0.0
    %1980 = vmatprep.subr.mxu0 0.0
    %1981 = vmatpush2.msra.mxu0 0.0
    %1982 = vmatprep.subr.mxu0 0.0
    %1983 = vmatpush2.msra.mxu0 0.0
    %1984 = vmatprep.mubr.f32.mxu0 0.0
    %1985 = vmatmul.mubr.f32.gmra.mxu0 %v1835
    %v1986 = vpop.f32.mrf.mxu0
    %v1987 = vadd.f32 0.0, %v1986
    %v1988 = vpop.f32.mrf.mxu0
    %v1989 = vadd.f32 0.0, %v1988
    %1990 = vdwg.mxu0
    %1991 = vmatprep.subr.mxu0 0.0
    %1992 = vmatpush1.msra.mxu0 0.0
    %1993 = vmatprep.subr.mxu0 0.0
    %1994 = vmatpush1.msra.mxu0 0.0
    %1995 = vmatprep.subr.mxu0 0.0
    %1996 = vmatpush1.msra.mxu0 0.0
    %1997 = vmatprep.subr.mxu0 0.0
    %1998 = vmatpush1.msra.mxu0 0.0
    %1999 = vmatprep.subr.mxu0 0.0
    %2000 = vmatpush1.msra.mxu0 0.0
    %2001 = vmatprep.subr.mxu0 0.0
    %2002 = vmatpush1.msra.mxu0 0.0
    %2003 = vmatprep.subr.mxu0 0.0
    %2004 = vmatpush1.msra.mxu0 0.0
    %2005 = vmatprep.subr.mxu0 0.0
    %2006 = vmatpush1.msra.mxu0 0.0
    %2007 = vmatprep.subr.mxu0 0.0
    %2008 = vmatpush1.msra.mxu0 0.0
    %2009 = vmatprep.subr.mxu0 0.0
    %2010 = vmatpush1.msra.mxu0 0.0
    %2011 = vmatprep.subr.mxu0 0.0
    %2012 = vmatpush1.msra.mxu0 0.0
    %2013 = vmatprep.subr.mxu0 0.0
    %2014 = vmatpush1.msra.mxu0 0.0
    %2015 = vmatprep.subr.mxu0 0.0
    %2016 = vmatpush1.msra.mxu0 0.0
    %2017 = vmatprep.subr.mxu0 0.0
    %2018 = vmatpush1.msra.mxu0 0.0
    %2019 = vmatprep.subr.mxu0 0.0
    %2020 = vmatpush1.msra.mxu0 0.0
    %2021 = vmatprep.subr.mxu0 %v1847
    %2022 = vmatpush1.msra.mxu0 %v1845
    %2023 = vmatprep.subr.mxu0 0.0
    %2024 = vmatpush2.msra.mxu0 0.0
    %2025 = vmatprep.subr.mxu0 0.0
    %2026 = vmatpush2.msra.mxu0 0.0
    %2027 = vmatprep.subr.mxu0 0.0
    %2028 = vmatpush2.msra.mxu0 0.0
    %2029 = vmatprep.subr.mxu0 0.0
    %2030 = vmatpush2.msra.mxu0 0.0
    %2031 = vmatprep.subr.mxu0 0.0
    %2032 = vmatpush2.msra.mxu0 0.0
    %2033 = vmatprep.subr.mxu0 0.0
    %2034 = vmatpush2.msra.mxu0 0.0
    %2035 = vmatprep.subr.mxu0 0.0
    %2036 = vmatpush2.msra.mxu0 0.0
    %2037 = vmatprep.subr.mxu0 0.0
    %2038 = vmatpush2.msra.mxu0 0.0
    %2039 = vmatprep.subr.mxu0 0.0
    %2040 = vmatpush2.msra.mxu0 0.0
    %2041 = vmatprep.subr.mxu0 0.0
    %2042 = vmatpush2.msra.mxu0 0.0
    %2043 = vmatprep.subr.mxu0 0.0
    %2044 = vmatpush2.msra.mxu0 0.0
    %2045 = vmatprep.subr.mxu0 0.0
    %2046 = vmatpush2.msra.mxu0 0.0
    %2047 = vmatprep.subr.mxu0 0.0
    %2048 = vmatpush2.msra.mxu0 0.0
    %2049 = vmatprep.subr.mxu0 0.0
    %2050 = vmatpush2.msra.mxu0 0.0
    %2051 = vmatprep.subr.mxu0 0.0
    %2052 = vmatpush2.msra.mxu0 0.0
    %2053 = vmatprep.subr.mxu0 0.0
    %2054 = vmatpush2.msra.mxu0 0.0
    %2055 = vmatprep.mubr.f32.mxu0 0.0
    %2056 = vmatmul.mubr.f32.gmra.mxu0 %v1835
    %v2057 = vpop.f32.mrf.mxu0
    %v2058 = vadd.f32 0.0, %v2057
    %v2059 = vpop.f32.mrf.mxu0
    %v2060 = vadd.f32 0.0, %v2059
    %2061 = vdwg.mxu0
    %v2062 = vadd.f32 %v1794, %v1916
    %v2063 = vadd.f32 %v1795, %v1918
    %v2064 = vadd.f32 %v1796, %v1987
    %v2065 = vadd.f32 %v1797, %v1989
    %v2066 = vadd.f32 %v1798, %v2058
    %v2067 = vadd.f32 %v1799, %v2060
    %v2068 = vld [vmem:[%s0] sm:$0xff]
    %v2069 = vld [vmem:[%s0 + $0x8] sm:$0xff]
    %v2070 = vld [vmem:[%s0 + $0x10] sm:$0xff]
    %v2071 = vld [vmem:[%s0 + $0x18] sm:$0xf]
    %s2072 = scalar_lea.vmem %s1, 40
    %v2073 = vld [vmem:[%s2072] sm:$0xff]
    %v2078 = vcombine.high %v2068, %v2068
    %v2079 = vcombine.high %v2069, %v2069
    %v2080 = vcombine.high %v2070, %v2070
    %2081 = vrot.lane.b32.xlu0 %v2068, 95
    %v2082 = vpop.permute.xlu0 %2081
    %2083 = vrot.lane.b32.xlu0 %v2078, 95
    %v2084 = vpop.permute.xlu0 %2083
    %2085 = vrot.lane.b32.xlu0 %v2069, 95
    %v2086 = vpop.permute.xlu0 %2085
    %2087 = vrot.lane.b32.xlu0 %v2079, 95
    %v2088 = vpop.permute.xlu0 %2087
    %2089 = vrot.lane.b32.xlu0 %v2070, 95
    %v2090 = vpop.permute.xlu0 %2089
    %2091 = vrot.lane.b32.xlu0 %v2080, 95
    %v2092 = vpop.permute.xlu0 %2091
    %2093 = vrot.lane.b32.xlu0 %v2071, 95
    %v2094 = vpop.permute.xlu0 %2093
    %vm2095 = vcmask 777216
    %v2096 = vsel %vm2095, %v2082, %v2084
    %v2097 = vsel %vm2095, %v2084, %v2086
    %v2098 = vsel %vm2095, %v2086, %v2088
    %v2099 = vsel %vm2095, %v2088, %v2090
    %v2100 = vsel %vm2095, %v2090, %v2092
    %v2101 = vsel %vm2095, %v2092, %v2094
    %v2103 = vsel %vm785, %v2073, 0
    %v2105 = vsel %vm789, %v2096, 0
    %v2107 = vsel %vm789, %v2097, 0
    %v2109 = vsel %vm789, %v2098, 0
    %v2111 = vsel %vm789, %v2099, 0
    %v2113 = vsel %vm789, %v2100, 0
    %v2115 = vsel %vm789, %v2101, 0
    %2117 = vmatprep.subr.mxu0 0.0
    %2118 = vmatpush1.msra.mxu0 0.0
    %2119 = vmatprep.subr.mxu0 0.0
    %2120 = vmatpush1.msra.mxu0 0.0
    %2121 = vmatprep.subr.mxu0 0.0
    %2122 = vmatpush1.msra.mxu0 0.0
    %2123 = vmatprep.subr.mxu0 0.0
    %2124 = vmatpush1.msra.mxu0 0.0
    %2125 = vmatprep.subr.mxu0 0.0
    %2126 = vmatpush1.msra.mxu0 0.0
    %2127 = vmatprep.subr.mxu0 0.0
    %2128 = vmatpush1.msra.mxu0 0.0
    %2129 = vmatprep.subr.mxu0 0.0
    %2130 = vmatpush1.msra.mxu0 0.0
    %2131 = vmatprep.subr.mxu0 0.0
    %2132 = vmatpush1.msra.mxu0 0.0
    %2133 = vmatprep.subr.mxu0 0.0
    %2134 = vmatpush1.msra.mxu0 0.0
    %2135 = vmatprep.subr.mxu0 0.0
    %2136 = vmatpush1.msra.mxu0 0.0
    %2137 = vmatprep.subr.mxu0 0.0
    %2138 = vmatpush1.msra.mxu0 0.0
    %2139 = vmatprep.subr.mxu0 0.0
    %2140 = vmatpush1.msra.mxu0 0.0
    %2141 = vmatprep.subr.mxu0 0.0
    %2142 = vmatpush1.msra.mxu0 0.0
    %2143 = vmatprep.subr.mxu0 0.0
    %2144 = vmatpush1.msra.mxu0 0.0
    %2145 = vmatprep.subr.mxu0 0.0
    %2146 = vmatpush1.msra.mxu0 0.0
    %2147 = vmatprep.subr.mxu0 %v2107
    %2148 = vmatpush1.msra.mxu0 %v2105
    %2149 = vmatprep.subr.mxu0 0.0
    %2150 = vmatpush2.msra.mxu0 0.0
    %2151 = vmatprep.subr.mxu0 0.0
    %2152 = vmatpush2.msra.mxu0 0.0
    %2153 = vmatprep.subr.mxu0 0.0
    %2154 = vmatpush2.msra.mxu0 0.0
    %2155 = vmatprep.subr.mxu0 0.0
    %2156 = vmatpush2.msra.mxu0 0.0
    %2157 = vmatprep.subr.mxu0 0.0
    %2158 = vmatpush2.msra.mxu0 0.0
    %2159 = vmatprep.subr.mxu0 0.0
    %2160 = vmatpush2.msra.mxu0 0.0
    %2161 = vmatprep.subr.mxu0 0.0
    %2162 = vmatpush2.msra.mxu0 0.0
    %2163 = vmatprep.subr.mxu0 0.0
    %2164 = vmatpush2.msra.mxu0 0.0
    %2165 = vmatprep.subr.mxu0 0.0
    %2166 = vmatpush2.msra.mxu0 0.0
    %2167 = vmatprep.subr.mxu0 0.0
    %2168 = vmatpush2.msra.mxu0 0.0
    %2169 = vmatprep.subr.mxu0 0.0
    %2170 = vmatpush2.msra.mxu0 0.0
    %2171 = vmatprep.subr.mxu0 0.0
    %2172 = vmatpush2.msra.mxu0 0.0
    %2173 = vmatprep.subr.mxu0 0.0
    %2174 = vmatpush2.msra.mxu0 0.0
    %2175 = vmatprep.subr.mxu0 0.0
    %2176 = vmatpush2.msra.mxu0 0.0
    %2177 = vmatprep.subr.mxu0 0.0
    %2178 = vmatpush2.msra.mxu0 0.0
    %2179 = vmatprep.subr.mxu0 0.0
    %2180 = vmatpush2.msra.mxu0 0.0
    %2181 = vmatprep.mubr.f32.mxu0 0.0
    %2182 = vmatmul.mubr.f32.gmra.mxu0 %v2103
    %v2183 = vpop.f32.mrf.mxu0
    %v2184 = vadd.f32 0.0, %v2183
    %v2185 = vpop.f32.mrf.mxu0
    %v2186 = vadd.f32 0.0, %v2185
    %2187 = vdwg.mxu0
    %2188 = vmatprep.subr.mxu0 0.0
    %2189 = vmatpush1.msra.mxu0 0.0
    %2190 = vmatprep.subr.mxu0 0.0
    %2191 = vmatpush1.msra.mxu0 0.0
    %2192 = vmatprep.subr.mxu0 0.0
    %2193 = vmatpush1.msra.mxu0 0.0
    %2194 = vmatprep.subr.mxu0 0.0
    %2195 = vmatpush1.msra.mxu0 0.0
    %2196 = vmatprep.subr.mxu0 0.0
    %2197 = vmatpush1.msra.mxu0 0.0
    %2198 = vmatprep.subr.mxu0 0.0
    %2199 = vmatpush1.msra.mxu0 0.0
    %2200 = vmatprep.subr.mxu0 0.0
    %2201 = vmatpush1.msra.mxu0 0.0
    %2202 = vmatprep.subr.mxu0 0.0
    %2203 = vmatpush1.msra.mxu0 0.0
    %2204 = vmatprep.subr.mxu0 0.0
    %2205 = vmatpush1.msra.mxu0 0.0
    %2206 = vmatprep.subr.mxu0 0.0
    %2207 = vmatpush1.msra.mxu0 0.0
    %2208 = vmatprep.subr.mxu0 0.0
    %2209 = vmatpush1.msra.mxu0 0.0
    %2210 = vmatprep.subr.mxu0 0.0
    %2211 = vmatpush1.msra.mxu0 0.0
    %2212 = vmatprep.subr.mxu0 0.0
    %2213 = vmatpush1.msra.mxu0 0.0
    %2214 = vmatprep.subr.mxu0 0.0
    %2215 = vmatpush1.msra.mxu0 0.0
    %2216 = vmatprep.subr.mxu0 0.0
    %2217 = vmatpush1.msra.mxu0 0.0
    %2218 = vmatprep.subr.mxu0 %v2111
    %2219 = vmatpush1.msra.mxu0 %v2109
    %2220 = vmatprep.subr.mxu0 0.0
    %2221 = vmatpush2.msra.mxu0 0.0
    %2222 = vmatprep.subr.mxu0 0.0
    %2223 = vmatpush2.msra.mxu0 0.0
    %2224 = vmatprep.subr.mxu0 0.0
    %2225 = vmatpush2.msra.mxu0 0.0
    %2226 = vmatprep.subr.mxu0 0.0
    %2227 = vmatpush2.msra.mxu0 0.0
    %2228 = vmatprep.subr.mxu0 0.0
    %2229 = vmatpush2.msra.mxu0 0.0
    %2230 = vmatprep.subr.mxu0 0.0
    %2231 = vmatpush2.msra.mxu0 0.0
    %2232 = vmatprep.subr.mxu0 0.0
    %2233 = vmatpush2.msra.mxu0 0.0
    %2234 = vmatprep.subr.mxu0 0.0
    %2235 = vmatpush2.msra.mxu0 0.0
    %2236 = vmatprep.subr.mxu0 0.0
    %2237 = vmatpush2.msra.mxu0 0.0
    %2238 = vmatprep.subr.mxu0 0.0
    %2239 = vmatpush2.msra.mxu0 0.0
    %2240 = vmatprep.subr.mxu0 0.0
    %2241 = vmatpush2.msra.mxu0 0.0
    %2242 = vmatprep.subr.mxu0 0.0
    %2243 = vmatpush2.msra.mxu0 0.0
    %2244 = vmatprep.subr.mxu0 0.0
    %2245 = vmatpush2.msra.mxu0 0.0
    %2246 = vmatprep.subr.mxu0 0.0
    %2247 = vmatpush2.msra.mxu0 0.0
    %2248 = vmatprep.subr.mxu0 0.0
    %2249 = vmatpush2.msra.mxu0 0.0
    %2250 = vmatprep.subr.mxu0 0.0
    %2251 = vmatpush2.msra.mxu0 0.0
    %2252 = vmatprep.mubr.f32.mxu0 0.0
    %2253 = vmatmul.mubr.f32.gmra.mxu0 %v2103
    %v2254 = vpop.f32.mrf.mxu0
    %v2255 = vadd.f32 0.0, %v2254
    %v2256 = vpop.f32.mrf.mxu0
    %v2257 = vadd.f32 0.0, %v2256
    %2258 = vdwg.mxu0
    %2259 = vmatprep.subr.mxu0 0.0
    %2260 = vmatpush1.msra.mxu0 0.0
    %2261 = vmatprep.subr.mxu0 0.0
    %2262 = vmatpush1.msra.mxu0 0.0
    %2263 = vmatprep.subr.mxu0 0.0
    %2264 = vmatpush1.msra.mxu0 0.0
    %2265 = vmatprep.subr.mxu0 0.0
    %2266 = vmatpush1.msra.mxu0 0.0
    %2267 = vmatprep.subr.mxu0 0.0
    %2268 = vmatpush1.msra.mxu0 0.0
    %2269 = vmatprep.subr.mxu0 0.0
    %2270 = vmatpush1.msra.mxu0 0.0
    %2271 = vmatprep.subr.mxu0 0.0
    %2272 = vmatpush1.msra.mxu0 0.0
    %2273 = vmatprep.subr.mxu0 0.0
    %2274 = vmatpush1.msra.mxu0 0.0
    %2275 = vmatprep.subr.mxu0 0.0
    %2276 = vmatpush1.msra.mxu0 0.0
    %2277 = vmatprep.subr.mxu0 0.0
    %2278 = vmatpush1.msra.mxu0 0.0
    %2279 = vmatprep.subr.mxu0 0.0
    %2280 = vmatpush1.msra.mxu0 0.0
    %2281 = vmatprep.subr.mxu0 0.0
    %2282 = vmatpush1.msra.mxu0 0.0
    %2283 = vmatprep.subr.mxu0 0.0
    %2284 = vmatpush1.msra.mxu0 0.0
    %2285 = vmatprep.subr.mxu0 0.0
    %2286 = vmatpush1.msra.mxu0 0.0
    %2287 = vmatprep.subr.mxu0 0.0
    %2288 = vmatpush1.msra.mxu0 0.0
    %2289 = vmatprep.subr.mxu0 %v2115
    %2290 = vmatpush1.msra.mxu0 %v2113
    %2291 = vmatprep.subr.mxu0 0.0
    %2292 = vmatpush2.msra.mxu0 0.0
    %2293 = vmatprep.subr.mxu0 0.0
    %2294 = vmatpush2.msra.mxu0 0.0
    %2295 = vmatprep.subr.mxu0 0.0
    %2296 = vmatpush2.msra.mxu0 0.0
    %2297 = vmatprep.subr.mxu0 0.0
    %2298 = vmatpush2.msra.mxu0 0.0
    %2299 = vmatprep.subr.mxu0 0.0
    %2300 = vmatpush2.msra.mxu0 0.0
    %2301 = vmatprep.subr.mxu0 0.0
    %2302 = vmatpush2.msra.mxu0 0.0
    %2303 = vmatprep.subr.mxu0 0.0
    %2304 = vmatpush2.msra.mxu0 0.0
    %2305 = vmatprep.subr.mxu0 0.0
    %2306 = vmatpush2.msra.mxu0 0.0
    %2307 = vmatprep.subr.mxu0 0.0
    %2308 = vmatpush2.msra.mxu0 0.0
    %2309 = vmatprep.subr.mxu0 0.0
    %2310 = vmatpush2.msra.mxu0 0.0
    %2311 = vmatprep.subr.mxu0 0.0
    %2312 = vmatpush2.msra.mxu0 0.0
    %2313 = vmatprep.subr.mxu0 0.0
    %2314 = vmatpush2.msra.mxu0 0.0
    %2315 = vmatprep.subr.mxu0 0.0
    %2316 = vmatpush2.msra.mxu0 0.0
    %2317 = vmatprep.subr.mxu0 0.0
    %2318 = vmatpush2.msra.mxu0 0.0
    %2319 = vmatprep.subr.mxu0 0.0
    %2320 = vmatpush2.msra.mxu0 0.0
    %2321 = vmatprep.subr.mxu0 0.0
    %2322 = vmatpush2.msra.mxu0 0.0
    %2323 = vmatprep.mubr.f32.mxu0 0.0
    %2324 = vmatmul.mubr.f32.gmra.mxu0 %v2103
    %v2325 = vpop.f32.mrf.mxu0
    %v2326 = vadd.f32 0.0, %v2325
    %v2327 = vpop.f32.mrf.mxu0
    %v2328 = vadd.f32 0.0, %v2327
    %2329 = vdwg.mxu0
    %v2330 = vadd.f32 %v2062, %v2184
    %v2331 = vadd.f32 %v2063, %v2186
    %v2332 = vadd.f32 %v2064, %v2255
    %v2333 = vadd.f32 %v2065, %v2257
    %v2334 = vadd.f32 %v2066, %v2326
    %v2335 = vadd.f32 %v2067, %v2328
    %v2336 = vld [vmem:[%s0] sm:$0xff]
    %v2337 = vld [vmem:[%s0 + $0x8] sm:$0xff]
    %v2338 = vld [vmem:[%s0 + $0x10] sm:$0xff]
    %v2339 = vld [vmem:[%s0 + $0x18] sm:$0xf]
    %s2340 = scalar_lea.vmem %s1, 48
    %v2341 = vld [vmem:[%s2340] sm:$0xff]
    %v2346 = vcombine.high %v2336, %v2336
    %v2347 = vcombine.high %v2337, %v2337
    %v2348 = vcombine.high %v2338, %v2338
    %2349 = vrot.lane.b32.xlu0 %v2336, 79
    %v2350 = vpop.permute.xlu0 %2349
    %2351 = vrot.lane.b32.xlu0 %v2346, 79
    %v2352 = vpop.permute.xlu0 %2351
    %2353 = vrot.lane.b32.xlu0 %v2337, 79
    %v2354 = vpop.permute.xlu0 %2353
    %2355 = vrot.lane.b32.xlu0 %v2347, 79
    %v2356 = vpop.permute.xlu0 %2355
    %2357 = vrot.lane.b32.xlu0 %v2338, 79
    %v2358 = vpop.permute.xlu0 %2357
    %2359 = vrot.lane.b32.xlu0 %v2348, 79
    %v2360 = vpop.permute.xlu0 %2359
    %2361 = vrot.lane.b32.xlu0 %v2339, 79
    %v2362 = vpop.permute.xlu0 %2361
    %vm2363 = vcmask 646144
    %v2364 = vsel %vm2363, %v2350, %v2352
    %v2365 = vsel %vm2363, %v2352, %v2354
    %v2366 = vsel %vm2363, %v2354, %v2356
    %v2367 = vsel %vm2363, %v2356, %v2358
    %v2368 = vsel %vm2363, %v2358, %v2360
    %v2369 = vsel %vm2363, %v2360, %v2362
    %v2371 = vsel %vm785, %v2341, 0
    %v2373 = vsel %vm789, %v2364, 0
    %v2375 = vsel %vm789, %v2365, 0
    %v2377 = vsel %vm789, %v2366, 0
    %v2379 = vsel %vm789, %v2367, 0
    %v2381 = vsel %vm789, %v2368, 0
    %v2383 = vsel %vm789, %v2369, 0
    %2385 = vmatprep.subr.mxu0 0.0
    %2386 = vmatpush1.msra.mxu0 0.0
    %2387 = vmatprep.subr.mxu0 0.0
    %2388 = vmatpush1.msra.mxu0 0.0
    %2389 = vmatprep.subr.mxu0 0.0
    %2390 = vmatpush1.msra.mxu0 0.0
    %2391 = vmatprep.subr.mxu0 0.0
    %2392 = vmatpush1.msra.mxu0 0.0
    %2393 = vmatprep.subr.mxu0 0.0
    %2394 = vmatpush1.msra.mxu0 0.0
    %2395 = vmatprep.subr.mxu0 0.0
    %2396 = vmatpush1.msra.mxu0 0.0
    %2397 = vmatprep.subr.mxu0 0.0
    %2398 = vmatpush1.msra.mxu0 0.0
    %2399 = vmatprep.subr.mxu0 0.0
    %2400 = vmatpush1.msra.mxu0 0.0
    %2401 = vmatprep.subr.mxu0 0.0
    %2402 = vmatpush1.msra.mxu0 0.0
    %2403 = vmatprep.subr.mxu0 0.0
    %2404 = vmatpush1.msra.mxu0 0.0
    %2405 = vmatprep.subr.mxu0 0.0
    %2406 = vmatpush1.msra.mxu0 0.0
    %2407 = vmatprep.subr.mxu0 0.0
    %2408 = vmatpush1.msra.mxu0 0.0
    %2409 = vmatprep.subr.mxu0 0.0
    %2410 = vmatpush1.msra.mxu0 0.0
    %2411 = vmatprep.subr.mxu0 0.0
    %2412 = vmatpush1.msra.mxu0 0.0
    %2413 = vmatprep.subr.mxu0 0.0
    %2414 = vmatpush1.msra.mxu0 0.0
    %2415 = vmatprep.subr.mxu0 %v2375
    %2416 = vmatpush1.msra.mxu0 %v2373
    %2417 = vmatprep.subr.mxu0 0.0
    %2418 = vmatpush2.msra.mxu0 0.0
    %2419 = vmatprep.subr.mxu0 0.0
    %2420 = vmatpush2.msra.mxu0 0.0
    %2421 = vmatprep.subr.mxu0 0.0
    %2422 = vmatpush2.msra.mxu0 0.0
    %2423 = vmatprep.subr.mxu0 0.0
    %2424 = vmatpush2.msra.mxu0 0.0
    %2425 = vmatprep.subr.mxu0 0.0
    %2426 = vmatpush2.msra.mxu0 0.0
    %2427 = vmatprep.subr.mxu0 0.0
    %2428 = vmatpush2.msra.mxu0 0.0
    %2429 = vmatprep.subr.mxu0 0.0
    %2430 = vmatpush2.msra.mxu0 0.0
    %2431 = vmatprep.subr.mxu0 0.0
    %2432 = vmatpush2.msra.mxu0 0.0
    %2433 = vmatprep.subr.mxu0 0.0
    %2434 = vmatpush2.msra.mxu0 0.0
    %2435 = vmatprep.subr.mxu0 0.0
    %2436 = vmatpush2.msra.mxu0 0.0
    %2437 = vmatprep.subr.mxu0 0.0
    %2438 = vmatpush2.msra.mxu0 0.0
    %2439 = vmatprep.subr.mxu0 0.0
    %2440 = vmatpush2.msra.mxu0 0.0
    %2441 = vmatprep.subr.mxu0 0.0
    %2442 = vmatpush2.msra.mxu0 0.0
    %2443 = vmatprep.subr.mxu0 0.0
    %2444 = vmatpush2.msra.mxu0 0.0
    %2445 = vmatprep.subr.mxu0 0.0
    %2446 = vmatpush2.msra.mxu0 0.0
    %2447 = vmatprep.subr.mxu0 0.0
    %2448 = vmatpush2.msra.mxu0 0.0
    %2449 = vmatprep.mubr.f32.mxu0 0.0
    %2450 = vmatmul.mubr.f32.gmra.mxu0 %v2371
    %v2451 = vpop.f32.mrf.mxu0
    %v2452 = vadd.f32 0.0, %v2451
    %v2453 = vpop.f32.mrf.mxu0
    %v2454 = vadd.f32 0.0, %v2453
    %2455 = vdwg.mxu0
    %2456 = vmatprep.subr.mxu0 0.0
    %2457 = vmatpush1.msra.mxu0 0.0
    %2458 = vmatprep.subr.mxu0 0.0
    %2459 = vmatpush1.msra.mxu0 0.0
    %2460 = vmatprep.subr.mxu0 0.0
    %2461 = vmatpush1.msra.mxu0 0.0
    %2462 = vmatprep.subr.mxu0 0.0
    %2463 = vmatpush1.msra.mxu0 0.0
    %2464 = vmatprep.subr.mxu0 0.0
    %2465 = vmatpush1.msra.mxu0 0.0
    %2466 = vmatprep.subr.mxu0 0.0
    %2467 = vmatpush1.msra.mxu0 0.0
    %2468 = vmatprep.subr.mxu0 0.0
    %2469 = vmatpush1.msra.mxu0 0.0
    %2470 = vmatprep.subr.mxu0 0.0
    %2471 = vmatpush1.msra.mxu0 0.0
    %2472 = vmatprep.subr.mxu0 0.0
    %2473 = vmatpush1.msra.mxu0 0.0
    %2474 = vmatprep.subr.mxu0 0.0
    %2475 = vmatpush1.msra.mxu0 0.0
    %2476 = vmatprep.subr.mxu0 0.0
    %2477 = vmatpush1.msra.mxu0 0.0
    %2478 = vmatprep.subr.mxu0 0.0
    %2479 = vmatpush1.msra.mxu0 0.0
    %2480 = vmatprep.subr.mxu0 0.0
    %2481 = vmatpush1.msra.mxu0 0.0
    %2482 = vmatprep.subr.mxu0 0.0
    %2483 = vmatpush1.msra.mxu0 0.0
    %2484 = vmatprep.subr.mxu0 0.0
    %2485 = vmatpush1.msra.mxu0 0.0
    %2486 = vmatprep.subr.mxu0 %v2379
    %2487 = vmatpush1.msra.mxu0 %v2377
    %2488 = vmatprep.subr.mxu0 0.0
    %2489 = vmatpush2.msra.mxu0 0.0
    %2490 = vmatprep.subr.mxu0 0.0
    %2491 = vmatpush2.msra.mxu0 0.0
    %2492 = vmatprep.subr.mxu0 0.0
    %2493 = vmatpush2.msra.mxu0 0.0
    %2494 = vmatprep.subr.mxu0 0.0
    %2495 = vmatpush2.msra.mxu0 0.0
    %2496 = vmatprep.subr.mxu0 0.0
    %2497 = vmatpush2.msra.mxu0 0.0
    %2498 = vmatprep.subr.mxu0 0.0
    %2499 = vmatpush2.msra.mxu0 0.0
    %2500 = vmatprep.subr.mxu0 0.0
    %2501 = vmatpush2.msra.mxu0 0.0
    %2502 = vmatprep.subr.mxu0 0.0
    %2503 = vmatpush2.msra.mxu0 0.0
    %2504 = vmatprep.subr.mxu0 0.0
    %2505 = vmatpush2.msra.mxu0 0.0
    %2506 = vmatprep.subr.mxu0 0.0
    %2507 = vmatpush2.msra.mxu0 0.0
    %2508 = vmatprep.subr.mxu0 0.0
    %2509 = vmatpush2.msra.mxu0 0.0
    %2510 = vmatprep.subr.mxu0 0.0
    %2511 = vmatpush2.msra.mxu0 0.0
    %2512 = vmatprep.subr.mxu0 0.0
    %2513 = vmatpush2.msra.mxu0 0.0
    %2514 = vmatprep.subr.mxu0 0.0
    %2515 = vmatpush2.msra.mxu0 0.0
    %2516 = vmatprep.subr.mxu0 0.0
    %2517 = vmatpush2.msra.mxu0 0.0
    %2518 = vmatprep.subr.mxu0 0.0
    %2519 = vmatpush2.msra.mxu0 0.0
    %2520 = vmatprep.mubr.f32.mxu0 0.0
    %2521 = vmatmul.mubr.f32.gmra.mxu0 %v2371
    %v2522 = vpop.f32.mrf.mxu0
    %v2523 = vadd.f32 0.0, %v2522
    %v2524 = vpop.f32.mrf.mxu0
    %v2525 = vadd.f32 0.0, %v2524
    %2526 = vdwg.mxu0
    %2527 = vmatprep.subr.mxu0 0.0
    %2528 = vmatpush1.msra.mxu0 0.0
    %2529 = vmatprep.subr.mxu0 0.0
    %2530 = vmatpush1.msra.mxu0 0.0
    %2531 = vmatprep.subr.mxu0 0.0
    %2532 = vmatpush1.msra.mxu0 0.0
    %2533 = vmatprep.subr.mxu0 0.0
    %2534 = vmatpush1.msra.mxu0 0.0
    %2535 = vmatprep.subr.mxu0 0.0
    %2536 = vmatpush1.msra.mxu0 0.0
    %2537 = vmatprep.subr.mxu0 0.0
    %2538 = vmatpush1.msra.mxu0 0.0
    %2539 = vmatprep.subr.mxu0 0.0
    %2540 = vmatpush1.msra.mxu0 0.0
    %2541 = vmatprep.subr.mxu0 0.0
    %2542 = vmatpush1.msra.mxu0 0.0
    %2543 = vmatprep.subr.mxu0 0.0
    %2544 = vmatpush1.msra.mxu0 0.0
    %2545 = vmatprep.subr.mxu0 0.0
    %2546 = vmatpush1.msra.mxu0 0.0
    %2547 = vmatprep.subr.mxu0 0.0
    %2548 = vmatpush1.msra.mxu0 0.0
    %2549 = vmatprep.subr.mxu0 0.0
    %2550 = vmatpush1.msra.mxu0 0.0
    %2551 = vmatprep.subr.mxu0 0.0
    %2552 = vmatpush1.msra.mxu0 0.0
    %2553 = vmatprep.subr.mxu0 0.0
    %2554 = vmatpush1.msra.mxu0 0.0
    %2555 = vmatprep.subr.mxu0 0.0
    %2556 = vmatpush1.msra.mxu0 0.0
    %2557 = vmatprep.subr.mxu0 %v2383
    %2558 = vmatpush1.msra.mxu0 %v2381
    %2559 = vmatprep.subr.mxu0 0.0
    %2560 = vmatpush2.msra.mxu0 0.0
    %2561 = vmatprep.subr.mxu0 0.0
    %2562 = vmatpush2.msra.mxu0 0.0
    %2563 = vmatprep.subr.mxu0 0.0
    %2564 = vmatpush2.msra.mxu0 0.0
    %2565 = vmatprep.subr.mxu0 0.0
    %2566 = vmatpush2.msra.mxu0 0.0
    %2567 = vmatprep.subr.mxu0 0.0
    %2568 = vmatpush2.msra.mxu0 0.0
    %2569 = vmatprep.subr.mxu0 0.0
    %2570 = vmatpush2.msra.mxu0 0.0
    %2571 = vmatprep.subr.mxu0 0.0
    %2572 = vmatpush2.msra.mxu0 0.0
    %2573 = vmatprep.subr.mxu0 0.0
    %2574 = vmatpush2.msra.mxu0 0.0
    %2575 = vmatprep.subr.mxu0 0.0
    %2576 = vmatpush2.msra.mxu0 0.0
    %2577 = vmatprep.subr.mxu0 0.0
    %2578 = vmatpush2.msra.mxu0 0.0
    %2579 = vmatprep.subr.mxu0 0.0
    %2580 = vmatpush2.msra.mxu0 0.0
    %2581 = vmatprep.subr.mxu0 0.0
    %2582 = vmatpush2.msra.mxu0 0.0
    %2583 = vmatprep.subr.mxu0 0.0
    %2584 = vmatpush2.msra.mxu0 0.0
    %2585 = vmatprep.subr.mxu0 0.0
    %2586 = vmatpush2.msra.mxu0 0.0
    %2587 = vmatprep.subr.mxu0 0.0
    %2588 = vmatpush2.msra.mxu0 0.0
    %2589 = vmatprep.subr.mxu0 0.0
    %2590 = vmatpush2.msra.mxu0 0.0
    %2591 = vmatprep.mubr.f32.mxu0 0.0
    %2592 = vmatmul.mubr.f32.gmra.mxu0 %v2371
    %v2593 = vpop.f32.mrf.mxu0
    %v2594 = vadd.f32 0.0, %v2593
    %v2595 = vpop.f32.mrf.mxu0
    %v2596 = vadd.f32 0.0, %v2595
    %2597 = vdwg.mxu0
    %v2598 = vadd.f32 %v2330, %v2452
    %v2599 = vadd.f32 %v2331, %v2454
    %v2600 = vadd.f32 %v2332, %v2523
    %v2601 = vadd.f32 %v2333, %v2525
    %v2602 = vadd.f32 %v2334, %v2594
    %v2603 = vadd.f32 %v2335, %v2596
    %v2604 = vld [vmem:[%s0] sm:$0xff]
    %v2605 = vld [vmem:[%s0 + $0x8] sm:$0xff]
    %v2606 = vld [vmem:[%s0 + $0x10] sm:$0xff]
    %v2607 = vld [vmem:[%s0 + $0x18] sm:$0xf]
    %s2608 = scalar_lea.vmem %s1, 56
    %v2609 = vld [vmem:[%s2608] sm:$0xff]
    %v2614 = vcombine.high %v2604, %v2604
    %v2615 = vcombine.high %v2605, %v2605
    %v2616 = vcombine.high %v2606, %v2606
    %2617 = vrot.lane.b32.xlu0 %v2604, 78
    %v2618 = vpop.permute.xlu0 %2617
    %2619 = vrot.lane.b32.xlu0 %v2614, 78
    %v2620 = vpop.permute.xlu0 %2619
    %2621 = vrot.lane.b32.xlu0 %v2605, 78
    %v2622 = vpop.permute.xlu0 %2621
    %2623 = vrot.lane.b32.xlu0 %v2615, 78
    %v2624 = vpop.permute.xlu0 %2623
    %2625 = vrot.lane.b32.xlu0 %v2606, 78
    %v2626 = vpop.permute.xlu0 %2625
    %2627 = vrot.lane.b32.xlu0 %v2616, 78
    %v2628 = vpop.permute.xlu0 %2627
    %2629 = vrot.lane.b32.xlu0 %v2607, 78
    %v2630 = vpop.permute.xlu0 %2629
    %vm2631 = vcmask 637952
    %v2632 = vsel %vm2631, %v2618, %v2620
    %v2633 = vsel %vm2631, %v2620, %v2622
    %v2634 = vsel %vm2631, %v2622, %v2624
    %v2635 = vsel %vm2631, %v2624, %v2626
    %v2636 = vsel %vm2631, %v2626, %v2628
    %v2637 = vsel %vm2631, %v2628, %v2630
    %v2639 = vsel %vm785, %v2609, 0
    %v2641 = vsel %vm789, %v2632, 0
    %v2643 = vsel %vm789, %v2633, 0
    %v2645 = vsel %vm789, %v2634, 0
    %v2647 = vsel %vm789, %v2635, 0
    %v2649 = vsel %vm789, %v2636, 0
    %v2651 = vsel %vm789, %v2637, 0
    %2653 = vmatprep.subr.mxu0 0.0
    %2654 = vmatpush1.msra.mxu0 0.0
    %2655 = vmatprep.subr.mxu0 0.0
    %2656 = vmatpush1.msra.mxu0 0.0
    %2657 = vmatprep.subr.mxu0 0.0
    %2658 = vmatpush1.msra.mxu0 0.0
    %2659 = vmatprep.subr.mxu0 0.0
    %2660 = vmatpush1.msra.mxu0 0.0
    %2661 = vmatprep.subr.mxu0 0.0
    %2662 = vmatpush1.msra.mxu0 0.0
    %2663 = vmatprep.subr.mxu0 0.0
    %2664 = vmatpush1.msra.mxu0 0.0
    %2665 = vmatprep.subr.mxu0 0.0
    %2666 = vmatpush1.msra.mxu0 0.0
    %2667 = vmatprep.subr.mxu0 0.0
    %2668 = vmatpush1.msra.mxu0 0.0
    %2669 = vmatprep.subr.mxu0 0.0
    %2670 = vmatpush1.msra.mxu0 0.0
    %2671 = vmatprep.subr.mxu0 0.0
    %2672 = vmatpush1.msra.mxu0 0.0
    %2673 = vmatprep.subr.mxu0 0.0
    %2674 = vmatpush1.msra.mxu0 0.0
    %2675 = vmatprep.subr.mxu0 0.0
    %2676 = vmatpush1.msra.mxu0 0.0
    %2677 = vmatprep.subr.mxu0 0.0
    %2678 = vmatpush1.msra.mxu0 0.0
    %2679 = vmatprep.subr.mxu0 0.0
    %2680 = vmatpush1.msra.mxu0 0.0
    %2681 = vmatprep.subr.mxu0 0.0
    %2682 = vmatpush1.msra.mxu0 0.0
    %2683 = vmatprep.subr.mxu0 %v2643
    %2684 = vmatpush1.msra.mxu0 %v2641
    %2685 = vmatprep.subr.mxu0 0.0
    %2686 = vmatpush2.msra.mxu0 0.0
    %2687 = vmatprep.subr.mxu0 0.0
    %2688 = vmatpush2.msra.mxu0 0.0
    %2689 = vmatprep.subr.mxu0 0.0
    %2690 = vmatpush2.msra.mxu0 0.0
    %2691 = vmatprep.subr.mxu0 0.0
    %2692 = vmatpush2.msra.mxu0 0.0
    %2693 = vmatprep.subr.mxu0 0.0
    %2694 = vmatpush2.msra.mxu0 0.0
    %2695 = vmatprep.subr.mxu0 0.0
    %2696 = vmatpush2.msra.mxu0 0.0
    %2697 = vmatprep.subr.mxu0 0.0
    %2698 = vmatpush2.msra.mxu0 0.0
    %2699 = vmatprep.subr.mxu0 0.0
    %2700 = vmatpush2.msra.mxu0 0.0
    %2701 = vmatprep.subr.mxu0 0.0
    %2702 = vmatpush2.msra.mxu0 0.0
    %2703 = vmatprep.subr.mxu0 0.0
    %2704 = vmatpush2.msra.mxu0 0.0
    %2705 = vmatprep.subr.mxu0 0.0
    %2706 = vmatpush2.msra.mxu0 0.0
    %2707 = vmatprep.subr.mxu0 0.0
    %2708 = vmatpush2.msra.mxu0 0.0
    %2709 = vmatprep.subr.mxu0 0.0
    %2710 = vmatpush2.msra.mxu0 0.0
    %2711 = vmatprep.subr.mxu0 0.0
    %2712 = vmatpush2.msra.mxu0 0.0
    %2713 = vmatprep.subr.mxu0 0.0
    %2714 = vmatpush2.msra.mxu0 0.0
    %2715 = vmatprep.subr.mxu0 0.0
    %2716 = vmatpush2.msra.mxu0 0.0
    %2717 = vmatprep.mubr.f32.mxu0 0.0
    %2718 = vmatmul.mubr.f32.gmra.mxu0 %v2639
    %v2719 = vpop.f32.mrf.mxu0
    %v2720 = vadd.f32 0.0, %v2719
    %v2721 = vpop.f32.mrf.mxu0
    %v2722 = vadd.f32 0.0, %v2721
    %2723 = vdwg.mxu0
    %2724 = vmatprep.subr.mxu0 0.0
    %2725 = vmatpush1.msra.mxu0 0.0
    %2726 = vmatprep.subr.mxu0 0.0
    %2727 = vmatpush1.msra.mxu0 0.0
    %2728 = vmatprep.subr.mxu0 0.0
    %2729 = vmatpush1.msra.mxu0 0.0
    %2730 = vmatprep.subr.mxu0 0.0
    %2731 = vmatpush1.msra.mxu0 0.0
    %2732 = vmatprep.subr.mxu0 0.0
    %2733 = vmatpush1.msra.mxu0 0.0
    %2734 = vmatprep.subr.mxu0 0.0
    %2735 = vmatpush1.msra.mxu0 0.0
    %2736 = vmatprep.subr.mxu0 0.0
    %2737 = vmatpush1.msra.mxu0 0.0
    %2738 = vmatprep.subr.mxu0 0.0
    %2739 = vmatpush1.msra.mxu0 0.0
    %2740 = vmatprep.subr.mxu0 0.0
    %2741 = vmatpush1.msra.mxu0 0.0
    %2742 = vmatprep.subr.mxu0 0.0
    %2743 = vmatpush1.msra.mxu0 0.0
    %2744 = vmatprep.subr.mxu0 0.0
    %2745 = vmatpush1.msra.mxu0 0.0
    %2746 = vmatprep.subr.mxu0 0.0
    %2747 = vmatpush1.msra.mxu0 0.0
    %2748 = vmatprep.subr.mxu0 0.0
    %2749 = vmatpush1.msra.mxu0 0.0
    %2750 = vmatprep.subr.mxu0 0.0
    %2751 = vmatpush1.msra.mxu0 0.0
    %2752 = vmatprep.subr.mxu0 0.0
    %2753 = vmatpush1.msra.mxu0 0.0
    %2754 = vmatprep.subr.mxu0 %v2647
    %2755 = vmatpush1.msra.mxu0 %v2645
    %2756 = vmatprep.subr.mxu0 0.0
    %2757 = vmatpush2.msra.mxu0 0.0
    %2758 = vmatprep.subr.mxu0 0.0
    %2759 = vmatpush2.msra.mxu0 0.0
    %2760 = vmatprep.subr.mxu0 0.0
    %2761 = vmatpush2.msra.mxu0 0.0
    %2762 = vmatprep.subr.mxu0 0.0
    %2763 = vmatpush2.msra.mxu0 0.0
    %2764 = vmatprep.subr.mxu0 0.0
    %2765 = vmatpush2.msra.mxu0 0.0
    %2766 = vmatprep.subr.mxu0 0.0
    %2767 = vmatpush2.msra.mxu0 0.0
    %2768 = vmatprep.subr.mxu0 0.0
    %2769 = vmatpush2.msra.mxu0 0.0
    %2770 = vmatprep.subr.mxu0 0.0
    %2771 = vmatpush2.msra.mxu0 0.0
    %2772 = vmatprep.subr.mxu0 0.0
    %2773 = vmatpush2.msra.mxu0 0.0
    %2774 = vmatprep.subr.mxu0 0.0
    %2775 = vmatpush2.msra.mxu0 0.0
    %2776 = vmatprep.subr.mxu0 0.0
    %2777 = vmatpush2.msra.mxu0 0.0
    %2778 = vmatprep.subr.mxu0 0.0
    %2779 = vmatpush2.msra.mxu0 0.0
    %2780 = vmatprep.subr.mxu0 0.0
    %2781 = vmatpush2.msra.mxu0 0.0
    %2782 = vmatprep.subr.mxu0 0.0
    %2783 = vmatpush2.msra.mxu0 0.0
    %2784 = vmatprep.subr.mxu0 0.0
    %2785 = vmatpush2.msra.mxu0 0.0
    %2786 = vmatprep.subr.mxu0 0.0
    %2787 = vmatpush2.msra.mxu0 0.0
    %2788 = vmatprep.mubr.f32.mxu0 0.0
    %2789 = vmatmul.mubr.f32.gmra.mxu0 %v2639
    %v2790 = vpop.f32.mrf.mxu0
    %v2791 = vadd.f32 0.0, %v2790
    %v2792 = vpop.f32.mrf.mxu0
    %v2793 = vadd.f32 0.0, %v2792
    %2794 = vdwg.mxu0
    %2795 = vmatprep.subr.mxu0 0.0
    %2796 = vmatpush1.msra.mxu0 0.0
    %2797 = vmatprep.subr.mxu0 0.0
    %2798 = vmatpush1.msra.mxu0 0.0
    %2799 = vmatprep.subr.mxu0 0.0
    %2800 = vmatpush1.msra.mxu0 0.0
    %2801 = vmatprep.subr.mxu0 0.0
    %2802 = vmatpush1.msra.mxu0 0.0
    %2803 = vmatprep.subr.mxu0 0.0
    %2804 = vmatpush1.msra.mxu0 0.0
    %2805 = vmatprep.subr.mxu0 0.0
    %2806 = vmatpush1.msra.mxu0 0.0
    %2807 = vmatprep.subr.mxu0 0.0
    %2808 = vmatpush1.msra.mxu0 0.0
    %2809 = vmatprep.subr.mxu0 0.0
    %2810 = vmatpush1.msra.mxu0 0.0
    %2811 = vmatprep.subr.mxu0 0.0
    %2812 = vmatpush1.msra.mxu0 0.0
    %2813 = vmatprep.subr.mxu0 0.0
    %2814 = vmatpush1.msra.mxu0 0.0
    %2815 = vmatprep.subr.mxu0 0.0
    %2816 = vmatpush1.msra.mxu0 0.0
    %2817 = vmatprep.subr.mxu0 0.0
    %2818 = vmatpush1.msra.mxu0 0.0
    %2819 = vmatprep.subr.mxu0 0.0
    %2820 = vmatpush1.msra.mxu0 0.0
    %2821 = vmatprep.subr.mxu0 0.0
    %2822 = vmatpush1.msra.mxu0 0.0
    %2823 = vmatprep.subr.mxu0 0.0
    %2824 = vmatpush1.msra.mxu0 0.0
    %2825 = vmatprep.subr.mxu0 %v2651
    %2826 = vmatpush1.msra.mxu0 %v2649
    %2827 = vmatprep.subr.mxu0 0.0
    %2828 = vmatpush2.msra.mxu0 0.0
    %2829 = vmatprep.subr.mxu0 0.0
    %2830 = vmatpush2.msra.mxu0 0.0
    %2831 = vmatprep.subr.mxu0 0.0
    %2832 = vmatpush2.msra.mxu0 0.0
    %2833 = vmatprep.subr.mxu0 0.0
    %2834 = vmatpush2.msra.mxu0 0.0
    %2835 = vmatprep.subr.mxu0 0.0
    %2836 = vmatpush2.msra.mxu0 0.0
    %2837 = vmatprep.subr.mxu0 0.0
    %2838 = vmatpush2.msra.mxu0 0.0
    %2839 = vmatprep.subr.mxu0 0.0
    %2840 = vmatpush2.msra.mxu0 0.0
    %2841 = vmatprep.subr.mxu0 0.0
    %2842 = vmatpush2.msra.mxu0 0.0
    %2843 = vmatprep.subr.mxu0 0.0
    %2844 = vmatpush2.msra.mxu0 0.0
    %2845 = vmatprep.subr.mxu0 0.0
    %2846 = vmatpush2.msra.mxu0 0.0
    %2847 = vmatprep.subr.mxu0 0.0
    %2848 = vmatpush2.msra.mxu0 0.0
    %2849 = vmatprep.subr.mxu0 0.0
    %2850 = vmatpush2.msra.mxu0 0.0
    %2851 = vmatprep.subr.mxu0 0.0
    %2852 = vmatpush2.msra.mxu0 0.0
    %2853 = vmatprep.subr.mxu0 0.0
    %2854 = vmatpush2.msra.mxu0 0.0
    %2855 = vmatprep.subr.mxu0 0.0
    %2856 = vmatpush2.msra.mxu0 0.0
    %2857 = vmatprep.subr.mxu0 0.0
    %2858 = vmatpush2.msra.mxu0 0.0
    %2859 = vmatprep.mubr.f32.mxu0 0.0
    %2860 = vmatmul.mubr.f32.gmra.mxu0 %v2639
    %v2861 = vpop.f32.mrf.mxu0
    %v2862 = vadd.f32 0.0, %v2861
    %v2863 = vpop.f32.mrf.mxu0
    %v2864 = vadd.f32 0.0, %v2863
    %2865 = vdwg.mxu0
    %v2866 = vadd.f32 %v2598, %v2720
    %v2867 = vadd.f32 %v2599, %v2722
    %v2868 = vadd.f32 %v2600, %v2791
    %v2869 = vadd.f32 %v2601, %v2793
    %v2870 = vadd.f32 %v2602, %v2862
    %v2871 = vadd.f32 %v2603, %v2864
    %v2872 = vld [vmem:[%s0] sm:$0xff]
    %v2873 = vld [vmem:[%s0 + $0x8] sm:$0xff]
    %v2874 = vld [vmem:[%s0 + $0x10] sm:$0xff]
    %v2875 = vld [vmem:[%s0 + $0x18] sm:$0xf]
    %s2876 = scalar_lea.vmem %s1, 64
    %v2877 = vld [vmem:[%s2876] sm:$0xff]
    %v2882 = vcombine.high %v2872, %v2872
    %v2883 = vcombine.high %v2873, %v2873
    %v2884 = vcombine.high %v2874, %v2874
    %2885 = vrot.lane.b32.xlu0 %v2872, 77
    %v2886 = vpop.permute.xlu0 %2885
    %2887 = vrot.lane.b32.xlu0 %v2882, 77
    %v2888 = vpop.permute.xlu0 %2887
    %2889 = vrot.lane.b32.xlu0 %v2873, 77
    %v2890 = vpop.permute.xlu0 %2889
    %2891 = vrot.lane.b32.xlu0 %v2883, 77
    %v2892 = vpop.permute.xlu0 %2891
    %2893 = vrot.lane.b32.xlu0 %v2874, 77
    %v2894 = vpop.permute.xlu0 %2893
    %2895 = vrot.lane.b32.xlu0 %v2884, 77
    %v2896 = vpop.permute.xlu0 %2895
    %2897 = vrot.lane.b32.xlu0 %v2875, 77
    %v2898 = vpop.permute.xlu0 %2897
    %vm2899 = vcmask 629760
    %v2900 = vsel %vm2899, %v2886, %v2888
    %v2901 = vsel %vm2899, %v2888, %v2890
    %v2902 = vsel %vm2899, %v2890, %v2892
    %v2903 = vsel %vm2899, %v2892, %v2894
    %v2904 = vsel %vm2899, %v2894, %v2896
    %v2905 = vsel %vm2899, %v2896, %v2898
    %v2907 = vsel %vm785, %v2877, 0
    %v2909 = vsel %vm789, %v2900, 0
    %v2911 = vsel %vm789, %v2901, 0
    %v2913 = vsel %vm789, %v2902, 0
    %v2915 = vsel %vm789, %v2903, 0
    %v2917 = vsel %vm789, %v2904, 0
    %v2919 = vsel %vm789, %v2905, 0
    %2921 = vmatprep.subr.mxu0 0.0
    %2922 = vmatpush1.msra.mxu0 0.0
    %2923 = vmatprep.subr.mxu0 0.0
    %2924 = vmatpush1.msra.mxu0 0.0
    %2925 = vmatprep.subr.mxu0 0.0
    %2926 = vmatpush1.msra.mxu0 0.0
    %2927 = vmatprep.subr.mxu0 0.0
    %2928 = vmatpush1.msra.mxu0 0.0
    %2929 = vmatprep.subr.mxu0 0.0
    %2930 = vmatpush1.msra.mxu0 0.0
    %2931 = vmatprep.subr.mxu0 0.0
    %2932 = vmatpush1.msra.mxu0 0.0
    %2933 = vmatprep.subr.mxu0 0.0
    %2934 = vmatpush1.msra.mxu0 0.0
    %2935 = vmatprep.subr.mxu0 0.0
    %2936 = vmatpush1.msra.mxu0 0.0
    %2937 = vmatprep.subr.mxu0 0.0
    %2938 = vmatpush1.msra.mxu0 0.0
    %2939 = vmatprep.subr.mxu0 0.0
    %2940 = vmatpush1.msra.mxu0 0.0
    %2941 = vmatprep.subr.mxu0 0.0
    %2942 = vmatpush1.msra.mxu0 0.0
    %2943 = vmatprep.subr.mxu0 0.0
    %2944 = vmatpush1.msra.mxu0 0.0
    %2945 = vmatprep.subr.mxu0 0.0
    %2946 = vmatpush1.msra.mxu0 0.0
    %2947 = vmatprep.subr.mxu0 0.0
    %2948 = vmatpush1.msra.mxu0 0.0
    %2949 = vmatprep.subr.mxu0 0.0
    %2950 = vmatpush1.msra.mxu0 0.0
    %2951 = vmatprep.subr.mxu0 %v2911
    %2952 = vmatpush1.msra.mxu0 %v2909
    %2953 = vmatprep.subr.mxu0 0.0
    %2954 = vmatpush2.msra.mxu0 0.0
    %2955 = vmatprep.subr.mxu0 0.0
    %2956 = vmatpush2.msra.mxu0 0.0
    %2957 = vmatprep.subr.mxu0 0.0
    %2958 = vmatpush2.msra.mxu0 0.0
    %2959 = vmatprep.subr.mxu0 0.0
    %2960 = vmatpush2.msra.mxu0 0.0
    %2961 = vmatprep.subr.mxu0 0.0
    %2962 = vmatpush2.msra.mxu0 0.0
    %2963 = vmatprep.subr.mxu0 0.0
    %2964 = vmatpush2.msra.mxu0 0.0
    %2965 = vmatprep.subr.mxu0 0.0
    %2966 = vmatpush2.msra.mxu0 0.0
    %2967 = vmatprep.subr.mxu0 0.0
    %2968 = vmatpush2.msra.mxu0 0.0
    %2969 = vmatprep.subr.mxu0 0.0
    %2970 = vmatpush2.msra.mxu0 0.0
    %2971 = vmatprep.subr.mxu0 0.0
    %2972 = vmatpush2.msra.mxu0 0.0
    %2973 = vmatprep.subr.mxu0 0.0
    %2974 = vmatpush2.msra.mxu0 0.0
    %2975 = vmatprep.subr.mxu0 0.0
    %2976 = vmatpush2.msra.mxu0 0.0
    %2977 = vmatprep.subr.mxu0 0.0
    %2978 = vmatpush2.msra.mxu0 0.0
    %2979 = vmatprep.subr.mxu0 0.0
    %2980 = vmatpush2.msra.mxu0 0.0
    %2981 = vmatprep.subr.mxu0 0.0
    %2982 = vmatpush2.msra.mxu0 0.0
    %2983 = vmatprep.subr.mxu0 0.0
    %2984 = vmatpush2.msra.mxu0 0.0
    %2985 = vmatprep.mubr.f32.mxu0 0.0
    %2986 = vmatmul.mubr.f32.gmra.mxu0 %v2907
    %v2987 = vpop.f32.mrf.mxu0
    %v2988 = vadd.f32 0.0, %v2987
    %v2989 = vpop.f32.mrf.mxu0
    %v2990 = vadd.f32 0.0, %v2989
    %2991 = vdwg.mxu0
    %2992 = vmatprep.subr.mxu0 0.0
    %2993 = vmatpush1.msra.mxu0 0.0
    %2994 = vmatprep.subr.mxu0 0.0
    %2995 = vmatpush1.msra.mxu0 0.0
    %2996 = vmatprep.subr.mxu0 0.0
    %2997 = vmatpush1.msra.mxu0 0.0
    %2998 = vmatprep.subr.mxu0 0.0
    %2999 = vmatpush1.msra.mxu0 0.0
    %3000 = vmatprep.subr.mxu0 0.0
    %3001 = vmatpush1.msra.mxu0 0.0
    %3002 = vmatprep.subr.mxu0 0.0
    %3003 = vmatpush1.msra.mxu0 0.0
    %3004 = vmatprep.subr.mxu0 0.0
    %3005 = vmatpush1.msra.mxu0 0.0
    %3006 = vmatprep.subr.mxu0 0.0
    %3007 = vmatpush1.msra.mxu0 0.0
    %3008 = vmatprep.subr.mxu0 0.0
    %3009 = vmatpush1.msra.mxu0 0.0
    %3010 = vmatprep.subr.mxu0 0.0
    %3011 = vmatpush1.msra.mxu0 0.0
    %3012 = vmatprep.subr.mxu0 0.0
    %3013 = vmatpush1.msra.mxu0 0.0
    %3014 = vmatprep.subr.mxu0 0.0
    %3015 = vmatpush1.msra.mxu0 0.0
    %3016 = vmatprep.subr.mxu0 0.0
    %3017 = vmatpush1.msra.mxu0 0.0
    %3018 = vmatprep.subr.mxu0 0.0
    %3019 = vmatpush1.msra.mxu0 0.0
    %3020 = vmatprep.subr.mxu0 0.0
    %3021 = vmatpush1.msra.mxu0 0.0
    %3022 = vmatprep.subr.mxu0 %v2915
    %3023 = vmatpush1.msra.mxu0 %v2913
    %3024 = vmatprep.subr.mxu0 0.0
    %3025 = vmatpush2.msra.mxu0 0.0
    %3026 = vmatprep.subr.mxu0 0.0
    %3027 = vmatpush2.msra.mxu0 0.0
    %3028 = vmatprep.subr.mxu0 0.0
    %3029 = vmatpush2.msra.mxu0 0.0
    %3030 = vmatprep.subr.mxu0 0.0
    %3031 = vmatpush2.msra.mxu0 0.0
    %3032 = vmatprep.subr.mxu0 0.0
    %3033 = vmatpush2.msra.mxu0 0.0
    %3034 = vmatprep.subr.mxu0 0.0
    %3035 = vmatpush2.msra.mxu0 0.0
    %3036 = vmatprep.subr.mxu0 0.0
    %3037 = vmatpush2.msra.mxu0 0.0
    %3038 = vmatprep.subr.mxu0 0.0
    %3039 = vmatpush2.msra.mxu0 0.0
    %3040 = vmatprep.subr.mxu0 0.0
    %3041 = vmatpush2.msra.mxu0 0.0
    %3042 = vmatprep.subr.mxu0 0.0
    %3043 = vmatpush2.msra.mxu0 0.0
    %3044 = vmatprep.subr.mxu0 0.0
    %3045 = vmatpush2.msra.mxu0 0.0
    %3046 = vmatprep.subr.mxu0 0.0
    %3047 = vmatpush2.msra.mxu0 0.0
    %3048 = vmatprep.subr.mxu0 0.0
    %3049 = vmatpush2.msra.mxu0 0.0
    %3050 = vmatprep.subr.mxu0 0.0
    %3051 = vmatpush2.msra.mxu0 0.0
    %3052 = vmatprep.subr.mxu0 0.0
    %3053 = vmatpush2.msra.mxu0 0.0
    %3054 = vmatprep.subr.mxu0 0.0
    %3055 = vmatpush2.msra.mxu0 0.0
    %3056 = vmatprep.mubr.f32.mxu0 0.0
    %3057 = vmatmul.mubr.f32.gmra.mxu0 %v2907
    %v3058 = vpop.f32.mrf.mxu0
    %v3059 = vadd.f32 0.0, %v3058
    %v3060 = vpop.f32.mrf.mxu0
    %v3061 = vadd.f32 0.0, %v3060
    %3062 = vdwg.mxu0
    %3063 = vmatprep.subr.mxu0 0.0
    %3064 = vmatpush1.msra.mxu0 0.0
    %3065 = vmatprep.subr.mxu0 0.0
    %3066 = vmatpush1.msra.mxu0 0.0
    %3067 = vmatprep.subr.mxu0 0.0
    %3068 = vmatpush1.msra.mxu0 0.0
    %3069 = vmatprep.subr.mxu0 0.0
    %3070 = vmatpush1.msra.mxu0 0.0
    %3071 = vmatprep.subr.mxu0 0.0
    %3072 = vmatpush1.msra.mxu0 0.0
    %3073 = vmatprep.subr.mxu0 0.0
    %3074 = vmatpush1.msra.mxu0 0.0
    %3075 = vmatprep.subr.mxu0 0.0
    %3076 = vmatpush1.msra.mxu0 0.0
    %3077 = vmatprep.subr.mxu0 0.0
    %3078 = vmatpush1.msra.mxu0 0.0
    %3079 = vmatprep.subr.mxu0 0.0
    %3080 = vmatpush1.msra.mxu0 0.0
    %3081 = vmatprep.subr.mxu0 0.0
    %3082 = vmatpush1.msra.mxu0 0.0
    %3083 = vmatprep.subr.mxu0 0.0
    %3084 = vmatpush1.msra.mxu0 0.0
    %3085 = vmatprep.subr.mxu0 0.0
    %3086 = vmatpush1.msra.mxu0 0.0
    %3087 = vmatprep.subr.mxu0 0.0
    %3088 = vmatpush1.msra.mxu0 0.0
    %3089 = vmatprep.subr.mxu0 0.0
    %3090 = vmatpush1.msra.mxu0 0.0
    %3091 = vmatprep.subr.mxu0 0.0
    %3092 = vmatpush1.msra.mxu0 0.0
    %3093 = vmatprep.subr.mxu0 %v2919
    %3094 = vmatpush1.msra.mxu0 %v2917
    %3095 = vmatprep.subr.mxu0 0.0
    %3096 = vmatpush2.msra.mxu0 0.0
    %3097 = vmatprep.subr.mxu0 0.0
    %3098 = vmatpush2.msra.mxu0 0.0
    %3099 = vmatprep.subr.mxu0 0.0
    %3100 = vmatpush2.msra.mxu0 0.0
    %3101 = vmatprep.subr.mxu0 0.0
    %3102 = vmatpush2.msra.mxu0 0.0
    %3103 = vmatprep.subr.mxu0 0.0
    %3104 = vmatpush2.msra.mxu0 0.0
    %3105 = vmatprep.subr.mxu0 0.0
    %3106 = vmatpush2.msra.mxu0 0.0
    %3107 = vmatprep.subr.mxu0 0.0
    %3108 = vmatpush2.msra.mxu0 0.0
    %3109 = vmatprep.subr.mxu0 0.0
    %3110 = vmatpush2.msra.mxu0 0.0
    %3111 = vmatprep.subr.mxu0 0.0
    %3112 = vmatpush2.msra.mxu0 0.0
    %3113 = vmatprep.subr.mxu0 0.0
    %3114 = vmatpush2.msra.mxu0 0.0
    %3115 = vmatprep.subr.mxu0 0.0
    %3116 = vmatpush2.msra.mxu0 0.0
    %3117 = vmatprep.subr.mxu0 0.0
    %3118 = vmatpush2.msra.mxu0 0.0
    %3119 = vmatprep.subr.mxu0 0.0
    %3120 = vmatpush2.msra.mxu0 0.0
    %3121 = vmatprep.subr.mxu0 0.0
    %3122 = vmatpush2.msra.mxu0 0.0
    %3123 = vmatprep.subr.mxu0 0.0
    %3124 = vmatpush2.msra.mxu0 0.0
    %3125 = vmatprep.subr.mxu0 0.0
    %3126 = vmatpush2.msra.mxu0 0.0
    %3127 = vmatprep.mubr.f32.mxu0 0.0
    %3128 = vmatmul.mubr.f32.gmra.mxu0 %v2907
    %v3129 = vpop.f32.mrf.mxu0
    %v3130 = vadd.f32 0.0, %v3129
    %v3131 = vpop.f32.mrf.mxu0
    %v3132 = vadd.f32 0.0, %v3131
    %3133 = vdwg.mxu0
    %v3134 = vadd.f32 %v2866, %v2988
    %v3135 = vadd.f32 %v2867, %v2990
    %v3136 = vadd.f32 %v2868, %v3059
    %v3137 = vadd.f32 %v2869, %v3061
    %v3138 = vadd.f32 %v2870, %v3130
    %v3139 = vadd.f32 %v2871, %v3132
    %v3140 = vld [vmem:[%s2] sm:$0xff]
    %3142 = vset.pattern.permute.xlu0 0
    %3143 = vperm.xlu0 %3142, %v3140
    %v3144 = vpop.permute.xlu0 %3143
    %v3146 = vadd.f32 %v3134, %v3144
    %v3147 = vadd.f32 %v3135, %v3144
    %v3148 = vadd.f32 %v3136, %v3144
    %v3149 = vadd.f32 %v3137, %v3144
    %v3150 = vadd.f32 %v3138, %v3144
    %v3151 = vadd.f32 %v3139, %v3144
    %v3152 = vmax.f32 %v3146, 0.0
    %v3153 = vmax.f32 %v3147, 0.0
    %v3154 = vmax.f32 %v3148, 0.0
    %v3155 = vmax.f32 %v3149, 0.0
    %v3156 = vmax.f32 %v3150, 0.0
    %v3157 = vmax.f32 %v3151, 0.0
    %v3158 = vld [vmem:[%s7] sm:$0x3f]
    %v3160 = vlaneseq
    %v3161 = vshrl.u32 %v3160, 7
    %v3162 = vsub.s32 0, %v3161
    %v3163 = vrot.slane %v3158, %v3162
    %v3164 = vlaneseq
    %v3165 = vshrl.u32 %v3164, 7
    %v3166 = vsub.s32 1, %v3165
    %v3167 = vrot.slane %v3158, %v3166
    %v3168 = vlaneseq
    %v3169 = vshrl.u32 %v3168, 7
    %v3170 = vsub.s32 2, %v3169
    %v3171 = vrot.slane %v3158, %v3170
    %v3172 = vlaneseq
    %v3173 = vshrl.u32 %v3172, 7
    %v3174 = vsub.s32 3, %v3173
    %v3175 = vrot.slane %v3158, %v3174
    %v3176 = vlaneseq
    %v3177 = vshrl.u32 %v3176, 7
    %v3178 = vsub.s32 4, %v3177
    %v3179 = vrot.slane %v3158, %v3178
    %v3180 = vlaneseq
    %v3181 = vshrl.u32 %v3180, 7
    %v3182 = vsub.s32 5, %v3181
    %v3183 = vrot.slane %v3158, %v3182
    %v3190 = vmul.f32 %v3152, %v3163
    %v3191 = vmul.f32 %v3153, %v3167
    %v3192 = vmul.f32 %v3154, %v3171
    %v3193 = vmul.f32 %v3155, %v3175
    %v3194 = vmul.f32 %v3156, %v3179
    %v3195 = vmul.f32 %v3157, %v3183
    %3196 = vst [vmem:[#allocation2] sm:$0xff] %v3190
    %3197 = vst [vmem:[#allocation2 + $0x8] sm:$0xff] %v3191
    %3198 = vst [vmem:[#allocation2 + $0x10] sm:$0xff] %v3192
    %3199 = vst [vmem:[#allocation2 + $0x18] sm:$0xff] %v3193
    %3200 = vst [vmem:[#allocation2 + $0x20] sm:$0xff] %v3194
    %3201 = vst [vmem:[#allocation2 + $0x28] sm:$0xff] %v3195
    %v3202 = vld [vmem:[#allocation2] sm:$0xff]
    %v3203 = vld [vmem:[#allocation2 + $0x8] sm:$0xff]
    %v3204 = vld [vmem:[#allocation2 + $0x10] sm:$0xff]
    %v3205 = vld [vmem:[#allocation2 + $0x18] sm:$0xff]
    %v3206 = vld [vmem:[#allocation2 + $0x20] sm:$0xff]
    %v3207 = vld [vmem:[#allocation2 + $0x28] sm:$0xff]
    %v3208 = vld [vmem:[%s3] sm:$0xff]
    %s3209 = scalar_lea.vmem %s3, 8
    %v3210 = vld [vmem:[%s3209] sm:$0xff]
    %3217 = vrot.lane.b32.xlu0 %v3202, 114
    %v3218 = vpop.permute.xlu0 %3217
    %3219 = vrot.lane.b32.xlu0 %v3203, 114
    %v3220 = vpop.permute.xlu0 %3219
    %3221 = vrot.lane.b32.xlu0 %v3204, 114
    %v3222 = vpop.permute.xlu0 %3221
    %3223 = vrot.lane.b32.xlu0 %v3205, 114
    %v3224 = vpop.permute.xlu0 %3223
    %3225 = vrot.lane.b32.xlu0 %v3206, 114
    %v3226 = vpop.permute.xlu0 %3225
    %3227 = vrot.lane.b32.xlu0 %v3207, 114
    %v3228 = vpop.permute.xlu0 %3227
    %v3229 = vsel %vm778, %v3218, %v3220
    %v3230 = vsel %vm778, %v3220, %v3222
    %v3231 = vsel %vm778, %v3222, %v3224
    %v3232 = vsel %vm778, %v3224, %v3226
    %v3233 = vsel %vm778, %v3226, %v3228
    %vm3240 = vcmask 64512
    %v3242 = vsel %vm3240, %v3210, 0
    %3244 = vmatprep.subr.mxu0 0.0
    %3245 = vmatpush1.msra.mxu0 0.0
    %3246 = vmatprep.subr.mxu0 0.0
    %3247 = vmatpush1.msra.mxu0 0.0
    %3248 = vmatprep.subr.mxu0 0.0
    %3249 = vmatpush1.msra.mxu0 0.0
    %3250 = vmatprep.subr.mxu0 0.0
    %3251 = vmatpush1.msra.mxu0 0.0
    %3252 = vmatprep.subr.mxu0 0.0
    %3253 = vmatpush1.msra.mxu0 0.0
    %3254 = vmatprep.subr.mxu0 0.0
    %3255 = vmatpush1.msra.mxu0 0.0
    %3256 = vmatprep.subr.mxu0 0.0
    %3257 = vmatpush1.msra.mxu0 0.0
    %3258 = vmatprep.subr.mxu0 0.0
    %3259 = vmatpush1.msra.mxu0 0.0
    %3260 = vmatprep.subr.mxu0 0.0
    %3261 = vmatpush1.msra.mxu0 0.0
    %3262 = vmatprep.subr.mxu0 0.0
    %3263 = vmatpush1.msra.mxu0 0.0
    %3264 = vmatprep.subr.mxu0 0.0
    %3265 = vmatpush1.msra.mxu0 0.0
    %3266 = vmatprep.subr.mxu0 0.0
    %3267 = vmatpush1.msra.mxu0 0.0
    %3268 = vmatprep.subr.mxu0 0.0
    %3269 = vmatpush1.msra.mxu0 0.0
    %3270 = vmatprep.subr.mxu0 0.0
    %3271 = vmatpush1.msra.mxu0 0.0
    %3272 = vmatprep.subr.mxu0 0.0
    %3273 = vmatpush1.msra.mxu0 0.0
    %3274 = vmatprep.subr.mxu0 %v3230
    %3275 = vmatpush1.msra.mxu0 %v3229
    %3276 = vmatprep.subr.mxu0 0.0
    %3277 = vmatpush2.msra.mxu0 0.0
    %3278 = vmatprep.subr.mxu0 0.0
    %3279 = vmatpush2.msra.mxu0 0.0
    %3280 = vmatprep.subr.mxu0 0.0
    %3281 = vmatpush2.msra.mxu0 0.0
    %3282 = vmatprep.subr.mxu0 0.0
    %3283 = vmatpush2.msra.mxu0 0.0
    %3284 = vmatprep.subr.mxu0 0.0
    %3285 = vmatpush2.msra.mxu0 0.0
    %3286 = vmatprep.subr.mxu0 0.0
    %3287 = vmatpush2.msra.mxu0 0.0
    %3288 = vmatprep.subr.mxu0 0.0
    %3289 = vmatpush2.msra.mxu0 0.0
    %3290 = vmatprep.subr.mxu0 0.0
    %3291 = vmatpush2.msra.mxu0 0.0
    %3292 = vmatprep.subr.mxu0 0.0
    %3293 = vmatpush2.msra.mxu0 0.0
    %3294 = vmatprep.subr.mxu0 0.0
    %3295 = vmatpush2.msra.mxu0 0.0
    %3296 = vmatprep.subr.mxu0 0.0
    %3297 = vmatpush2.msra.mxu0 0.0
    %3298 = vmatprep.subr.mxu0 0.0
    %3299 = vmatpush2.msra.mxu0 0.0
    %3300 = vmatprep.subr.mxu0 0.0
    %3301 = vmatpush2.msra.mxu0 0.0
    %3302 = vmatprep.subr.mxu0 0.0
    %3303 = vmatpush2.msra.mxu0 0.0
    %3304 = vmatprep.subr.mxu0 0.0
    %3305 = vmatpush2.msra.mxu0 0.0
    %3306 = vmatprep.subr.mxu0 0.0
    %3307 = vmatpush2.msra.mxu0 0.0
    %3308 = vmatprep.mubr.f32.mxu0 0.0
    %3309 = vmatmul.mubr.f32.gmra.mxu0 %v3242
    %v3310 = vpop.f32.mrf.mxu0
    %v3311 = vadd.f32 0.0, %v3310
    %v3312 = vpop.f32.mrf.mxu0
    %v3313 = vadd.f32 0.0, %v3312
    %3314 = vdwg.mxu0
    %3315 = vmatprep.subr.mxu0 0.0
    %3316 = vmatpush1.msra.mxu0 0.0
    %3317 = vmatprep.subr.mxu0 0.0
    %3318 = vmatpush1.msra.mxu0 0.0
    %3319 = vmatprep.subr.mxu0 0.0
    %3320 = vmatpush1.msra.mxu0 0.0
    %3321 = vmatprep.subr.mxu0 0.0
    %3322 = vmatpush1.msra.mxu0 0.0
    %3323 = vmatprep.subr.mxu0 0.0
    %3324 = vmatpush1.msra.mxu0 0.0
    %3325 = vmatprep.subr.mxu0 0.0
    %3326 = vmatpush1.msra.mxu0 0.0
    %3327 = vmatprep.subr.mxu0 0.0
    %3328 = vmatpush1.msra.mxu0 0.0
    %3329 = vmatprep.subr.mxu0 0.0
    %3330 = vmatpush1.msra.mxu0 0.0
    %3331 = vmatprep.subr.mxu0 0.0
    %3332 = vmatpush1.msra.mxu0 0.0
    %3333 = vmatprep.subr.mxu0 0.0
    %3334 = vmatpush1.msra.mxu0 0.0
    %3335 = vmatprep.subr.mxu0 0.0
    %3336 = vmatpush1.msra.mxu0 0.0
    %3337 = vmatprep.subr.mxu0 0.0
    %3338 = vmatpush1.msra.mxu0 0.0
    %3339 = vmatprep.subr.mxu0 0.0
    %3340 = vmatpush1.msra.mxu0 0.0
    %3341 = vmatprep.subr.mxu0 0.0
    %3342 = vmatpush1.msra.mxu0 0.0
    %3343 = vmatprep.subr.mxu0 0.0
    %3344 = vmatpush1.msra.mxu0 0.0
    %3345 = vmatprep.subr.mxu0 %v3232
    %3346 = vmatpush1.msra.mxu0 %v3231
    %3347 = vmatprep.subr.mxu0 0.0
    %3348 = vmatpush2.msra.mxu0 0.0
    %3349 = vmatprep.subr.mxu0 0.0
    %3350 = vmatpush2.msra.mxu0 0.0
    %3351 = vmatprep.subr.mxu0 0.0
    %3352 = vmatpush2.msra.mxu0 0.0
    %3353 = vmatprep.subr.mxu0 0.0
    %3354 = vmatpush2.msra.mxu0 0.0
    %3355 = vmatprep.subr.mxu0 0.0
    %3356 = vmatpush2.msra.mxu0 0.0
    %3357 = vmatprep.subr.mxu0 0.0
    %3358 = vmatpush2.msra.mxu0 0.0
    %3359 = vmatprep.subr.mxu0 0.0
    %3360 = vmatpush2.msra.mxu0 0.0
    %3361 = vmatprep.subr.mxu0 0.0
    %3362 = vmatpush2.msra.mxu0 0.0
    %3363 = vmatprep.subr.mxu0 0.0
    %3364 = vmatpush2.msra.mxu0 0.0
    %3365 = vmatprep.subr.mxu0 0.0
    %3366 = vmatpush2.msra.mxu0 0.0
    %3367 = vmatprep.subr.mxu0 0.0
    %3368 = vmatpush2.msra.mxu0 0.0
    %3369 = vmatprep.subr.mxu0 0.0
    %3370 = vmatpush2.msra.mxu0 0.0
    %3371 = vmatprep.subr.mxu0 0.0
    %3372 = vmatpush2.msra.mxu0 0.0
    %3373 = vmatprep.subr.mxu0 0.0
    %3374 = vmatpush2.msra.mxu0 0.0
    %3375 = vmatprep.subr.mxu0 0.0
    %3376 = vmatpush2.msra.mxu0 0.0
    %3377 = vmatprep.subr.mxu0 0.0
    %3378 = vmatpush2.msra.mxu0 0.0
    %3379 = vmatprep.mubr.f32.mxu0 0.0
    %3380 = vmatmul.mubr.f32.gmra.mxu0 %v3242
    %v3381 = vpop.f32.mrf.mxu0
    %v3382 = vadd.f32 0.0, %v3381
    %v3383 = vpop.f32.mrf.mxu0
    %v3384 = vadd.f32 0.0, %v3383
    %3385 = vdwg.mxu0
    %3386 = vmatprep.subr.mxu0 0.0
    %3387 = vmatpush1.msra.mxu0 0.0
    %3388 = vmatprep.subr.mxu0 0.0
    %3389 = vmatpush1.msra.mxu0 0.0
    %3390 = vmatprep.subr.mxu0 0.0
    %3391 = vmatpush1.msra.mxu0 0.0
    %3392 = vmatprep.subr.mxu0 0.0
    %3393 = vmatpush1.msra.mxu0 0.0
    %3394 = vmatprep.subr.mxu0 0.0
    %3395 = vmatpush1.msra.mxu0 0.0
    %3396 = vmatprep.subr.mxu0 0.0
    %3397 = vmatpush1.msra.mxu0 0.0
    %3398 = vmatprep.subr.mxu0 0.0
    %3399 = vmatpush1.msra.mxu0 0.0
    %3400 = vmatprep.subr.mxu0 0.0
    %3401 = vmatpush1.msra.mxu0 0.0
    %3402 = vmatprep.subr.mxu0 0.0
    %3403 = vmatpush1.msra.mxu0 0.0
    %3404 = vmatprep.subr.mxu0 0.0
    %3405 = vmatpush1.msra.mxu0 0.0
    %3406 = vmatprep.subr.mxu0 0.0
    %3407 = vmatpush1.msra.mxu0 0.0
    %3408 = vmatprep.subr.mxu0 0.0
    %3409 = vmatpush1.msra.mxu0 0.0
    %3410 = vmatprep.subr.mxu0 0.0
    %3411 = vmatpush1.msra.mxu0 0.0
    %3412 = vmatprep.subr.mxu0 0.0
    %3413 = vmatpush1.msra.mxu0 0.0
    %3414 = vmatprep.subr.mxu0 0.0
    %3415 = vmatpush1.msra.mxu0 0.0
    %3416 = vmatprep.subr.mxu0 %v3228
    %3417 = vmatpush1.msra.mxu0 %v3233
    %3418 = vmatprep.subr.mxu0 0.0
    %3419 = vmatpush2.msra.mxu0 0.0
    %3420 = vmatprep.subr.mxu0 0.0
    %3421 = vmatpush2.msra.mxu0 0.0
    %3422 = vmatprep.subr.mxu0 0.0
    %3423 = vmatpush2.msra.mxu0 0.0
    %3424 = vmatprep.subr.mxu0 0.0
    %3425 = vmatpush2.msra.mxu0 0.0
    %3426 = vmatprep.subr.mxu0 0.0
    %3427 = vmatpush2.msra.mxu0 0.0
    %3428 = vmatprep.subr.mxu0 0.0
    %3429 = vmatpush2.msra.mxu0 0.0
    %3430 = vmatprep.subr.mxu0 0.0
    %3431 = vmatpush2.msra.mxu0 0.0
    %3432 = vmatprep.subr.mxu0 0.0
    %3433 = vmatpush2.msra.mxu0 0.0
    %3434 = vmatprep.subr.mxu0 0.0
    %3435 = vmatpush2.msra.mxu0 0.0
    %3436 = vmatprep.subr.mxu0 0.0
    %3437 = vmatpush2.msra.mxu0 0.0
    %3438 = vmatprep.subr.mxu0 0.0
    %3439 = vmatpush2.msra.mxu0 0.0
    %3440 = vmatprep.subr.mxu0 0.0
    %3441 = vmatpush2.msra.mxu0 0.0
    %3442 = vmatprep.subr.mxu0 0.0
    %3443 = vmatpush2.msra.mxu0 0.0
    %3444 = vmatprep.subr.mxu0 0.0
    %3445 = vmatpush2.msra.mxu0 0.0
    %3446 = vmatprep.subr.mxu0 0.0
    %3447 = vmatpush2.msra.mxu0 0.0
    %3448 = vmatprep.subr.mxu0 0.0
    %3449 = vmatpush2.msra.mxu0 0.0
    %3450 = vmatprep.mubr.f32.mxu0 0.0
    %3451 = vmatmul.mubr.f32.gmra.mxu0 %v3242
    %v3452 = vpop.f32.mrf.mxu0
    %v3453 = vadd.f32 0.0, %v3452
    %v3454 = vpop.f32.mrf.mxu0
    %v3455 = vadd.f32 0.0, %v3454
    %3456 = vdwg.mxu0
    %3457 = vrot.lane.b32.xlu0 %v3202, 115
    %v3458 = vpop.permute.xlu0 %3457
    %3459 = vrot.lane.b32.xlu0 %v3203, 115
    %v3460 = vpop.permute.xlu0 %3459
    %3461 = vrot.lane.b32.xlu0 %v3204, 115
    %v3462 = vpop.permute.xlu0 %3461
    %3463 = vrot.lane.b32.xlu0 %v3205, 115
    %v3464 = vpop.permute.xlu0 %3463
    %3465 = vrot.lane.b32.xlu0 %v3206, 115
    %v3466 = vpop.permute.xlu0 %3465
    %3467 = vrot.lane.b32.xlu0 %v3207, 115
    %v3468 = vpop.permute.xlu0 %3467
    %v3469 = vsel %vm1029, %v3458, %v3460
    %v3470 = vsel %vm1029, %v3460, %v3462
    %v3471 = vsel %vm1029, %v3462, %v3464
    %v3472 = vsel %vm1029, %v3464, %v3466
    %v3473 = vsel %vm1029, %v3466, %v3468
    %v3481 = vsel %vm3240, %v3208, 0
    %3483 = vmatprep.subr.mxu0 0.0
    %3484 = vmatpush1.msra.mxu0 0.0
    %3485 = vmatprep.subr.mxu0 0.0
    %3486 = vmatpush1.msra.mxu0 0.0
    %3487 = vmatprep.subr.mxu0 0.0
    %3488 = vmatpush1.msra.mxu0 0.0
    %3489 = vmatprep.subr.mxu0 0.0
    %3490 = vmatpush1.msra.mxu0 0.0
    %3491 = vmatprep.subr.mxu0 0.0
    %3492 = vmatpush1.msra.mxu0 0.0
    %3493 = vmatprep.subr.mxu0 0.0
    %3494 = vmatpush1.msra.mxu0 0.0
    %3495 = vmatprep.subr.mxu0 0.0
    %3496 = vmatpush1.msra.mxu0 0.0
    %3497 = vmatprep.subr.mxu0 0.0
    %3498 = vmatpush1.msra.mxu0 0.0
    %3499 = vmatprep.subr.mxu0 0.0
    %3500 = vmatpush1.msra.mxu0 0.0
    %3501 = vmatprep.subr.mxu0 0.0
    %3502 = vmatpush1.msra.mxu0 0.0
    %3503 = vmatprep.subr.mxu0 0.0
    %3504 = vmatpush1.msra.mxu0 0.0
    %3505 = vmatprep.subr.mxu0 0.0
    %3506 = vmatpush1.msra.mxu0 0.0
    %3507 = vmatprep.subr.mxu0 0.0
    %3508 = vmatpush1.msra.mxu0 0.0
    %3509 = vmatprep.subr.mxu0 0.0
    %3510 = vmatpush1.msra.mxu0 0.0
    %3511 = vmatprep.subr.mxu0 0.0
    %3512 = vmatpush1.msra.mxu0 0.0
    %3513 = vmatprep.subr.mxu0 %v3470
    %3514 = vmatpush1.msra.mxu0 %v3469
    %3515 = vmatprep.subr.mxu0 0.0
    %3516 = vmatpush2.msra.mxu0 0.0
    %3517 = vmatprep.subr.mxu0 0.0
    %3518 = vmatpush2.msra.mxu0 0.0
    %3519 = vmatprep.subr.mxu0 0.0
    %3520 = vmatpush2.msra.mxu0 0.0
    %3521 = vmatprep.subr.mxu0 0.0
    %3522 = vmatpush2.msra.mxu0 0.0
    %3523 = vmatprep.subr.mxu0 0.0
    %3524 = vmatpush2.msra.mxu0 0.0
    %3525 = vmatprep.subr.mxu0 0.0
    %3526 = vmatpush2.msra.mxu0 0.0
    %3527 = vmatprep.subr.mxu0 0.0
    %3528 = vmatpush2.msra.mxu0 0.0
    %3529 = vmatprep.subr.mxu0 0.0
    %3530 = vmatpush2.msra.mxu0 0.0
    %3531 = vmatprep.subr.mxu0 0.0
    %3532 = vmatpush2.msra.mxu0 0.0
    %3533 = vmatprep.subr.mxu0 0.0
    %3534 = vmatpush2.msra.mxu0 0.0
    %3535 = vmatprep.subr.mxu0 0.0
    %3536 = vmatpush2.msra.mxu0 0.0
    %3537 = vmatprep.subr.mxu0 0.0
    %3538 = vmatpush2.msra.mxu0 0.0
    %3539 = vmatprep.subr.mxu0 0.0
    %3540 = vmatpush2.msra.mxu0 0.0
    %3541 = vmatprep.subr.mxu0 0.0
    %3542 = vmatpush2.msra.mxu0 0.0
    %3543 = vmatprep.subr.mxu0 0.0
    %3544 = vmatpush2.msra.mxu0 0.0
    %3545 = vmatprep.subr.mxu0 0.0
    %3546 = vmatpush2.msra.mxu0 0.0
    %3547 = vmatprep.mubr.f32.mxu0 0.0
    %3548 = vmatmul.mubr.f32.gmra.mxu0 %v3481
    %v3549 = vpop.f32.mrf.mxu0
    %v3550 = vadd.f32 %v3311, %v3549
    %v3551 = vpop.f32.mrf.mxu0
    %v3552 = vadd.f32 %v3313, %v3551
    %3553 = vdwg.mxu0
    %3554 = vmatprep.subr.mxu0 0.0
    %3555 = vmatpush1.msra.mxu0 0.0
    %3556 = vmatprep.subr.mxu0 0.0
    %3557 = vmatpush1.msra.mxu0 0.0
    %3558 = vmatprep.subr.mxu0 0.0
    %3559 = vmatpush1.msra.mxu0 0.0
    %3560 = vmatprep.subr.mxu0 0.0
    %3561 = vmatpush1.msra.mxu0 0.0
    %3562 = vmatprep.subr.mxu0 0.0
    %3563 = vmatpush1.msra.mxu0 0.0
    %3564 = vmatprep.subr.mxu0 0.0
    %3565 = vmatpush1.msra.mxu0 0.0
    %3566 = vmatprep.subr.mxu0 0.0
    %3567 = vmatpush1.msra.mxu0 0.0
    %3568 = vmatprep.subr.mxu0 0.0
    %3569 = vmatpush1.msra.mxu0 0.0
    %3570 = vmatprep.subr.mxu0 0.0
    %3571 = vmatpush1.msra.mxu0 0.0
    %3572 = vmatprep.subr.mxu0 0.0
    %3573 = vmatpush1.msra.mxu0 0.0
    %3574 = vmatprep.subr.mxu0 0.0
    %3575 = vmatpush1.msra.mxu0 0.0
    %3576 = vmatprep.subr.mxu0 0.0
    %3577 = vmatpush1.msra.mxu0 0.0
    %3578 = vmatprep.subr.mxu0 0.0
    %3579 = vmatpush1.msra.mxu0 0.0
    %3580 = vmatprep.subr.mxu0 0.0
    %3581 = vmatpush1.msra.mxu0 0.0
    %3582 = vmatprep.subr.mxu0 0.0
    %3583 = vmatpush1.msra.mxu0 0.0
    %3584 = vmatprep.subr.mxu0 %v3472
    %3585 = vmatpush1.msra.mxu0 %v3471
    %3586 = vmatprep.subr.mxu0 0.0
    %3587 = vmatpush2.msra.mxu0 0.0
    %3588 = vmatprep.subr.mxu0 0.0
    %3589 = vmatpush2.msra.mxu0 0.0
    %3590 = vmatprep.subr.mxu0 0.0
    %3591 = vmatpush2.msra.mxu0 0.0
    %3592 = vmatprep.subr.mxu0 0.0
    %3593 = vmatpush2.msra.mxu0 0.0
    %3594 = vmatprep.subr.mxu0 0.0
    %3595 = vmatpush2.msra.mxu0 0.0
    %3596 = vmatprep.subr.mxu0 0.0
    %3597 = vmatpush2.msra.mxu0 0.0
    %3598 = vmatprep.subr.mxu0 0.0
    %3599 = vmatpush2.msra.mxu0 0.0
    %3600 = vmatprep.subr.mxu0 0.0
    %3601 = vmatpush2.msra.mxu0 0.0
    %3602 = vmatprep.subr.mxu0 0.0
    %3603 = vmatpush2.msra.mxu0 0.0
    %3604 = vmatprep.subr.mxu0 0.0
    %3605 = vmatpush2.msra.mxu0 0.0
    %3606 = vmatprep.subr.mxu0 0.0
    %3607 = vmatpush2.msra.mxu0 0.0
    %3608 = vmatprep.subr.mxu0 0.0
    %3609 = vmatpush2.msra.mxu0 0.0
    %3610 = vmatprep.subr.mxu0 0.0
    %3611 = vmatpush2.msra.mxu0 0.0
    %3612 = vmatprep.subr.mxu0 0.0
    %3613 = vmatpush2.msra.mxu0 0.0
    %3614 = vmatprep.subr.mxu0 0.0
    %3615 = vmatpush2.msra.mxu0 0.0
    %3616 = vmatprep.subr.mxu0 0.0
    %3617 = vmatpush2.msra.mxu0 0.0
    %3618 = vmatprep.mubr.f32.mxu0 0.0
    %3619 = vmatmul.mubr.f32.gmra.mxu0 %v3481
    %v3620 = vpop.f32.mrf.mxu0
    %v3621 = vadd.f32 %v3382, %v3620
    %v3622 = vpop.f32.mrf.mxu0
    %v3623 = vadd.f32 %v3384, %v3622
    %3624 = vdwg.mxu0
    %3625 = vmatprep.subr.mxu0 0.0
    %3626 = vmatpush1.msra.mxu0 0.0
    %3627 = vmatprep.subr.mxu0 0.0
    %3628 = vmatpush1.msra.mxu0 0.0
    %3629 = vmatprep.subr.mxu0 0.0
    %3630 = vmatpush1.msra.mxu0 0.0
    %3631 = vmatprep.subr.mxu0 0.0
    %3632 = vmatpush1.msra.mxu0 0.0
    %3633 = vmatprep.subr.mxu0 0.0
    %3634 = vmatpush1.msra.mxu0 0.0
    %3635 = vmatprep.subr.mxu0 0.0
    %3636 = vmatpush1.msra.mxu0 0.0
    %3637 = vmatprep.subr.mxu0 0.0
    %3638 = vmatpush1.msra.mxu0 0.0
    %3639 = vmatprep.subr.mxu0 0.0
    %3640 = vmatpush1.msra.mxu0 0.0
    %3641 = vmatprep.subr.mxu0 0.0
    %3642 = vmatpush1.msra.mxu0 0.0
    %3643 = vmatprep.subr.mxu0 0.0
    %3644 = vmatpush1.msra.mxu0 0.0
    %3645 = vmatprep.subr.mxu0 0.0
    %3646 = vmatpush1.msra.mxu0 0.0
    %3647 = vmatprep.subr.mxu0 0.0
    %3648 = vmatpush1.msra.mxu0 0.0
    %3649 = vmatprep.subr.mxu0 0.0
    %3650 = vmatpush1.msra.mxu0 0.0
    %3651 = vmatprep.subr.mxu0 0.0
    %3652 = vmatpush1.msra.mxu0 0.0
    %3653 = vmatprep.subr.mxu0 0.0
    %3654 = vmatpush1.msra.mxu0 0.0
    %3655 = vmatprep.subr.mxu0 %v3468
    %3656 = vmatpush1.msra.mxu0 %v3473
    %3657 = vmatprep.subr.mxu0 0.0
    %3658 = vmatpush2.msra.mxu0 0.0
    %3659 = vmatprep.subr.mxu0 0.0
    %3660 = vmatpush2.msra.mxu0 0.0
    %3661 = vmatprep.subr.mxu0 0.0
    %3662 = vmatpush2.msra.mxu0 0.0
    %3663 = vmatprep.subr.mxu0 0.0
    %3664 = vmatpush2.msra.mxu0 0.0
    %3665 = vmatprep.subr.mxu0 0.0
    %3666 = vmatpush2.msra.mxu0 0.0
    %3667 = vmatprep.subr.mxu0 0.0
    %3668 = vmatpush2.msra.mxu0 0.0
    %3669 = vmatprep.subr.mxu0 0.0
    %3670 = vmatpush2.msra.mxu0 0.0
    %3671 = vmatprep.subr.mxu0 0.0
    %3672 = vmatpush2.msra.mxu0 0.0
    %3673 = vmatprep.subr.mxu0 0.0
    %3674 = vmatpush2.msra.mxu0 0.0
    %3675 = vmatprep.subr.mxu0 0.0
    %3676 = vmatpush2.msra.mxu0 0.0
    %3677 = vmatprep.subr.mxu0 0.0
    %3678 = vmatpush2.msra.mxu0 0.0
    %3679 = vmatprep.subr.mxu0 0.0
    %3680 = vmatpush2.msra.mxu0 0.0
    %3681 = vmatprep.subr.mxu0 0.0
    %3682 = vmatpush2.msra.mxu0 0.0
    %3683 = vmatprep.subr.mxu0 0.0
    %3684 = vmatpush2.msra.mxu0 0.0
    %3685 = vmatprep.subr.mxu0 0.0
    %3686 = vmatpush2.msra.mxu0 0.0
    %3687 = vmatprep.subr.mxu0 0.0
    %3688 = vmatpush2.msra.mxu0 0.0
    %3689 = vmatprep.mubr.f32.mxu0 0.0
    %3690 = vmatmul.mubr.f32.gmra.mxu0 %v3481
    %v3691 = vpop.f32.mrf.mxu0
    %v3692 = vadd.f32 %v3453, %v3691
    %v3693 = vpop.f32.mrf.mxu0
    %v3694 = vadd.f32 %v3455, %v3693
    %3695 = vdwg.mxu0
    %s3696 = scalar_lea.vmem %s3, 16
    %v3697 = vld [vmem:[%s3696] sm:$0xff]
    %3698 = vrot.lane.b32.xlu0 %v3202, 113
    %v3699 = vpop.permute.xlu0 %3698
    %3700 = vrot.lane.b32.xlu0 %v3203, 113
    %v3701 = vpop.permute.xlu0 %3700
    %3702 = vrot.lane.b32.xlu0 %v3204, 113
    %v3703 = vpop.permute.xlu0 %3702
    %3704 = vrot.lane.b32.xlu0 %v3205, 113
    %v3705 = vpop.permute.xlu0 %3704
    %3706 = vrot.lane.b32.xlu0 %v3206, 113
    %v3707 = vpop.permute.xlu0 %3706
    %3708 = vrot.lane.b32.xlu0 %v3207, 113
    %v3709 = vpop.permute.xlu0 %3708
    %v3710 = vsel %vm1291, %v3699, %v3701
    %v3711 = vsel %vm1291, %v3701, %v3703
    %v3712 = vsel %vm1291, %v3703, %v3705
    %v3713 = vsel %vm1291, %v3705, %v3707
    %v3714 = vsel %vm1291, %v3707, %v3709
    %v3722 = vsel %vm3240, %v3697, 0
    %3724 = vmatprep.subr.mxu0 0.0
    %3725 = vmatpush1.msra.mxu0 0.0
    %3726 = vmatprep.subr.mxu0 0.0
    %3727 = vmatpush1.msra.mxu0 0.0
    %3728 = vmatprep.subr.mxu0 0.0
    %3729 = vmatpush1.msra.mxu0 0.0
    %3730 = vmatprep.subr.mxu0 0.0
    %3731 = vmatpush1.msra.mxu0 0.0
    %3732 = vmatprep.subr.mxu0 0.0
    %3733 = vmatpush1.msra.mxu0 0.0
    %3734 = vmatprep.subr.mxu0 0.0
    %3735 = vmatpush1.msra.mxu0 0.0
    %3736 = vmatprep.subr.mxu0 0.0
    %3737 = vmatpush1.msra.mxu0 0.0
    %3738 = vmatprep.subr.mxu0 0.0
    %3739 = vmatpush1.msra.mxu0 0.0
    %3740 = vmatprep.subr.mxu0 0.0
    %3741 = vmatpush1.msra.mxu0 0.0
    %3742 = vmatprep.subr.mxu0 0.0
    %3743 = vmatpush1.msra.mxu0 0.0
    %3744 = vmatprep.subr.mxu0 0.0
    %3745 = vmatpush1.msra.mxu0 0.0
    %3746 = vmatprep.subr.mxu0 0.0
    %3747 = vmatpush1.msra.mxu0 0.0
    %3748 = vmatprep.subr.mxu0 0.0
    %3749 = vmatpush1.msra.mxu0 0.0
    %3750 = vmatprep.subr.mxu0 0.0
    %3751 = vmatpush1.msra.mxu0 0.0
    %3752 = vmatprep.subr.mxu0 0.0
    %3753 = vmatpush1.msra.mxu0 0.0
    %3754 = vmatprep.subr.mxu0 %v3711
    %3755 = vmatpush1.msra.mxu0 %v3710
    %3756 = vmatprep.subr.mxu0 0.0
    %3757 = vmatpush2.msra.mxu0 0.0
    %3758 = vmatprep.subr.mxu0 0.0
    %3759 = vmatpush2.msra.mxu0 0.0
    %3760 = vmatprep.subr.mxu0 0.0
    %3761 = vmatpush2.msra.mxu0 0.0
    %3762 = vmatprep.subr.mxu0 0.0
    %3763 = vmatpush2.msra.mxu0 0.0
    %3764 = vmatprep.subr.mxu0 0.0
    %3765 = vmatpush2.msra.mxu0 0.0
    %3766 = vmatprep.subr.mxu0 0.0
    %3767 = vmatpush2.msra.mxu0 0.0
    %3768 = vmatprep.subr.mxu0 0.0
    %3769 = vmatpush2.msra.mxu0 0.0
    %3770 = vmatprep.subr.mxu0 0.0
    %3771 = vmatpush2.msra.mxu0 0.0
    %3772 = vmatprep.subr.mxu0 0.0
    %3773 = vmatpush2.msra.mxu0 0.0
    %3774 = vmatprep.subr.mxu0 0.0
    %3775 = vmatpush2.msra.mxu0 0.0
    %3776 = vmatprep.subr.mxu0 0.0
    %3777 = vmatpush2.msra.mxu0 0.0
    %3778 = vmatprep.subr.mxu0 0.0
    %3779 = vmatpush2.msra.mxu0 0.0
    %3780 = vmatprep.subr.mxu0 0.0
    %3781 = vmatpush2.msra.mxu0 0.0
    %3782 = vmatprep.subr.mxu0 0.0
    %3783 = vmatpush2.msra.mxu0 0.0
    %3784 = vmatprep.subr.mxu0 0.0
    %3785 = vmatpush2.msra.mxu0 0.0
    %3786 = vmatprep.subr.mxu0 0.0
    %3787 = vmatpush2.msra.mxu0 0.0
    %3788 = vmatprep.mubr.f32.mxu0 0.0
    %3789 = vmatmul.mubr.f32.gmra.mxu0 %v3722
    %v3790 = vpop.f32.mrf.mxu0
    %v3791 = vadd.f32 0.0, %v3790
    %v3792 = vpop.f32.mrf.mxu0
    %v3793 = vadd.f32 0.0, %v3792
    %3794 = vdwg.mxu0
    %3795 = vmatprep.subr.mxu0 0.0
    %3796 = vmatpush1.msra.mxu0 0.0
    %3797 = vmatprep.subr.mxu0 0.0
    %3798 = vmatpush1.msra.mxu0 0.0
    %3799 = vmatprep.subr.mxu0 0.0
    %3800 = vmatpush1.msra.mxu0 0.0
    %3801 = vmatprep.subr.mxu0 0.0
    %3802 = vmatpush1.msra.mxu0 0.0
    %3803 = vmatprep.subr.mxu0 0.0
    %3804 = vmatpush1.msra.mxu0 0.0
    %3805 = vmatprep.subr.mxu0 0.0
    %3806 = vmatpush1.msra.mxu0 0.0
    %3807 = vmatprep.subr.mxu0 0.0
    %3808 = vmatpush1.msra.mxu0 0.0
    %3809 = vmatprep.subr.mxu0 0.0
    %3810 = vmatpush1.msra.mxu0 0.0
    %3811 = vmatprep.subr.mxu0 0.0
    %3812 = vmatpush1.msra.mxu0 0.0
    %3813 = vmatprep.subr.mxu0 0.0
    %3814 = vmatpush1.msra.mxu0 0.0
    %3815 = vmatprep.subr.mxu0 0.0
    %3816 = vmatpush1.msra.mxu0 0.0
    %3817 = vmatprep.subr.mxu0 0.0
    %3818 = vmatpush1.msra.mxu0 0.0
    %3819 = vmatprep.subr.mxu0 0.0
    %3820 = vmatpush1.msra.mxu0 0.0
    %3821 = vmatprep.subr.mxu0 0.0
    %3822 = vmatpush1.msra.mxu0 0.0
    %3823 = vmatprep.subr.mxu0 0.0
    %3824 = vmatpush1.msra.mxu0 0.0
    %3825 = vmatprep.subr.mxu0 %v3713
    %3826 = vmatpush1.msra.mxu0 %v3712
    %3827 = vmatprep.subr.mxu0 0.0
    %3828 = vmatpush2.msra.mxu0 0.0
    %3829 = vmatprep.subr.mxu0 0.0
    %3830 = vmatpush2.msra.mxu0 0.0
    %3831 = vmatprep.subr.mxu0 0.0
    %3832 = vmatpush2.msra.mxu0 0.0
    %3833 = vmatprep.subr.mxu0 0.0
    %3834 = vmatpush2.msra.mxu0 0.0
    %3835 = vmatprep.subr.mxu0 0.0
    %3836 = vmatpush2.msra.mxu0 0.0
    %3837 = vmatprep.subr.mxu0 0.0
    %3838 = vmatpush2.msra.mxu0 0.0
    %3839 = vmatprep.subr.mxu0 0.0
    %3840 = vmatpush2.msra.mxu0 0.0
    %3841 = vmatprep.subr.mxu0 0.0
    %3842 = vmatpush2.msra.mxu0 0.0
    %3843 = vmatprep.subr.mxu0 0.0
    %3844 = vmatpush2.msra.mxu0 0.0
    %3845 = vmatprep.subr.mxu0 0.0
    %3846 = vmatpush2.msra.mxu0 0.0
    %3847 = vmatprep.subr.mxu0 0.0
    %3848 = vmatpush2.msra.mxu0 0.0
    %3849 = vmatprep.subr.mxu0 0.0
    %3850 = vmatpush2.msra.mxu0 0.0
    %3851 = vmatprep.subr.mxu0 0.0
    %3852 = vmatpush2.msra.mxu0 0.0
    %3853 = vmatprep.subr.mxu0 0.0
    %3854 = vmatpush2.msra.mxu0 0.0
    %3855 = vmatprep.subr.mxu0 0.0
    %3856 = vmatpush2.msra.mxu0 0.0
    %3857 = vmatprep.subr.mxu0 0.0
    %3858 = vmatpush2.msra.mxu0 0.0
    %3859 = vmatprep.mubr.f32.mxu0 0.0
    %3860 = vmatmul.mubr.f32.gmra.mxu0 %v3722
    %v3861 = vpop.f32.mrf.mxu0
    %v3862 = vadd.f32 0.0, %v3861
    %v3863 = vpop.f32.mrf.mxu0
    %v3864 = vadd.f32 0.0, %v3863
    %3865 = vdwg.mxu0
    %3866 = vmatprep.subr.mxu0 0.0
    %3867 = vmatpush1.msra.mxu0 0.0
    %3868 = vmatprep.subr.mxu0 0.0
    %3869 = vmatpush1.msra.mxu0 0.0
    %3870 = vmatprep.subr.mxu0 0.0
    %3871 = vmatpush1.msra.mxu0 0.0
    %3872 = vmatprep.subr.mxu0 0.0
    %3873 = vmatpush1.msra.mxu0 0.0
    %3874 = vmatprep.subr.mxu0 0.0
    %3875 = vmatpush1.msra.mxu0 0.0
    %3876 = vmatprep.subr.mxu0 0.0
    %3877 = vmatpush1.msra.mxu0 0.0
    %3878 = vmatprep.subr.mxu0 0.0
    %3879 = vmatpush1.msra.mxu0 0.0
    %3880 = vmatprep.subr.mxu0 0.0
    %3881 = vmatpush1.msra.mxu0 0.0
    %3882 = vmatprep.subr.mxu0 0.0
    %3883 = vmatpush1.msra.mxu0 0.0
    %3884 = vmatprep.subr.mxu0 0.0
    %3885 = vmatpush1.msra.mxu0 0.0
    %3886 = vmatprep.subr.mxu0 0.0
    %3887 = vmatpush1.msra.mxu0 0.0
    %3888 = vmatprep.subr.mxu0 0.0
    %3889 = vmatpush1.msra.mxu0 0.0
    %3890 = vmatprep.subr.mxu0 0.0
    %3891 = vmatpush1.msra.mxu0 0.0
    %3892 = vmatprep.subr.mxu0 0.0
    %3893 = vmatpush1.msra.mxu0 0.0
    %3894 = vmatprep.subr.mxu0 0.0
    %3895 = vmatpush1.msra.mxu0 0.0
    %3896 = vmatprep.subr.mxu0 %v3709
    %3897 = vmatpush1.msra.mxu0 %v3714
    %3898 = vmatprep.subr.mxu0 0.0
    %3899 = vmatpush2.msra.mxu0 0.0
    %3900 = vmatprep.subr.mxu0 0.0
    %3901 = vmatpush2.msra.mxu0 0.0
    %3902 = vmatprep.subr.mxu0 0.0
    %3903 = vmatpush2.msra.mxu0 0.0
    %3904 = vmatprep.subr.mxu0 0.0
    %3905 = vmatpush2.msra.mxu0 0.0
    %3906 = vmatprep.subr.mxu0 0.0
    %3907 = vmatpush2.msra.mxu0 0.0
    %3908 = vmatprep.subr.mxu0 0.0
    %3909 = vmatpush2.msra.mxu0 0.0
    %3910 = vmatprep.subr.mxu0 0.0
    %3911 = vmatpush2.msra.mxu0 0.0
    %3912 = vmatprep.subr.mxu0 0.0
    %3913 = vmatpush2.msra.mxu0 0.0
    %3914 = vmatprep.subr.mxu0 0.0
    %3915 = vmatpush2.msra.mxu0 0.0
    %3916 = vmatprep.subr.mxu0 0.0
    %3917 = vmatpush2.msra.mxu0 0.0
    %3918 = vmatprep.subr.mxu0 0.0
    %3919 = vmatpush2.msra.mxu0 0.0
    %3920 = vmatprep.subr.mxu0 0.0
    %3921 = vmatpush2.msra.mxu0 0.0
    %3922 = vmatprep.subr.mxu0 0.0
    %3923 = vmatpush2.msra.mxu0 0.0
    %3924 = vmatprep.subr.mxu0 0.0
    %3925 = vmatpush2.msra.mxu0 0.0
    %3926 = vmatprep.subr.mxu0 0.0
    %3927 = vmatpush2.msra.mxu0 0.0
    %3928 = vmatprep.subr.mxu0 0.0
    %3929 = vmatpush2.msra.mxu0 0.0
    %3930 = vmatprep.mubr.f32.mxu0 0.0
    %3931 = vmatmul.mubr.f32.gmra.mxu0 %v3722
    %v3932 = vpop.f32.mrf.mxu0
    %v3933 = vadd.f32 0.0, %v3932
    %v3934 = vpop.f32.mrf.mxu0
    %v3935 = vadd.f32 0.0, %v3934
    %3936 = vdwg.mxu0
    %v3937 = vadd.f32 %v3550, %v3791
    %v3938 = vadd.f32 %v3552, %v3793
    %v3939 = vadd.f32 %v3621, %v3862
    %v3940 = vadd.f32 %v3623, %v3864
    %v3941 = vadd.f32 %v3692, %v3933
    %v3942 = vadd.f32 %v3694, %v3935
    %s3943 = scalar_lea.vmem %s3, 24
    %v3944 = vld [vmem:[%s3943] sm:$0xff]
    %3945 = vrot.lane.b32.xlu0 %v3202, 97
    %v3946 = vpop.permute.xlu0 %3945
    %3947 = vrot.lane.b32.xlu0 %v3203, 97
    %v3948 = vpop.permute.xlu0 %3947
    %3949 = vrot.lane.b32.xlu0 %v3204, 97
    %v3950 = vpop.permute.xlu0 %3949
    %3951 = vrot.lane.b32.xlu0 %v3205, 97
    %v3952 = vpop.permute.xlu0 %3951
    %3953 = vrot.lane.b32.xlu0 %v3206, 97
    %v3954 = vpop.permute.xlu0 %3953
    %3955 = vrot.lane.b32.xlu0 %v3207, 97
    %v3956 = vpop.permute.xlu0 %3955
    %v3957 = vsel %vm1559, %v3946, %v3948
    %v3958 = vsel %vm1559, %v3948, %v3950
    %v3959 = vsel %vm1559, %v3950, %v3952
    %v3960 = vsel %vm1559, %v3952, %v3954
    %v3961 = vsel %vm1559, %v3954, %v3956
    %v3969 = vsel %vm3240, %v3944, 0
    %3971 = vmatprep.subr.mxu0 0.0
    %3972 = vmatpush1.msra.mxu0 0.0
    %3973 = vmatprep.subr.mxu0 0.0
    %3974 = vmatpush1.msra.mxu0 0.0
    %3975 = vmatprep.subr.mxu0 0.0
    %3976 = vmatpush1.msra.mxu0 0.0
    %3977 = vmatprep.subr.mxu0 0.0
    %3978 = vmatpush1.msra.mxu0 0.0
    %3979 = vmatprep.subr.mxu0 0.0
    %3980 = vmatpush1.msra.mxu0 0.0
    %3981 = vmatprep.subr.mxu0 0.0
    %3982 = vmatpush1.msra.mxu0 0.0
    %3983 = vmatprep.subr.mxu0 0.0
    %3984 = vmatpush1.msra.mxu0 0.0
    %3985 = vmatprep.subr.mxu0 0.0
    %3986 = vmatpush1.msra.mxu0 0.0
    %3987 = vmatprep.subr.mxu0 0.0
    %3988 = vmatpush1.msra.mxu0 0.0
    %3989 = vmatprep.subr.mxu0 0.0
    %3990 = vmatpush1.msra.mxu0 0.0
    %3991 = vmatprep.subr.mxu0 0.0
    %3992 = vmatpush1.msra.mxu0 0.0
    %3993 = vmatprep.subr.mxu0 0.0
    %3994 = vmatpush1.msra.mxu0 0.0
    %3995 = vmatprep.subr.mxu0 0.0
    %3996 = vmatpush1.msra.mxu0 0.0
    %3997 = vmatprep.subr.mxu0 0.0
    %3998 = vmatpush1.msra.mxu0 0.0
    %3999 = vmatprep.subr.mxu0 0.0
    %4000 = vmatpush1.msra.mxu0 0.0
    %4001 = vmatprep.subr.mxu0 %v3958
    %4002 = vmatpush1.msra.mxu0 %v3957
    %4003 = vmatprep.subr.mxu0 0.0
    %4004 = vmatpush2.msra.mxu0 0.0
    %4005 = vmatprep.subr.mxu0 0.0
    %4006 = vmatpush2.msra.mxu0 0.0
    %4007 = vmatprep.subr.mxu0 0.0
    %4008 = vmatpush2.msra.mxu0 0.0
    %4009 = vmatprep.subr.mxu0 0.0
    %4010 = vmatpush2.msra.mxu0 0.0
    %4011 = vmatprep.subr.mxu0 0.0
    %4012 = vmatpush2.msra.mxu0 0.0
    %4013 = vmatprep.subr.mxu0 0.0
    %4014 = vmatpush2.msra.mxu0 0.0
    %4015 = vmatprep.subr.mxu0 0.0
    %4016 = vmatpush2.msra.mxu0 0.0
    %4017 = vmatprep.subr.mxu0 0.0
    %4018 = vmatpush2.msra.mxu0 0.0
    %4019 = vmatprep.subr.mxu0 0.0
    %4020 = vmatpush2.msra.mxu0 0.0
    %4021 = vmatprep.subr.mxu0 0.0
    %4022 = vmatpush2.msra.mxu0 0.0
    %4023 = vmatprep.subr.mxu0 0.0
    %4024 = vmatpush2.msra.mxu0 0.0
    %4025 = vmatprep.subr.mxu0 0.0
    %4026 = vmatpush2.msra.mxu0 0.0
    %4027 = vmatprep.subr.mxu0 0.0
    %4028 = vmatpush2.msra.mxu0 0.0
    %4029 = vmatprep.subr.mxu0 0.0
    %4030 = vmatpush2.msra.mxu0 0.0
    %4031 = vmatprep.subr.mxu0 0.0
    %4032 = vmatpush2.msra.mxu0 0.0
    %4033 = vmatprep.subr.mxu0 0.0
    %4034 = vmatpush2.msra.mxu0 0.0
    %4035 = vmatprep.mubr.f32.mxu0 0.0
    %4036 = vmatmul.mubr.f32.gmra.mxu0 %v3969
    %v4037 = vpop.f32.mrf.mxu0
    %v4038 = vadd.f32 0.0, %v4037
    %v4039 = vpop.f32.mrf.mxu0
    %v4040 = vadd.f32 0.0, %v4039
    %4041 = vdwg.mxu0
    %4042 = vmatprep.subr.mxu0 0.0
    %4043 = vmatpush1.msra.mxu0 0.0
    %4044 = vmatprep.subr.mxu0 0.0
    %4045 = vmatpush1.msra.mxu0 0.0
    %4046 = vmatprep.subr.mxu0 0.0
    %4047 = vmatpush1.msra.mxu0 0.0
    %4048 = vmatprep.subr.mxu0 0.0
    %4049 = vmatpush1.msra.mxu0 0.0
    %4050 = vmatprep.subr.mxu0 0.0
    %4051 = vmatpush1.msra.mxu0 0.0
    %4052 = vmatprep.subr.mxu0 0.0
    %4053 = vmatpush1.msra.mxu0 0.0
    %4054 = vmatprep.subr.mxu0 0.0
    %4055 = vmatpush1.msra.mxu0 0.0
    %4056 = vmatprep.subr.mxu0 0.0
    %4057 = vmatpush1.msra.mxu0 0.0
    %4058 = vmatprep.subr.mxu0 0.0
    %4059 = vmatpush1.msra.mxu0 0.0
    %4060 = vmatprep.subr.mxu0 0.0
    %4061 = vmatpush1.msra.mxu0 0.0
    %4062 = vmatprep.subr.mxu0 0.0
    %4063 = vmatpush1.msra.mxu0 0.0
    %4064 = vmatprep.subr.mxu0 0.0
    %4065 = vmatpush1.msra.mxu0 0.0
    %4066 = vmatprep.subr.mxu0 0.0
    %4067 = vmatpush1.msra.mxu0 0.0
    %4068 = vmatprep.subr.mxu0 0.0
    %4069 = vmatpush1.msra.mxu0 0.0
    %4070 = vmatprep.subr.mxu0 0.0
    %4071 = vmatpush1.msra.mxu0 0.0
    %4072 = vmatprep.subr.mxu0 %v3960
    %4073 = vmatpush1.msra.mxu0 %v3959
    %4074 = vmatprep.subr.mxu0 0.0
    %4075 = vmatpush2.msra.mxu0 0.0
    %4076 = vmatprep.subr.mxu0 0.0
    %4077 = vmatpush2.msra.mxu0 0.0
    %4078 = vmatprep.subr.mxu0 0.0
    %4079 = vmatpush2.msra.mxu0 0.0
    %4080 = vmatprep.subr.mxu0 0.0
    %4081 = vmatpush2.msra.mxu0 0.0
    %4082 = vmatprep.subr.mxu0 0.0
    %4083 = vmatpush2.msra.mxu0 0.0
    %4084 = vmatprep.subr.mxu0 0.0
    %4085 = vmatpush2.msra.mxu0 0.0
    %4086 = vmatprep.subr.mxu0 0.0
    %4087 = vmatpush2.msra.mxu0 0.0
    %4088 = vmatprep.subr.mxu0 0.0
    %4089 = vmatpush2.msra.mxu0 0.0
    %4090 = vmatprep.subr.mxu0 0.0
    %4091 = vmatpush2.msra.mxu0 0.0
    %4092 = vmatprep.subr.mxu0 0.0
    %4093 = vmatpush2.msra.mxu0 0.0
    %4094 = vmatprep.subr.mxu0 0.0
    %4095 = vmatpush2.msra.mxu0 0.0
    %4096 = vmatprep.subr.mxu0 0.0
    %4097 = vmatpush2.msra.mxu0 0.0
    %4098 = vmatprep.subr.mxu0 0.0
    %4099 = vmatpush2.msra.mxu0 0.0
    %4100 = vmatprep.subr.mxu0 0.0
    %4101 = vmatpush2.msra.mxu0 0.0
    %4102 = vmatprep.subr.mxu0 0.0
    %4103 = vmatpush2.msra.mxu0 0.0
    %4104 = vmatprep.subr.mxu0 0.0
    %4105 = vmatpush2.msra.mxu0 0.0
    %4106 = vmatprep.mubr.f32.mxu0 0.0
    %4107 = vmatmul.mubr.f32.gmra.mxu0 %v3969
    %v4108 = vpop.f32.mrf.mxu0
    %v4109 = vadd.f32 0.0, %v4108
    %v4110 = vpop.f32.mrf.mxu0
    %v4111 = vadd.f32 0.0, %v4110
    %4112 = vdwg.mxu0
    %4113 = vmatprep.subr.mxu0 0.0
    %4114 = vmatpush1.msra.mxu0 0.0
    %4115 = vmatprep.subr.mxu0 0.0
    %4116 = vmatpush1.msra.mxu0 0.0
    %4117 = vmatprep.subr.mxu0 0.0
    %4118 = vmatpush1.msra.mxu0 0.0
    %4119 = vmatprep.subr.mxu0 0.0
    %4120 = vmatpush1.msra.mxu0 0.0
    %4121 = vmatprep.subr.mxu0 0.0
    %4122 = vmatpush1.msra.mxu0 0.0
    %4123 = vmatprep.subr.mxu0 0.0
    %4124 = vmatpush1.msra.mxu0 0.0
    %4125 = vmatprep.subr.mxu0 0.0
    %4126 = vmatpush1.msra.mxu0 0.0
    %4127 = vmatprep.subr.mxu0 0.0
    %4128 = vmatpush1.msra.mxu0 0.0
    %4129 = vmatprep.subr.mxu0 0.0
    %4130 = vmatpush1.msra.mxu0 0.0
    %4131 = vmatprep.subr.mxu0 0.0
    %4132 = vmatpush1.msra.mxu0 0.0
    %4133 = vmatprep.subr.mxu0 0.0
    %4134 = vmatpush1.msra.mxu0 0.0
    %4135 = vmatprep.subr.mxu0 0.0
    %4136 = vmatpush1.msra.mxu0 0.0
    %4137 = vmatprep.subr.mxu0 0.0
    %4138 = vmatpush1.msra.mxu0 0.0
    %4139 = vmatprep.subr.mxu0 0.0
    %4140 = vmatpush1.msra.mxu0 0.0
    %4141 = vmatprep.subr.mxu0 0.0
    %4142 = vmatpush1.msra.mxu0 0.0
    %4143 = vmatprep.subr.mxu0 %v3956
    %4144 = vmatpush1.msra.mxu0 %v3961
    %4145 = vmatprep.subr.mxu0 0.0
    %4146 = vmatpush2.msra.mxu0 0.0
    %4147 = vmatprep.subr.mxu0 0.0
    %4148 = vmatpush2.msra.mxu0 0.0
    %4149 = vmatprep.subr.mxu0 0.0
    %4150 = vmatpush2.msra.mxu0 0.0
    %4151 = vmatprep.subr.mxu0 0.0
    %4152 = vmatpush2.msra.mxu0 0.0
    %4153 = vmatprep.subr.mxu0 0.0
    %4154 = vmatpush2.msra.mxu0 0.0
    %4155 = vmatprep.subr.mxu0 0.0
    %4156 = vmatpush2.msra.mxu0 0.0
    %4157 = vmatprep.subr.mxu0 0.0
    %4158 = vmatpush2.msra.mxu0 0.0
    %4159 = vmatprep.subr.mxu0 0.0
    %4160 = vmatpush2.msra.mxu0 0.0
    %4161 = vmatprep.subr.mxu0 0.0
    %4162 = vmatpush2.msra.mxu0 0.0
    %4163 = vmatprep.subr.mxu0 0.0
    %4164 = vmatpush2.msra.mxu0 0.0
    %4165 = vmatprep.subr.mxu0 0.0
    %4166 = vmatpush2.msra.mxu0 0.0
    %4167 = vmatprep.subr.mxu0 0.0
    %4168 = vmatpush2.msra.mxu0 0.0
    %4169 = vmatprep.subr.mxu0 0.0
    %4170 = vmatpush2.msra.mxu0 0.0
    %4171 = vmatprep.subr.mxu0 0.0
    %4172 = vmatpush2.msra.mxu0 0.0
    %4173 = vmatprep.subr.mxu0 0.0
    %4174 = vmatpush2.msra.mxu0 0.0
    %4175 = vmatprep.subr.mxu0 0.0
    %4176 = vmatpush2.msra.mxu0 0.0
    %4177 = vmatprep.mubr.f32.mxu0 0.0
    %4178 = vmatmul.mubr.f32.gmra.mxu0 %v3969
    %v4179 = vpop.f32.mrf.mxu0
    %v4180 = vadd.f32 0.0, %v4179
    %v4181 = vpop.f32.mrf.mxu0
    %v4182 = vadd.f32 0.0, %v4181
    %4183 = vdwg.mxu0
    %v4184 = vadd.f32 %v3937, %v4038
    %v4185 = vadd.f32 %v3938, %v4040
    %v4186 = vadd.f32 %v3939, %v4109
    %v4187 = vadd.f32 %v3940, %v4111
    %v4188 = vadd.f32 %v3941, %v4180
    %v4189 = vadd.f32 %v3942, %v4182
    %s4190 = scalar_lea.vmem %s3, 32
    %v4191 = vld [vmem:[%s4190] sm:$0xff]
    %4192 = vrot.lane.b32.xlu0 %v3202, 96
    %v4193 = vpop.permute.xlu0 %4192
    %4194 = vrot.lane.b32.xlu0 %v3203, 96
    %v4195 = vpop.permute.xlu0 %4194
    %4196 = vrot.lane.b32.xlu0 %v3204, 96
    %v4197 = vpop.permute.xlu0 %4196
    %4198 = vrot.lane.b32.xlu0 %v3205, 96
    %v4199 = vpop.permute.xlu0 %4198
    %4200 = vrot.lane.b32.xlu0 %v3206, 96
    %v4201 = vpop.permute.xlu0 %4200
    %4202 = vrot.lane.b32.xlu0 %v3207, 96
    %v4203 = vpop.permute.xlu0 %4202
    %v4204 = vsel %vm1827, %v4193, %v4195
    %v4205 = vsel %vm1827, %v4195, %v4197
    %v4206 = vsel %vm1827, %v4197, %v4199
    %v4207 = vsel %vm1827, %v4199, %v4201
    %v4208 = vsel %vm1827, %v4201, %v4203
    %v4216 = vsel %vm3240, %v4191, 0
    %4218 = vmatprep.subr.mxu0 0.0
    %4219 = vmatpush1.msra.mxu0 0.0
    %4220 = vmatprep.subr.mxu0 0.0
    %4221 = vmatpush1.msra.mxu0 0.0
    %4222 = vmatprep.subr.mxu0 0.0
    %4223 = vmatpush1.msra.mxu0 0.0
    %4224 = vmatprep.subr.mxu0 0.0
    %4225 = vmatpush1.msra.mxu0 0.0
    %4226 = vmatprep.subr.mxu0 0.0
    %4227 = vmatpush1.msra.mxu0 0.0
    %4228 = vmatprep.subr.mxu0 0.0
    %4229 = vmatpush1.msra.mxu0 0.0
    %4230 = vmatprep.subr.mxu0 0.0
    %4231 = vmatpush1.msra.mxu0 0.0
    %4232 = vmatprep.subr.mxu0 0.0
    %4233 = vmatpush1.msra.mxu0 0.0
    %4234 = vmatprep.subr.mxu0 0.0
    %4235 = vmatpush1.msra.mxu0 0.0
    %4236 = vmatprep.subr.mxu0 0.0
    %4237 = vmatpush1.msra.mxu0 0.0
    %4238 = vmatprep.subr.mxu0 0.0
    %4239 = vmatpush1.msra.mxu0 0.0
    %4240 = vmatprep.subr.mxu0 0.0
    %4241 = vmatpush1.msra.mxu0 0.0
    %4242 = vmatprep.subr.mxu0 0.0
    %4243 = vmatpush1.msra.mxu0 0.0
    %4244 = vmatprep.subr.mxu0 0.0
    %4245 = vmatpush1.msra.mxu0 0.0
    %4246 = vmatprep.subr.mxu0 0.0
    %4247 = vmatpush1.msra.mxu0 0.0
    %4248 = vmatprep.subr.mxu0 %v4205
    %4249 = vmatpush1.msra.mxu0 %v4204
    %4250 = vmatprep.subr.mxu0 0.0
    %4251 = vmatpush2.msra.mxu0 0.0
    %4252 = vmatprep.subr.mxu0 0.0
    %4253 = vmatpush2.msra.mxu0 0.0
    %4254 = vmatprep.subr.mxu0 0.0
    %4255 = vmatpush2.msra.mxu0 0.0
    %4256 = vmatprep.subr.mxu0 0.0
    %4257 = vmatpush2.msra.mxu0 0.0
    %4258 = vmatprep.subr.mxu0 0.0
    %4259 = vmatpush2.msra.mxu0 0.0
    %4260 = vmatprep.subr.mxu0 0.0
    %4261 = vmatpush2.msra.mxu0 0.0
    %4262 = vmatprep.subr.mxu0 0.0
    %4263 = vmatpush2.msra.mxu0 0.0
    %4264 = vmatprep.subr.mxu0 0.0
    %4265 = vmatpush2.msra.mxu0 0.0
    %4266 = vmatprep.subr.mxu0 0.0
    %4267 = vmatpush2.msra.mxu0 0.0
    %4268 = vmatprep.subr.mxu0 0.0
    %4269 = vmatpush2.msra.mxu0 0.0
    %4270 = vmatprep.subr.mxu0 0.0
    %4271 = vmatpush2.msra.mxu0 0.0
    %4272 = vmatprep.subr.mxu0 0.0
    %4273 = vmatpush2.msra.mxu0 0.0
    %4274 = vmatprep.subr.mxu0 0.0
    %4275 = vmatpush2.msra.mxu0 0.0
    %4276 = vmatprep.subr.mxu0 0.0
    %4277 = vmatpush2.msra.mxu0 0.0
    %4278 = vmatprep.subr.mxu0 0.0
    %4279 = vmatpush2.msra.mxu0 0.0
    %4280 = vmatprep.subr.mxu0 0.0
    %4281 = vmatpush2.msra.mxu0 0.0
    %4282 = vmatprep.mubr.f32.mxu0 0.0
    %4283 = vmatmul.mubr.f32.gmra.mxu0 %v4216
    %v4284 = vpop.f32.mrf.mxu0
    %v4285 = vadd.f32 0.0, %v4284
    %v4286 = vpop.f32.mrf.mxu0
    %v4287 = vadd.f32 0.0, %v4286
    %4288 = vdwg.mxu0
    %4289 = vmatprep.subr.mxu0 0.0
    %4290 = vmatpush1.msra.mxu0 0.0
    %4291 = vmatprep.subr.mxu0 0.0
    %4292 = vmatpush1.msra.mxu0 0.0
    %4293 = vmatprep.subr.mxu0 0.0
    %4294 = vmatpush1.msra.mxu0 0.0
    %4295 = vmatprep.subr.mxu0 0.0
    %4296 = vmatpush1.msra.mxu0 0.0
    %4297 = vmatprep.subr.mxu0 0.0
    %4298 = vmatpush1.msra.mxu0 0.0
    %4299 = vmatprep.subr.mxu0 0.0
    %4300 = vmatpush1.msra.mxu0 0.0
    %4301 = vmatprep.subr.mxu0 0.0
    %4302 = vmatpush1.msra.mxu0 0.0
    %4303 = vmatprep.subr.mxu0 0.0
    %4304 = vmatpush1.msra.mxu0 0.0
    %4305 = vmatprep.subr.mxu0 0.0
    %4306 = vmatpush1.msra.mxu0 0.0
    %4307 = vmatprep.subr.mxu0 0.0
    %4308 = vmatpush1.msra.mxu0 0.0
    %4309 = vmatprep.subr.mxu0 0.0
    %4310 = vmatpush1.msra.mxu0 0.0
    %4311 = vmatprep.subr.mxu0 0.0
    %4312 = vmatpush1.msra.mxu0 0.0
    %4313 = vmatprep.subr.mxu0 0.0
    %4314 = vmatpush1.msra.mxu0 0.0
    %4315 = vmatprep.subr.mxu0 0.0
    %4316 = vmatpush1.msra.mxu0 0.0
    %4317 = vmatprep.subr.mxu0 0.0
    %4318 = vmatpush1.msra.mxu0 0.0
    %4319 = vmatprep.subr.mxu0 %v4207
    %4320 = vmatpush1.msra.mxu0 %v4206
    %4321 = vmatprep.subr.mxu0 0.0
    %4322 = vmatpush2.msra.mxu0 0.0
    %4323 = vmatprep.subr.mxu0 0.0
    %4324 = vmatpush2.msra.mxu0 0.0
    %4325 = vmatprep.subr.mxu0 0.0
    %4326 = vmatpush2.msra.mxu0 0.0
    %4327 = vmatprep.subr.mxu0 0.0
    %4328 = vmatpush2.msra.mxu0 0.0
    %4329 = vmatprep.subr.mxu0 0.0
    %4330 = vmatpush2.msra.mxu0 0.0
    %4331 = vmatprep.subr.mxu0 0.0
    %4332 = vmatpush2.msra.mxu0 0.0
    %4333 = vmatprep.subr.mxu0 0.0
    %4334 = vmatpush2.msra.mxu0 0.0
    %4335 = vmatprep.subr.mxu0 0.0
    %4336 = vmatpush2.msra.mxu0 0.0
    %4337 = vmatprep.subr.mxu0 0.0
    %4338 = vmatpush2.msra.mxu0 0.0
    %4339 = vmatprep.subr.mxu0 0.0
    %4340 = vmatpush2.msra.mxu0 0.0
    %4341 = vmatprep.subr.mxu0 0.0
    %4342 = vmatpush2.msra.mxu0 0.0
    %4343 = vmatprep.subr.mxu0 0.0
    %4344 = vmatpush2.msra.mxu0 0.0
    %4345 = vmatprep.subr.mxu0 0.0
    %4346 = vmatpush2.msra.mxu0 0.0
    %4347 = vmatprep.subr.mxu0 0.0
    %4348 = vmatpush2.msra.mxu0 0.0
    %4349 = vmatprep.subr.mxu0 0.0
    %4350 = vmatpush2.msra.mxu0 0.0
    %4351 = vmatprep.subr.mxu0 0.0
    %4352 = vmatpush2.msra.mxu0 0.0
    %4353 = vmatprep.mubr.f32.mxu0 0.0
    %4354 = vmatmul.mubr.f32.gmra.mxu0 %v4216
    %v4355 = vpop.f32.mrf.mxu0
    %v4356 = vadd.f32 0.0, %v4355
    %v4357 = vpop.f32.mrf.mxu0
    %v4358 = vadd.f32 0.0, %v4357
    %4359 = vdwg.mxu0
    %4360 = vmatprep.subr.mxu0 0.0
    %4361 = vmatpush1.msra.mxu0 0.0
    %4362 = vmatprep.subr.mxu0 0.0
    %4363 = vmatpush1.msra.mxu0 0.0
    %4364 = vmatprep.subr.mxu0 0.0
    %4365 = vmatpush1.msra.mxu0 0.0
    %4366 = vmatprep.subr.mxu0 0.0
    %4367 = vmatpush1.msra.mxu0 0.0
    %4368 = vmatprep.subr.mxu0 0.0
    %4369 = vmatpush1.msra.mxu0 0.0
    %4370 = vmatprep.subr.mxu0 0.0
    %4371 = vmatpush1.msra.mxu0 0.0
    %4372 = vmatprep.subr.mxu0 0.0
    %4373 = vmatpush1.msra.mxu0 0.0
    %4374 = vmatprep.subr.mxu0 0.0
    %4375 = vmatpush1.msra.mxu0 0.0
    %4376 = vmatprep.subr.mxu0 0.0
    %4377 = vmatpush1.msra.mxu0 0.0
    %4378 = vmatprep.subr.mxu0 0.0
    %4379 = vmatpush1.msra.mxu0 0.0
    %4380 = vmatprep.subr.mxu0 0.0
    %4381 = vmatpush1.msra.mxu0 0.0
    %4382 = vmatprep.subr.mxu0 0.0
    %4383 = vmatpush1.msra.mxu0 0.0
    %4384 = vmatprep.subr.mxu0 0.0
    %4385 = vmatpush1.msra.mxu0 0.0
    %4386 = vmatprep.subr.mxu0 0.0
    %4387 = vmatpush1.msra.mxu0 0.0
    %4388 = vmatprep.subr.mxu0 0.0
    %4389 = vmatpush1.msra.mxu0 0.0
    %4390 = vmatprep.subr.mxu0 %v4203
    %4391 = vmatpush1.msra.mxu0 %v4208
    %4392 = vmatprep.subr.mxu0 0.0
    %4393 = vmatpush2.msra.mxu0 0.0
    %4394 = vmatprep.subr.mxu0 0.0
    %4395 = vmatpush2.msra.mxu0 0.0
    %4396 = vmatprep.subr.mxu0 0.0
    %4397 = vmatpush2.msra.mxu0 0.0
    %4398 = vmatprep.subr.mxu0 0.0
    %4399 = vmatpush2.msra.mxu0 0.0
    %4400 = vmatprep.subr.mxu0 0.0
    %4401 = vmatpush2.msra.mxu0 0.0
    %4402 = vmatprep.subr.mxu0 0.0
    %4403 = vmatpush2.msra.mxu0 0.0
    %4404 = vmatprep.subr.mxu0 0.0
    %4405 = vmatpush2.msra.mxu0 0.0
    %4406 = vmatprep.subr.mxu0 0.0
    %4407 = vmatpush2.msra.mxu0 0.0
    %4408 = vmatprep.subr.mxu0 0.0
    %4409 = vmatpush2.msra.mxu0 0.0
    %4410 = vmatprep.subr.mxu0 0.0
    %4411 = vmatpush2.msra.mxu0 0.0
    %4412 = vmatprep.subr.mxu0 0.0
    %4413 = vmatpush2.msra.mxu0 0.0
    %4414 = vmatprep.subr.mxu0 0.0
    %4415 = vmatpush2.msra.mxu0 0.0
    %4416 = vmatprep.subr.mxu0 0.0
    %4417 = vmatpush2.msra.mxu0 0.0
    %4418 = vmatprep.subr.mxu0 0.0
    %4419 = vmatpush2.msra.mxu0 0.0
    %4420 = vmatprep.subr.mxu0 0.0
    %4421 = vmatpush2.msra.mxu0 0.0
    %4422 = vmatprep.subr.mxu0 0.0
    %4423 = vmatpush2.msra.mxu0 0.0
    %4424 = vmatprep.mubr.f32.mxu0 0.0
    %4425 = vmatmul.mubr.f32.gmra.mxu0 %v4216
    %v4426 = vpop.f32.mrf.mxu0
    %v4427 = vadd.f32 0.0, %v4426
    %v4428 = vpop.f32.mrf.mxu0
    %v4429 = vadd.f32 0.0, %v4428
    %4430 = vdwg.mxu0
    %v4431 = vadd.f32 %v4184, %v4285
    %v4432 = vadd.f32 %v4185, %v4287
    %v4433 = vadd.f32 %v4186, %v4356
    %v4434 = vadd.f32 %v4187, %v4358
    %v4435 = vadd.f32 %v4188, %v4427
    %v4436 = vadd.f32 %v4189, %v4429
    %s4437 = scalar_lea.vmem %s3, 40
    %v4438 = vld [vmem:[%s4437] sm:$0xff]
    %4439 = vrot.lane.b32.xlu0 %v3202, 95
    %v4440 = vpop.permute.xlu0 %4439
    %4441 = vrot.lane.b32.xlu0 %v3203, 95
    %v4442 = vpop.permute.xlu0 %4441
    %4443 = vrot.lane.b32.xlu0 %v3204, 95
    %v4444 = vpop.permute.xlu0 %4443
    %4445 = vrot.lane.b32.xlu0 %v3205, 95
    %v4446 = vpop.permute.xlu0 %4445
    %4447 = vrot.lane.b32.xlu0 %v3206, 95
    %v4448 = vpop.permute.xlu0 %4447
    %4449 = vrot.lane.b32.xlu0 %v3207, 95
    %v4450 = vpop.permute.xlu0 %4449
    %v4451 = vsel %vm2095, %v4440, %v4442
    %v4452 = vsel %vm2095, %v4442, %v4444
    %v4453 = vsel %vm2095, %v4444, %v4446
    %v4454 = vsel %vm2095, %v4446, %v4448
    %v4455 = vsel %vm2095, %v4448, %v4450
    %v4463 = vsel %vm3240, %v4438, 0
    %4465 = vmatprep.subr.mxu0 0.0
    %4466 = vmatpush1.msra.mxu0 0.0
    %4467 = vmatprep.subr.mxu0 0.0
    %4468 = vmatpush1.msra.mxu0 0.0
    %4469 = vmatprep.subr.mxu0 0.0
    %4470 = vmatpush1.msra.mxu0 0.0
    %4471 = vmatprep.subr.mxu0 0.0
    %4472 = vmatpush1.msra.mxu0 0.0
    %4473 = vmatprep.subr.mxu0 0.0
    %4474 = vmatpush1.msra.mxu0 0.0
    %4475 = vmatprep.subr.mxu0 0.0
    %4476 = vmatpush1.msra.mxu0 0.0
    %4477 = vmatprep.subr.mxu0 0.0
    %4478 = vmatpush1.msra.mxu0 0.0
    %4479 = vmatprep.subr.mxu0 0.0
    %4480 = vmatpush1.msra.mxu0 0.0
    %4481 = vmatprep.subr.mxu0 0.0
    %4482 = vmatpush1.msra.mxu0 0.0
    %4483 = vmatprep.subr.mxu0 0.0
    %4484 = vmatpush1.msra.mxu0 0.0
    %4485 = vmatprep.subr.mxu0 0.0
    %4486 = vmatpush1.msra.mxu0 0.0
    %4487 = vmatprep.subr.mxu0 0.0
    %4488 = vmatpush1.msra.mxu0 0.0
    %4489 = vmatprep.subr.mxu0 0.0
    %4490 = vmatpush1.msra.mxu0 0.0
    %4491 = vmatprep.subr.mxu0 0.0
    %4492 = vmatpush1.msra.mxu0 0.0
    %4493 = vmatprep.subr.mxu0 0.0
    %4494 = vmatpush1.msra.mxu0 0.0
    %4495 = vmatprep.subr.mxu0 %v4452
    %4496 = vmatpush1.msra.mxu0 %v4451
    %4497 = vmatprep.subr.mxu0 0.0
    %4498 = vmatpush2.msra.mxu0 0.0
    %4499 = vmatprep.subr.mxu0 0.0
    %4500 = vmatpush2.msra.mxu0 0.0
    %4501 = vmatprep.subr.mxu0 0.0
    %4502 = vmatpush2.msra.mxu0 0.0
    %4503 = vmatprep.subr.mxu0 0.0
    %4504 = vmatpush2.msra.mxu0 0.0
    %4505 = vmatprep.subr.mxu0 0.0
    %4506 = vmatpush2.msra.mxu0 0.0
    %4507 = vmatprep.subr.mxu0 0.0
    %4508 = vmatpush2.msra.mxu0 0.0
    %4509 = vmatprep.subr.mxu0 0.0
    %4510 = vmatpush2.msra.mxu0 0.0
    %4511 = vmatprep.subr.mxu0 0.0
    %4512 = vmatpush2.msra.mxu0 0.0
    %4513 = vmatprep.subr.mxu0 0.0
    %4514 = vmatpush2.msra.mxu0 0.0
    %4515 = vmatprep.subr.mxu0 0.0
    %4516 = vmatpush2.msra.mxu0 0.0
    %4517 = vmatprep.subr.mxu0 0.0
    %4518 = vmatpush2.msra.mxu0 0.0
    %4519 = vmatprep.subr.mxu0 0.0
    %4520 = vmatpush2.msra.mxu0 0.0
    %4521 = vmatprep.subr.mxu0 0.0
    %4522 = vmatpush2.msra.mxu0 0.0
    %4523 = vmatprep.subr.mxu0 0.0
    %4524 = vmatpush2.msra.mxu0 0.0
    %4525 = vmatprep.subr.mxu0 0.0
    %4526 = vmatpush2.msra.mxu0 0.0
    %4527 = vmatprep.subr.mxu0 0.0
    %4528 = vmatpush2.msra.mxu0 0.0
    %4529 = vmatprep.mubr.f32.mxu0 0.0
    %4530 = vmatmul.mubr.f32.gmra.mxu0 %v4463
    %v4531 = vpop.f32.mrf.mxu0
    %v4532 = vadd.f32 0.0, %v4531
    %v4533 = vpop.f32.mrf.mxu0
    %v4534 = vadd.f32 0.0, %v4533
    %4535 = vdwg.mxu0
    %4536 = vmatprep.subr.mxu0 0.0
    %4537 = vmatpush1.msra.mxu0 0.0
    %4538 = vmatprep.subr.mxu0 0.0
    %4539 = vmatpush1.msra.mxu0 0.0
    %4540 = vmatprep.subr.mxu0 0.0
    %4541 = vmatpush1.msra.mxu0 0.0
    %4542 = vmatprep.subr.mxu0 0.0
    %4543 = vmatpush1.msra.mxu0 0.0
    %4544 = vmatprep.subr.mxu0 0.0
    %4545 = vmatpush1.msra.mxu0 0.0
    %4546 = vmatprep.subr.mxu0 0.0
    %4547 = vmatpush1.msra.mxu0 0.0
    %4548 = vmatprep.subr.mxu0 0.0
    %4549 = vmatpush1.msra.mxu0 0.0
    %4550 = vmatprep.subr.mxu0 0.0
    %4551 = vmatpush1.msra.mxu0 0.0
    %4552 = vmatprep.subr.mxu0 0.0
    %4553 = vmatpush1.msra.mxu0 0.0
    %4554 = vmatprep.subr.mxu0 0.0
    %4555 = vmatpush1.msra.mxu0 0.0
    %4556 = vmatprep.subr.mxu0 0.0
    %4557 = vmatpush1.msra.mxu0 0.0
    %4558 = vmatprep.subr.mxu0 0.0
    %4559 = vmatpush1.msra.mxu0 0.0
    %4560 = vmatprep.subr.mxu0 0.0
    %4561 = vmatpush1.msra.mxu0 0.0
    %4562 = vmatprep.subr.mxu0 0.0
    %4563 = vmatpush1.msra.mxu0 0.0
    %4564 = vmatprep.subr.mxu0 0.0
    %4565 = vmatpush1.msra.mxu0 0.0
    %4566 = vmatprep.subr.mxu0 %v4454
    %4567 = vmatpush1.msra.mxu0 %v4453
    %4568 = vmatprep.subr.mxu0 0.0
    %4569 = vmatpush2.msra.mxu0 0.0
    %4570 = vmatprep.subr.mxu0 0.0
    %4571 = vmatpush2.msra.mxu0 0.0
    %4572 = vmatprep.subr.mxu0 0.0
    %4573 = vmatpush2.msra.mxu0 0.0
    %4574 = vmatprep.subr.mxu0 0.0
    %4575 = vmatpush2.msra.mxu0 0.0
    %4576 = vmatprep.subr.mxu0 0.0
    %4577 = vmatpush2.msra.mxu0 0.0
    %4578 = vmatprep.subr.mxu0 0.0
    %4579 = vmatpush2.msra.mxu0 0.0
    %4580 = vmatprep.subr.mxu0 0.0
    %4581 = vmatpush2.msra.mxu0 0.0
    %4582 = vmatprep.subr.mxu0 0.0
    %4583 = vmatpush2.msra.mxu0 0.0
    %4584 = vmatprep.subr.mxu0 0.0
    %4585 = vmatpush2.msra.mxu0 0.0
    %4586 = vmatprep.subr.mxu0 0.0
    %4587 = vmatpush2.msra.mxu0 0.0
    %4588 = vmatprep.subr.mxu0 0.0
    %4589 = vmatpush2.msra.mxu0 0.0
    %4590 = vmatprep.subr.mxu0 0.0
    %4591 = vmatpush2.msra.mxu0 0.0
    %4592 = vmatprep.subr.mxu0 0.0
    %4593 = vmatpush2.msra.mxu0 0.0
    %4594 = vmatprep.subr.mxu0 0.0
    %4595 = vmatpush2.msra.mxu0 0.0
    %4596 = vmatprep.subr.mxu0 0.0
    %4597 = vmatpush2.msra.mxu0 0.0
    %4598 = vmatprep.subr.mxu0 0.0
    %4599 = vmatpush2.msra.mxu0 0.0
    %4600 = vmatprep.mubr.f32.mxu0 0.0
    %4601 = vmatmul.mubr.f32.gmra.mxu0 %v4463
    %v4602 = vpop.f32.mrf.mxu0
    %v4603 = vadd.f32 0.0, %v4602
    %v4604 = vpop.f32.mrf.mxu0
    %v4605 = vadd.f32 0.0, %v4604
    %4606 = vdwg.mxu0
    %4607 = vmatprep.subr.mxu0 0.0
    %4608 = vmatpush1.msra.mxu0 0.0
    %4609 = vmatprep.subr.mxu0 0.0
    %4610 = vmatpush1.msra.mxu0 0.0
    %4611 = vmatprep.subr.mxu0 0.0
    %4612 = vmatpush1.msra.mxu0 0.0
    %4613 = vmatprep.subr.mxu0 0.0
    %4614 = vmatpush1.msra.mxu0 0.0
    %4615 = vmatprep.subr.mxu0 0.0
    %4616 = vmatpush1.msra.mxu0 0.0
    %4617 = vmatprep.subr.mxu0 0.0
    %4618 = vmatpush1.msra.mxu0 0.0
    %4619 = vmatprep.subr.mxu0 0.0
    %4620 = vmatpush1.msra.mxu0 0.0
    %4621 = vmatprep.subr.mxu0 0.0
    %4622 = vmatpush1.msra.mxu0 0.0
    %4623 = vmatprep.subr.mxu0 0.0
    %4624 = vmatpush1.msra.mxu0 0.0
    %4625 = vmatprep.subr.mxu0 0.0
    %4626 = vmatpush1.msra.mxu0 0.0
    %4627 = vmatprep.subr.mxu0 0.0
    %4628 = vmatpush1.msra.mxu0 0.0
    %4629 = vmatprep.subr.mxu0 0.0
    %4630 = vmatpush1.msra.mxu0 0.0
    %4631 = vmatprep.subr.mxu0 0.0
    %4632 = vmatpush1.msra.mxu0 0.0
    %4633 = vmatprep.subr.mxu0 0.0
    %4634 = vmatpush1.msra.mxu0 0.0
    %4635 = vmatprep.subr.mxu0 0.0
    %4636 = vmatpush1.msra.mxu0 0.0
    %4637 = vmatprep.subr.mxu0 %v4450
    %4638 = vmatpush1.msra.mxu0 %v4455
    %4639 = vmatprep.subr.mxu0 0.0
    %4640 = vmatpush2.msra.mxu0 0.0
    %4641 = vmatprep.subr.mxu0 0.0
    %4642 = vmatpush2.msra.mxu0 0.0
    %4643 = vmatprep.subr.mxu0 0.0
    %4644 = vmatpush2.msra.mxu0 0.0
    %4645 = vmatprep.subr.mxu0 0.0
    %4646 = vmatpush2.msra.mxu0 0.0
    %4647 = vmatprep.subr.mxu0 0.0
    %4648 = vmatpush2.msra.mxu0 0.0
    %4649 = vmatprep.subr.mxu0 0.0
    %4650 = vmatpush2.msra.mxu0 0.0
    %4651 = vmatprep.subr.mxu0 0.0
    %4652 = vmatpush2.msra.mxu0 0.0
    %4653 = vmatprep.subr.mxu0 0.0
    %4654 = vmatpush2.msra.mxu0 0.0
    %4655 = vmatprep.subr.mxu0 0.0
    %4656 = vmatpush2.msra.mxu0 0.0
    %4657 = vmatprep.subr.mxu0 0.0
    %4658 = vmatpush2.msra.mxu0 0.0
    %4659 = vmatprep.subr.mxu0 0.0
    %4660 = vmatpush2.msra.mxu0 0.0
    %4661 = vmatprep.subr.mxu0 0.0
    %4662 = vmatpush2.msra.mxu0 0.0
    %4663 = vmatprep.subr.mxu0 0.0
    %4664 = vmatpush2.msra.mxu0 0.0
    %4665 = vmatprep.subr.mxu0 0.0
    %4666 = vmatpush2.msra.mxu0 0.0
    %4667 = vmatprep.subr.mxu0 0.0
    %4668 = vmatpush2.msra.mxu0 0.0
    %4669 = vmatprep.subr.mxu0 0.0
    %4670 = vmatpush2.msra.mxu0 0.0
    %4671 = vmatprep.mubr.f32.mxu0 0.0
    %4672 = vmatmul.mubr.f32.gmra.mxu0 %v4463
    %v4673 = vpop.f32.mrf.mxu0
    %v4674 = vadd.f32 0.0, %v4673
    %v4675 = vpop.f32.mrf.mxu0
    %v4676 = vadd.f32 0.0, %v4675
    %4677 = vdwg.mxu0
    %v4678 = vadd.f32 %v4431, %v4532
    %v4679 = vadd.f32 %v4432, %v4534
    %v4680 = vadd.f32 %v4433, %v4603
    %v4681 = vadd.f32 %v4434, %v4605
    %v4682 = vadd.f32 %v4435, %v4674
    %v4683 = vadd.f32 %v4436, %v4676
    %s4684 = scalar_lea.vmem %s3, 48
    %v4685 = vld [vmem:[%s4684] sm:$0xff]
    %4686 = vrot.lane.b32.xlu0 %v3202, 79
    %v4687 = vpop.permute.xlu0 %4686
    %4688 = vrot.lane.b32.xlu0 %v3203, 79
    %v4689 = vpop.permute.xlu0 %4688
    %4690 = vrot.lane.b32.xlu0 %v3204, 79
    %v4691 = vpop.permute.xlu0 %4690
    %4692 = vrot.lane.b32.xlu0 %v3205, 79
    %v4693 = vpop.permute.xlu0 %4692
    %4694 = vrot.lane.b32.xlu0 %v3206, 79
    %v4695 = vpop.permute.xlu0 %4694
    %4696 = vrot.lane.b32.xlu0 %v3207, 79
    %v4697 = vpop.permute.xlu0 %4696
    %v4698 = vsel %vm2363, %v4687, %v4689
    %v4699 = vsel %vm2363, %v4689, %v4691
    %v4700 = vsel %vm2363, %v4691, %v4693
    %v4701 = vsel %vm2363, %v4693, %v4695
    %v4702 = vsel %vm2363, %v4695, %v4697
    %v4710 = vsel %vm3240, %v4685, 0
    %4712 = vmatprep.subr.mxu0 0.0
    %4713 = vmatpush1.msra.mxu0 0.0
    %4714 = vmatprep.subr.mxu0 0.0
    %4715 = vmatpush1.msra.mxu0 0.0
    %4716 = vmatprep.subr.mxu0 0.0
    %4717 = vmatpush1.msra.mxu0 0.0
    %4718 = vmatprep.subr.mxu0 0.0
    %4719 = vmatpush1.msra.mxu0 0.0
    %4720 = vmatprep.subr.mxu0 0.0
    %4721 = vmatpush1.msra.mxu0 0.0
    %4722 = vmatprep.subr.mxu0 0.0
    %4723 = vmatpush1.msra.mxu0 0.0
    %4724 = vmatprep.subr.mxu0 0.0
    %4725 = vmatpush1.msra.mxu0 0.0
    %4726 = vmatprep.subr.mxu0 0.0
    %4727 = vmatpush1.msra.mxu0 0.0
    %4728 = vmatprep.subr.mxu0 0.0
    %4729 = vmatpush1.msra.mxu0 0.0
    %4730 = vmatprep.subr.mxu0 0.0
    %4731 = vmatpush1.msra.mxu0 0.0
    %4732 = vmatprep.subr.mxu0 0.0
    %4733 = vmatpush1.msra.mxu0 0.0
    %4734 = vmatprep.subr.mxu0 0.0
    %4735 = vmatpush1.msra.mxu0 0.0
    %4736 = vmatprep.subr.mxu0 0.0
    %4737 = vmatpush1.msra.mxu0 0.0
    %4738 = vmatprep.subr.mxu0 0.0
    %4739 = vmatpush1.msra.mxu0 0.0
    %4740 = vmatprep.subr.mxu0 0.0
    %4741 = vmatpush1.msra.mxu0 0.0
    %4742 = vmatprep.subr.mxu0 %v4699
    %4743 = vmatpush1.msra.mxu0 %v4698
    %4744 = vmatprep.subr.mxu0 0.0
    %4745 = vmatpush2.msra.mxu0 0.0
    %4746 = vmatprep.subr.mxu0 0.0
    %4747 = vmatpush2.msra.mxu0 0.0
    %4748 = vmatprep.subr.mxu0 0.0
    %4749 = vmatpush2.msra.mxu0 0.0
    %4750 = vmatprep.subr.mxu0 0.0
    %4751 = vmatpush2.msra.mxu0 0.0
    %4752 = vmatprep.subr.mxu0 0.0
    %4753 = vmatpush2.msra.mxu0 0.0
    %4754 = vmatprep.subr.mxu0 0.0
    %4755 = vmatpush2.msra.mxu0 0.0
    %4756 = vmatprep.subr.mxu0 0.0
    %4757 = vmatpush2.msra.mxu0 0.0
    %4758 = vmatprep.subr.mxu0 0.0
    %4759 = vmatpush2.msra.mxu0 0.0
    %4760 = vmatprep.subr.mxu0 0.0
    %4761 = vmatpush2.msra.mxu0 0.0
    %4762 = vmatprep.subr.mxu0 0.0
    %4763 = vmatpush2.msra.mxu0 0.0
    %4764 = vmatprep.subr.mxu0 0.0
    %4765 = vmatpush2.msra.mxu0 0.0
    %4766 = vmatprep.subr.mxu0 0.0
    %4767 = vmatpush2.msra.mxu0 0.0
    %4768 = vmatprep.subr.mxu0 0.0
    %4769 = vmatpush2.msra.mxu0 0.0
    %4770 = vmatprep.subr.mxu0 0.0
    %4771 = vmatpush2.msra.mxu0 0.0
    %4772 = vmatprep.subr.mxu0 0.0
    %4773 = vmatpush2.msra.mxu0 0.0
    %4774 = vmatprep.subr.mxu0 0.0
    %4775 = vmatpush2.msra.mxu0 0.0
    %4776 = vmatprep.mubr.f32.mxu0 0.0
    %4777 = vmatmul.mubr.f32.gmra.mxu0 %v4710
    %v4778 = vpop.f32.mrf.mxu0
    %v4779 = vadd.f32 0.0, %v4778
    %v4780 = vpop.f32.mrf.mxu0
    %v4781 = vadd.f32 0.0, %v4780
    %4782 = vdwg.mxu0
    %4783 = vmatprep.subr.mxu0 0.0
    %4784 = vmatpush1.msra.mxu0 0.0
    %4785 = vmatprep.subr.mxu0 0.0
    %4786 = vmatpush1.msra.mxu0 0.0
    %4787 = vmatprep.subr.mxu0 0.0
    %4788 = vmatpush1.msra.mxu0 0.0
    %4789 = vmatprep.subr.mxu0 0.0
    %4790 = vmatpush1.msra.mxu0 0.0
    %4791 = vmatprep.subr.mxu0 0.0
    %4792 = vmatpush1.msra.mxu0 0.0
    %4793 = vmatprep.subr.mxu0 0.0
    %4794 = vmatpush1.msra.mxu0 0.0
    %4795 = vmatprep.subr.mxu0 0.0
    %4796 = vmatpush1.msra.mxu0 0.0
    %4797 = vmatprep.subr.mxu0 0.0
    %4798 = vmatpush1.msra.mxu0 0.0
    %4799 = vmatprep.subr.mxu0 0.0
    %4800 = vmatpush1.msra.mxu0 0.0
    %4801 = vmatprep.subr.mxu0 0.0
    %4802 = vmatpush1.msra.mxu0 0.0
    %4803 = vmatprep.subr.mxu0 0.0
    %4804 = vmatpush1.msra.mxu0 0.0
    %4805 = vmatprep.subr.mxu0 0.0
    %4806 = vmatpush1.msra.mxu0 0.0
    %4807 = vmatprep.subr.mxu0 0.0
    %4808 = vmatpush1.msra.mxu0 0.0
    %4809 = vmatprep.subr.mxu0 0.0
    %4810 = vmatpush1.msra.mxu0 0.0
    %4811 = vmatprep.subr.mxu0 0.0
    %4812 = vmatpush1.msra.mxu0 0.0
    %4813 = vmatprep.subr.mxu0 %v4701
    %4814 = vmatpush1.msra.mxu0 %v4700
    %4815 = vmatprep.subr.mxu0 0.0
    %4816 = vmatpush2.msra.mxu0 0.0
    %4817 = vmatprep.subr.mxu0 0.0
    %4818 = vmatpush2.msra.mxu0 0.0
    %4819 = vmatprep.subr.mxu0 0.0
    %4820 = vmatpush2.msra.mxu0 0.0
    %4821 = vmatprep.subr.mxu0 0.0
    %4822 = vmatpush2.msra.mxu0 0.0
    %4823 = vmatprep.subr.mxu0 0.0
    %4824 = vmatpush2.msra.mxu0 0.0
    %4825 = vmatprep.subr.mxu0 0.0
    %4826 = vmatpush2.msra.mxu0 0.0
    %4827 = vmatprep.subr.mxu0 0.0
    %4828 = vmatpush2.msra.mxu0 0.0
    %4829 = vmatprep.subr.mxu0 0.0
    %4830 = vmatpush2.msra.mxu0 0.0
    %4831 = vmatprep.subr.mxu0 0.0
    %4832 = vmatpush2.msra.mxu0 0.0
    %4833 = vmatprep.subr.mxu0 0.0
    %4834 = vmatpush2.msra.mxu0 0.0
    %4835 = vmatprep.subr.mxu0 0.0
    %4836 = vmatpush2.msra.mxu0 0.0
    %4837 = vmatprep.subr.mxu0 0.0
    %4838 = vmatpush2.msra.mxu0 0.0
    %4839 = vmatprep.subr.mxu0 0.0
    %4840 = vmatpush2.msra.mxu0 0.0
    %4841 = vmatprep.subr.mxu0 0.0
    %4842 = vmatpush2.msra.mxu0 0.0
    %4843 = vmatprep.subr.mxu0 0.0
    %4844 = vmatpush2.msra.mxu0 0.0
    %4845 = vmatprep.subr.mxu0 0.0
    %4846 = vmatpush2.msra.mxu0 0.0
    %4847 = vmatprep.mubr.f32.mxu0 0.0
    %4848 = vmatmul.mubr.f32.gmra.mxu0 %v4710
    %v4849 = vpop.f32.mrf.mxu0
    %v4850 = vadd.f32 0.0, %v4849
    %v4851 = vpop.f32.mrf.mxu0
    %v4852 = vadd.f32 0.0, %v4851
    %4853 = vdwg.mxu0
    %4854 = vmatprep.subr.mxu0 0.0
    %4855 = vmatpush1.msra.mxu0 0.0
    %4856 = vmatprep.subr.mxu0 0.0
    %4857 = vmatpush1.msra.mxu0 0.0
    %4858 = vmatprep.subr.mxu0 0.0
    %4859 = vmatpush1.msra.mxu0 0.0
    %4860 = vmatprep.subr.mxu0 0.0
    %4861 = vmatpush1.msra.mxu0 0.0
    %4862 = vmatprep.subr.mxu0 0.0
    %4863 = vmatpush1.msra.mxu0 0.0
    %4864 = vmatprep.subr.mxu0 0.0
    %4865 = vmatpush1.msra.mxu0 0.0
    %4866 = vmatprep.subr.mxu0 0.0
    %4867 = vmatpush1.msra.mxu0 0.0
    %4868 = vmatprep.subr.mxu0 0.0
    %4869 = vmatpush1.msra.mxu0 0.0
    %4870 = vmatprep.subr.mxu0 0.0
    %4871 = vmatpush1.msra.mxu0 0.0
    %4872 = vmatprep.subr.mxu0 0.0
    %4873 = vmatpush1.msra.mxu0 0.0
    %4874 = vmatprep.subr.mxu0 0.0
    %4875 = vmatpush1.msra.mxu0 0.0
    %4876 = vmatprep.subr.mxu0 0.0
    %4877 = vmatpush1.msra.mxu0 0.0
    %4878 = vmatprep.subr.mxu0 0.0
    %4879 = vmatpush1.msra.mxu0 0.0
    %4880 = vmatprep.subr.mxu0 0.0
    %4881 = vmatpush1.msra.mxu0 0.0
    %4882 = vmatprep.subr.mxu0 0.0
    %4883 = vmatpush1.msra.mxu0 0.0
    %4884 = vmatprep.subr.mxu0 %v4697
    %4885 = vmatpush1.msra.mxu0 %v4702
    %4886 = vmatprep.subr.mxu0 0.0
    %4887 = vmatpush2.msra.mxu0 0.0
    %4888 = vmatprep.subr.mxu0 0.0
    %4889 = vmatpush2.msra.mxu0 0.0
    %4890 = vmatprep.subr.mxu0 0.0
    %4891 = vmatpush2.msra.mxu0 0.0
    %4892 = vmatprep.subr.mxu0 0.0
    %4893 = vmatpush2.msra.mxu0 0.0
    %4894 = vmatprep.subr.mxu0 0.0
    %4895 = vmatpush2.msra.mxu0 0.0
    %4896 = vmatprep.subr.mxu0 0.0
    %4897 = vmatpush2.msra.mxu0 0.0
    %4898 = vmatprep.subr.mxu0 0.0
    %4899 = vmatpush2.msra.mxu0 0.0
    %4900 = vmatprep.subr.mxu0 0.0
    %4901 = vmatpush2.msra.mxu0 0.0
    %4902 = vmatprep.subr.mxu0 0.0
    %4903 = vmatpush2.msra.mxu0 0.0
    %4904 = vmatprep.subr.mxu0 0.0
    %4905 = vmatpush2.msra.mxu0 0.0
    %4906 = vmatprep.subr.mxu0 0.0
    %4907 = vmatpush2.msra.mxu0 0.0
    %4908 = vmatprep.subr.mxu0 0.0
    %4909 = vmatpush2.msra.mxu0 0.0
    %4910 = vmatprep.subr.mxu0 0.0
    %4911 = vmatpush2.msra.mxu0 0.0
    %4912 = vmatprep.subr.mxu0 0.0
    %4913 = vmatpush2.msra.mxu0 0.0
    %4914 = vmatprep.subr.mxu0 0.0
    %4915 = vmatpush2.msra.mxu0 0.0
    %4916 = vmatprep.subr.mxu0 0.0
    %4917 = vmatpush2.msra.mxu0 0.0
    %4918 = vmatprep.mubr.f32.mxu0 0.0
    %4919 = vmatmul.mubr.f32.gmra.mxu0 %v4710
    %v4920 = vpop.f32.mrf.mxu0
    %v4921 = vadd.f32 0.0, %v4920
    %v4922 = vpop.f32.mrf.mxu0
    %v4923 = vadd.f32 0.0, %v4922
    %4924 = vdwg.mxu0
    %v4925 = vadd.f32 %v4678, %v4779
    %v4926 = vadd.f32 %v4679, %v4781
    %v4927 = vadd.f32 %v4680, %v4850
    %v4928 = vadd.f32 %v4681, %v4852
    %v4929 = vadd.f32 %v4682, %v4921
    %v4930 = vadd.f32 %v4683, %v4923
    %s4931 = scalar_lea.vmem %s3, 56
    %v4932 = vld [vmem:[%s4931] sm:$0xff]
    %4933 = vrot.lane.b32.xlu0 %v3202, 78
    %v4934 = vpop.permute.xlu0 %4933
    %4935 = vrot.lane.b32.xlu0 %v3203, 78
    %v4936 = vpop.permute.xlu0 %4935
    %4937 = vrot.lane.b32.xlu0 %v3204, 78
    %v4938 = vpop.permute.xlu0 %4937
    %4939 = vrot.lane.b32.xlu0 %v3205, 78
    %v4940 = vpop.permute.xlu0 %4939
    %4941 = vrot.lane.b32.xlu0 %v3206, 78
    %v4942 = vpop.permute.xlu0 %4941
    %4943 = vrot.lane.b32.xlu0 %v3207, 78
    %v4944 = vpop.permute.xlu0 %4943
    %v4945 = vsel %vm2631, %v4934, %v4936
    %v4946 = vsel %vm2631, %v4936, %v4938
    %v4947 = vsel %vm2631, %v4938, %v4940
    %v4948 = vsel %vm2631, %v4940, %v4942
    %v4949 = vsel %vm2631, %v4942, %v4944
    %v4957 = vsel %vm3240, %v4932, 0
    %4959 = vmatprep.subr.mxu0 0.0
    %4960 = vmatpush1.msra.mxu0 0.0
    %4961 = vmatprep.subr.mxu0 0.0
    %4962 = vmatpush1.msra.mxu0 0.0
    %4963 = vmatprep.subr.mxu0 0.0
    %4964 = vmatpush1.msra.mxu0 0.0
    %4965 = vmatprep.subr.mxu0 0.0
    %4966 = vmatpush1.msra.mxu0 0.0
    %4967 = vmatprep.subr.mxu0 0.0
    %4968 = vmatpush1.msra.mxu0 0.0
    %4969 = vmatprep.subr.mxu0 0.0
    %4970 = vmatpush1.msra.mxu0 0.0
    %4971 = vmatprep.subr.mxu0 0.0
    %4972 = vmatpush1.msra.mxu0 0.0
    %4973 = vmatprep.subr.mxu0 0.0
    %4974 = vmatpush1.msra.mxu0 0.0
    %4975 = vmatprep.subr.mxu0 0.0
    %4976 = vmatpush1.msra.mxu0 0.0
    %4977 = vmatprep.subr.mxu0 0.0
    %4978 = vmatpush1.msra.mxu0 0.0
    %4979 = vmatprep.subr.mxu0 0.0
    %4980 = vmatpush1.msra.mxu0 0.0
    %4981 = vmatprep.subr.mxu0 0.0
    %4982 = vmatpush1.msra.mxu0 0.0
    %4983 = vmatprep.subr.mxu0 0.0
    %4984 = vmatpush1.msra.mxu0 0.0
    %4985 = vmatprep.subr.mxu0 0.0
    %4986 = vmatpush1.msra.mxu0 0.0
    %4987 = vmatprep.subr.mxu0 0.0
    %4988 = vmatpush1.msra.mxu0 0.0
    %4989 = vmatprep.subr.mxu0 %v4946
    %4990 = vmatpush1.msra.mxu0 %v4945
    %4991 = vmatprep.subr.mxu0 0.0
    %4992 = vmatpush2.msra.mxu0 0.0
    %4993 = vmatprep.subr.mxu0 0.0
    %4994 = vmatpush2.msra.mxu0 0.0
    %4995 = vmatprep.subr.mxu0 0.0
    %4996 = vmatpush2.msra.mxu0 0.0
    %4997 = vmatprep.subr.mxu0 0.0
    %4998 = vmatpush2.msra.mxu0 0.0
    %4999 = vmatprep.subr.mxu0 0.0
    %5000 = vmatpush2.msra.mxu0 0.0
    %5001 = vmatprep.subr.mxu0 0.0
    %5002 = vmatpush2.msra.mxu0 0.0
    %5003 = vmatprep.subr.mxu0 0.0
    %5004 = vmatpush2.msra.mxu0 0.0
    %5005 = vmatprep.subr.mxu0 0.0
    %5006 = vmatpush2.msra.mxu0 0.0
    %5007 = vmatprep.subr.mxu0 0.0
    %5008 = vmatpush2.msra.mxu0 0.0
    %5009 = vmatprep.subr.mxu0 0.0
    %5010 = vmatpush2.msra.mxu0 0.0
    %5011 = vmatprep.subr.mxu0 0.0
    %5012 = vmatpush2.msra.mxu0 0.0
    %5013 = vmatprep.subr.mxu0 0.0
    %5014 = vmatpush2.msra.mxu0 0.0
    %5015 = vmatprep.subr.mxu0 0.0
    %5016 = vmatpush2.msra.mxu0 0.0
    %5017 = vmatprep.subr.mxu0 0.0
    %5018 = vmatpush2.msra.mxu0 0.0
    %5019 = vmatprep.subr.mxu0 0.0
    %5020 = vmatpush2.msra.mxu0 0.0
    %5021 = vmatprep.subr.mxu0 0.0
    %5022 = vmatpush2.msra.mxu0 0.0
    %5023 = vmatprep.mubr.f32.mxu0 0.0
    %5024 = vmatmul.mubr.f32.gmra.mxu0 %v4957
    %v5025 = vpop.f32.mrf.mxu0
    %v5026 = vadd.f32 0.0, %v5025
    %v5027 = vpop.f32.mrf.mxu0
    %v5028 = vadd.f32 0.0, %v5027
    %5029 = vdwg.mxu0
    %5030 = vmatprep.subr.mxu0 0.0
    %5031 = vmatpush1.msra.mxu0 0.0
    %5032 = vmatprep.subr.mxu0 0.0
    %5033 = vmatpush1.msra.mxu0 0.0
    %5034 = vmatprep.subr.mxu0 0.0
    %5035 = vmatpush1.msra.mxu0 0.0
    %5036 = vmatprep.subr.mxu0 0.0
    %5037 = vmatpush1.msra.mxu0 0.0
    %5038 = vmatprep.subr.mxu0 0.0
    %5039 = vmatpush1.msra.mxu0 0.0
    %5040 = vmatprep.subr.mxu0 0.0
    %5041 = vmatpush1.msra.mxu0 0.0
    %5042 = vmatprep.subr.mxu0 0.0
    %5043 = vmatpush1.msra.mxu0 0.0
    %5044 = vmatprep.subr.mxu0 0.0
    %5045 = vmatpush1.msra.mxu0 0.0
    %5046 = vmatprep.subr.mxu0 0.0
    %5047 = vmatpush1.msra.mxu0 0.0
    %5048 = vmatprep.subr.mxu0 0.0
    %5049 = vmatpush1.msra.mxu0 0.0
    %5050 = vmatprep.subr.mxu0 0.0
    %5051 = vmatpush1.msra.mxu0 0.0
    %5052 = vmatprep.subr.mxu0 0.0
    %5053 = vmatpush1.msra.mxu0 0.0
    %5054 = vmatprep.subr.mxu0 0.0
    %5055 = vmatpush1.msra.mxu0 0.0
    %5056 = vmatprep.subr.mxu0 0.0
    %5057 = vmatpush1.msra.mxu0 0.0
    %5058 = vmatprep.subr.mxu0 0.0
    %5059 = vmatpush1.msra.mxu0 0.0
    %5060 = vmatprep.subr.mxu0 %v4948
    %5061 = vmatpush1.msra.mxu0 %v4947
    %5062 = vmatprep.subr.mxu0 0.0
    %5063 = vmatpush2.msra.mxu0 0.0
    %5064 = vmatprep.subr.mxu0 0.0
    %5065 = vmatpush2.msra.mxu0 0.0
    %5066 = vmatprep.subr.mxu0 0.0
    %5067 = vmatpush2.msra.mxu0 0.0
    %5068 = vmatprep.subr.mxu0 0.0
    %5069 = vmatpush2.msra.mxu0 0.0
    %5070 = vmatprep.subr.mxu0 0.0
    %5071 = vmatpush2.msra.mxu0 0.0
    %5072 = vmatprep.subr.mxu0 0.0
    %5073 = vmatpush2.msra.mxu0 0.0
    %5074 = vmatprep.subr.mxu0 0.0
    %5075 = vmatpush2.msra.mxu0 0.0
    %5076 = vmatprep.subr.mxu0 0.0
    %5077 = vmatpush2.msra.mxu0 0.0
    %5078 = vmatprep.subr.mxu0 0.0
    %5079 = vmatpush2.msra.mxu0 0.0
    %5080 = vmatprep.subr.mxu0 0.0
    %5081 = vmatpush2.msra.mxu0 0.0
    %5082 = vmatprep.subr.mxu0 0.0
    %5083 = vmatpush2.msra.mxu0 0.0
    %5084 = vmatprep.subr.mxu0 0.0
    %5085 = vmatpush2.msra.mxu0 0.0
    %5086 = vmatprep.subr.mxu0 0.0
    %5087 = vmatpush2.msra.mxu0 0.0
    %5088 = vmatprep.subr.mxu0 0.0
    %5089 = vmatpush2.msra.mxu0 0.0
    %5090 = vmatprep.subr.mxu0 0.0
    %5091 = vmatpush2.msra.mxu0 0.0
    %5092 = vmatprep.subr.mxu0 0.0
    %5093 = vmatpush2.msra.mxu0 0.0
    %5094 = vmatprep.mubr.f32.mxu0 0.0
    %5095 = vmatmul.mubr.f32.gmra.mxu0 %v4957
    %v5096 = vpop.f32.mrf.mxu0
    %v5097 = vadd.f32 0.0, %v5096
    %v5098 = vpop.f32.mrf.mxu0
    %v5099 = vadd.f32 0.0, %v5098
    %5100 = vdwg.mxu0
    %5101 = vmatprep.subr.mxu0 0.0
    %5102 = vmatpush1.msra.mxu0 0.0
    %5103 = vmatprep.subr.mxu0 0.0
    %5104 = vmatpush1.msra.mxu0 0.0
    %5105 = vmatprep.subr.mxu0 0.0
    %5106 = vmatpush1.msra.mxu0 0.0
    %5107 = vmatprep.subr.mxu0 0.0
    %5108 = vmatpush1.msra.mxu0 0.0
    %5109 = vmatprep.subr.mxu0 0.0
    %5110 = vmatpush1.msra.mxu0 0.0
    %5111 = vmatprep.subr.mxu0 0.0
    %5112 = vmatpush1.msra.mxu0 0.0
    %5113 = vmatprep.subr.mxu0 0.0
    %5114 = vmatpush1.msra.mxu0 0.0
    %5115 = vmatprep.subr.mxu0 0.0
    %5116 = vmatpush1.msra.mxu0 0.0
    %5117 = vmatprep.subr.mxu0 0.0
    %5118 = vmatpush1.msra.mxu0 0.0
    %5119 = vmatprep.subr.mxu0 0.0
    %5120 = vmatpush1.msra.mxu0 0.0
    %5121 = vmatprep.subr.mxu0 0.0
    %5122 = vmatpush1.msra.mxu0 0.0
    %5123 = vmatprep.subr.mxu0 0.0
    %5124 = vmatpush1.msra.mxu0 0.0
    %5125 = vmatprep.subr.mxu0 0.0
    %5126 = vmatpush1.msra.mxu0 0.0
    %5127 = vmatprep.subr.mxu0 0.0
    %5128 = vmatpush1.msra.mxu0 0.0
    %5129 = vmatprep.subr.mxu0 0.0
    %5130 = vmatpush1.msra.mxu0 0.0
    %5131 = vmatprep.subr.mxu0 %v4944
    %5132 = vmatpush1.msra.mxu0 %v4949
    %5133 = vmatprep.subr.mxu0 0.0
    %5134 = vmatpush2.msra.mxu0 0.0
    %5135 = vmatprep.subr.mxu0 0.0
    %5136 = vmatpush2.msra.mxu0 0.0
    %5137 = vmatprep.subr.mxu0 0.0
    %5138 = vmatpush2.msra.mxu0 0.0
    %5139 = vmatprep.subr.mxu0 0.0
    %5140 = vmatpush2.msra.mxu0 0.0
    %5141 = vmatprep.subr.mxu0 0.0
    %5142 = vmatpush2.msra.mxu0 0.0
    %5143 = vmatprep.subr.mxu0 0.0
    %5144 = vmatpush2.msra.mxu0 0.0
    %5145 = vmatprep.subr.mxu0 0.0
    %5146 = vmatpush2.msra.mxu0 0.0
    %5147 = vmatprep.subr.mxu0 0.0
    %5148 = vmatpush2.msra.mxu0 0.0
    %5149 = vmatprep.subr.mxu0 0.0
    %5150 = vmatpush2.msra.mxu0 0.0
    %5151 = vmatprep.subr.mxu0 0.0
    %5152 = vmatpush2.msra.mxu0 0.0
    %5153 = vmatprep.subr.mxu0 0.0
    %5154 = vmatpush2.msra.mxu0 0.0
    %5155 = vmatprep.subr.mxu0 0.0
    %5156 = vmatpush2.msra.mxu0 0.0
    %5157 = vmatprep.subr.mxu0 0.0
    %5158 = vmatpush2.msra.mxu0 0.0
    %5159 = vmatprep.subr.mxu0 0.0
    %5160 = vmatpush2.msra.mxu0 0.0
    %5161 = vmatprep.subr.mxu0 0.0
    %5162 = vmatpush2.msra.mxu0 0.0
    %5163 = vmatprep.subr.mxu0 0.0
    %5164 = vmatpush2.msra.mxu0 0.0
    %5165 = vmatprep.mubr.f32.mxu0 0.0
    %5166 = vmatmul.mubr.f32.gmra.mxu0 %v4957
    %v5167 = vpop.f32.mrf.mxu0
    %v5168 = vadd.f32 0.0, %v5167
    %v5169 = vpop.f32.mrf.mxu0
    %v5170 = vadd.f32 0.0, %v5169
    %5171 = vdwg.mxu0
    %v5172 = vadd.f32 %v4925, %v5026
    %v5173 = vadd.f32 %v4926, %v5028
    %v5174 = vadd.f32 %v4927, %v5097
    %v5175 = vadd.f32 %v4928, %v5099
    %v5176 = vadd.f32 %v4929, %v5168
    %v5177 = vadd.f32 %v4930, %v5170
    %s5178 = scalar_lea.vmem %s3, 64
    %v5179 = vld [vmem:[%s5178] sm:$0xff]
    %5180 = vrot.lane.b32.xlu0 %v3202, 77
    %v5181 = vpop.permute.xlu0 %5180
    %5182 = vrot.lane.b32.xlu0 %v3203, 77
    %v5183 = vpop.permute.xlu0 %5182
    %5184 = vrot.lane.b32.xlu0 %v3204, 77
    %v5185 = vpop.permute.xlu0 %5184
    %5186 = vrot.lane.b32.xlu0 %v3205, 77
    %v5187 = vpop.permute.xlu0 %5186
    %5188 = vrot.lane.b32.xlu0 %v3206, 77
    %v5189 = vpop.permute.xlu0 %5188
    %5190 = vrot.lane.b32.xlu0 %v3207, 77
    %v5191 = vpop.permute.xlu0 %5190
    %v5192 = vsel %vm2899, %v5181, %v5183
    %v5193 = vsel %vm2899, %v5183, %v5185
    %v5194 = vsel %vm2899, %v5185, %v5187
    %v5195 = vsel %vm2899, %v5187, %v5189
    %v5196 = vsel %vm2899, %v5189, %v5191
    %v5204 = vsel %vm3240, %v5179, 0
    %5206 = vmatprep.subr.mxu0 0.0
    %5207 = vmatpush1.msra.mxu0 0.0
    %5208 = vmatprep.subr.mxu0 0.0
    %5209 = vmatpush1.msra.mxu0 0.0
    %5210 = vmatprep.subr.mxu0 0.0
    %5211 = vmatpush1.msra.mxu0 0.0
    %5212 = vmatprep.subr.mxu0 0.0
    %5213 = vmatpush1.msra.mxu0 0.0
    %5214 = vmatprep.subr.mxu0 0.0
    %5215 = vmatpush1.msra.mxu0 0.0
    %5216 = vmatprep.subr.mxu0 0.0
    %5217 = vmatpush1.msra.mxu0 0.0
    %5218 = vmatprep.subr.mxu0 0.0
    %5219 = vmatpush1.msra.mxu0 0.0
    %5220 = vmatprep.subr.mxu0 0.0
    %5221 = vmatpush1.msra.mxu0 0.0
    %5222 = vmatprep.subr.mxu0 0.0
    %5223 = vmatpush1.msra.mxu0 0.0
    %5224 = vmatprep.subr.mxu0 0.0
    %5225 = vmatpush1.msra.mxu0 0.0
    %5226 = vmatprep.subr.mxu0 0.0
    %5227 = vmatpush1.msra.mxu0 0.0
    %5228 = vmatprep.subr.mxu0 0.0
    %5229 = vmatpush1.msra.mxu0 0.0
    %5230 = vmatprep.subr.mxu0 0.0
    %5231 = vmatpush1.msra.mxu0 0.0
    %5232 = vmatprep.subr.mxu0 0.0
    %5233 = vmatpush1.msra.mxu0 0.0
    %5234 = vmatprep.subr.mxu0 0.0
    %5235 = vmatpush1.msra.mxu0 0.0
    %5236 = vmatprep.subr.mxu0 %v5193
    %5237 = vmatpush1.msra.mxu0 %v5192
    %5238 = vmatprep.subr.mxu0 0.0
    %5239 = vmatpush2.msra.mxu0 0.0
    %5240 = vmatprep.subr.mxu0 0.0
    %5241 = vmatpush2.msra.mxu0 0.0
    %5242 = vmatprep.subr.mxu0 0.0
    %5243 = vmatpush2.msra.mxu0 0.0
    %5244 = vmatprep.subr.mxu0 0.0
    %5245 = vmatpush2.msra.mxu0 0.0
    %5246 = vmatprep.subr.mxu0 0.0
    %5247 = vmatpush2.msra.mxu0 0.0
    %5248 = vmatprep.subr.mxu0 0.0
    %5249 = vmatpush2.msra.mxu0 0.0
    %5250 = vmatprep.subr.mxu0 0.0
    %5251 = vmatpush2.msra.mxu0 0.0
    %5252 = vmatprep.subr.mxu0 0.0
    %5253 = vmatpush2.msra.mxu0 0.0
    %5254 = vmatprep.subr.mxu0 0.0
    %5255 = vmatpush2.msra.mxu0 0.0
    %5256 = vmatprep.subr.mxu0 0.0
    %5257 = vmatpush2.msra.mxu0 0.0
    %5258 = vmatprep.subr.mxu0 0.0
    %5259 = vmatpush2.msra.mxu0 0.0
    %5260 = vmatprep.subr.mxu0 0.0
    %5261 = vmatpush2.msra.mxu0 0.0
    %5262 = vmatprep.subr.mxu0 0.0
    %5263 = vmatpush2.msra.mxu0 0.0
    %5264 = vmatprep.subr.mxu0 0.0
    %5265 = vmatpush2.msra.mxu0 0.0
    %5266 = vmatprep.subr.mxu0 0.0
    %5267 = vmatpush2.msra.mxu0 0.0
    %5268 = vmatprep.subr.mxu0 0.0
    %5269 = vmatpush2.msra.mxu0 0.0
    %5270 = vmatprep.mubr.f32.mxu0 0.0
    %5271 = vmatmul.mubr.f32.gmra.mxu0 %v5204
    %v5272 = vpop.f32.mrf.mxu0
    %v5273 = vadd.f32 0.0, %v5272
    %v5274 = vpop.f32.mrf.mxu0
    %v5275 = vadd.f32 0.0, %v5274
    %5276 = vdwg.mxu0
    %5277 = vmatprep.subr.mxu0 0.0
    %5278 = vmatpush1.msra.mxu0 0.0
    %5279 = vmatprep.subr.mxu0 0.0
    %5280 = vmatpush1.msra.mxu0 0.0
    %5281 = vmatprep.subr.mxu0 0.0
    %5282 = vmatpush1.msra.mxu0 0.0
    %5283 = vmatprep.subr.mxu0 0.0
    %5284 = vmatpush1.msra.mxu0 0.0
    %5285 = vmatprep.subr.mxu0 0.0
    %5286 = vmatpush1.msra.mxu0 0.0
    %5287 = vmatprep.subr.mxu0 0.0
    %5288 = vmatpush1.msra.mxu0 0.0
    %5289 = vmatprep.subr.mxu0 0.0
    %5290 = vmatpush1.msra.mxu0 0.0
    %5291 = vmatprep.subr.mxu0 0.0
    %5292 = vmatpush1.msra.mxu0 0.0
    %5293 = vmatprep.subr.mxu0 0.0
    %5294 = vmatpush1.msra.mxu0 0.0
    %5295 = vmatprep.subr.mxu0 0.0
    %5296 = vmatpush1.msra.mxu0 0.0
    %5297 = vmatprep.subr.mxu0 0.0
    %5298 = vmatpush1.msra.mxu0 0.0
    %5299 = vmatprep.subr.mxu0 0.0
    %5300 = vmatpush1.msra.mxu0 0.0
    %5301 = vmatprep.subr.mxu0 0.0
    %5302 = vmatpush1.msra.mxu0 0.0
    %5303 = vmatprep.subr.mxu0 0.0
    %5304 = vmatpush1.msra.mxu0 0.0
    %5305 = vmatprep.subr.mxu0 0.0
    %5306 = vmatpush1.msra.mxu0 0.0
    %5307 = vmatprep.subr.mxu0 %v5195
    %5308 = vmatpush1.msra.mxu0 %v5194
    %5309 = vmatprep.subr.mxu0 0.0
    %5310 = vmatpush2.msra.mxu0 0.0
    %5311 = vmatprep.subr.mxu0 0.0
    %5312 = vmatpush2.msra.mxu0 0.0
    %5313 = vmatprep.subr.mxu0 0.0
    %5314 = vmatpush2.msra.mxu0 0.0
    %5315 = vmatprep.subr.mxu0 0.0
    %5316 = vmatpush2.msra.mxu0 0.0
    %5317 = vmatprep.subr.mxu0 0.0
    %5318 = vmatpush2.msra.mxu0 0.0
    %5319 = vmatprep.subr.mxu0 0.0
    %5320 = vmatpush2.msra.mxu0 0.0
    %5321 = vmatprep.subr.mxu0 0.0
    %5322 = vmatpush2.msra.mxu0 0.0
    %5323 = vmatprep.subr.mxu0 0.0
    %5324 = vmatpush2.msra.mxu0 0.0
    %5325 = vmatprep.subr.mxu0 0.0
    %5326 = vmatpush2.msra.mxu0 0.0
    %5327 = vmatprep.subr.mxu0 0.0
    %5328 = vmatpush2.msra.mxu0 0.0
    %5329 = vmatprep.subr.mxu0 0.0
    %5330 = vmatpush2.msra.mxu0 0.0
    %5331 = vmatprep.subr.mxu0 0.0
    %5332 = vmatpush2.msra.mxu0 0.0
    %5333 = vmatprep.subr.mxu0 0.0
    %5334 = vmatpush2.msra.mxu0 0.0
    %5335 = vmatprep.subr.mxu0 0.0
    %5336 = vmatpush2.msra.mxu0 0.0
    %5337 = vmatprep.subr.mxu0 0.0
    %5338 = vmatpush2.msra.mxu0 0.0
    %5339 = vmatprep.subr.mxu0 0.0
    %5340 = vmatpush2.msra.mxu0 0.0
    %5341 = vmatprep.mubr.f32.mxu0 0.0
    %5342 = vmatmul.mubr.f32.gmra.mxu0 %v5204
    %v5343 = vpop.f32.mrf.mxu0
    %v5344 = vadd.f32 0.0, %v5343
    %v5345 = vpop.f32.mrf.mxu0
    %v5346 = vadd.f32 0.0, %v5345
    %5347 = vdwg.mxu0
    %5348 = vmatprep.subr.mxu0 0.0
    %5349 = vmatpush1.msra.mxu0 0.0
    %5350 = vmatprep.subr.mxu0 0.0
    %5351 = vmatpush1.msra.mxu0 0.0
    %5352 = vmatprep.subr.mxu0 0.0
    %5353 = vmatpush1.msra.mxu0 0.0
    %5354 = vmatprep.subr.mxu0 0.0
    %5355 = vmatpush1.msra.mxu0 0.0
    %5356 = vmatprep.subr.mxu0 0.0
    %5357 = vmatpush1.msra.mxu0 0.0
    %5358 = vmatprep.subr.mxu0 0.0
    %5359 = vmatpush1.msra.mxu0 0.0
    %5360 = vmatprep.subr.mxu0 0.0
    %5361 = vmatpush1.msra.mxu0 0.0
    %5362 = vmatprep.subr.mxu0 0.0
    %5363 = vmatpush1.msra.mxu0 0.0
    %5364 = vmatprep.subr.mxu0 0.0
    %5365 = vmatpush1.msra.mxu0 0.0
    %5366 = vmatprep.subr.mxu0 0.0
    %5367 = vmatpush1.msra.mxu0 0.0
    %5368 = vmatprep.subr.mxu0 0.0
    %5369 = vmatpush1.msra.mxu0 0.0
    %5370 = vmatprep.subr.mxu0 0.0
    %5371 = vmatpush1.msra.mxu0 0.0
    %5372 = vmatprep.subr.mxu0 0.0
    %5373 = vmatpush1.msra.mxu0 0.0
    %5374 = vmatprep.subr.mxu0 0.0
    %5375 = vmatpush1.msra.mxu0 0.0
    %5376 = vmatprep.subr.mxu0 0.0
    %5377 = vmatpush1.msra.mxu0 0.0
    %5378 = vmatprep.subr.mxu0 %v5191
    %5379 = vmatpush1.msra.mxu0 %v5196
    %5380 = vmatprep.subr.mxu0 0.0
    %5381 = vmatpush2.msra.mxu0 0.0
    %5382 = vmatprep.subr.mxu0 0.0
    %5383 = vmatpush2.msra.mxu0 0.0
    %5384 = vmatprep.subr.mxu0 0.0
    %5385 = vmatpush2.msra.mxu0 0.0
    %5386 = vmatprep.subr.mxu0 0.0
    %5387 = vmatpush2.msra.mxu0 0.0
    %5388 = vmatprep.subr.mxu0 0.0
    %5389 = vmatpush2.msra.mxu0 0.0
    %5390 = vmatprep.subr.mxu0 0.0
    %5391 = vmatpush2.msra.mxu0 0.0
    %5392 = vmatprep.subr.mxu0 0.0
    %5393 = vmatpush2.msra.mxu0 0.0
    %5394 = vmatprep.subr.mxu0 0.0
    %5395 = vmatpush2.msra.mxu0 0.0
    %5396 = vmatprep.subr.mxu0 0.0
    %5397 = vmatpush2.msra.mxu0 0.0
    %5398 = vmatprep.subr.mxu0 0.0
    %5399 = vmatpush2.msra.mxu0 0.0
    %5400 = vmatprep.subr.mxu0 0.0
    %5401 = vmatpush2.msra.mxu0 0.0
    %5402 = vmatprep.subr.mxu0 0.0
    %5403 = vmatpush2.msra.mxu0 0.0
    %5404 = vmatprep.subr.mxu0 0.0
    %5405 = vmatpush2.msra.mxu0 0.0
    %5406 = vmatprep.subr.mxu0 0.0
    %5407 = vmatpush2.msra.mxu0 0.0
    %5408 = vmatprep.subr.mxu0 0.0
    %5409 = vmatpush2.msra.mxu0 0.0
    %5410 = vmatprep.subr.mxu0 0.0
    %5411 = vmatpush2.msra.mxu0 0.0
    %5412 = vmatprep.mubr.f32.mxu0 0.0
    %5413 = vmatmul.mubr.f32.gmra.mxu0 %v5204
    %v5414 = vpop.f32.mrf.mxu0
    %v5415 = vadd.f32 0.0, %v5414
    %v5416 = vpop.f32.mrf.mxu0
    %v5417 = vadd.f32 0.0, %v5416
    %5418 = vdwg.mxu0
    %v5419 = vadd.f32 %v5172, %v5273
    %v5420 = vadd.f32 %v5173, %v5275
    %v5421 = vadd.f32 %v5174, %v5344
    %v5422 = vadd.f32 %v5175, %v5346
    %v5423 = vadd.f32 %v5176, %v5415
    %v5424 = vadd.f32 %v5177, %v5417
    %v5425 = vld [vmem:[%s4] sm:$0xff]
    %5427 = vset.pattern.permute.xlu0 0
    %5428 = vperm.xlu0 %5427, %v5425
    %v5429 = vpop.permute.xlu0 %5428
    %v5431 = vadd.f32 %v5419, %v5429
    %v5432 = vadd.f32 %v5420, %v5429
    %v5433 = vadd.f32 %v5421, %v5429
    %v5434 = vadd.f32 %v5422, %v5429
    %v5435 = vadd.f32 %v5423, %v5429
    %v5436 = vadd.f32 %v5424, %v5429
    %v5437 = vmax.f32 %v5431, 0.0
    %v5438 = vmax.f32 %v5432, 0.0
    %v5439 = vmax.f32 %v5433, 0.0
    %v5440 = vmax.f32 %v5434, 0.0
    %v5441 = vmax.f32 %v5435, 0.0
    %v5442 = vmax.f32 %v5436, 0.0
    %5443 = vst [vmem:[#allocation3] sm:$0xff] %v5437
    %5444 = vst [vmem:[#allocation3 + $0x8] sm:$0xff] %v5438
    %5445 = vst [vmem:[#allocation3 + $0x10] sm:$0xff] %v5439
    %5446 = vst [vmem:[#allocation3 + $0x18] sm:$0xff] %v5440
    %5447 = vst [vmem:[#allocation3 + $0x20] sm:$0xff] %v5441
    %5448 = vst.msk [vmem:[#allocation3 + $0x28] sm:$0xff] %vm3240, %v5442
    %s5449 = smul.u32 8, 324
    %s5450 = smul.u32 %s5449, 1
    %s5451 = sshll.u32 %s5450, 4
    %5452 = dma.done [#allocation5], %s5451
    %v5453 = vld [vmem:[#allocation4] sm:$0xff]
    %v5454 = vld [vmem:[#allocation4 + $0x8] sm:$0xff]
    %v5455 = vld [vmem:[#allocation4 + $0x10] sm:$0xff]
    %v5456 = vld [vmem:[#allocation4 + $0x18] sm:$0xff]
    %v5457 = vld [vmem:[#allocation4 + $0x20] sm:$0xff]
    %v5458 = vld [vmem:[#allocation4 + $0x28] sm:$0xff]
    %v5459 = vld [vmem:[#allocation4 + $0x30] sm:$0xff]
    %v5460 = vld [vmem:[#allocation4 + $0x38] sm:$0xff]
    %v5461 = vld [vmem:[#allocation4 + $0x40] sm:$0xff]
    %v5462 = vld [vmem:[#allocation4 + $0x48] sm:$0xff]
    %v5463 = vld [vmem:[#allocation4 + $0x50] sm:$0xff]
    %v5464 = vld [vmem:[#allocation4 + $0x58] sm:$0xff]
    %v5465 = vld [vmem:[#allocation4 + $0x60] sm:$0xff]
    %v5466 = vld [vmem:[#allocation4 + $0x68] sm:$0xff]
    %v5467 = vld [vmem:[#allocation4 + $0x70] sm:$0xff]
    %v5468 = vld [vmem:[#allocation4 + $0x78] sm:$0xff]
    %v5469 = vld [vmem:[#allocation4 + $0x80] sm:$0xff]
    %v5470 = vld [vmem:[#allocation4 + $0x88] sm:$0xff]
    %v5471 = vld [vmem:[#allocation4 + $0x90] sm:$0xff]
    %v5472 = vld [vmem:[#allocation4 + $0x98] sm:$0xff]
    %v5473 = vld [vmem:[#allocation4 + $0xa0] sm:$0xff]
    %v5474 = vld [vmem:[#allocation4 + $0xa8] sm:$0xff]
    %v5475 = vld [vmem:[#allocation4 + $0xb0] sm:$0xff]
    %v5476 = vld [vmem:[#allocation4 + $0xb8] sm:$0xff]
    %v5477 = vld [vmem:[#allocation4 + $0xc0] sm:$0xff]
    %v5478 = vld [vmem:[#allocation4 + $0xc8] sm:$0xff]
    %v5479 = vld [vmem:[#allocation4 + $0xd0] sm:$0xff]
    %v5480 = vld [vmem:[#allocation4 + $0xd8] sm:$0xff]
    %v5481 = vld [vmem:[#allocation4 + $0xe0] sm:$0xff]
    %v5482 = vld [vmem:[#allocation4 + $0xe8] sm:$0xff]
    %v5483 = vld [vmem:[#allocation4 + $0xf0] sm:$0xff]
    %v5484 = vld [vmem:[#allocation4 + $0xf8] sm:$0xff]
    %v5485 = vld [vmem:[#allocation4 + $0x100] sm:$0xff]
    %v5486 = vld [vmem:[#allocation4 + $0x108] sm:$0xff]
    %v5487 = vld [vmem:[#allocation4 + $0x110] sm:$0xff]
    %v5488 = vld [vmem:[#allocation4 + $0x118] sm:$0xff]
    %v5489 = vld [vmem:[#allocation4 + $0x120] sm:$0xff]
    %v5490 = vld [vmem:[#allocation4 + $0x128] sm:$0xff]
    %v5491 = vld [vmem:[#allocation4 + $0x130] sm:$0xff]
    %v5492 = vld [vmem:[#allocation4 + $0x138] sm:$0xff]
    %v5493 = vld [vmem:[#allocation4 + $0x140] sm:$0xf]
    %v5494 = vld [vmem:[#allocation3] ss:$8 sm:$0x7]
    %s5495 = scalar_lea.vmem [#allocation3], 16
    %v5496 = vld [vmem:[%s5495] ss:$8 sm:$0xf]
    %s5497 = scalar_lea.vmem [#allocation4], 328
    %v5498 = vld [vmem:[%s5497] sm:$0xff]
    %v5499 = vld [vmem:[%s5497 + $0x8] sm:$0xff]
    %v5500 = vld [vmem:[%s5497 + $0x10] sm:$0xff]
    %v5501 = vld [vmem:[%s5497 + $0x18] sm:$0xff]
    %v5502 = vld [vmem:[%s5497 + $0x20] sm:$0xff]
    %v5503 = vld [vmem:[%s5497 + $0x28] sm:$0xff]
    %v5504 = vld [vmem:[%s5497 + $0x30] sm:$0xff]
    %v5505 = vld [vmem:[%s5497 + $0x38] sm:$0xff]
    %v5506 = vld [vmem:[%s5497 + $0x40] sm:$0xff]
    %v5507 = vld [vmem:[%s5497 + $0x48] sm:$0xff]
    %v5508 = vld [vmem:[%s5497 + $0x50] sm:$0xff]
    %v5509 = vld [vmem:[%s5497 + $0x58] sm:$0xff]
    %v5510 = vld [vmem:[%s5497 + $0x60] sm:$0xff]
    %v5511 = vld [vmem:[%s5497 + $0x68] sm:$0xff]
    %v5512 = vld [vmem:[%s5497 + $0x70] sm:$0xff]
    %v5513 = vld [vmem:[%s5497 + $0x78] sm:$0xff]
    %v5514 = vld [vmem:[%s5497 + $0x80] sm:$0xff]
    %v5515 = vld [vmem:[%s5497 + $0x88] sm:$0xff]
    %v5516 = vld [vmem:[%s5497 + $0x90] sm:$0xff]
    %v5517 = vld [vmem:[%s5497 + $0x98] sm:$0xff]
    %v5518 = vld [vmem:[%s5497 + $0xa0] sm:$0xff]
    %v5519 = vld [vmem:[%s5497 + $0xa8] sm:$0xff]
    %v5520 = vld [vmem:[%s5497 + $0xb0] sm:$0xff]
    %v5521 = vld [vmem:[%s5497 + $0xb8] sm:$0xff]
    %v5522 = vld [vmem:[%s5497 + $0xc0] sm:$0xff]
    %v5523 = vld [vmem:[%s5497 + $0xc8] sm:$0xff]
    %v5524 = vld [vmem:[%s5497 + $0xd0] sm:$0xff]
    %v5525 = vld [vmem:[%s5497 + $0xd8] sm:$0xff]
    %v5526 = vld [vmem:[%s5497 + $0xe0] sm:$0xff]
    %v5527 = vld [vmem:[%s5497 + $0xe8] sm:$0xff]
    %v5528 = vld [vmem:[%s5497 + $0xf0] sm:$0xff]
    %v5529 = vld [vmem:[%s5497 + $0xf8] sm:$0xff]
    %v5530 = vld [vmem:[%s5497 + $0x100] sm:$0xff]
    %v5531 = vld [vmem:[%s5497 + $0x108] sm:$0xff]
    %v5532 = vld [vmem:[%s5497 + $0x110] sm:$0xff]
    %v5533 = vld [vmem:[%s5497 + $0x118] sm:$0xff]
    %v5534 = vld [vmem:[%s5497 + $0x120] sm:$0xff]
    %v5535 = vld [vmem:[%s5497 + $0x128] sm:$0xff]
    %v5536 = vld [vmem:[%s5497 + $0x130] sm:$0xff]
    %v5537 = vld [vmem:[%s5497 + $0x138] sm:$0xff]
    %v5538 = vld [vmem:[%s5497 + $0x140] sm:$0xf]
    %s5539 = scalar_lea.vmem [#allocation3], 1
    %v5540 = vld [vmem:[%s5539] ss:$8 sm:$0x7]
    %v5542 = vlaneseq
    %v5543 = vshrl.u32 %v5542, 7
    %v5544 = vsub.s32 0, %v5543
    %v5545 = vrot.slane %v5540, %v5544
    %v5546 = vlaneseq
    %v5547 = vshrl.u32 %v5546, 7
    %v5548 = vsub.s32 1, %v5547
    %v5549 = vrot.slane %v5540, %v5548
    %v5550 = vlaneseq
    %v5551 = vshrl.u32 %v5550, 7
    %v5552 = vsub.s32 2, %v5551
    %v5553 = vrot.slane %v5540, %v5552
    %vm5556 = vcmask 556032
    %v5557 = vsel %vm5556, %v5553, 0
    %v5560 = vsel %vm789, %v5538, 0
    %5562 = vmatprep.subr.mxu0 0.0
    %5563 = vmatpush1.msra.mxu0 %v5513
    %5564 = vmatprep.subr.mxu0 0.0
    %5565 = vmatpush1.msra.mxu0 %v5512
    %5566 = vmatprep.subr.mxu0 0.0
    %5567 = vmatpush1.msra.mxu0 %v5511
    %5568 = vmatprep.subr.mxu0 0.0
    %5569 = vmatpush1.msra.mxu0 %v5510
    %5570 = vmatprep.subr.mxu0 0.0
    %5571 = vmatpush1.msra.mxu0 %v5509
    %5572 = vmatprep.subr.mxu0 0.0
    %5573 = vmatpush1.msra.mxu0 %v5508
    %5574 = vmatprep.subr.mxu0 0.0
    %5575 = vmatpush1.msra.mxu0 %v5507
    %5576 = vmatprep.subr.mxu0 0.0
    %5577 = vmatpush1.msra.mxu0 %v5506
    %5578 = vmatprep.subr.mxu0 0.0
    %5579 = vmatpush1.msra.mxu0 %v5505
    %5580 = vmatprep.subr.mxu0 0.0
    %5581 = vmatpush1.msra.mxu0 %v5504
    %5582 = vmatprep.subr.mxu0 0.0
    %5583 = vmatpush1.msra.mxu0 %v5503
    %5584 = vmatprep.subr.mxu0 0.0
    %5585 = vmatpush1.msra.mxu0 %v5502
    %5586 = vmatprep.subr.mxu0 0.0
    %5587 = vmatpush1.msra.mxu0 %v5501
    %5588 = vmatprep.subr.mxu0 0.0
    %5589 = vmatpush1.msra.mxu0 %v5500
    %5590 = vmatprep.subr.mxu0 0.0
    %5591 = vmatpush1.msra.mxu0 %v5499
    %5592 = vmatprep.subr.mxu0 0.0
    %5593 = vmatpush1.msra.mxu0 %v5498
    %5594 = vmatprep.subr.mxu0 0.0
    %5595 = vmatpush2.msra.mxu0 %v5529
    %5596 = vmatprep.subr.mxu0 0.0
    %5597 = vmatpush2.msra.mxu0 %v5528
    %5598 = vmatprep.subr.mxu0 0.0
    %5599 = vmatpush2.msra.mxu0 %v5527
    %5600 = vmatprep.subr.mxu0 0.0
    %5601 = vmatpush2.msra.mxu0 %v5526
    %5602 = vmatprep.subr.mxu0 0.0
    %5603 = vmatpush2.msra.mxu0 %v5525
    %5604 = vmatprep.subr.mxu0 0.0
    %5605 = vmatpush2.msra.mxu0 %v5524
    %5606 = vmatprep.subr.mxu0 0.0
    %5607 = vmatpush2.msra.mxu0 %v5523
    %5608 = vmatprep.subr.mxu0 0.0
    %5609 = vmatpush2.msra.mxu0 %v5522
    %5610 = vmatprep.subr.mxu0 0.0
    %5611 = vmatpush2.msra.mxu0 %v5521
    %5612 = vmatprep.subr.mxu0 0.0
    %5613 = vmatpush2.msra.mxu0 %v5520
    %5614 = vmatprep.subr.mxu0 0.0
    %5615 = vmatpush2.msra.mxu0 %v5519
    %5616 = vmatprep.subr.mxu0 0.0
    %5617 = vmatpush2.msra.mxu0 %v5518
    %5618 = vmatprep.subr.mxu0 0.0
    %5619 = vmatpush2.msra.mxu0 %v5517
    %5620 = vmatprep.subr.mxu0 0.0
    %5621 = vmatpush2.msra.mxu0 %v5516
    %5622 = vmatprep.subr.mxu0 0.0
    %5623 = vmatpush2.msra.mxu0 %v5515
    %5624 = vmatprep.subr.mxu0 0.0
    %5625 = vmatpush2.msra.mxu0 %v5514
    %5626 = vmatprep.mubr.f32.mxu0 %v5549
    %5627 = vmatmul.mubr.f32.gmra.mxu0 %v5545
    %v5628 = vpop.f32.mrf.mxu0
    %v5629 = vadd.f32 0.0, %v5628
    %v5630 = vpop.f32.mrf.mxu0
    %5631 = vdwg.mxu0
    %5632 = vmatprep.subr.mxu0 0.0
    %5633 = vmatpush1.msra.mxu0 0.0
    %5634 = vmatprep.subr.mxu0 0.0
    %5635 = vmatpush1.msra.mxu0 0.0
    %5636 = vmatprep.subr.mxu0 0.0
    %5637 = vmatpush1.msra.mxu0 0.0
    %5638 = vmatprep.subr.mxu0 0.0
    %5639 = vmatpush1.msra.mxu0 0.0
    %5640 = vmatprep.subr.mxu0 0.0
    %5641 = vmatpush1.msra.mxu0 0.0
    %5642 = vmatprep.subr.mxu0 0.0
    %5643 = vmatpush1.msra.mxu0 0.0
    %5644 = vmatprep.subr.mxu0 0.0
    %5645 = vmatpush1.msra.mxu0 0.0
    %5646 = vmatprep.subr.mxu0 0.0
    %5647 = vmatpush1.msra.mxu0 %v5560
    %5648 = vmatprep.subr.mxu0 0.0
    %5649 = vmatpush1.msra.mxu0 %v5537
    %5650 = vmatprep.subr.mxu0 0.0
    %5651 = vmatpush1.msra.mxu0 %v5536
    %5652 = vmatprep.subr.mxu0 0.0
    %5653 = vmatpush1.msra.mxu0 %v5535
    %5654 = vmatprep.subr.mxu0 0.0
    %5655 = vmatpush1.msra.mxu0 %v5534
    %5656 = vmatprep.subr.mxu0 0.0
    %5657 = vmatpush1.msra.mxu0 %v5533
    %5658 = vmatprep.subr.mxu0 0.0
    %5659 = vmatpush1.msra.mxu0 %v5532
    %5660 = vmatprep.subr.mxu0 0.0
    %5661 = vmatpush1.msra.mxu0 %v5531
    %5662 = vmatprep.subr.mxu0 0.0
    %5663 = vmatpush1.msra.mxu0 %v5530
    %5664 = vmatprep.subr.mxu0 0.0
    %5665 = vmatpush2.msra.mxu0 0.0
    %5666 = vmatprep.subr.mxu0 0.0
    %5667 = vmatpush2.msra.mxu0 0.0
    %5668 = vmatprep.subr.mxu0 0.0
    %5669 = vmatpush2.msra.mxu0 0.0
    %5670 = vmatprep.subr.mxu0 0.0
    %5671 = vmatpush2.msra.mxu0 0.0
    %5672 = vmatprep.subr.mxu0 0.0
    %5673 = vmatpush2.msra.mxu0 0.0
    %5674 = vmatprep.subr.mxu0 0.0
    %5675 = vmatpush2.msra.mxu0 0.0
    %5676 = vmatprep.subr.mxu0 0.0
    %5677 = vmatpush2.msra.mxu0 0.0
    %5678 = vmatprep.subr.mxu0 0.0
    %5679 = vmatpush2.msra.mxu0 0.0
    %5680 = vmatprep.subr.mxu0 0.0
    %5681 = vmatpush2.msra.mxu0 0.0
    %5682 = vmatprep.subr.mxu0 0.0
    %5683 = vmatpush2.msra.mxu0 0.0
    %5684 = vmatprep.subr.mxu0 0.0
    %5685 = vmatpush2.msra.mxu0 0.0
    %5686 = vmatprep.subr.mxu0 0.0
    %5687 = vmatpush2.msra.mxu0 0.0
    %5688 = vmatprep.subr.mxu0 0.0
    %5689 = vmatpush2.msra.mxu0 0.0
    %5690 = vmatprep.subr.mxu0 0.0
    %5691 = vmatpush2.msra.mxu0 0.0
    %5692 = vmatprep.subr.mxu0 0.0
    %5693 = vmatpush2.msra.mxu0 0.0
    %5694 = vmatprep.subr.mxu0 0.0
    %5695 = vmatpush2.msra.mxu0 0.0
    %5696 = vmatprep.mubr.f32.mxu0 0.0
    %5697 = vmatmul.mubr.f32.gmra.mxu0 %v5557
    %v5698 = vpop.f32.mrf.mxu0
    %v5699 = vadd.f32 %v5629, %v5698
    %v5700 = vpop.f32.mrf.mxu0
    %5701 = vdwg.mxu0
    %v5703 = vlaneseq
    %v5704 = vshrl.u32 %v5703, 7
    %v5705 = vsub.s32 0, %v5704
    %v5706 = vrot.slane %v5494, %v5705
    %v5707 = vlaneseq
    %v5708 = vshrl.u32 %v5707, 7
    %v5709 = vsub.s32 1, %v5708
    %v5710 = vrot.slane %v5494, %v5709
    %v5711 = vlaneseq
    %v5712 = vshrl.u32 %v5711, 7
    %v5713 = vsub.s32 2, %v5712
    %v5714 = vrot.slane %v5494, %v5713
    %v5717 = vsel %vm5556, %v5714, 0
    %v5720 = vsel %vm789, %v5493, 0
    %5722 = vmatprep.subr.mxu0 0.0
    %5723 = vmatpush1.msra.mxu0 %v5468
    %5724 = vmatprep.subr.mxu0 0.0
    %5725 = vmatpush1.msra.mxu0 %v5467
    %5726 = vmatprep.subr.mxu0 0.0
    %5727 = vmatpush1.msra.mxu0 %v5466
    %5728 = vmatprep.subr.mxu0 0.0
    %5729 = vmatpush1.msra.mxu0 %v5465
    %5730 = vmatprep.subr.mxu0 0.0
    %5731 = vmatpush1.msra.mxu0 %v5464
    %5732 = vmatprep.subr.mxu0 0.0
    %5733 = vmatpush1.msra.mxu0 %v5463
    %5734 = vmatprep.subr.mxu0 0.0
    %5735 = vmatpush1.msra.mxu0 %v5462
    %5736 = vmatprep.subr.mxu0 0.0
    %5737 = vmatpush1.msra.mxu0 %v5461
    %5738 = vmatprep.subr.mxu0 0.0
    %5739 = vmatpush1.msra.mxu0 %v5460
    %5740 = vmatprep.subr.mxu0 0.0
    %5741 = vmatpush1.msra.mxu0 %v5459
    %5742 = vmatprep.subr.mxu0 0.0
    %5743 = vmatpush1.msra.mxu0 %v5458
    %5744 = vmatprep.subr.mxu0 0.0
    %5745 = vmatpush1.msra.mxu0 %v5457
    %5746 = vmatprep.subr.mxu0 0.0
    %5747 = vmatpush1.msra.mxu0 %v5456
    %5748 = vmatprep.subr.mxu0 0.0
    %5749 = vmatpush1.msra.mxu0 %v5455
    %5750 = vmatprep.subr.mxu0 0.0
    %5751 = vmatpush1.msra.mxu0 %v5454
    %5752 = vmatprep.subr.mxu0 0.0
    %5753 = vmatpush1.msra.mxu0 %v5453
    %5754 = vmatprep.subr.mxu0 0.0
    %5755 = vmatpush2.msra.mxu0 %v5484
    %5756 = vmatprep.subr.mxu0 0.0
    %5757 = vmatpush2.msra.mxu0 %v5483
    %5758 = vmatprep.subr.mxu0 0.0
    %5759 = vmatpush2.msra.mxu0 %v5482
    %5760 = vmatprep.subr.mxu0 0.0
    %5761 = vmatpush2.msra.mxu0 %v5481
    %5762 = vmatprep.subr.mxu0 0.0
    %5763 = vmatpush2.msra.mxu0 %v5480
    %5764 = vmatprep.subr.mxu0 0.0
    %5765 = vmatpush2.msra.mxu0 %v5479
    %5766 = vmatprep.subr.mxu0 0.0
    %5767 = vmatpush2.msra.mxu0 %v5478
    %5768 = vmatprep.subr.mxu0 0.0
    %5769 = vmatpush2.msra.mxu0 %v5477
    %5770 = vmatprep.subr.mxu0 0.0
    %5771 = vmatpush2.msra.mxu0 %v5476
    %5772 = vmatprep.subr.mxu0 0.0
    %5773 = vmatpush2.msra.mxu0 %v5475
    %5774 = vmatprep.subr.mxu0 0.0
    %5775 = vmatpush2.msra.mxu0 %v5474
    %5776 = vmatprep.subr.mxu0 0.0
    %5777 = vmatpush2.msra.mxu0 %v5473
    %5778 = vmatprep.subr.mxu0 0.0
    %5779 = vmatpush2.msra.mxu0 %v5472
    %5780 = vmatprep.subr.mxu0 0.0
    %5781 = vmatpush2.msra.mxu0 %v5471
    %5782 = vmatprep.subr.mxu0 0.0
    %5783 = vmatpush2.msra.mxu0 %v5470
    %5784 = vmatprep.subr.mxu0 0.0
    %5785 = vmatpush2.msra.mxu0 %v5469
    %5786 = vmatprep.mubr.f32.mxu0 %v5710
    %5787 = vmatmul.mubr.f32.gmra.mxu0 %v5706
    %v5788 = vpop.f32.mrf.mxu0
    %v5789 = vadd.f32 %v5699, %v5788
    %v5790 = vpop.f32.mrf.mxu0
    %5791 = vdwg.mxu0
    %5792 = vmatprep.subr.mxu0 0.0
    %5793 = vmatpush1.msra.mxu0 0.0
    %5794 = vmatprep.subr.mxu0 0.0
    %5795 = vmatpush1.msra.mxu0 0.0
    %5796 = vmatprep.subr.mxu0 0.0
    %5797 = vmatpush1.msra.mxu0 0.0
    %5798 = vmatprep.subr.mxu0 0.0
    %5799 = vmatpush1.msra.mxu0 0.0
    %5800 = vmatprep.subr.mxu0 0.0
    %5801 = vmatpush1.msra.mxu0 0.0
    %5802 = vmatprep.subr.mxu0 0.0
    %5803 = vmatpush1.msra.mxu0 0.0
    %5804 = vmatprep.subr.mxu0 0.0
    %5805 = vmatpush1.msra.mxu0 0.0
    %5806 = vmatprep.subr.mxu0 0.0
    %5807 = vmatpush1.msra.mxu0 %v5720
    %5808 = vmatprep.subr.mxu0 0.0
    %5809 = vmatpush1.msra.mxu0 %v5492
    %5810 = vmatprep.subr.mxu0 0.0
    %5811 = vmatpush1.msra.mxu0 %v5491
    %5812 = vmatprep.subr.mxu0 0.0
    %5813 = vmatpush1.msra.mxu0 %v5490
    %5814 = vmatprep.subr.mxu0 0.0
    %5815 = vmatpush1.msra.mxu0 %v5489
    %5816 = vmatprep.subr.mxu0 0.0
    %5817 = vmatpush1.msra.mxu0 %v5488
    %5818 = vmatprep.subr.mxu0 0.0
    %5819 = vmatpush1.msra.mxu0 %v5487
    %5820 = vmatprep.subr.mxu0 0.0
    %5821 = vmatpush1.msra.mxu0 %v5486
    %5822 = vmatprep.subr.mxu0 0.0
    %5823 = vmatpush1.msra.mxu0 %v5485
    %5824 = vmatprep.subr.mxu0 0.0
    %5825 = vmatpush2.msra.mxu0 0.0
    %5826 = vmatprep.subr.mxu0 0.0
    %5827 = vmatpush2.msra.mxu0 0.0
    %5828 = vmatprep.subr.mxu0 0.0
    %5829 = vmatpush2.msra.mxu0 0.0
    %5830 = vmatprep.subr.mxu0 0.0
    %5831 = vmatpush2.msra.mxu0 0.0
    %5832 = vmatprep.subr.mxu0 0.0
    %5833 = vmatpush2.msra.mxu0 0.0
    %5834 = vmatprep.subr.mxu0 0.0
    %5835 = vmatpush2.msra.mxu0 0.0
    %5836 = vmatprep.subr.mxu0 0.0
    %5837 = vmatpush2.msra.mxu0 0.0
    %5838 = vmatprep.subr.mxu0 0.0
    %5839 = vmatpush2.msra.mxu0 0.0
    %5840 = vmatprep.subr.mxu0 0.0
    %5841 = vmatpush2.msra.mxu0 0.0
    %5842 = vmatprep.subr.mxu0 0.0
    %5843 = vmatpush2.msra.mxu0 0.0
    %5844 = vmatprep.subr.mxu0 0.0
    %5845 = vmatpush2.msra.mxu0 0.0
    %5846 = vmatprep.subr.mxu0 0.0
    %5847 = vmatpush2.msra.mxu0 0.0
    %5848 = vmatprep.subr.mxu0 0.0
    %5849 = vmatpush2.msra.mxu0 0.0
    %5850 = vmatprep.subr.mxu0 0.0
    %5851 = vmatpush2.msra.mxu0 0.0
    %5852 = vmatprep.subr.mxu0 0.0
    %5853 = vmatpush2.msra.mxu0 0.0
    %5854 = vmatprep.subr.mxu0 0.0
    %5855 = vmatpush2.msra.mxu0 0.0
    %5856 = vmatprep.mubr.f32.mxu0 0.0
    %5857 = vmatmul.mubr.f32.gmra.mxu0 %v5717
    %v5858 = vpop.f32.mrf.mxu0
    %v5859 = vadd.f32 %v5789, %v5858
    %v5860 = vpop.f32.mrf.mxu0
    %5861 = vdwg.mxu0
    %s5862 = scalar_lea.vmem [#allocation3], 17
    %v5863 = vld [vmem:[%s5862] ss:$8 sm:$0xf]
    %v5865 = vlaneseq
    %v5866 = vshrl.u32 %v5865, 7
    %v5867 = vsub.s32 0, %v5866
    %v5868 = vrot.slane %v5863, %v5867
    %v5869 = vlaneseq
    %v5870 = vshrl.u32 %v5869, 7
    %v5871 = vsub.s32 1, %v5870
    %v5872 = vrot.slane %v5863, %v5871
    %v5873 = vlaneseq
    %v5874 = vshrl.u32 %v5873, 7
    %v5875 = vsub.s32 2, %v5874
    %v5876 = vrot.slane %v5863, %v5875
    %v5877 = vlaneseq
    %v5878 = vshrl.u32 %v5877, 7
    %v5879 = vsub.s32 3, %v5878
    %v5880 = vrot.slane %v5863, %v5879
    %5881 = vrot.lane.b32.xlu0 %v5868, 60
    %v5882 = vpop.permute.xlu0 %5881
    %5883 = vrot.lane.b32.xlu0 %v5872, 60
    %v5884 = vpop.permute.xlu0 %5883
    %5885 = vrot.lane.b32.xlu0 %v5876, 60
    %v5886 = vpop.permute.xlu0 %5885
    %5887 = vrot.lane.b32.xlu0 %v5880, 60
    %v5888 = vpop.permute.xlu0 %5887
    %vm5889 = vcmask 490496
    %v5890 = vsel %vm5889, %v5882, %v5884
    %v5891 = vsel %vm5889, %v5884, %v5886
    %v5892 = vsel %vm5889, %v5886, %v5888
    %v5895 = vsel %vm5556, %v5892, 0
    %5897 = vmatprep.subr.mxu0 0.0
    %5898 = vmatpush1.msra.mxu0 %v5513
    %5899 = vmatprep.subr.mxu0 0.0
    %5900 = vmatpush1.msra.mxu0 %v5512
    %5901 = vmatprep.subr.mxu0 0.0
    %5902 = vmatpush1.msra.mxu0 %v5511
    %5903 = vmatprep.subr.mxu0 0.0
    %5904 = vmatpush1.msra.mxu0 %v5510
    %5905 = vmatprep.subr.mxu0 0.0
    %5906 = vmatpush1.msra.mxu0 %v5509
    %5907 = vmatprep.subr.mxu0 0.0
    %5908 = vmatpush1.msra.mxu0 %v5508
    %5909 = vmatprep.subr.mxu0 0.0
    %5910 = vmatpush1.msra.mxu0 %v5507
    %5911 = vmatprep.subr.mxu0 0.0
    %5912 = vmatpush1.msra.mxu0 %v5506
    %5913 = vmatprep.subr.mxu0 0.0
    %5914 = vmatpush1.msra.mxu0 %v5505
    %5915 = vmatprep.subr.mxu0 0.0
    %5916 = vmatpush1.msra.mxu0 %v5504
    %5917 = vmatprep.subr.mxu0 0.0
    %5918 = vmatpush1.msra.mxu0 %v5503
    %5919 = vmatprep.subr.mxu0 0.0
    %5920 = vmatpush1.msra.mxu0 %v5502
    %5921 = vmatprep.subr.mxu0 0.0
    %5922 = vmatpush1.msra.mxu0 %v5501
    %5923 = vmatprep.subr.mxu0 0.0
    %5924 = vmatpush1.msra.mxu0 %v5500
    %5925 = vmatprep.subr.mxu0 0.0
    %5926 = vmatpush1.msra.mxu0 %v5499
    %5927 = vmatprep.subr.mxu0 0.0
    %5928 = vmatpush1.msra.mxu0 %v5498
    %5929 = vmatprep.subr.mxu0 0.0
    %5930 = vmatpush2.msra.mxu0 %v5529
    %5931 = vmatprep.subr.mxu0 0.0
    %5932 = vmatpush2.msra.mxu0 %v5528
    %5933 = vmatprep.subr.mxu0 0.0
    %5934 = vmatpush2.msra.mxu0 %v5527
    %5935 = vmatprep.subr.mxu0 0.0
    %5936 = vmatpush2.msra.mxu0 %v5526
    %5937 = vmatprep.subr.mxu0 0.0
    %5938 = vmatpush2.msra.mxu0 %v5525
    %5939 = vmatprep.subr.mxu0 0.0
    %5940 = vmatpush2.msra.mxu0 %v5524
    %5941 = vmatprep.subr.mxu0 0.0
    %5942 = vmatpush2.msra.mxu0 %v5523
    %5943 = vmatprep.subr.mxu0 0.0
    %5944 = vmatpush2.msra.mxu0 %v5522
    %5945 = vmatprep.subr.mxu0 0.0
    %5946 = vmatpush2.msra.mxu0 %v5521
    %5947 = vmatprep.subr.mxu0 0.0
    %5948 = vmatpush2.msra.mxu0 %v5520
    %5949 = vmatprep.subr.mxu0 0.0
    %5950 = vmatpush2.msra.mxu0 %v5519
    %5951 = vmatprep.subr.mxu0 0.0
    %5952 = vmatpush2.msra.mxu0 %v5518
    %5953 = vmatprep.subr.mxu0 0.0
    %5954 = vmatpush2.msra.mxu0 %v5517
    %5955 = vmatprep.subr.mxu0 0.0
    %5956 = vmatpush2.msra.mxu0 %v5516
    %5957 = vmatprep.subr.mxu0 0.0
    %5958 = vmatpush2.msra.mxu0 %v5515
    %5959 = vmatprep.subr.mxu0 0.0
    %5960 = vmatpush2.msra.mxu0 %v5514
    %5961 = vmatprep.mubr.f32.mxu0 %v5891
    %5962 = vmatmul.mubr.f32.gmra.mxu0 %v5890
    %v5963 = vpop.f32.mrf.mxu0
    %v5964 = vadd.f32 0.0, %v5963
    %v5965 = vpop.f32.mrf.mxu0
    %5966 = vdwg.mxu0
    %5967 = vmatprep.subr.mxu0 0.0
    %5968 = vmatpush1.msra.mxu0 0.0
    %5969 = vmatprep.subr.mxu0 0.0
    %5970 = vmatpush1.msra.mxu0 0.0
    %5971 = vmatprep.subr.mxu0 0.0
    %5972 = vmatpush1.msra.mxu0 0.0
    %5973 = vmatprep.subr.mxu0 0.0
    %5974 = vmatpush1.msra.mxu0 0.0
    %5975 = vmatprep.subr.mxu0 0.0
    %5976 = vmatpush1.msra.mxu0 0.0
    %5977 = vmatprep.subr.mxu0 0.0
    %5978 = vmatpush1.msra.mxu0 0.0
    %5979 = vmatprep.subr.mxu0 0.0
    %5980 = vmatpush1.msra.mxu0 0.0
    %5981 = vmatprep.subr.mxu0 0.0
    %5982 = vmatpush1.msra.mxu0 %v5560
    %5983 = vmatprep.subr.mxu0 0.0
    %5984 = vmatpush1.msra.mxu0 %v5537
    %5985 = vmatprep.subr.mxu0 0.0
    %5986 = vmatpush1.msra.mxu0 %v5536
    %5987 = vmatprep.subr.mxu0 0.0
    %5988 = vmatpush1.msra.mxu0 %v5535
    %5989 = vmatprep.subr.mxu0 0.0
    %5990 = vmatpush1.msra.mxu0 %v5534
    %5991 = vmatprep.subr.mxu0 0.0
    %5992 = vmatpush1.msra.mxu0 %v5533
    %5993 = vmatprep.subr.mxu0 0.0
    %5994 = vmatpush1.msra.mxu0 %v5532
    %5995 = vmatprep.subr.mxu0 0.0
    %5996 = vmatpush1.msra.mxu0 %v5531
    %5997 = vmatprep.subr.mxu0 0.0
    %5998 = vmatpush1.msra.mxu0 %v5530
    %5999 = vmatprep.subr.mxu0 0.0
    %6000 = vmatpush2.msra.mxu0 0.0
    %6001 = vmatprep.subr.mxu0 0.0
    %6002 = vmatpush2.msra.mxu0 0.0
    %6003 = vmatprep.subr.mxu0 0.0
    %6004 = vmatpush2.msra.mxu0 0.0
    %6005 = vmatprep.subr.mxu0 0.0
    %6006 = vmatpush2.msra.mxu0 0.0
    %6007 = vmatprep.subr.mxu0 0.0
    %6008 = vmatpush2.msra.mxu0 0.0
    %6009 = vmatprep.subr.mxu0 0.0
    %6010 = vmatpush2.msra.mxu0 0.0
    %6011 = vmatprep.subr.mxu0 0.0
    %6012 = vmatpush2.msra.mxu0 0.0
    %6013 = vmatprep.subr.mxu0 0.0
    %6014 = vmatpush2.msra.mxu0 0.0
    %6015 = vmatprep.subr.mxu0 0.0
    %6016 = vmatpush2.msra.mxu0 0.0
    %6017 = vmatprep.subr.mxu0 0.0
    %6018 = vmatpush2.msra.mxu0 0.0
    %6019 = vmatprep.subr.mxu0 0.0
    %6020 = vmatpush2.msra.mxu0 0.0
    %6021 = vmatprep.subr.mxu0 0.0
    %6022 = vmatpush2.msra.mxu0 0.0
    %6023 = vmatprep.subr.mxu0 0.0
    %6024 = vmatpush2.msra.mxu0 0.0
    %6025 = vmatprep.subr.mxu0 0.0
    %6026 = vmatpush2.msra.mxu0 0.0
    %6027 = vmatprep.subr.mxu0 0.0
    %6028 = vmatpush2.msra.mxu0 0.0
    %6029 = vmatprep.subr.mxu0 0.0
    %6030 = vmatpush2.msra.mxu0 0.0
    %6031 = vmatprep.mubr.f32.mxu0 0.0
    %6032 = vmatmul.mubr.f32.gmra.mxu0 %v5895
    %v6033 = vpop.f32.mrf.mxu0
    %v6034 = vadd.f32 %v5964, %v6033
    %v6035 = vpop.f32.mrf.mxu0
    %6036 = vdwg.mxu0
    %v6038 = vlaneseq
    %v6039 = vshrl.u32 %v6038, 7
    %v6040 = vsub.s32 0, %v6039
    %v6041 = vrot.slane %v5496, %v6040
    %v6042 = vlaneseq
    %v6043 = vshrl.u32 %v6042, 7
    %v6044 = vsub.s32 1, %v6043
    %v6045 = vrot.slane %v5496, %v6044
    %v6046 = vlaneseq
    %v6047 = vshrl.u32 %v6046, 7
    %v6048 = vsub.s32 2, %v6047
    %v6049 = vrot.slane %v5496, %v6048
    %v6050 = vlaneseq
    %v6051 = vshrl.u32 %v6050, 7
    %v6052 = vsub.s32 3, %v6051
    %v6053 = vrot.slane %v5496, %v6052
    %6054 = vrot.lane.b32.xlu0 %v6041, 60
    %v6055 = vpop.permute.xlu0 %6054
    %6056 = vrot.lane.b32.xlu0 %v6045, 60
    %v6057 = vpop.permute.xlu0 %6056
    %6058 = vrot.lane.b32.xlu0 %v6049, 60
    %v6059 = vpop.permute.xlu0 %6058
    %6060 = vrot.lane.b32.xlu0 %v6053, 60
    %v6061 = vpop.permute.xlu0 %6060
    %v6062 = vsel %vm5889, %v6055, %v6057
    %v6063 = vsel %vm5889, %v6057, %v6059
    %v6064 = vsel %vm5889, %v6059, %v6061
    %v6067 = vsel %vm5556, %v6064, 0
    %6069 = vmatprep.subr.mxu0 0.0
    %6070 = vmatpush1.msra.mxu0 %v5468
    %6071 = vmatprep.subr.mxu0 0.0
    %6072 = vmatpush1.msra.mxu0 %v5467
    %6073 = vmatprep.subr.mxu0 0.0
    %6074 = vmatpush1.msra.mxu0 %v5466
    %6075 = vmatprep.subr.mxu0 0.0
    %6076 = vmatpush1.msra.mxu0 %v5465
    %6077 = vmatprep.subr.mxu0 0.0
    %6078 = vmatpush1.msra.mxu0 %v5464
    %6079 = vmatprep.subr.mxu0 0.0
    %6080 = vmatpush1.msra.mxu0 %v5463
    %6081 = vmatprep.subr.mxu0 0.0
    %6082 = vmatpush1.msra.mxu0 %v5462
    %6083 = vmatprep.subr.mxu0 0.0
    %6084 = vmatpush1.msra.mxu0 %v5461
    %6085 = vmatprep.subr.mxu0 0.0
    %6086 = vmatpush1.msra.mxu0 %v5460
    %6087 = vmatprep.subr.mxu0 0.0
    %6088 = vmatpush1.msra.mxu0 %v5459
    %6089 = vmatprep.subr.mxu0 0.0
    %6090 = vmatpush1.msra.mxu0 %v5458
    %6091 = vmatprep.subr.mxu0 0.0
    %6092 = vmatpush1.msra.mxu0 %v5457
    %6093 = vmatprep.subr.mxu0 0.0
    %6094 = vmatpush1.msra.mxu0 %v5456
    %6095 = vmatprep.subr.mxu0 0.0
    %6096 = vmatpush1.msra.mxu0 %v5455
    %6097 = vmatprep.subr.mxu0 0.0
    %6098 = vmatpush1.msra.mxu0 %v5454
    %6099 = vmatprep.subr.mxu0 0.0
    %6100 = vmatpush1.msra.mxu0 %v5453
    %6101 = vmatprep.subr.mxu0 0.0
    %6102 = vmatpush2.msra.mxu0 %v5484
    %6103 = vmatprep.subr.mxu0 0.0
    %6104 = vmatpush2.msra.mxu0 %v5483
    %6105 = vmatprep.subr.mxu0 0.0
    %6106 = vmatpush2.msra.mxu0 %v5482
    %6107 = vmatprep.subr.mxu0 0.0
    %6108 = vmatpush2.msra.mxu0 %v5481
    %6109 = vmatprep.subr.mxu0 0.0
    %6110 = vmatpush2.msra.mxu0 %v5480
    %6111 = vmatprep.subr.mxu0 0.0
    %6112 = vmatpush2.msra.mxu0 %v5479
    %6113 = vmatprep.subr.mxu0 0.0
    %6114 = vmatpush2.msra.mxu0 %v5478
    %6115 = vmatprep.subr.mxu0 0.0
    %6116 = vmatpush2.msra.mxu0 %v5477
    %6117 = vmatprep.subr.mxu0 0.0
    %6118 = vmatpush2.msra.mxu0 %v5476
    %6119 = vmatprep.subr.mxu0 0.0
    %6120 = vmatpush2.msra.mxu0 %v5475
    %6121 = vmatprep.subr.mxu0 0.0
    %6122 = vmatpush2.msra.mxu0 %v5474
    %6123 = vmatprep.subr.mxu0 0.0
    %6124 = vmatpush2.msra.mxu0 %v5473
    %6125 = vmatprep.subr.mxu0 0.0
    %6126 = vmatpush2.msra.mxu0 %v5472
    %6127 = vmatprep.subr.mxu0 0.0
    %6128 = vmatpush2.msra.mxu0 %v5471
    %6129 = vmatprep.subr.mxu0 0.0
    %6130 = vmatpush2.msra.mxu0 %v5470
    %6131 = vmatprep.subr.mxu0 0.0
    %6132 = vmatpush2.msra.mxu0 %v5469
    %6133 = vmatprep.mubr.f32.mxu0 %v6063
    %6134 = vmatmul.mubr.f32.gmra.mxu0 %v6062
    %v6135 = vpop.f32.mrf.mxu0
    %v6136 = vadd.f32 %v6034, %v6135
    %v6137 = vpop.f32.mrf.mxu0
    %6138 = vdwg.mxu0
    %6139 = vmatprep.subr.mxu0 0.0
    %6140 = vmatpush1.msra.mxu0 0.0
    %6141 = vmatprep.subr.mxu0 0.0
    %6142 = vmatpush1.msra.mxu0 0.0
    %6143 = vmatprep.subr.mxu0 0.0
    %6144 = vmatpush1.msra.mxu0 0.0
    %6145 = vmatprep.subr.mxu0 0.0
    %6146 = vmatpush1.msra.mxu0 0.0
    %6147 = vmatprep.subr.mxu0 0.0
    %6148 = vmatpush1.msra.mxu0 0.0
    %6149 = vmatprep.subr.mxu0 0.0
    %6150 = vmatpush1.msra.mxu0 0.0
    %6151 = vmatprep.subr.mxu0 0.0
    %6152 = vmatpush1.msra.mxu0 0.0
    %6153 = vmatprep.subr.mxu0 0.0
    %6154 = vmatpush1.msra.mxu0 %v5720
    %6155 = vmatprep.subr.mxu0 0.0
    %6156 = vmatpush1.msra.mxu0 %v5492
    %6157 = vmatprep.subr.mxu0 0.0
    %6158 = vmatpush1.msra.mxu0 %v5491
    %6159 = vmatprep.subr.mxu0 0.0
    %6160 = vmatpush1.msra.mxu0 %v5490
    %6161 = vmatprep.subr.mxu0 0.0
    %6162 = vmatpush1.msra.mxu0 %v5489
    %6163 = vmatprep.subr.mxu0 0.0
    %6164 = vmatpush1.msra.mxu0 %v5488
    %6165 = vmatprep.subr.mxu0 0.0
    %6166 = vmatpush1.msra.mxu0 %v5487
    %6167 = vmatprep.subr.mxu0 0.0
    %6168 = vmatpush1.msra.mxu0 %v5486
    %6169 = vmatprep.subr.mxu0 0.0
    %6170 = vmatpush1.msra.mxu0 %v5485
    %6171 = vmatprep.subr.mxu0 0.0
    %6172 = vmatpush2.msra.mxu0 0.0
    %6173 = vmatprep.subr.mxu0 0.0
    %6174 = vmatpush2.msra.mxu0 0.0
    %6175 = vmatprep.subr.mxu0 0.0
    %6176 = vmatpush2.msra.mxu0 0.0
    %6177 = vmatprep.subr.mxu0 0.0
    %6178 = vmatpush2.msra.mxu0 0.0
    %6179 = vmatprep.subr.mxu0 0.0
    %6180 = vmatpush2.msra.mxu0 0.0
    %6181 = vmatprep.subr.mxu0 0.0
    %6182 = vmatpush2.msra.mxu0 0.0
    %6183 = vmatprep.subr.mxu0 0.0
    %6184 = vmatpush2.msra.mxu0 0.0
    %6185 = vmatprep.subr.mxu0 0.0
    %6186 = vmatpush2.msra.mxu0 0.0
    %6187 = vmatprep.subr.mxu0 0.0
    %6188 = vmatpush2.msra.mxu0 0.0
    %6189 = vmatprep.subr.mxu0 0.0
    %6190 = vmatpush2.msra.mxu0 0.0
    %6191 = vmatprep.subr.mxu0 0.0
    %6192 = vmatpush2.msra.mxu0 0.0
    %6193 = vmatprep.subr.mxu0 0.0
    %6194 = vmatpush2.msra.mxu0 0.0
    %6195 = vmatprep.subr.mxu0 0.0
    %6196 = vmatpush2.msra.mxu0 0.0
    %6197 = vmatprep.subr.mxu0 0.0
    %6198 = vmatpush2.msra.mxu0 0.0
    %6199 = vmatprep.subr.mxu0 0.0
    %6200 = vmatpush2.msra.mxu0 0.0
    %6201 = vmatprep.subr.mxu0 0.0
    %6202 = vmatpush2.msra.mxu0 0.0
    %6203 = vmatprep.mubr.f32.mxu0 0.0
    %6204 = vmatmul.mubr.f32.gmra.mxu0 %v6067
    %v6205 = vpop.f32.mrf.mxu0
    %v6206 = vadd.f32 %v6136, %v6205
    %v6207 = vpop.f32.mrf.mxu0
    %6208 = vdwg.mxu0
    %s6209 = scalar_lea.vmem [#allocation4], 656
    %v6210 = vld [vmem:[%s6209] sm:$0xff]
    %v6211 = vld [vmem:[%s6209 + $0x8] sm:$0xff]
    %v6212 = vld [vmem:[%s6209 + $0x10] sm:$0xff]
    %v6213 = vld [vmem:[%s6209 + $0x18] sm:$0xff]
    %v6214 = vld [vmem:[%s6209 + $0x20] sm:$0xff]
    %v6215 = vld [vmem:[%s6209 + $0x28] sm:$0xff]
    %v6216 = vld [vmem:[%s6209 + $0x30] sm:$0xff]
    %v6217 = vld [vmem:[%s6209 + $0x38] sm:$0xff]
    %v6218 = vld [vmem:[%s6209 + $0x40] sm:$0xff]
    %v6219 = vld [vmem:[%s6209 + $0x48] sm:$0xff]
    %v6220 = vld [vmem:[%s6209 + $0x50] sm:$0xff]
    %v6221 = vld [vmem:[%s6209 + $0x58] sm:$0xff]
    %v6222 = vld [vmem:[%s6209 + $0x60] sm:$0xff]
    %v6223 = vld [vmem:[%s6209 + $0x68] sm:$0xff]
    %v6224 = vld [vmem:[%s6209 + $0x70] sm:$0xff]
    %v6225 = vld [vmem:[%s6209 + $0x78] sm:$0xff]
    %v6226 = vld [vmem:[%s6209 + $0x80] sm:$0xff]
    %v6227 = vld [vmem:[%s6209 + $0x88] sm:$0xff]
    %v6228 = vld [vmem:[%s6209 + $0x90] sm:$0xff]
    %v6229 = vld [vmem:[%s6209 + $0x98] sm:$0xff]
    %v6230 = vld [vmem:[%s6209 + $0xa0] sm:$0xff]
    %v6231 = vld [vmem:[%s6209 + $0xa8] sm:$0xff]
    %v6232 = vld [vmem:[%s6209 + $0xb0] sm:$0xff]
    %v6233 = vld [vmem:[%s6209 + $0xb8] sm:$0xff]
    %v6234 = vld [vmem:[%s6209 + $0xc0] sm:$0xff]
    %v6235 = vld [vmem:[%s6209 + $0xc8] sm:$0xff]
    %v6236 = vld [vmem:[%s6209 + $0xd0] sm:$0xff]
    %v6237 = vld [vmem:[%s6209 + $0xd8] sm:$0xff]
    %v6238 = vld [vmem:[%s6209 + $0xe0] sm:$0xff]
    %v6239 = vld [vmem:[%s6209 + $0xe8] sm:$0xff]
    %v6240 = vld [vmem:[%s6209 + $0xf0] sm:$0xff]
    %v6241 = vld [vmem:[%s6209 + $0xf8] sm:$0xff]
    %v6242 = vld [vmem:[%s6209 + $0x100] sm:$0xff]
    %v6243 = vld [vmem:[%s6209 + $0x108] sm:$0xff]
    %v6244 = vld [vmem:[%s6209 + $0x110] sm:$0xff]
    %v6245 = vld [vmem:[%s6209 + $0x118] sm:$0xff]
    %v6246 = vld [vmem:[%s6209 + $0x120] sm:$0xff]
    %v6247 = vld [vmem:[%s6209 + $0x128] sm:$0xff]
    %v6248 = vld [vmem:[%s6209 + $0x130] sm:$0xff]
    %v6249 = vld [vmem:[%s6209 + $0x138] sm:$0xff]
    %v6250 = vld [vmem:[%s6209 + $0x140] sm:$0xf]
    %s6251 = scalar_lea.vmem [#allocation3], 2
    %v6252 = vld [vmem:[%s6251] ss:$8 sm:$0x7]
    %v6254 = vlaneseq
    %v6255 = vshrl.u32 %v6254, 7
    %v6256 = vsub.s32 0, %v6255
    %v6257 = vrot.slane %v6252, %v6256
    %v6258 = vlaneseq
    %v6259 = vshrl.u32 %v6258, 7
    %v6260 = vsub.s32 1, %v6259
    %v6261 = vrot.slane %v6252, %v6260
    %v6262 = vlaneseq
    %v6263 = vshrl.u32 %v6262, 7
    %v6264 = vsub.s32 2, %v6263
    %v6265 = vrot.slane %v6252, %v6264
    %v6268 = vsel %vm5556, %v6265, 0
    %v6271 = vsel %vm789, %v6250, 0
    %6273 = vmatprep.subr.mxu0 0.0
    %6274 = vmatpush1.msra.mxu0 %v6225
    %6275 = vmatprep.subr.mxu0 0.0
    %6276 = vmatpush1.msra.mxu0 %v6224
    %6277 = vmatprep.subr.mxu0 0.0
    %6278 = vmatpush1.msra.mxu0 %v6223
    %6279 = vmatprep.subr.mxu0 0.0
    %6280 = vmatpush1.msra.mxu0 %v6222
    %6281 = vmatprep.subr.mxu0 0.0
    %6282 = vmatpush1.msra.mxu0 %v6221
    %6283 = vmatprep.subr.mxu0 0.0
    %6284 = vmatpush1.msra.mxu0 %v6220
    %6285 = vmatprep.subr.mxu0 0.0
    %6286 = vmatpush1.msra.mxu0 %v6219
    %6287 = vmatprep.subr.mxu0 0.0
    %6288 = vmatpush1.msra.mxu0 %v6218
    %6289 = vmatprep.subr.mxu0 0.0
    %6290 = vmatpush1.msra.mxu0 %v6217
    %6291 = vmatprep.subr.mxu0 0.0
    %6292 = vmatpush1.msra.mxu0 %v6216
    %6293 = vmatprep.subr.mxu0 0.0
    %6294 = vmatpush1.msra.mxu0 %v6215
    %6295 = vmatprep.subr.mxu0 0.0
    %6296 = vmatpush1.msra.mxu0 %v6214
    %6297 = vmatprep.subr.mxu0 0.0
    %6298 = vmatpush1.msra.mxu0 %v6213
    %6299 = vmatprep.subr.mxu0 0.0
    %6300 = vmatpush1.msra.mxu0 %v6212
    %6301 = vmatprep.subr.mxu0 0.0
    %6302 = vmatpush1.msra.mxu0 %v6211
    %6303 = vmatprep.subr.mxu0 0.0
    %6304 = vmatpush1.msra.mxu0 %v6210
    %6305 = vmatprep.subr.mxu0 0.0
    %6306 = vmatpush2.msra.mxu0 %v6241
    %6307 = vmatprep.subr.mxu0 0.0
    %6308 = vmatpush2.msra.mxu0 %v6240
    %6309 = vmatprep.subr.mxu0 0.0
    %6310 = vmatpush2.msra.mxu0 %v6239
    %6311 = vmatprep.subr.mxu0 0.0
    %6312 = vmatpush2.msra.mxu0 %v6238
    %6313 = vmatprep.subr.mxu0 0.0
    %6314 = vmatpush2.msra.mxu0 %v6237
    %6315 = vmatprep.subr.mxu0 0.0
    %6316 = vmatpush2.msra.mxu0 %v6236
    %6317 = vmatprep.subr.mxu0 0.0
    %6318 = vmatpush2.msra.mxu0 %v6235
    %6319 = vmatprep.subr.mxu0 0.0
    %6320 = vmatpush2.msra.mxu0 %v6234
    %6321 = vmatprep.subr.mxu0 0.0
    %6322 = vmatpush2.msra.mxu0 %v6233
    %6323 = vmatprep.subr.mxu0 0.0
    %6324 = vmatpush2.msra.mxu0 %v6232
    %6325 = vmatprep.subr.mxu0 0.0
    %6326 = vmatpush2.msra.mxu0 %v6231
    %6327 = vmatprep.subr.mxu0 0.0
    %6328 = vmatpush2.msra.mxu0 %v6230
    %6329 = vmatprep.subr.mxu0 0.0
    %6330 = vmatpush2.msra.mxu0 %v6229
    %6331 = vmatprep.subr.mxu0 0.0
    %6332 = vmatpush2.msra.mxu0 %v6228
    %6333 = vmatprep.subr.mxu0 0.0
    %6334 = vmatpush2.msra.mxu0 %v6227
    %6335 = vmatprep.subr.mxu0 0.0
    %6336 = vmatpush2.msra.mxu0 %v6226
    %6337 = vmatprep.mubr.f32.mxu0 %v6261
    %6338 = vmatmul.mubr.f32.gmra.mxu0 %v6257
    %v6339 = vpop.f32.mrf.mxu0
    %v6340 = vadd.f32 0.0, %v6339
    %v6341 = vpop.f32.mrf.mxu0
    %6342 = vdwg.mxu0
    %6343 = vmatprep.subr.mxu0 0.0
    %6344 = vmatpush1.msra.mxu0 0.0
    %6345 = vmatprep.subr.mxu0 0.0
    %6346 = vmatpush1.msra.mxu0 0.0
    %6347 = vmatprep.subr.mxu0 0.0
    %6348 = vmatpush1.msra.mxu0 0.0
    %6349 = vmatprep.subr.mxu0 0.0
    %6350 = vmatpush1.msra.mxu0 0.0
    %6351 = vmatprep.subr.mxu0 0.0
    %6352 = vmatpush1.msra.mxu0 0.0
    %6353 = vmatprep.subr.mxu0 0.0
    %6354 = vmatpush1.msra.mxu0 0.0
    %6355 = vmatprep.subr.mxu0 0.0
    %6356 = vmatpush1.msra.mxu0 0.0
    %6357 = vmatprep.subr.mxu0 0.0
    %6358 = vmatpush1.msra.mxu0 %v6271
    %6359 = vmatprep.subr.mxu0 0.0
    %6360 = vmatpush1.msra.mxu0 %v6249
    %6361 = vmatprep.subr.mxu0 0.0
    %6362 = vmatpush1.msra.mxu0 %v6248
    %6363 = vmatprep.subr.mxu0 0.0
    %6364 = vmatpush1.msra.mxu0 %v6247
    %6365 = vmatprep.subr.mxu0 0.0
    %6366 = vmatpush1.msra.mxu0 %v6246
    %6367 = vmatprep.subr.mxu0 0.0
    %6368 = vmatpush1.msra.mxu0 %v6245
    %6369 = vmatprep.subr.mxu0 0.0
    %6370 = vmatpush1.msra.mxu0 %v6244
    %6371 = vmatprep.subr.mxu0 0.0
    %6372 = vmatpush1.msra.mxu0 %v6243
    %6373 = vmatprep.subr.mxu0 0.0
    %6374 = vmatpush1.msra.mxu0 %v6242
    %6375 = vmatprep.subr.mxu0 0.0
    %6376 = vmatpush2.msra.mxu0 0.0
    %6377 = vmatprep.subr.mxu0 0.0
    %6378 = vmatpush2.msra.mxu0 0.0
    %6379 = vmatprep.subr.mxu0 0.0
    %6380 = vmatpush2.msra.mxu0 0.0
    %6381 = vmatprep.subr.mxu0 0.0
    %6382 = vmatpush2.msra.mxu0 0.0
    %6383 = vmatprep.subr.mxu0 0.0
    %6384 = vmatpush2.msra.mxu0 0.0
    %6385 = vmatprep.subr.mxu0 0.0
    %6386 = vmatpush2.msra.mxu0 0.0
    %6387 = vmatprep.subr.mxu0 0.0
    %6388 = vmatpush2.msra.mxu0 0.0
    %6389 = vmatprep.subr.mxu0 0.0
    %6390 = vmatpush2.msra.mxu0 0.0
    %6391 = vmatprep.subr.mxu0 0.0
    %6392 = vmatpush2.msra.mxu0 0.0
    %6393 = vmatprep.subr.mxu0 0.0
    %6394 = vmatpush2.msra.mxu0 0.0
    %6395 = vmatprep.subr.mxu0 0.0
    %6396 = vmatpush2.msra.mxu0 0.0
    %6397 = vmatprep.subr.mxu0 0.0
    %6398 = vmatpush2.msra.mxu0 0.0
    %6399 = vmatprep.subr.mxu0 0.0
    %6400 = vmatpush2.msra.mxu0 0.0
    %6401 = vmatprep.subr.mxu0 0.0
    %6402 = vmatpush2.msra.mxu0 0.0
    %6403 = vmatprep.subr.mxu0 0.0
    %6404 = vmatpush2.msra.mxu0 0.0
    %6405 = vmatprep.subr.mxu0 0.0
    %6406 = vmatpush2.msra.mxu0 0.0
    %6407 = vmatprep.mubr.f32.mxu0 0.0
    %6408 = vmatmul.mubr.f32.gmra.mxu0 %v6268
    %v6409 = vpop.f32.mrf.mxu0
    %v6410 = vadd.f32 %v6340, %v6409
    %v6411 = vpop.f32.mrf.mxu0
    %6412 = vdwg.mxu0
    %v6413 = vadd.f32 %v5859, %v6410
    %s6414 = scalar_lea.vmem [#allocation3], 18
    %v6415 = vld [vmem:[%s6414] ss:$8 sm:$0xf]
    %v6417 = vlaneseq
    %v6418 = vshrl.u32 %v6417, 7
    %v6419 = vsub.s32 0, %v6418
    %v6420 = vrot.slane %v6415, %v6419
    %v6421 = vlaneseq
    %v6422 = vshrl.u32 %v6421, 7
    %v6423 = vsub.s32 1, %v6422
    %v6424 = vrot.slane %v6415, %v6423
    %v6425 = vlaneseq
    %v6426 = vshrl.u32 %v6425, 7
    %v6427 = vsub.s32 2, %v6426
    %v6428 = vrot.slane %v6415, %v6427
    %v6429 = vlaneseq
    %v6430 = vshrl.u32 %v6429, 7
    %v6431 = vsub.s32 3, %v6430
    %v6432 = vrot.slane %v6415, %v6431
    %6433 = vrot.lane.b32.xlu0 %v6420, 60
    %v6434 = vpop.permute.xlu0 %6433
    %6435 = vrot.lane.b32.xlu0 %v6424, 60
    %v6436 = vpop.permute.xlu0 %6435
    %6437 = vrot.lane.b32.xlu0 %v6428, 60
    %v6438 = vpop.permute.xlu0 %6437
    %6439 = vrot.lane.b32.xlu0 %v6432, 60
    %v6440 = vpop.permute.xlu0 %6439
    %v6441 = vsel %vm5889, %v6434, %v6436
    %v6442 = vsel %vm5889, %v6436, %v6438
    %v6443 = vsel %vm5889, %v6438, %v6440
    %v6446 = vsel %vm5556, %v6443, 0
    %6448 = vmatprep.subr.mxu0 0.0
    %6449 = vmatpush1.msra.mxu0 %v6225
    %6450 = vmatprep.subr.mxu0 0.0
    %6451 = vmatpush1.msra.mxu0 %v6224
    %6452 = vmatprep.subr.mxu0 0.0
    %6453 = vmatpush1.msra.mxu0 %v6223
    %6454 = vmatprep.subr.mxu0 0.0
    %6455 = vmatpush1.msra.mxu0 %v6222
    %6456 = vmatprep.subr.mxu0 0.0
    %6457 = vmatpush1.msra.mxu0 %v6221
    %6458 = vmatprep.subr.mxu0 0.0
    %6459 = vmatpush1.msra.mxu0 %v6220
    %6460 = vmatprep.subr.mxu0 0.0
    %6461 = vmatpush1.msra.mxu0 %v6219
    %6462 = vmatprep.subr.mxu0 0.0
    %6463 = vmatpush1.msra.mxu0 %v6218
    %6464 = vmatprep.subr.mxu0 0.0
    %6465 = vmatpush1.msra.mxu0 %v6217
    %6466 = vmatprep.subr.mxu0 0.0
    %6467 = vmatpush1.msra.mxu0 %v6216
    %6468 = vmatprep.subr.mxu0 0.0
    %6469 = vmatpush1.msra.mxu0 %v6215
    %6470 = vmatprep.subr.mxu0 0.0
    %6471 = vmatpush1.msra.mxu0 %v6214
    %6472 = vmatprep.subr.mxu0 0.0
    %6473 = vmatpush1.msra.mxu0 %v6213
    %6474 = vmatprep.subr.mxu0 0.0
    %6475 = vmatpush1.msra.mxu0 %v6212
    %6476 = vmatprep.subr.mxu0 0.0
    %6477 = vmatpush1.msra.mxu0 %v6211
    %6478 = vmatprep.subr.mxu0 0.0
    %6479 = vmatpush1.msra.mxu0 %v6210
    %6480 = vmatprep.subr.mxu0 0.0
    %6481 = vmatpush2.msra.mxu0 %v6241
    %6482 = vmatprep.subr.mxu0 0.0
    %6483 = vmatpush2.msra.mxu0 %v6240
    %6484 = vmatprep.subr.mxu0 0.0
    %6485 = vmatpush2.msra.mxu0 %v6239
    %6486 = vmatprep.subr.mxu0 0.0
    %6487 = vmatpush2.msra.mxu0 %v6238
    %6488 = vmatprep.subr.mxu0 0.0
    %6489 = vmatpush2.msra.mxu0 %v6237
    %6490 = vmatprep.subr.mxu0 0.0
    %6491 = vmatpush2.msra.mxu0 %v6236
    %6492 = vmatprep.subr.mxu0 0.0
    %6493 = vmatpush2.msra.mxu0 %v6235
    %6494 = vmatprep.subr.mxu0 0.0
    %6495 = vmatpush2.msra.mxu0 %v6234
    %6496 = vmatprep.subr.mxu0 0.0
    %6497 = vmatpush2.msra.mxu0 %v6233
    %6498 = vmatprep.subr.mxu0 0.0
    %6499 = vmatpush2.msra.mxu0 %v6232
    %6500 = vmatprep.subr.mxu0 0.0
    %6501 = vmatpush2.msra.mxu0 %v6231
    %6502 = vmatprep.subr.mxu0 0.0
    %6503 = vmatpush2.msra.mxu0 %v6230
    %6504 = vmatprep.subr.mxu0 0.0
    %6505 = vmatpush2.msra.mxu0 %v6229
    %6506 = vmatprep.subr.mxu0 0.0
    %6507 = vmatpush2.msra.mxu0 %v6228
    %6508 = vmatprep.subr.mxu0 0.0
    %6509 = vmatpush2.msra.mxu0 %v6227
    %6510 = vmatprep.subr.mxu0 0.0
    %6511 = vmatpush2.msra.mxu0 %v6226
    %6512 = vmatprep.mubr.f32.mxu0 %v6442
    %6513 = vmatmul.mubr.f32.gmra.mxu0 %v6441
    %v6514 = vpop.f32.mrf.mxu0
    %v6515 = vadd.f32 0.0, %v6514
    %v6516 = vpop.f32.mrf.mxu0
    %6517 = vdwg.mxu0
    %6518 = vmatprep.subr.mxu0 0.0
    %6519 = vmatpush1.msra.mxu0 0.0
    %6520 = vmatprep.subr.mxu0 0.0
    %6521 = vmatpush1.msra.mxu0 0.0
    %6522 = vmatprep.subr.mxu0 0.0
    %6523 = vmatpush1.msra.mxu0 0.0
    %6524 = vmatprep.subr.mxu0 0.0
    %6525 = vmatpush1.msra.mxu0 0.0
    %6526 = vmatprep.subr.mxu0 0.0
    %6527 = vmatpush1.msra.mxu0 0.0
    %6528 = vmatprep.subr.mxu0 0.0
    %6529 = vmatpush1.msra.mxu0 0.0
    %6530 = vmatprep.subr.mxu0 0.0
    %6531 = vmatpush1.msra.mxu0 0.0
    %6532 = vmatprep.subr.mxu0 0.0
    %6533 = vmatpush1.msra.mxu0 %v6271
    %6534 = vmatprep.subr.mxu0 0.0
    %6535 = vmatpush1.msra.mxu0 %v6249
    %6536 = vmatprep.subr.mxu0 0.0
    %6537 = vmatpush1.msra.mxu0 %v6248
    %6538 = vmatprep.subr.mxu0 0.0
    %6539 = vmatpush1.msra.mxu0 %v6247
    %6540 = vmatprep.subr.mxu0 0.0
    %6541 = vmatpush1.msra.mxu0 %v6246
    %6542 = vmatprep.subr.mxu0 0.0
    %6543 = vmatpush1.msra.mxu0 %v6245
    %6544 = vmatprep.subr.mxu0 0.0
    %6545 = vmatpush1.msra.mxu0 %v6244
    %6546 = vmatprep.subr.mxu0 0.0
    %6547 = vmatpush1.msra.mxu0 %v6243
    %6548 = vmatprep.subr.mxu0 0.0
    %6549 = vmatpush1.msra.mxu0 %v6242
    %6550 = vmatprep.subr.mxu0 0.0
    %6551 = vmatpush2.msra.mxu0 0.0
    %6552 = vmatprep.subr.mxu0 0.0
    %6553 = vmatpush2.msra.mxu0 0.0
    %6554 = vmatprep.subr.mxu0 0.0
    %6555 = vmatpush2.msra.mxu0 0.0
    %6556 = vmatprep.subr.mxu0 0.0
    %6557 = vmatpush2.msra.mxu0 0.0
    %6558 = vmatprep.subr.mxu0 0.0
    %6559 = vmatpush2.msra.mxu0 0.0
    %6560 = vmatprep.subr.mxu0 0.0
    %6561 = vmatpush2.msra.mxu0 0.0
    %6562 = vmatprep.subr.mxu0 0.0
    %6563 = vmatpush2.msra.mxu0 0.0
    %6564 = vmatprep.subr.mxu0 0.0
    %6565 = vmatpush2.msra.mxu0 0.0
    %6566 = vmatprep.subr.mxu0 0.0
    %6567 = vmatpush2.msra.mxu0 0.0
    %6568 = vmatprep.subr.mxu0 0.0
    %6569 = vmatpush2.msra.mxu0 0.0
    %6570 = vmatprep.subr.mxu0 0.0
    %6571 = vmatpush2.msra.mxu0 0.0
    %6572 = vmatprep.subr.mxu0 0.0
    %6573 = vmatpush2.msra.mxu0 0.0
    %6574 = vmatprep.subr.mxu0 0.0
    %6575 = vmatpush2.msra.mxu0 0.0
    %6576 = vmatprep.subr.mxu0 0.0
    %6577 = vmatpush2.msra.mxu0 0.0
    %6578 = vmatprep.subr.mxu0 0.0
    %6579 = vmatpush2.msra.mxu0 0.0
    %6580 = vmatprep.subr.mxu0 0.0
    %6581 = vmatpush2.msra.mxu0 0.0
    %6582 = vmatprep.mubr.f32.mxu0 0.0
    %6583 = vmatmul.mubr.f32.gmra.mxu0 %v6446
    %v6584 = vpop.f32.mrf.mxu0
    %v6585 = vadd.f32 %v6515, %v6584
    %v6586 = vpop.f32.mrf.mxu0
    %6587 = vdwg.mxu0
    %v6588 = vadd.f32 %v6206, %v6585
    %s6589 = scalar_lea.vmem [#allocation4], 984
    %v6590 = vld [vmem:[%s6589] sm:$0xff]
    %v6591 = vld [vmem:[%s6589 + $0x8] sm:$0xff]
    %v6592 = vld [vmem:[%s6589 + $0x10] sm:$0xff]
    %v6593 = vld [vmem:[%s6589 + $0x18] sm:$0xff]
    %v6594 = vld [vmem:[%s6589 + $0x20] sm:$0xff]
    %v6595 = vld [vmem:[%s6589 + $0x28] sm:$0xff]
    %v6596 = vld [vmem:[%s6589 + $0x30] sm:$0xff]
    %v6597 = vld [vmem:[%s6589 + $0x38] sm:$0xff]
    %v6598 = vld [vmem:[%s6589 + $0x40] sm:$0xff]
    %v6599 = vld [vmem:[%s6589 + $0x48] sm:$0xff]
    %v6600 = vld [vmem:[%s6589 + $0x50] sm:$0xff]
    %v6601 = vld [vmem:[%s6589 + $0x58] sm:$0xff]
    %v6602 = vld [vmem:[%s6589 + $0x60] sm:$0xff]
    %v6603 = vld [vmem:[%s6589 + $0x68] sm:$0xff]
    %v6604 = vld [vmem:[%s6589 + $0x70] sm:$0xff]
    %v6605 = vld [vmem:[%s6589 + $0x78] sm:$0xff]
    %v6606 = vld [vmem:[%s6589 + $0x80] sm:$0xff]
    %v6607 = vld [vmem:[%s6589 + $0x88] sm:$0xff]
    %v6608 = vld [vmem:[%s6589 + $0x90] sm:$0xff]
    %v6609 = vld [vmem:[%s6589 + $0x98] sm:$0xff]
    %v6610 = vld [vmem:[%s6589 + $0xa0] sm:$0xff]
    %v6611 = vld [vmem:[%s6589 + $0xa8] sm:$0xff]
    %v6612 = vld [vmem:[%s6589 + $0xb0] sm:$0xff]
    %v6613 = vld [vmem:[%s6589 + $0xb8] sm:$0xff]
    %v6614 = vld [vmem:[%s6589 + $0xc0] sm:$0xff]
    %v6615 = vld [vmem:[%s6589 + $0xc8] sm:$0xff]
    %v6616 = vld [vmem:[%s6589 + $0xd0] sm:$0xff]
    %v6617 = vld [vmem:[%s6589 + $0xd8] sm:$0xff]
    %v6618 = vld [vmem:[%s6589 + $0xe0] sm:$0xff]
    %v6619 = vld [vmem:[%s6589 + $0xe8] sm:$0xff]
    %v6620 = vld [vmem:[%s6589 + $0xf0] sm:$0xff]
    %v6621 = vld [vmem:[%s6589 + $0xf8] sm:$0xff]
    %v6622 = vld [vmem:[%s6589 + $0x100] sm:$0xff]
    %v6623 = vld [vmem:[%s6589 + $0x108] sm:$0xff]
    %v6624 = vld [vmem:[%s6589 + $0x110] sm:$0xff]
    %v6625 = vld [vmem:[%s6589 + $0x118] sm:$0xff]
    %v6626 = vld [vmem:[%s6589 + $0x120] sm:$0xff]
    %v6627 = vld [vmem:[%s6589 + $0x128] sm:$0xff]
    %v6628 = vld [vmem:[%s6589 + $0x130] sm:$0xff]
    %v6629 = vld [vmem:[%s6589 + $0x138] sm:$0xff]
    %v6630 = vld [vmem:[%s6589 + $0x140] sm:$0xf]
    %s6631 = scalar_lea.vmem [#allocation3], 3
    %v6632 = vld [vmem:[%s6631] ss:$8 sm:$0x7]
    %v6634 = vlaneseq
    %v6635 = vshrl.u32 %v6634, 7
    %v6636 = vsub.s32 0, %v6635
    %v6637 = vrot.slane %v6632, %v6636
    %v6638 = vlaneseq
    %v6639 = vshrl.u32 %v6638, 7
    %v6640 = vsub.s32 1, %v6639
    %v6641 = vrot.slane %v6632, %v6640
    %v6642 = vlaneseq
    %v6643 = vshrl.u32 %v6642, 7
    %v6644 = vsub.s32 2, %v6643
    %v6645 = vrot.slane %v6632, %v6644
    %v6648 = vsel %vm5556, %v6645, 0
    %v6651 = vsel %vm789, %v6630, 0
    %6653 = vmatprep.subr.mxu0 0.0
    %6654 = vmatpush1.msra.mxu0 %v6605
    %6655 = vmatprep.subr.mxu0 0.0
    %6656 = vmatpush1.msra.mxu0 %v6604
    %6657 = vmatprep.subr.mxu0 0.0
    %6658 = vmatpush1.msra.mxu0 %v6603
    %6659 = vmatprep.subr.mxu0 0.0
    %6660 = vmatpush1.msra.mxu0 %v6602
    %6661 = vmatprep.subr.mxu0 0.0
    %6662 = vmatpush1.msra.mxu0 %v6601
    %6663 = vmatprep.subr.mxu0 0.0
    %6664 = vmatpush1.msra.mxu0 %v6600
    %6665 = vmatprep.subr.mxu0 0.0
    %6666 = vmatpush1.msra.mxu0 %v6599
    %6667 = vmatprep.subr.mxu0 0.0
    %6668 = vmatpush1.msra.mxu0 %v6598
    %6669 = vmatprep.subr.mxu0 0.0
    %6670 = vmatpush1.msra.mxu0 %v6597
    %6671 = vmatprep.subr.mxu0 0.0
    %6672 = vmatpush1.msra.mxu0 %v6596
    %6673 = vmatprep.subr.mxu0 0.0
    %6674 = vmatpush1.msra.mxu0 %v6595
    %6675 = vmatprep.subr.mxu0 0.0
    %6676 = vmatpush1.msra.mxu0 %v6594
    %6677 = vmatprep.subr.mxu0 0.0
    %6678 = vmatpush1.msra.mxu0 %v6593
    %6679 = vmatprep.subr.mxu0 0.0
    %6680 = vmatpush1.msra.mxu0 %v6592
    %6681 = vmatprep.subr.mxu0 0.0
    %6682 = vmatpush1.msra.mxu0 %v6591
    %6683 = vmatprep.subr.mxu0 0.0
    %6684 = vmatpush1.msra.mxu0 %v6590
    %6685 = vmatprep.subr.mxu0 0.0
    %6686 = vmatpush2.msra.mxu0 %v6621
    %6687 = vmatprep.subr.mxu0 0.0
    %6688 = vmatpush2.msra.mxu0 %v6620
    %6689 = vmatprep.subr.mxu0 0.0
    %6690 = vmatpush2.msra.mxu0 %v6619
    %6691 = vmatprep.subr.mxu0 0.0
    %6692 = vmatpush2.msra.mxu0 %v6618
    %6693 = vmatprep.subr.mxu0 0.0
    %6694 = vmatpush2.msra.mxu0 %v6617
    %6695 = vmatprep.subr.mxu0 0.0
    %6696 = vmatpush2.msra.mxu0 %v6616
    %6697 = vmatprep.subr.mxu0 0.0
    %6698 = vmatpush2.msra.mxu0 %v6615
    %6699 = vmatprep.subr.mxu0 0.0
    %6700 = vmatpush2.msra.mxu0 %v6614
    %6701 = vmatprep.subr.mxu0 0.0
    %6702 = vmatpush2.msra.mxu0 %v6613
    %6703 = vmatprep.subr.mxu0 0.0
    %6704 = vmatpush2.msra.mxu0 %v6612
    %6705 = vmatprep.subr.mxu0 0.0
    %6706 = vmatpush2.msra.mxu0 %v6611
    %6707 = vmatprep.subr.mxu0 0.0
    %6708 = vmatpush2.msra.mxu0 %v6610
    %6709 = vmatprep.subr.mxu0 0.0
    %6710 = vmatpush2.msra.mxu0 %v6609
    %6711 = vmatprep.subr.mxu0 0.0
    %6712 = vmatpush2.msra.mxu0 %v6608
    %6713 = vmatprep.subr.mxu0 0.0
    %6714 = vmatpush2.msra.mxu0 %v6607
    %6715 = vmatprep.subr.mxu0 0.0
    %6716 = vmatpush2.msra.mxu0 %v6606
    %6717 = vmatprep.mubr.f32.mxu0 %v6641
    %6718 = vmatmul.mubr.f32.gmra.mxu0 %v6637
    %v6719 = vpop.f32.mrf.mxu0
    %v6720 = vadd.f32 0.0, %v6719
    %v6721 = vpop.f32.mrf.mxu0
    %6722 = vdwg.mxu0
    %6723 = vmatprep.subr.mxu0 0.0
    %6724 = vmatpush1.msra.mxu0 0.0
    %6725 = vmatprep.subr.mxu0 0.0
    %6726 = vmatpush1.msra.mxu0 0.0
    %6727 = vmatprep.subr.mxu0 0.0
    %6728 = vmatpush1.msra.mxu0 0.0
    %6729 = vmatprep.subr.mxu0 0.0
    %6730 = vmatpush1.msra.mxu0 0.0
    %6731 = vmatprep.subr.mxu0 0.0
    %6732 = vmatpush1.msra.mxu0 0.0
    %6733 = vmatprep.subr.mxu0 0.0
    %6734 = vmatpush1.msra.mxu0 0.0
    %6735 = vmatprep.subr.mxu0 0.0
    %6736 = vmatpush1.msra.mxu0 0.0
    %6737 = vmatprep.subr.mxu0 0.0
    %6738 = vmatpush1.msra.mxu0 %v6651
    %6739 = vmatprep.subr.mxu0 0.0
    %6740 = vmatpush1.msra.mxu0 %v6629
    %6741 = vmatprep.subr.mxu0 0.0
    %6742 = vmatpush1.msra.mxu0 %v6628
    %6743 = vmatprep.subr.mxu0 0.0
    %6744 = vmatpush1.msra.mxu0 %v6627
    %6745 = vmatprep.subr.mxu0 0.0
    %6746 = vmatpush1.msra.mxu0 %v6626
    %6747 = vmatprep.subr.mxu0 0.0
    %6748 = vmatpush1.msra.mxu0 %v6625
    %6749 = vmatprep.subr.mxu0 0.0
    %6750 = vmatpush1.msra.mxu0 %v6624
    %6751 = vmatprep.subr.mxu0 0.0
    %6752 = vmatpush1.msra.mxu0 %v6623
    %6753 = vmatprep.subr.mxu0 0.0
    %6754 = vmatpush1.msra.mxu0 %v6622
    %6755 = vmatprep.subr.mxu0 0.0
    %6756 = vmatpush2.msra.mxu0 0.0
    %6757 = vmatprep.subr.mxu0 0.0
    %6758 = vmatpush2.msra.mxu0 0.0
    %6759 = vmatprep.subr.mxu0 0.0
    %6760 = vmatpush2.msra.mxu0 0.0
    %6761 = vmatprep.subr.mxu0 0.0
    %6762 = vmatpush2.msra.mxu0 0.0
    %6763 = vmatprep.subr.mxu0 0.0
    %6764 = vmatpush2.msra.mxu0 0.0
    %6765 = vmatprep.subr.mxu0 0.0
    %6766 = vmatpush2.msra.mxu0 0.0
    %6767 = vmatprep.subr.mxu0 0.0
    %6768 = vmatpush2.msra.mxu0 0.0
    %6769 = vmatprep.subr.mxu0 0.0
    %6770 = vmatpush2.msra.mxu0 0.0
    %6771 = vmatprep.subr.mxu0 0.0
    %6772 = vmatpush2.msra.mxu0 0.0
    %6773 = vmatprep.subr.mxu0 0.0
    %6774 = vmatpush2.msra.mxu0 0.0
    %6775 = vmatprep.subr.mxu0 0.0
    %6776 = vmatpush2.msra.mxu0 0.0
    %6777 = vmatprep.subr.mxu0 0.0
    %6778 = vmatpush2.msra.mxu0 0.0
    %6779 = vmatprep.subr.mxu0 0.0
    %6780 = vmatpush2.msra.mxu0 0.0
    %6781 = vmatprep.subr.mxu0 0.0
    %6782 = vmatpush2.msra.mxu0 0.0
    %6783 = vmatprep.subr.mxu0 0.0
    %6784 = vmatpush2.msra.mxu0 0.0
    %6785 = vmatprep.subr.mxu0 0.0
    %6786 = vmatpush2.msra.mxu0 0.0
    %6787 = vmatprep.mubr.f32.mxu0 0.0
    %6788 = vmatmul.mubr.f32.gmra.mxu0 %v6648
    %v6789 = vpop.f32.mrf.mxu0
    %v6790 = vadd.f32 %v6720, %v6789
    %v6791 = vpop.f32.mrf.mxu0
    %6792 = vdwg.mxu0
    %v6793 = vadd.f32 %v6413, %v6790
    %s6794 = scalar_lea.vmem [#allocation3], 19
    %v6795 = vld [vmem:[%s6794] ss:$8 sm:$0xf]
    %v6797 = vlaneseq
    %v6798 = vshrl.u32 %v6797, 7
    %v6799 = vsub.s32 0, %v6798
    %v6800 = vrot.slane %v6795, %v6799
    %v6801 = vlaneseq
    %v6802 = vshrl.u32 %v6801, 7
    %v6803 = vsub.s32 1, %v6802
    %v6804 = vrot.slane %v6795, %v6803
    %v6805 = vlaneseq
    %v6806 = vshrl.u32 %v6805, 7
    %v6807 = vsub.s32 2, %v6806
    %v6808 = vrot.slane %v6795, %v6807
    %v6809 = vlaneseq
    %v6810 = vshrl.u32 %v6809, 7
    %v6811 = vsub.s32 3, %v6810
    %v6812 = vrot.slane %v6795, %v6811
    %6813 = vrot.lane.b32.xlu0 %v6800, 60
    %v6814 = vpop.permute.xlu0 %6813
    %6815 = vrot.lane.b32.xlu0 %v6804, 60
    %v6816 = vpop.permute.xlu0 %6815
    %6817 = vrot.lane.b32.xlu0 %v6808, 60
    %v6818 = vpop.permute.xlu0 %6817
    %6819 = vrot.lane.b32.xlu0 %v6812, 60
    %v6820 = vpop.permute.xlu0 %6819
    %v6821 = vsel %vm5889, %v6814, %v6816
    %v6822 = vsel %vm5889, %v6816, %v6818
    %v6823 = vsel %vm5889, %v6818, %v6820
    %v6826 = vsel %vm5556, %v6823, 0
    %6828 = vmatprep.subr.mxu0 0.0
    %6829 = vmatpush1.msra.mxu0 %v6605
    %6830 = vmatprep.subr.mxu0 0.0
    %6831 = vmatpush1.msra.mxu0 %v6604
    %6832 = vmatprep.subr.mxu0 0.0
    %6833 = vmatpush1.msra.mxu0 %v6603
    %6834 = vmatprep.subr.mxu0 0.0
    %6835 = vmatpush1.msra.mxu0 %v6602
    %6836 = vmatprep.subr.mxu0 0.0
    %6837 = vmatpush1.msra.mxu0 %v6601
    %6838 = vmatprep.subr.mxu0 0.0
    %6839 = vmatpush1.msra.mxu0 %v6600
    %6840 = vmatprep.subr.mxu0 0.0
    %6841 = vmatpush1.msra.mxu0 %v6599
    %6842 = vmatprep.subr.mxu0 0.0
    %6843 = vmatpush1.msra.mxu0 %v6598
    %6844 = vmatprep.subr.mxu0 0.0
    %6845 = vmatpush1.msra.mxu0 %v6597
    %6846 = vmatprep.subr.mxu0 0.0
    %6847 = vmatpush1.msra.mxu0 %v6596
    %6848 = vmatprep.subr.mxu0 0.0
    %6849 = vmatpush1.msra.mxu0 %v6595
    %6850 = vmatprep.subr.mxu0 0.0
    %6851 = vmatpush1.msra.mxu0 %v6594
    %6852 = vmatprep.subr.mxu0 0.0
    %6853 = vmatpush1.msra.mxu0 %v6593
    %6854 = vmatprep.subr.mxu0 0.0
    %6855 = vmatpush1.msra.mxu0 %v6592
    %6856 = vmatprep.subr.mxu0 0.0
    %6857 = vmatpush1.msra.mxu0 %v6591
    %6858 = vmatprep.subr.mxu0 0.0
    %6859 = vmatpush1.msra.mxu0 %v6590
    %6860 = vmatprep.subr.mxu0 0.0
    %6861 = vmatpush2.msra.mxu0 %v6621
    %6862 = vmatprep.subr.mxu0 0.0
    %6863 = vmatpush2.msra.mxu0 %v6620
    %6864 = vmatprep.subr.mxu0 0.0
    %6865 = vmatpush2.msra.mxu0 %v6619
    %6866 = vmatprep.subr.mxu0 0.0
    %6867 = vmatpush2.msra.mxu0 %v6618
    %6868 = vmatprep.subr.mxu0 0.0
    %6869 = vmatpush2.msra.mxu0 %v6617
    %6870 = vmatprep.subr.mxu0 0.0
    %6871 = vmatpush2.msra.mxu0 %v6616
    %6872 = vmatprep.subr.mxu0 0.0
    %6873 = vmatpush2.msra.mxu0 %v6615
    %6874 = vmatprep.subr.mxu0 0.0
    %6875 = vmatpush2.msra.mxu0 %v6614
    %6876 = vmatprep.subr.mxu0 0.0
    %6877 = vmatpush2.msra.mxu0 %v6613
    %6878 = vmatprep.subr.mxu0 0.0
    %6879 = vmatpush2.msra.mxu0 %v6612
    %6880 = vmatprep.subr.mxu0 0.0
    %6881 = vmatpush2.msra.mxu0 %v6611
    %6882 = vmatprep.subr.mxu0 0.0
    %6883 = vmatpush2.msra.mxu0 %v6610
    %6884 = vmatprep.subr.mxu0 0.0
    %6885 = vmatpush2.msra.mxu0 %v6609
    %6886 = vmatprep.subr.mxu0 0.0
    %6887 = vmatpush2.msra.mxu0 %v6608
    %6888 = vmatprep.subr.mxu0 0.0
    %6889 = vmatpush2.msra.mxu0 %v6607
    %6890 = vmatprep.subr.mxu0 0.0
    %6891 = vmatpush2.msra.mxu0 %v6606
    %6892 = vmatprep.mubr.f32.mxu0 %v6822
    %6893 = vmatmul.mubr.f32.gmra.mxu0 %v6821
    %v6894 = vpop.f32.mrf.mxu0
    %v6895 = vadd.f32 0.0, %v6894
    %v6896 = vpop.f32.mrf.mxu0
    %6897 = vdwg.mxu0
    %6898 = vmatprep.subr.mxu0 0.0
    %6899 = vmatpush1.msra.mxu0 0.0
    %6900 = vmatprep.subr.mxu0 0.0
    %6901 = vmatpush1.msra.mxu0 0.0
    %6902 = vmatprep.subr.mxu0 0.0
    %6903 = vmatpush1.msra.mxu0 0.0
    %6904 = vmatprep.subr.mxu0 0.0
    %6905 = vmatpush1.msra.mxu0 0.0
    %6906 = vmatprep.subr.mxu0 0.0
    %6907 = vmatpush1.msra.mxu0 0.0
    %6908 = vmatprep.subr.mxu0 0.0
    %6909 = vmatpush1.msra.mxu0 0.0
    %6910 = vmatprep.subr.mxu0 0.0
    %6911 = vmatpush1.msra.mxu0 0.0
    %6912 = vmatprep.subr.mxu0 0.0
    %6913 = vmatpush1.msra.mxu0 %v6651
    %6914 = vmatprep.subr.mxu0 0.0
    %6915 = vmatpush1.msra.mxu0 %v6629
    %6916 = vmatprep.subr.mxu0 0.0
    %6917 = vmatpush1.msra.mxu0 %v6628
    %6918 = vmatprep.subr.mxu0 0.0
    %6919 = vmatpush1.msra.mxu0 %v6627
    %6920 = vmatprep.subr.mxu0 0.0
    %6921 = vmatpush1.msra.mxu0 %v6626
    %6922 = vmatprep.subr.mxu0 0.0
    %6923 = vmatpush1.msra.mxu0 %v6625
    %6924 = vmatprep.subr.mxu0 0.0
    %6925 = vmatpush1.msra.mxu0 %v6624
    %6926 = vmatprep.subr.mxu0 0.0
    %6927 = vmatpush1.msra.mxu0 %v6623
    %6928 = vmatprep.subr.mxu0 0.0
    %6929 = vmatpush1.msra.mxu0 %v6622
    %6930 = vmatprep.subr.mxu0 0.0
    %6931 = vmatpush2.msra.mxu0 0.0
    %6932 = vmatprep.subr.mxu0 0.0
    %6933 = vmatpush2.msra.mxu0 0.0
    %6934 = vmatprep.subr.mxu0 0.0
    %6935 = vmatpush2.msra.mxu0 0.0
    %6936 = vmatprep.subr.mxu0 0.0
    %6937 = vmatpush2.msra.mxu0 0.0
    %6938 = vmatprep.subr.mxu0 0.0
    %6939 = vmatpush2.msra.mxu0 0.0
    %6940 = vmatprep.subr.mxu0 0.0
    %6941 = vmatpush2.msra.mxu0 0.0
    %6942 = vmatprep.subr.mxu0 0.0
    %6943 = vmatpush2.msra.mxu0 0.0
    %6944 = vmatprep.subr.mxu0 0.0
    %6945 = vmatpush2.msra.mxu0 0.0
    %6946 = vmatprep.subr.mxu0 0.0
    %6947 = vmatpush2.msra.mxu0 0.0
    %6948 = vmatprep.subr.mxu0 0.0
    %6949 = vmatpush2.msra.mxu0 0.0
    %6950 = vmatprep.subr.mxu0 0.0
    %6951 = vmatpush2.msra.mxu0 0.0
    %6952 = vmatprep.subr.mxu0 0.0
    %6953 = vmatpush2.msra.mxu0 0.0
    %6954 = vmatprep.subr.mxu0 0.0
    %6955 = vmatpush2.msra.mxu0 0.0
    %6956 = vmatprep.subr.mxu0 0.0
    %6957 = vmatpush2.msra.mxu0 0.0
    %6958 = vmatprep.subr.mxu0 0.0
    %6959 = vmatpush2.msra.mxu0 0.0
    %6960 = vmatprep.subr.mxu0 0.0
    %6961 = vmatpush2.msra.mxu0 0.0
    %6962 = vmatprep.mubr.f32.mxu0 0.0
    %6963 = vmatmul.mubr.f32.gmra.mxu0 %v6826
    %v6964 = vpop.f32.mrf.mxu0
    %v6965 = vadd.f32 %v6895, %v6964
    %v6966 = vpop.f32.mrf.mxu0
    %6967 = vdwg.mxu0
    %v6968 = vadd.f32 %v6588, %v6965
    %s6969 = scalar_lea.vmem [#allocation4], 1312
    %v6970 = vld [vmem:[%s6969] sm:$0xff]
    %v6971 = vld [vmem:[%s6969 + $0x8] sm:$0xff]
    %v6972 = vld [vmem:[%s6969 + $0x10] sm:$0xff]
    %v6973 = vld [vmem:[%s6969 + $0x18] sm:$0xff]
    %v6974 = vld [vmem:[%s6969 + $0x20] sm:$0xff]
    %v6975 = vld [vmem:[%s6969 + $0x28] sm:$0xff]
    %v6976 = vld [vmem:[%s6969 + $0x30] sm:$0xff]
    %v6977 = vld [vmem:[%s6969 + $0x38] sm:$0xff]
    %v6978 = vld [vmem:[%s6969 + $0x40] sm:$0xff]
    %v6979 = vld [vmem:[%s6969 + $0x48] sm:$0xff]
    %v6980 = vld [vmem:[%s6969 + $0x50] sm:$0xff]
    %v6981 = vld [vmem:[%s6969 + $0x58] sm:$0xff]
    %v6982 = vld [vmem:[%s6969 + $0x60] sm:$0xff]
    %v6983 = vld [vmem:[%s6969 + $0x68] sm:$0xff]
    %v6984 = vld [vmem:[%s6969 + $0x70] sm:$0xff]
    %v6985 = vld [vmem:[%s6969 + $0x78] sm:$0xff]
    %v6986 = vld [vmem:[%s6969 + $0x80] sm:$0xff]
    %v6987 = vld [vmem:[%s6969 + $0x88] sm:$0xff]
    %v6988 = vld [vmem:[%s6969 + $0x90] sm:$0xff]
    %v6989 = vld [vmem:[%s6969 + $0x98] sm:$0xff]
    %v6990 = vld [vmem:[%s6969 + $0xa0] sm:$0xff]
    %v6991 = vld [vmem:[%s6969 + $0xa8] sm:$0xff]
    %v6992 = vld [vmem:[%s6969 + $0xb0] sm:$0xff]
    %v6993 = vld [vmem:[%s6969 + $0xb8] sm:$0xff]
    %v6994 = vld [vmem:[%s6969 + $0xc0] sm:$0xff]
    %v6995 = vld [vmem:[%s6969 + $0xc8] sm:$0xff]
    %v6996 = vld [vmem:[%s6969 + $0xd0] sm:$0xff]
    %v6997 = vld [vmem:[%s6969 + $0xd8] sm:$0xff]
    %v6998 = vld [vmem:[%s6969 + $0xe0] sm:$0xff]
    %v6999 = vld [vmem:[%s6969 + $0xe8] sm:$0xff]
    %v7000 = vld [vmem:[%s6969 + $0xf0] sm:$0xff]
    %v7001 = vld [vmem:[%s6969 + $0xf8] sm:$0xff]
    %v7002 = vld [vmem:[%s6969 + $0x100] sm:$0xff]
    %v7003 = vld [vmem:[%s6969 + $0x108] sm:$0xff]
    %v7004 = vld [vmem:[%s6969 + $0x110] sm:$0xff]
    %v7005 = vld [vmem:[%s6969 + $0x118] sm:$0xff]
    %v7006 = vld [vmem:[%s6969 + $0x120] sm:$0xff]
    %v7007 = vld [vmem:[%s6969 + $0x128] sm:$0xff]
    %v7008 = vld [vmem:[%s6969 + $0x130] sm:$0xff]
    %v7009 = vld [vmem:[%s6969 + $0x138] sm:$0xff]
    %v7010 = vld [vmem:[%s6969 + $0x140] sm:$0xf]
    %s7011 = scalar_lea.vmem [#allocation3], 4
    %v7012 = vld [vmem:[%s7011] ss:$8 sm:$0x7]
    %v7014 = vlaneseq
    %v7015 = vshrl.u32 %v7014, 7
    %v7016 = vsub.s32 0, %v7015
    %v7017 = vrot.slane %v7012, %v7016
    %v7018 = vlaneseq
    %v7019 = vshrl.u32 %v7018, 7
    %v7020 = vsub.s32 1, %v7019
    %v7021 = vrot.slane %v7012, %v7020
    %v7022 = vlaneseq
    %v7023 = vshrl.u32 %v7022, 7
    %v7024 = vsub.s32 2, %v7023
    %v7025 = vrot.slane %v7012, %v7024
    %v7028 = vsel %vm5556, %v7025, 0
    %v7031 = vsel %vm789, %v7010, 0
    %7033 = vmatprep.subr.mxu0 0.0
    %7034 = vmatpush1.msra.mxu0 %v6985
    %7035 = vmatprep.subr.mxu0 0.0
    %7036 = vmatpush1.msra.mxu0 %v6984
    %7037 = vmatprep.subr.mxu0 0.0
    %7038 = vmatpush1.msra.mxu0 %v6983
    %7039 = vmatprep.subr.mxu0 0.0
    %7040 = vmatpush1.msra.mxu0 %v6982
    %7041 = vmatprep.subr.mxu0 0.0
    %7042 = vmatpush1.msra.mxu0 %v6981
    %7043 = vmatprep.subr.mxu0 0.0
    %7044 = vmatpush1.msra.mxu0 %v6980
    %7045 = vmatprep.subr.mxu0 0.0
    %7046 = vmatpush1.msra.mxu0 %v6979
    %7047 = vmatprep.subr.mxu0 0.0
    %7048 = vmatpush1.msra.mxu0 %v6978
    %7049 = vmatprep.subr.mxu0 0.0
    %7050 = vmatpush1.msra.mxu0 %v6977
    %7051 = vmatprep.subr.mxu0 0.0
    %7052 = vmatpush1.msra.mxu0 %v6976
    %7053 = vmatprep.subr.mxu0 0.0
    %7054 = vmatpush1.msra.mxu0 %v6975
    %7055 = vmatprep.subr.mxu0 0.0
    %7056 = vmatpush1.msra.mxu0 %v6974
    %7057 = vmatprep.subr.mxu0 0.0
    %7058 = vmatpush1.msra.mxu0 %v6973
    %7059 = vmatprep.subr.mxu0 0.0
    %7060 = vmatpush1.msra.mxu0 %v6972
    %7061 = vmatprep.subr.mxu0 0.0
    %7062 = vmatpush1.msra.mxu0 %v6971
    %7063 = vmatprep.subr.mxu0 0.0
    %7064 = vmatpush1.msra.mxu0 %v6970
    %7065 = vmatprep.subr.mxu0 0.0
    %7066 = vmatpush2.msra.mxu0 %v7001
    %7067 = vmatprep.subr.mxu0 0.0
    %7068 = vmatpush2.msra.mxu0 %v7000
    %7069 = vmatprep.subr.mxu0 0.0
    %7070 = vmatpush2.msra.mxu0 %v6999
    %7071 = vmatprep.subr.mxu0 0.0
    %7072 = vmatpush2.msra.mxu0 %v6998
    %7073 = vmatprep.subr.mxu0 0.0
    %7074 = vmatpush2.msra.mxu0 %v6997
    %7075 = vmatprep.subr.mxu0 0.0
    %7076 = vmatpush2.msra.mxu0 %v6996
    %7077 = vmatprep.subr.mxu0 0.0
    %7078 = vmatpush2.msra.mxu0 %v6995
    %7079 = vmatprep.subr.mxu0 0.0
    %7080 = vmatpush2.msra.mxu0 %v6994
    %7081 = vmatprep.subr.mxu0 0.0
    %7082 = vmatpush2.msra.mxu0 %v6993
    %7083 = vmatprep.subr.mxu0 0.0
    %7084 = vmatpush2.msra.mxu0 %v6992
    %7085 = vmatprep.subr.mxu0 0.0
    %7086 = vmatpush2.msra.mxu0 %v6991
    %7087 = vmatprep.subr.mxu0 0.0
    %7088 = vmatpush2.msra.mxu0 %v6990
    %7089 = vmatprep.subr.mxu0 0.0
    %7090 = vmatpush2.msra.mxu0 %v6989
    %7091 = vmatprep.subr.mxu0 0.0
    %7092 = vmatpush2.msra.mxu0 %v6988
    %7093 = vmatprep.subr.mxu0 0.0
    %7094 = vmatpush2.msra.mxu0 %v6987
    %7095 = vmatprep.subr.mxu0 0.0
    %7096 = vmatpush2.msra.mxu0 %v6986
    %7097 = vmatprep.mubr.f32.mxu0 %v7021
    %7098 = vmatmul.mubr.f32.gmra.mxu0 %v7017
    %v7099 = vpop.f32.mrf.mxu0
    %v7100 = vadd.f32 0.0, %v7099
    %v7101 = vpop.f32.mrf.mxu0
    %7102 = vdwg.mxu0
    %7103 = vmatprep.subr.mxu0 0.0
    %7104 = vmatpush1.msra.mxu0 0.0
    %7105 = vmatprep.subr.mxu0 0.0
    %7106 = vmatpush1.msra.mxu0 0.0
    %7107 = vmatprep.subr.mxu0 0.0
    %7108 = vmatpush1.msra.mxu0 0.0
    %7109 = vmatprep.subr.mxu0 0.0
    %7110 = vmatpush1.msra.mxu0 0.0
    %7111 = vmatprep.subr.mxu0 0.0
    %7112 = vmatpush1.msra.mxu0 0.0
    %7113 = vmatprep.subr.mxu0 0.0
    %7114 = vmatpush1.msra.mxu0 0.0
    %7115 = vmatprep.subr.mxu0 0.0
    %7116 = vmatpush1.msra.mxu0 0.0
    %7117 = vmatprep.subr.mxu0 0.0
    %7118 = vmatpush1.msra.mxu0 %v7031
    %7119 = vmatprep.subr.mxu0 0.0
    %7120 = vmatpush1.msra.mxu0 %v7009
    %7121 = vmatprep.subr.mxu0 0.0
    %7122 = vmatpush1.msra.mxu0 %v7008
    %7123 = vmatprep.subr.mxu0 0.0
    %7124 = vmatpush1.msra.mxu0 %v7007
    %7125 = vmatprep.subr.mxu0 0.0
    %7126 = vmatpush1.msra.mxu0 %v7006
    %7127 = vmatprep.subr.mxu0 0.0
    %7128 = vmatpush1.msra.mxu0 %v7005
    %7129 = vmatprep.subr.mxu0 0.0
    %7130 = vmatpush1.msra.mxu0 %v7004
    %7131 = vmatprep.subr.mxu0 0.0
    %7132 = vmatpush1.msra.mxu0 %v7003
    %7133 = vmatprep.subr.mxu0 0.0
    %7134 = vmatpush1.msra.mxu0 %v7002
    %7135 = vmatprep.subr.mxu0 0.0
    %7136 = vmatpush2.msra.mxu0 0.0
    %7137 = vmatprep.subr.mxu0 0.0
    %7138 = vmatpush2.msra.mxu0 0.0
    %7139 = vmatprep.subr.mxu0 0.0
    %7140 = vmatpush2.msra.mxu0 0.0
    %7141 = vmatprep.subr.mxu0 0.0
    %7142 = vmatpush2.msra.mxu0 0.0
    %7143 = vmatprep.subr.mxu0 0.0
    %7144 = vmatpush2.msra.mxu0 0.0
    %7145 = vmatprep.subr.mxu0 0.0
    %7146 = vmatpush2.msra.mxu0 0.0
    %7147 = vmatprep.subr.mxu0 0.0
    %7148 = vmatpush2.msra.mxu0 0.0
    %7149 = vmatprep.subr.mxu0 0.0
    %7150 = vmatpush2.msra.mxu0 0.0
    %7151 = vmatprep.subr.mxu0 0.0
    %7152 = vmatpush2.msra.mxu0 0.0
    %7153 = vmatprep.subr.mxu0 0.0
    %7154 = vmatpush2.msra.mxu0 0.0
    %7155 = vmatprep.subr.mxu0 0.0
    %7156 = vmatpush2.msra.mxu0 0.0
    %7157 = vmatprep.subr.mxu0 0.0
    %7158 = vmatpush2.msra.mxu0 0.0
    %7159 = vmatprep.subr.mxu0 0.0
    %7160 = vmatpush2.msra.mxu0 0.0
    %7161 = vmatprep.subr.mxu0 0.0
    %7162 = vmatpush2.msra.mxu0 0.0
    %7163 = vmatprep.subr.mxu0 0.0
    %7164 = vmatpush2.msra.mxu0 0.0
    %7165 = vmatprep.subr.mxu0 0.0
    %7166 = vmatpush2.msra.mxu0 0.0
    %7167 = vmatprep.mubr.f32.mxu0 0.0
    %7168 = vmatmul.mubr.f32.gmra.mxu0 %v7028
    %v7169 = vpop.f32.mrf.mxu0
    %v7170 = vadd.f32 %v7100, %v7169
    %v7171 = vpop.f32.mrf.mxu0
    %7172 = vdwg.mxu0
    %v7173 = vadd.f32 %v6793, %v7170
    %s7174 = scalar_lea.vmem [#allocation3], 20
    %v7175 = vld [vmem:[%s7174] ss:$8 sm:$0xf]
    %v7177 = vlaneseq
    %v7178 = vshrl.u32 %v7177, 7
    %v7179 = vsub.s32 0, %v7178
    %v7180 = vrot.slane %v7175, %v7179
    %v7181 = vlaneseq
    %v7182 = vshrl.u32 %v7181, 7
    %v7183 = vsub.s32 1, %v7182
    %v7184 = vrot.slane %v7175, %v7183
    %v7185 = vlaneseq
    %v7186 = vshrl.u32 %v7185, 7
    %v7187 = vsub.s32 2, %v7186
    %v7188 = vrot.slane %v7175, %v7187
    %v7189 = vlaneseq
    %v7190 = vshrl.u32 %v7189, 7
    %v7191 = vsub.s32 3, %v7190
    %v7192 = vrot.slane %v7175, %v7191
    %7193 = vrot.lane.b32.xlu0 %v7180, 60
    %v7194 = vpop.permute.xlu0 %7193
    %7195 = vrot.lane.b32.xlu0 %v7184, 60
    %v7196 = vpop.permute.xlu0 %7195
    %7197 = vrot.lane.b32.xlu0 %v7188, 60
    %v7198 = vpop.permute.xlu0 %7197
    %7199 = vrot.lane.b32.xlu0 %v7192, 60
    %v7200 = vpop.permute.xlu0 %7199
    %v7201 = vsel %vm5889, %v7194, %v7196
    %v7202 = vsel %vm5889, %v7196, %v7198
    %v7203 = vsel %vm5889, %v7198, %v7200
    %v7206 = vsel %vm5556, %v7203, 0
    %7208 = vmatprep.subr.mxu0 0.0
    %7209 = vmatpush1.msra.mxu0 %v6985
    %7210 = vmatprep.subr.mxu0 0.0
    %7211 = vmatpush1.msra.mxu0 %v6984
    %7212 = vmatprep.subr.mxu0 0.0
    %7213 = vmatpush1.msra.mxu0 %v6983
    %7214 = vmatprep.subr.mxu0 0.0
    %7215 = vmatpush1.msra.mxu0 %v6982
    %7216 = vmatprep.subr.mxu0 0.0
    %7217 = vmatpush1.msra.mxu0 %v6981
    %7218 = vmatprep.subr.mxu0 0.0
    %7219 = vmatpush1.msra.mxu0 %v6980
    %7220 = vmatprep.subr.mxu0 0.0
    %7221 = vmatpush1.msra.mxu0 %v6979
    %7222 = vmatprep.subr.mxu0 0.0
    %7223 = vmatpush1.msra.mxu0 %v6978
    %7224 = vmatprep.subr.mxu0 0.0
    %7225 = vmatpush1.msra.mxu0 %v6977
    %7226 = vmatprep.subr.mxu0 0.0
    %7227 = vmatpush1.msra.mxu0 %v6976
    %7228 = vmatprep.subr.mxu0 0.0
    %7229 = vmatpush1.msra.mxu0 %v6975
    %7230 = vmatprep.subr.mxu0 0.0
    %7231 = vmatpush1.msra.mxu0 %v6974
    %7232 = vmatprep.subr.mxu0 0.0
    %7233 = vmatpush1.msra.mxu0 %v6973
    %7234 = vmatprep.subr.mxu0 0.0
    %7235 = vmatpush1.msra.mxu0 %v6972
    %7236 = vmatprep.subr.mxu0 0.0
    %7237 = vmatpush1.msra.mxu0 %v6971
    %7238 = vmatprep.subr.mxu0 0.0
    %7239 = vmatpush1.msra.mxu0 %v6970
    %7240 = vmatprep.subr.mxu0 0.0
    %7241 = vmatpush2.msra.mxu0 %v7001
    %7242 = vmatprep.subr.mxu0 0.0
    %7243 = vmatpush2.msra.mxu0 %v7000
    %7244 = vmatprep.subr.mxu0 0.0
    %7245 = vmatpush2.msra.mxu0 %v6999
    %7246 = vmatprep.subr.mxu0 0.0
    %7247 = vmatpush2.msra.mxu0 %v6998
    %7248 = vmatprep.subr.mxu0 0.0
    %7249 = vmatpush2.msra.mxu0 %v6997
    %7250 = vmatprep.subr.mxu0 0.0
    %7251 = vmatpush2.msra.mxu0 %v6996
    %7252 = vmatprep.subr.mxu0 0.0
    %7253 = vmatpush2.msra.mxu0 %v6995
    %7254 = vmatprep.subr.mxu0 0.0
    %7255 = vmatpush2.msra.mxu0 %v6994
    %7256 = vmatprep.subr.mxu0 0.0
    %7257 = vmatpush2.msra.mxu0 %v6993
    %7258 = vmatprep.subr.mxu0 0.0
    %7259 = vmatpush2.msra.mxu0 %v6992
    %7260 = vmatprep.subr.mxu0 0.0
    %7261 = vmatpush2.msra.mxu0 %v6991
    %7262 = vmatprep.subr.mxu0 0.0
    %7263 = vmatpush2.msra.mxu0 %v6990
    %7264 = vmatprep.subr.mxu0 0.0
    %7265 = vmatpush2.msra.mxu0 %v6989
    %7266 = vmatprep.subr.mxu0 0.0
    %7267 = vmatpush2.msra.mxu0 %v6988
    %7268 = vmatprep.subr.mxu0 0.0
    %7269 = vmatpush2.msra.mxu0 %v6987
    %7270 = vmatprep.subr.mxu0 0.0
    %7271 = vmatpush2.msra.mxu0 %v6986
    %7272 = vmatprep.mubr.f32.mxu0 %v7202
    %7273 = vmatmul.mubr.f32.gmra.mxu0 %v7201
    %v7274 = vpop.f32.mrf.mxu0
    %v7275 = vadd.f32 0.0, %v7274
    %v7276 = vpop.f32.mrf.mxu0
    %7277 = vdwg.mxu0
    %7278 = vmatprep.subr.mxu0 0.0
    %7279 = vmatpush1.msra.mxu0 0.0
    %7280 = vmatprep.subr.mxu0 0.0
    %7281 = vmatpush1.msra.mxu0 0.0
    %7282 = vmatprep.subr.mxu0 0.0
    %7283 = vmatpush1.msra.mxu0 0.0
    %7284 = vmatprep.subr.mxu0 0.0
    %7285 = vmatpush1.msra.mxu0 0.0
    %7286 = vmatprep.subr.mxu0 0.0
    %7287 = vmatpush1.msra.mxu0 0.0
    %7288 = vmatprep.subr.mxu0 0.0
    %7289 = vmatpush1.msra.mxu0 0.0
    %7290 = vmatprep.subr.mxu0 0.0
    %7291 = vmatpush1.msra.mxu0 0.0
    %7292 = vmatprep.subr.mxu0 0.0
    %7293 = vmatpush1.msra.mxu0 %v7031
    %7294 = vmatprep.subr.mxu0 0.0
    %7295 = vmatpush1.msra.mxu0 %v7009
    %7296 = vmatprep.subr.mxu0 0.0
    %7297 = vmatpush1.msra.mxu0 %v7008
    %7298 = vmatprep.subr.mxu0 0.0
    %7299 = vmatpush1.msra.mxu0 %v7007
    %7300 = vmatprep.subr.mxu0 0.0
    %7301 = vmatpush1.msra.mxu0 %v7006
    %7302 = vmatprep.subr.mxu0 0.0
    %7303 = vmatpush1.msra.mxu0 %v7005
    %7304 = vmatprep.subr.mxu0 0.0
    %7305 = vmatpush1.msra.mxu0 %v7004
    %7306 = vmatprep.subr.mxu0 0.0
    %7307 = vmatpush1.msra.mxu0 %v7003
    %7308 = vmatprep.subr.mxu0 0.0
    %7309 = vmatpush1.msra.mxu0 %v7002
    %7310 = vmatprep.subr.mxu0 0.0
    %7311 = vmatpush2.msra.mxu0 0.0
    %7312 = vmatprep.subr.mxu0 0.0
    %7313 = vmatpush2.msra.mxu0 0.0
    %7314 = vmatprep.subr.mxu0 0.0
    %7315 = vmatpush2.msra.mxu0 0.0
    %7316 = vmatprep.subr.mxu0 0.0
    %7317 = vmatpush2.msra.mxu0 0.0
    %7318 = vmatprep.subr.mxu0 0.0
    %7319 = vmatpush2.msra.mxu0 0.0
    %7320 = vmatprep.subr.mxu0 0.0
    %7321 = vmatpush2.msra.mxu0 0.0
    %7322 = vmatprep.subr.mxu0 0.0
    %7323 = vmatpush2.msra.mxu0 0.0
    %7324 = vmatprep.subr.mxu0 0.0
    %7325 = vmatpush2.msra.mxu0 0.0
    %7326 = vmatprep.subr.mxu0 0.0
    %7327 = vmatpush2.msra.mxu0 0.0
    %7328 = vmatprep.subr.mxu0 0.0
    %7329 = vmatpush2.msra.mxu0 0.0
    %7330 = vmatprep.subr.mxu0 0.0
    %7331 = vmatpush2.msra.mxu0 0.0
    %7332 = vmatprep.subr.mxu0 0.0
    %7333 = vmatpush2.msra.mxu0 0.0
    %7334 = vmatprep.subr.mxu0 0.0
    %7335 = vmatpush2.msra.mxu0 0.0
    %7336 = vmatprep.subr.mxu0 0.0
    %7337 = vmatpush2.msra.mxu0 0.0
    %7338 = vmatprep.subr.mxu0 0.0
    %7339 = vmatpush2.msra.mxu0 0.0
    %7340 = vmatprep.subr.mxu0 0.0
    %7341 = vmatpush2.msra.mxu0 0.0
    %7342 = vmatprep.mubr.f32.mxu0 0.0
    %7343 = vmatmul.mubr.f32.gmra.mxu0 %v7206
    %v7344 = vpop.f32.mrf.mxu0
    %v7345 = vadd.f32 %v7275, %v7344
    %v7346 = vpop.f32.mrf.mxu0
    %7347 = vdwg.mxu0
    %v7348 = vadd.f32 %v6968, %v7345
    %s7349 = scalar_lea.vmem [#allocation4], 1640
    %v7350 = vld [vmem:[%s7349] sm:$0xff]
    %v7351 = vld [vmem:[%s7349 + $0x8] sm:$0xff]
    %v7352 = vld [vmem:[%s7349 + $0x10] sm:$0xff]
    %v7353 = vld [vmem:[%s7349 + $0x18] sm:$0xff]
    %v7354 = vld [vmem:[%s7349 + $0x20] sm:$0xff]
    %v7355 = vld [vmem:[%s7349 + $0x28] sm:$0xff]
    %v7356 = vld [vmem:[%s7349 + $0x30] sm:$0xff]
    %v7357 = vld [vmem:[%s7349 + $0x38] sm:$0xff]
    %v7358 = vld [vmem:[%s7349 + $0x40] sm:$0xff]
    %v7359 = vld [vmem:[%s7349 + $0x48] sm:$0xff]
    %v7360 = vld [vmem:[%s7349 + $0x50] sm:$0xff]
    %v7361 = vld [vmem:[%s7349 + $0x58] sm:$0xff]
    %v7362 = vld [vmem:[%s7349 + $0x60] sm:$0xff]
    %v7363 = vld [vmem:[%s7349 + $0x68] sm:$0xff]
    %v7364 = vld [vmem:[%s7349 + $0x70] sm:$0xff]
    %v7365 = vld [vmem:[%s7349 + $0x78] sm:$0xff]
    %v7366 = vld [vmem:[%s7349 + $0x80] sm:$0xff]
    %v7367 = vld [vmem:[%s7349 + $0x88] sm:$0xff]
    %v7368 = vld [vmem:[%s7349 + $0x90] sm:$0xff]
    %v7369 = vld [vmem:[%s7349 + $0x98] sm:$0xff]
    %v7370 = vld [vmem:[%s7349 + $0xa0] sm:$0xff]
    %v7371 = vld [vmem:[%s7349 + $0xa8] sm:$0xff]
    %v7372 = vld [vmem:[%s7349 + $0xb0] sm:$0xff]
    %v7373 = vld [vmem:[%s7349 + $0xb8] sm:$0xff]
    %v7374 = vld [vmem:[%s7349 + $0xc0] sm:$0xff]
    %v7375 = vld [vmem:[%s7349 + $0xc8] sm:$0xff]
    %v7376 = vld [vmem:[%s7349 + $0xd0] sm:$0xff]
    %v7377 = vld [vmem:[%s7349 + $0xd8] sm:$0xff]
    %v7378 = vld [vmem:[%s7349 + $0xe0] sm:$0xff]
    %v7379 = vld [vmem:[%s7349 + $0xe8] sm:$0xff]
    %v7380 = vld [vmem:[%s7349 + $0xf0] sm:$0xff]
    %v7381 = vld [vmem:[%s7349 + $0xf8] sm:$0xff]
    %v7382 = vld [vmem:[%s7349 + $0x100] sm:$0xff]
    %v7383 = vld [vmem:[%s7349 + $0x108] sm:$0xff]
    %v7384 = vld [vmem:[%s7349 + $0x110] sm:$0xff]
    %v7385 = vld [vmem:[%s7349 + $0x118] sm:$0xff]
    %v7386 = vld [vmem:[%s7349 + $0x120] sm:$0xff]
    %v7387 = vld [vmem:[%s7349 + $0x128] sm:$0xff]
    %v7388 = vld [vmem:[%s7349 + $0x130] sm:$0xff]
    %v7389 = vld [vmem:[%s7349 + $0x138] sm:$0xff]
    %v7390 = vld [vmem:[%s7349 + $0x140] sm:$0xf]
    %s7391 = scalar_lea.vmem [#allocation3], 5
    %v7392 = vld [vmem:[%s7391] ss:$8 sm:$0x7]
    %v7394 = vlaneseq
    %v7395 = vshrl.u32 %v7394, 7
    %v7396 = vsub.s32 0, %v7395
    %v7397 = vrot.slane %v7392, %v7396
    %v7398 = vlaneseq
    %v7399 = vshrl.u32 %v7398, 7
    %v7400 = vsub.s32 1, %v7399
    %v7401 = vrot.slane %v7392, %v7400
    %v7402 = vlaneseq
    %v7403 = vshrl.u32 %v7402, 7
    %v7404 = vsub.s32 2, %v7403
    %v7405 = vrot.slane %v7392, %v7404
    %v7408 = vsel %vm5556, %v7405, 0
    %v7411 = vsel %vm789, %v7390, 0
    %7413 = vmatprep.subr.mxu0 0.0
    %7414 = vmatpush1.msra.mxu0 %v7365
    %7415 = vmatprep.subr.mxu0 0.0
    %7416 = vmatpush1.msra.mxu0 %v7364
    %7417 = vmatprep.subr.mxu0 0.0
    %7418 = vmatpush1.msra.mxu0 %v7363
    %7419 = vmatprep.subr.mxu0 0.0
    %7420 = vmatpush1.msra.mxu0 %v7362
    %7421 = vmatprep.subr.mxu0 0.0
    %7422 = vmatpush1.msra.mxu0 %v7361
    %7423 = vmatprep.subr.mxu0 0.0
    %7424 = vmatpush1.msra.mxu0 %v7360
    %7425 = vmatprep.subr.mxu0 0.0
    %7426 = vmatpush1.msra.mxu0 %v7359
    %7427 = vmatprep.subr.mxu0 0.0
    %7428 = vmatpush1.msra.mxu0 %v7358
    %7429 = vmatprep.subr.mxu0 0.0
    %7430 = vmatpush1.msra.mxu0 %v7357
    %7431 = vmatprep.subr.mxu0 0.0
    %7432 = vmatpush1.msra.mxu0 %v7356
    %7433 = vmatprep.subr.mxu0 0.0
    %7434 = vmatpush1.msra.mxu0 %v7355
    %7435 = vmatprep.subr.mxu0 0.0
    %7436 = vmatpush1.msra.mxu0 %v7354
    %7437 = vmatprep.subr.mxu0 0.0
    %7438 = vmatpush1.msra.mxu0 %v7353
    %7439 = vmatprep.subr.mxu0 0.0
    %7440 = vmatpush1.msra.mxu0 %v7352
    %7441 = vmatprep.subr.mxu0 0.0
    %7442 = vmatpush1.msra.mxu0 %v7351
    %7443 = vmatprep.subr.mxu0 0.0
    %7444 = vmatpush1.msra.mxu0 %v7350
    %7445 = vmatprep.subr.mxu0 0.0
    %7446 = vmatpush2.msra.mxu0 %v7381
    %7447 = vmatprep.subr.mxu0 0.0
    %7448 = vmatpush2.msra.mxu0 %v7380
    %7449 = vmatprep.subr.mxu0 0.0
    %7450 = vmatpush2.msra.mxu0 %v7379
    %7451 = vmatprep.subr.mxu0 0.0
    %7452 = vmatpush2.msra.mxu0 %v7378
    %7453 = vmatprep.subr.mxu0 0.0
    %7454 = vmatpush2.msra.mxu0 %v7377
    %7455 = vmatprep.subr.mxu0 0.0
    %7456 = vmatpush2.msra.mxu0 %v7376
    %7457 = vmatprep.subr.mxu0 0.0
    %7458 = vmatpush2.msra.mxu0 %v7375
    %7459 = vmatprep.subr.mxu0 0.0
    %7460 = vmatpush2.msra.mxu0 %v7374
    %7461 = vmatprep.subr.mxu0 0.0
    %7462 = vmatpush2.msra.mxu0 %v7373
    %7463 = vmatprep.subr.mxu0 0.0
    %7464 = vmatpush2.msra.mxu0 %v7372
    %7465 = vmatprep.subr.mxu0 0.0
    %7466 = vmatpush2.msra.mxu0 %v7371
    %7467 = vmatprep.subr.mxu0 0.0
    %7468 = vmatpush2.msra.mxu0 %v7370
    %7469 = vmatprep.subr.mxu0 0.0
    %7470 = vmatpush2.msra.mxu0 %v7369
    %7471 = vmatprep.subr.mxu0 0.0
    %7472 = vmatpush2.msra.mxu0 %v7368
    %7473 = vmatprep.subr.mxu0 0.0
    %7474 = vmatpush2.msra.mxu0 %v7367
    %7475 = vmatprep.subr.mxu0 0.0
    %7476 = vmatpush2.msra.mxu0 %v7366
    %7477 = vmatprep.mubr.f32.mxu0 %v7401
    %7478 = vmatmul.mubr.f32.gmra.mxu0 %v7397
    %v7479 = vpop.f32.mrf.mxu0
    %v7480 = vadd.f32 0.0, %v7479
    %v7481 = vpop.f32.mrf.mxu0
    %7482 = vdwg.mxu0
    %7483 = vmatprep.subr.mxu0 0.0
    %7484 = vmatpush1.msra.mxu0 0.0
    %7485 = vmatprep.subr.mxu0 0.0
    %7486 = vmatpush1.msra.mxu0 0.0
    %7487 = vmatprep.subr.mxu0 0.0
    %7488 = vmatpush1.msra.mxu0 0.0
    %7489 = vmatprep.subr.mxu0 0.0
    %7490 = vmatpush1.msra.mxu0 0.0
    %7491 = vmatprep.subr.mxu0 0.0
    %7492 = vmatpush1.msra.mxu0 0.0
    %7493 = vmatprep.subr.mxu0 0.0
    %7494 = vmatpush1.msra.mxu0 0.0
    %7495 = vmatprep.subr.mxu0 0.0
    %7496 = vmatpush1.msra.mxu0 0.0
    %7497 = vmatprep.subr.mxu0 0.0
    %7498 = vmatpush1.msra.mxu0 %v7411
    %7499 = vmatprep.subr.mxu0 0.0
    %7500 = vmatpush1.msra.mxu0 %v7389
    %7501 = vmatprep.subr.mxu0 0.0
    %7502 = vmatpush1.msra.mxu0 %v7388
    %7503 = vmatprep.subr.mxu0 0.0
    %7504 = vmatpush1.msra.mxu0 %v7387
    %7505 = vmatprep.subr.mxu0 0.0
    %7506 = vmatpush1.msra.mxu0 %v7386
    %7507 = vmatprep.subr.mxu0 0.0
    %7508 = vmatpush1.msra.mxu0 %v7385
    %7509 = vmatprep.subr.mxu0 0.0
    %7510 = vmatpush1.msra.mxu0 %v7384
    %7511 = vmatprep.subr.mxu0 0.0
    %7512 = vmatpush1.msra.mxu0 %v7383
    %7513 = vmatprep.subr.mxu0 0.0
    %7514 = vmatpush1.msra.mxu0 %v7382
    %7515 = vmatprep.subr.mxu0 0.0
    %7516 = vmatpush2.msra.mxu0 0.0
    %7517 = vmatprep.subr.mxu0 0.0
    %7518 = vmatpush2.msra.mxu0 0.0
    %7519 = vmatprep.subr.mxu0 0.0
    %7520 = vmatpush2.msra.mxu0 0.0
    %7521 = vmatprep.subr.mxu0 0.0
    %7522 = vmatpush2.msra.mxu0 0.0
    %7523 = vmatprep.subr.mxu0 0.0
    %7524 = vmatpush2.msra.mxu0 0.0
    %7525 = vmatprep.subr.mxu0 0.0
    %7526 = vmatpush2.msra.mxu0 0.0
    %7527 = vmatprep.subr.mxu0 0.0
    %7528 = vmatpush2.msra.mxu0 0.0
    %7529 = vmatprep.subr.mxu0 0.0
    %7530 = vmatpush2.msra.mxu0 0.0
    %7531 = vmatprep.subr.mxu0 0.0
    %7532 = vmatpush2.msra.mxu0 0.0
    %7533 = vmatprep.subr.mxu0 0.0
    %7534 = vmatpush2.msra.mxu0 0.0
    %7535 = vmatprep.subr.mxu0 0.0
    %7536 = vmatpush2.msra.mxu0 0.0
    %7537 = vmatprep.subr.mxu0 0.0
    %7538 = vmatpush2.msra.mxu0 0.0
    %7539 = vmatprep.subr.mxu0 0.0
    %7540 = vmatpush2.msra.mxu0 0.0
    %7541 = vmatprep.subr.mxu0 0.0
    %7542 = vmatpush2.msra.mxu0 0.0
    %7543 = vmatprep.subr.mxu0 0.0
    %7544 = vmatpush2.msra.mxu0 0.0
    %7545 = vmatprep.subr.mxu0 0.0
    %7546 = vmatpush2.msra.mxu0 0.0
    %7547 = vmatprep.mubr.f32.mxu0 0.0
    %7548 = vmatmul.mubr.f32.gmra.mxu0 %v7408
    %v7549 = vpop.f32.mrf.mxu0
    %v7550 = vadd.f32 %v7480, %v7549
    %v7551 = vpop.f32.mrf.mxu0
    %7552 = vdwg.mxu0
    %v7553 = vadd.f32 %v7173, %v7550
    %s7554 = scalar_lea.vmem [#allocation3], 21
    %v7555 = vld [vmem:[%s7554] ss:$8 sm:$0xf]
    %v7557 = vlaneseq
    %v7558 = vshrl.u32 %v7557, 7
    %v7559 = vsub.s32 0, %v7558
    %v7560 = vrot.slane %v7555, %v7559
    %v7561 = vlaneseq
    %v7562 = vshrl.u32 %v7561, 7
    %v7563 = vsub.s32 1, %v7562
    %v7564 = vrot.slane %v7555, %v7563
    %v7565 = vlaneseq
    %v7566 = vshrl.u32 %v7565, 7
    %v7567 = vsub.s32 2, %v7566
    %v7568 = vrot.slane %v7555, %v7567
    %v7569 = vlaneseq
    %v7570 = vshrl.u32 %v7569, 7
    %v7571 = vsub.s32 3, %v7570
    %v7572 = vrot.slane %v7555, %v7571
    %7573 = vrot.lane.b32.xlu0 %v7560, 60
    %v7574 = vpop.permute.xlu0 %7573
    %7575 = vrot.lane.b32.xlu0 %v7564, 60
    %v7576 = vpop.permute.xlu0 %7575
    %7577 = vrot.lane.b32.xlu0 %v7568, 60
    %v7578 = vpop.permute.xlu0 %7577
    %7579 = vrot.lane.b32.xlu0 %v7572, 60
    %v7580 = vpop.permute.xlu0 %7579
    %v7581 = vsel %vm5889, %v7574, %v7576
    %v7582 = vsel %vm5889, %v7576, %v7578
    %v7583 = vsel %vm5889, %v7578, %v7580
    %v7586 = vsel %vm5556, %v7583, 0
    %7588 = vmatprep.subr.mxu0 0.0
    %7589 = vmatpush1.msra.mxu0 %v7365
    %7590 = vmatprep.subr.mxu0 0.0
    %7591 = vmatpush1.msra.mxu0 %v7364
    %7592 = vmatprep.subr.mxu0 0.0
    %7593 = vmatpush1.msra.mxu0 %v7363
    %7594 = vmatprep.subr.mxu0 0.0
    %7595 = vmatpush1.msra.mxu0 %v7362
    %7596 = vmatprep.subr.mxu0 0.0
    %7597 = vmatpush1.msra.mxu0 %v7361
    %7598 = vmatprep.subr.mxu0 0.0
    %7599 = vmatpush1.msra.mxu0 %v7360
    %7600 = vmatprep.subr.mxu0 0.0
    %7601 = vmatpush1.msra.mxu0 %v7359
    %7602 = vmatprep.subr.mxu0 0.0
    %7603 = vmatpush1.msra.mxu0 %v7358
    %7604 = vmatprep.subr.mxu0 0.0
    %7605 = vmatpush1.msra.mxu0 %v7357
    %7606 = vmatprep.subr.mxu0 0.0
    %7607 = vmatpush1.msra.mxu0 %v7356
    %7608 = vmatprep.subr.mxu0 0.0
    %7609 = vmatpush1.msra.mxu0 %v7355
    %7610 = vmatprep.subr.mxu0 0.0
    %7611 = vmatpush1.msra.mxu0 %v7354
    %7612 = vmatprep.subr.mxu0 0.0
    %7613 = vmatpush1.msra.mxu0 %v7353
    %7614 = vmatprep.subr.mxu0 0.0
    %7615 = vmatpush1.msra.mxu0 %v7352
    %7616 = vmatprep.subr.mxu0 0.0
    %7617 = vmatpush1.msra.mxu0 %v7351
    %7618 = vmatprep.subr.mxu0 0.0
    %7619 = vmatpush1.msra.mxu0 %v7350
    %7620 = vmatprep.subr.mxu0 0.0
    %7621 = vmatpush2.msra.mxu0 %v7381
    %7622 = vmatprep.subr.mxu0 0.0
    %7623 = vmatpush2.msra.mxu0 %v7380
    %7624 = vmatprep.subr.mxu0 0.0
    %7625 = vmatpush2.msra.mxu0 %v7379
    %7626 = vmatprep.subr.mxu0 0.0
    %7627 = vmatpush2.msra.mxu0 %v7378
    %7628 = vmatprep.subr.mxu0 0.0
    %7629 = vmatpush2.msra.mxu0 %v7377
    %7630 = vmatprep.subr.mxu0 0.0
    %7631 = vmatpush2.msra.mxu0 %v7376
    %7632 = vmatprep.subr.mxu0 0.0
    %7633 = vmatpush2.msra.mxu0 %v7375
    %7634 = vmatprep.subr.mxu0 0.0
    %7635 = vmatpush2.msra.mxu0 %v7374
    %7636 = vmatprep.subr.mxu0 0.0
    %7637 = vmatpush2.msra.mxu0 %v7373
    %7638 = vmatprep.subr.mxu0 0.0
    %7639 = vmatpush2.msra.mxu0 %v7372
    %7640 = vmatprep.subr.mxu0 0.0
    %7641 = vmatpush2.msra.mxu0 %v7371
    %7642 = vmatprep.subr.mxu0 0.0
    %7643 = vmatpush2.msra.mxu0 %v7370
    %7644 = vmatprep.subr.mxu0 0.0
    %7645 = vmatpush2.msra.mxu0 %v7369
    %7646 = vmatprep.subr.mxu0 0.0
    %7647 = vmatpush2.msra.mxu0 %v7368
    %7648 = vmatprep.subr.mxu0 0.0
    %7649 = vmatpush2.msra.mxu0 %v7367
    %7650 = vmatprep.subr.mxu0 0.0
    %7651 = vmatpush2.msra.mxu0 %v7366
    %7652 = vmatprep.mubr.f32.mxu0 %v7582
    %7653 = vmatmul.mubr.f32.gmra.mxu0 %v7581
    %v7654 = vpop.f32.mrf.mxu0
    %v7655 = vadd.f32 0.0, %v7654
    %v7656 = vpop.f32.mrf.mxu0
    %7657 = vdwg.mxu0
    %7658 = vmatprep.subr.mxu0 0.0
    %7659 = vmatpush1.msra.mxu0 0.0
    %7660 = vmatprep.subr.mxu0 0.0
    %7661 = vmatpush1.msra.mxu0 0.0
    %7662 = vmatprep.subr.mxu0 0.0
    %7663 = vmatpush1.msra.mxu0 0.0
    %7664 = vmatprep.subr.mxu0 0.0
    %7665 = vmatpush1.msra.mxu0 0.0
    %7666 = vmatprep.subr.mxu0 0.0
    %7667 = vmatpush1.msra.mxu0 0.0
    %7668 = vmatprep.subr.mxu0 0.0
    %7669 = vmatpush1.msra.mxu0 0.0
    %7670 = vmatprep.subr.mxu0 0.0
    %7671 = vmatpush1.msra.mxu0 0.0
    %7672 = vmatprep.subr.mxu0 0.0
    %7673 = vmatpush1.msra.mxu0 %v7411
    %7674 = vmatprep.subr.mxu0 0.0
    %7675 = vmatpush1.msra.mxu0 %v7389
    %7676 = vmatprep.subr.mxu0 0.0
    %7677 = vmatpush1.msra.mxu0 %v7388
    %7678 = vmatprep.subr.mxu0 0.0
    %7679 = vmatpush1.msra.mxu0 %v7387
    %7680 = vmatprep.subr.mxu0 0.0
    %7681 = vmatpush1.msra.mxu0 %v7386
    %7682 = vmatprep.subr.mxu0 0.0
    %7683 = vmatpush1.msra.mxu0 %v7385
    %7684 = vmatprep.subr.mxu0 0.0
    %7685 = vmatpush1.msra.mxu0 %v7384
    %7686 = vmatprep.subr.mxu0 0.0
    %7687 = vmatpush1.msra.mxu0 %v7383
    %7688 = vmatprep.subr.mxu0 0.0
    %7689 = vmatpush1.msra.mxu0 %v7382
    %7690 = vmatprep.subr.mxu0 0.0
    %7691 = vmatpush2.msra.mxu0 0.0
    %7692 = vmatprep.subr.mxu0 0.0
    %7693 = vmatpush2.msra.mxu0 0.0
    %7694 = vmatprep.subr.mxu0 0.0
    %7695 = vmatpush2.msra.mxu0 0.0
    %7696 = vmatprep.subr.mxu0 0.0
    %7697 = vmatpush2.msra.mxu0 0.0
    %7698 = vmatprep.subr.mxu0 0.0
    %7699 = vmatpush2.msra.mxu0 0.0
    %7700 = vmatprep.subr.mxu0 0.0
    %7701 = vmatpush2.msra.mxu0 0.0
    %7702 = vmatprep.subr.mxu0 0.0
    %7703 = vmatpush2.msra.mxu0 0.0
    %7704 = vmatprep.subr.mxu0 0.0
    %7705 = vmatpush2.msra.mxu0 0.0
    %7706 = vmatprep.subr.mxu0 0.0
    %7707 = vmatpush2.msra.mxu0 0.0
    %7708 = vmatprep.subr.mxu0 0.0
    %7709 = vmatpush2.msra.mxu0 0.0
    %7710 = vmatprep.subr.mxu0 0.0
    %7711 = vmatpush2.msra.mxu0 0.0
    %7712 = vmatprep.subr.mxu0 0.0
    %7713 = vmatpush2.msra.mxu0 0.0
    %7714 = vmatprep.subr.mxu0 0.0
    %7715 = vmatpush2.msra.mxu0 0.0
    %7716 = vmatprep.subr.mxu0 0.0
    %7717 = vmatpush2.msra.mxu0 0.0
    %7718 = vmatprep.subr.mxu0 0.0
    %7719 = vmatpush2.msra.mxu0 0.0
    %7720 = vmatprep.subr.mxu0 0.0
    %7721 = vmatpush2.msra.mxu0 0.0
    %7722 = vmatprep.mubr.f32.mxu0 0.0
    %7723 = vmatmul.mubr.f32.gmra.mxu0 %v7586
    %v7724 = vpop.f32.mrf.mxu0
    %v7725 = vadd.f32 %v7655, %v7724
    %v7726 = vpop.f32.mrf.mxu0
    %7727 = vdwg.mxu0
    %v7728 = vadd.f32 %v7348, %v7725
    %s7729 = scalar_lea.vmem [#allocation4], 1968
    %v7730 = vld [vmem:[%s7729] sm:$0xff]
    %v7731 = vld [vmem:[%s7729 + $0x8] sm:$0xff]
    %v7732 = vld [vmem:[%s7729 + $0x10] sm:$0xff]
    %v7733 = vld [vmem:[%s7729 + $0x18] sm:$0xff]
    %v7734 = vld [vmem:[%s7729 + $0x20] sm:$0xff]
    %v7735 = vld [vmem:[%s7729 + $0x28] sm:$0xff]
    %v7736 = vld [vmem:[%s7729 + $0x30] sm:$0xff]
    %v7737 = vld [vmem:[%s7729 + $0x38] sm:$0xff]
    %v7738 = vld [vmem:[%s7729 + $0x40] sm:$0xff]
    %v7739 = vld [vmem:[%s7729 + $0x48] sm:$0xff]
    %v7740 = vld [vmem:[%s7729 + $0x50] sm:$0xff]
    %v7741 = vld [vmem:[%s7729 + $0x58] sm:$0xff]
    %v7742 = vld [vmem:[%s7729 + $0x60] sm:$0xff]
    %v7743 = vld [vmem:[%s7729 + $0x68] sm:$0xff]
    %v7744 = vld [vmem:[%s7729 + $0x70] sm:$0xff]
    %v7745 = vld [vmem:[%s7729 + $0x78] sm:$0xff]
    %v7746 = vld [vmem:[%s7729 + $0x80] sm:$0xff]
    %v7747 = vld [vmem:[%s7729 + $0x88] sm:$0xff]
    %v7748 = vld [vmem:[%s7729 + $0x90] sm:$0xff]
    %v7749 = vld [vmem:[%s7729 + $0x98] sm:$0xff]
    %v7750 = vld [vmem:[%s7729 + $0xa0] sm:$0xff]
    %v7751 = vld [vmem:[%s7729 + $0xa8] sm:$0xff]
    %v7752 = vld [vmem:[%s7729 + $0xb0] sm:$0xff]
    %v7753 = vld [vmem:[%s7729 + $0xb8] sm:$0xff]
    %v7754 = vld [vmem:[%s7729 + $0xc0] sm:$0xff]
    %v7755 = vld [vmem:[%s7729 + $0xc8] sm:$0xff]
    %v7756 = vld [vmem:[%s7729 + $0xd0] sm:$0xff]
    %v7757 = vld [vmem:[%s7729 + $0xd8] sm:$0xff]
    %v7758 = vld [vmem:[%s7729 + $0xe0] sm:$0xff]
    %v7759 = vld [vmem:[%s7729 + $0xe8] sm:$0xff]
    %v7760 = vld [vmem:[%s7729 + $0xf0] sm:$0xff]
    %v7761 = vld [vmem:[%s7729 + $0xf8] sm:$0xff]
    %v7762 = vld [vmem:[%s7729 + $0x100] sm:$0xff]
    %v7763 = vld [vmem:[%s7729 + $0x108] sm:$0xff]
    %v7764 = vld [vmem:[%s7729 + $0x110] sm:$0xff]
    %v7765 = vld [vmem:[%s7729 + $0x118] sm:$0xff]
    %v7766 = vld [vmem:[%s7729 + $0x120] sm:$0xff]
    %v7767 = vld [vmem:[%s7729 + $0x128] sm:$0xff]
    %v7768 = vld [vmem:[%s7729 + $0x130] sm:$0xff]
    %v7769 = vld [vmem:[%s7729 + $0x138] sm:$0xff]
    %v7770 = vld [vmem:[%s7729 + $0x140] sm:$0xf]
    %s7771 = scalar_lea.vmem [#allocation3], 6
    %v7772 = vld [vmem:[%s7771] ss:$8 sm:$0x7]
    %v7774 = vlaneseq
    %v7775 = vshrl.u32 %v7774, 7
    %v7776 = vsub.s32 0, %v7775
    %v7777 = vrot.slane %v7772, %v7776
    %v7778 = vlaneseq
    %v7779 = vshrl.u32 %v7778, 7
    %v7780 = vsub.s32 1, %v7779
    %v7781 = vrot.slane %v7772, %v7780
    %v7782 = vlaneseq
    %v7783 = vshrl.u32 %v7782, 7
    %v7784 = vsub.s32 2, %v7783
    %v7785 = vrot.slane %v7772, %v7784
    %v7788 = vsel %vm5556, %v7785, 0
    %v7791 = vsel %vm789, %v7770, 0
    %7793 = vmatprep.subr.mxu0 0.0
    %7794 = vmatpush1.msra.mxu0 %v7745
    %7795 = vmatprep.subr.mxu0 0.0
    %7796 = vmatpush1.msra.mxu0 %v7744
    %7797 = vmatprep.subr.mxu0 0.0
    %7798 = vmatpush1.msra.mxu0 %v7743
    %7799 = vmatprep.subr.mxu0 0.0
    %7800 = vmatpush1.msra.mxu0 %v7742
    %7801 = vmatprep.subr.mxu0 0.0
    %7802 = vmatpush1.msra.mxu0 %v7741
    %7803 = vmatprep.subr.mxu0 0.0
    %7804 = vmatpush1.msra.mxu0 %v7740
    %7805 = vmatprep.subr.mxu0 0.0
    %7806 = vmatpush1.msra.mxu0 %v7739
    %7807 = vmatprep.subr.mxu0 0.0
    %7808 = vmatpush1.msra.mxu0 %v7738
    %7809 = vmatprep.subr.mxu0 0.0
    %7810 = vmatpush1.msra.mxu0 %v7737
    %7811 = vmatprep.subr.mxu0 0.0
    %7812 = vmatpush1.msra.mxu0 %v7736
    %7813 = vmatprep.subr.mxu0 0.0
    %7814 = vmatpush1.msra.mxu0 %v7735
    %7815 = vmatprep.subr.mxu0 0.0
    %7816 = vmatpush1.msra.mxu0 %v7734
    %7817 = vmatprep.subr.mxu0 0.0
    %7818 = vmatpush1.msra.mxu0 %v7733
    %7819 = vmatprep.subr.mxu0 0.0
    %7820 = vmatpush1.msra.mxu0 %v7732
    %7821 = vmatprep.subr.mxu0 0.0
    %7822 = vmatpush1.msra.mxu0 %v7731
    %7823 = vmatprep.subr.mxu0 0.0
    %7824 = vmatpush1.msra.mxu0 %v7730
    %7825 = vmatprep.subr.mxu0 0.0
    %7826 = vmatpush2.msra.mxu0 %v7761
    %7827 = vmatprep.subr.mxu0 0.0
    %7828 = vmatpush2.msra.mxu0 %v7760
    %7829 = vmatprep.subr.mxu0 0.0
    %7830 = vmatpush2.msra.mxu0 %v7759
    %7831 = vmatprep.subr.mxu0 0.0
    %7832 = vmatpush2.msra.mxu0 %v7758
    %7833 = vmatprep.subr.mxu0 0.0
    %7834 = vmatpush2.msra.mxu0 %v7757
    %7835 = vmatprep.subr.mxu0 0.0
    %7836 = vmatpush2.msra.mxu0 %v7756
    %7837 = vmatprep.subr.mxu0 0.0
    %7838 = vmatpush2.msra.mxu0 %v7755
    %7839 = vmatprep.subr.mxu0 0.0
    %7840 = vmatpush2.msra.mxu0 %v7754
    %7841 = vmatprep.subr.mxu0 0.0
    %7842 = vmatpush2.msra.mxu0 %v7753
    %7843 = vmatprep.subr.mxu0 0.0
    %7844 = vmatpush2.msra.mxu0 %v7752
    %7845 = vmatprep.subr.mxu0 0.0
    %7846 = vmatpush2.msra.mxu0 %v7751
    %7847 = vmatprep.subr.mxu0 0.0
    %7848 = vmatpush2.msra.mxu0 %v7750
    %7849 = vmatprep.subr.mxu0 0.0
    %7850 = vmatpush2.msra.mxu0 %v7749
    %7851 = vmatprep.subr.mxu0 0.0
    %7852 = vmatpush2.msra.mxu0 %v7748
    %7853 = vmatprep.subr.mxu0 0.0
    %7854 = vmatpush2.msra.mxu0 %v7747
    %7855 = vmatprep.subr.mxu0 0.0
    %7856 = vmatpush2.msra.mxu0 %v7746
    %7857 = vmatprep.mubr.f32.mxu0 %v7781
    %7858 = vmatmul.mubr.f32.gmra.mxu0 %v7777
    %v7859 = vpop.f32.mrf.mxu0
    %v7860 = vadd.f32 0.0, %v7859
    %v7861 = vpop.f32.mrf.mxu0
    %7862 = vdwg.mxu0
    %7863 = vmatprep.subr.mxu0 0.0
    %7864 = vmatpush1.msra.mxu0 0.0
    %7865 = vmatprep.subr.mxu0 0.0
    %7866 = vmatpush1.msra.mxu0 0.0
    %7867 = vmatprep.subr.mxu0 0.0
    %7868 = vmatpush1.msra.mxu0 0.0
    %7869 = vmatprep.subr.mxu0 0.0
    %7870 = vmatpush1.msra.mxu0 0.0
    %7871 = vmatprep.subr.mxu0 0.0
    %7872 = vmatpush1.msra.mxu0 0.0
    %7873 = vmatprep.subr.mxu0 0.0
    %7874 = vmatpush1.msra.mxu0 0.0
    %7875 = vmatprep.subr.mxu0 0.0
    %7876 = vmatpush1.msra.mxu0 0.0
    %7877 = vmatprep.subr.mxu0 0.0
    %7878 = vmatpush1.msra.mxu0 %v7791
    %7879 = vmatprep.subr.mxu0 0.0
    %7880 = vmatpush1.msra.mxu0 %v7769
    %7881 = vmatprep.subr.mxu0 0.0
    %7882 = vmatpush1.msra.mxu0 %v7768
    %7883 = vmatprep.subr.mxu0 0.0
    %7884 = vmatpush1.msra.mxu0 %v7767
    %7885 = vmatprep.subr.mxu0 0.0
    %7886 = vmatpush1.msra.mxu0 %v7766
    %7887 = vmatprep.subr.mxu0 0.0
    %7888 = vmatpush1.msra.mxu0 %v7765
    %7889 = vmatprep.subr.mxu0 0.0
    %7890 = vmatpush1.msra.mxu0 %v7764
    %7891 = vmatprep.subr.mxu0 0.0
    %7892 = vmatpush1.msra.mxu0 %v7763
    %7893 = vmatprep.subr.mxu0 0.0
    %7894 = vmatpush1.msra.mxu0 %v7762
    %7895 = vmatprep.subr.mxu0 0.0
    %7896 = vmatpush2.msra.mxu0 0.0
    %7897 = vmatprep.subr.mxu0 0.0
    %7898 = vmatpush2.msra.mxu0 0.0
    %7899 = vmatprep.subr.mxu0 0.0
    %7900 = vmatpush2.msra.mxu0 0.0
    %7901 = vmatprep.subr.mxu0 0.0
    %7902 = vmatpush2.msra.mxu0 0.0
    %7903 = vmatprep.subr.mxu0 0.0
    %7904 = vmatpush2.msra.mxu0 0.0
    %7905 = vmatprep.subr.mxu0 0.0
    %7906 = vmatpush2.msra.mxu0 0.0
    %7907 = vmatprep.subr.mxu0 0.0
    %7908 = vmatpush2.msra.mxu0 0.0
    %7909 = vmatprep.subr.mxu0 0.0
    %7910 = vmatpush2.msra.mxu0 0.0
    %7911 = vmatprep.subr.mxu0 0.0
    %7912 = vmatpush2.msra.mxu0 0.0
    %7913 = vmatprep.subr.mxu0 0.0
    %7914 = vmatpush2.msra.mxu0 0.0
    %7915 = vmatprep.subr.mxu0 0.0
    %7916 = vmatpush2.msra.mxu0 0.0
    %7917 = vmatprep.subr.mxu0 0.0
    %7918 = vmatpush2.msra.mxu0 0.0
    %7919 = vmatprep.subr.mxu0 0.0
    %7920 = vmatpush2.msra.mxu0 0.0
    %7921 = vmatprep.subr.mxu0 0.0
    %7922 = vmatpush2.msra.mxu0 0.0
    %7923 = vmatprep.subr.mxu0 0.0
    %7924 = vmatpush2.msra.mxu0 0.0
    %7925 = vmatprep.subr.mxu0 0.0
    %7926 = vmatpush2.msra.mxu0 0.0
    %7927 = vmatprep.mubr.f32.mxu0 0.0
    %7928 = vmatmul.mubr.f32.gmra.mxu0 %v7788
    %v7929 = vpop.f32.mrf.mxu0
    %v7930 = vadd.f32 %v7860, %v7929
    %v7931 = vpop.f32.mrf.mxu0
    %7932 = vdwg.mxu0
    %v7933 = vadd.f32 %v7553, %v7930
    %s7934 = scalar_lea.vmem [#allocation3], 22
    %v7935 = vld [vmem:[%s7934] ss:$8 sm:$0xf]
    %v7937 = vlaneseq
    %v7938 = vshrl.u32 %v7937, 7
    %v7939 = vsub.s32 0, %v7938
    %v7940 = vrot.slane %v7935, %v7939
    %v7941 = vlaneseq
    %v7942 = vshrl.u32 %v7941, 7
    %v7943 = vsub.s32 1, %v7942
    %v7944 = vrot.slane %v7935, %v7943
    %v7945 = vlaneseq
    %v7946 = vshrl.u32 %v7945, 7
    %v7947 = vsub.s32 2, %v7946
    %v7948 = vrot.slane %v7935, %v7947
    %v7949 = vlaneseq
    %v7950 = vshrl.u32 %v7949, 7
    %v7951 = vsub.s32 3, %v7950
    %v7952 = vrot.slane %v7935, %v7951
    %7953 = vrot.lane.b32.xlu0 %v7940, 60
    %v7954 = vpop.permute.xlu0 %7953
    %7955 = vrot.lane.b32.xlu0 %v7944, 60
    %v7956 = vpop.permute.xlu0 %7955
    %7957 = vrot.lane.b32.xlu0 %v7948, 60
    %v7958 = vpop.permute.xlu0 %7957
    %7959 = vrot.lane.b32.xlu0 %v7952, 60
    %v7960 = vpop.permute.xlu0 %7959
    %v7961 = vsel %vm5889, %v7954, %v7956
    %v7962 = vsel %vm5889, %v7956, %v7958
    %v7963 = vsel %vm5889, %v7958, %v7960
    %v7966 = vsel %vm5556, %v7963, 0
    %7968 = vmatprep.subr.mxu0 0.0
    %7969 = vmatpush1.msra.mxu0 %v7745
    %7970 = vmatprep.subr.mxu0 0.0
    %7971 = vmatpush1.msra.mxu0 %v7744
    %7972 = vmatprep.subr.mxu0 0.0
    %7973 = vmatpush1.msra.mxu0 %v7743
    %7974 = vmatprep.subr.mxu0 0.0
    %7975 = vmatpush1.msra.mxu0 %v7742
    %7976 = vmatprep.subr.mxu0 0.0
    %7977 = vmatpush1.msra.mxu0 %v7741
    %7978 = vmatprep.subr.mxu0 0.0
    %7979 = vmatpush1.msra.mxu0 %v7740
    %7980 = vmatprep.subr.mxu0 0.0
    %7981 = vmatpush1.msra.mxu0 %v7739
    %7982 = vmatprep.subr.mxu0 0.0
    %7983 = vmatpush1.msra.mxu0 %v7738
    %7984 = vmatprep.subr.mxu0 0.0
    %7985 = vmatpush1.msra.mxu0 %v7737
    %7986 = vmatprep.subr.mxu0 0.0
    %7987 = vmatpush1.msra.mxu0 %v7736
    %7988 = vmatprep.subr.mxu0 0.0
    %7989 = vmatpush1.msra.mxu0 %v7735
    %7990 = vmatprep.subr.mxu0 0.0
    %7991 = vmatpush1.msra.mxu0 %v7734
    %7992 = vmatprep.subr.mxu0 0.0
    %7993 = vmatpush1.msra.mxu0 %v7733
    %7994 = vmatprep.subr.mxu0 0.0
    %7995 = vmatpush1.msra.mxu0 %v7732
    %7996 = vmatprep.subr.mxu0 0.0
    %7997 = vmatpush1.msra.mxu0 %v7731
    %7998 = vmatprep.subr.mxu0 0.0
    %7999 = vmatpush1.msra.mxu0 %v7730
    %8000 = vmatprep.subr.mxu0 0.0
    %8001 = vmatpush2.msra.mxu0 %v7761
    %8002 = vmatprep.subr.mxu0 0.0
    %8003 = vmatpush2.msra.mxu0 %v7760
    %8004 = vmatprep.subr.mxu0 0.0
    %8005 = vmatpush2.msra.mxu0 %v7759
    %8006 = vmatprep.subr.mxu0 0.0
    %8007 = vmatpush2.msra.mxu0 %v7758
    %8008 = vmatprep.subr.mxu0 0.0
    %8009 = vmatpush2.msra.mxu0 %v7757
    %8010 = vmatprep.subr.mxu0 0.0
    %8011 = vmatpush2.msra.mxu0 %v7756
    %8012 = vmatprep.subr.mxu0 0.0
    %8013 = vmatpush2.msra.mxu0 %v7755
    %8014 = vmatprep.subr.mxu0 0.0
    %8015 = vmatpush2.msra.mxu0 %v7754
    %8016 = vmatprep.subr.mxu0 0.0
    %8017 = vmatpush2.msra.mxu0 %v7753
    %8018 = vmatprep.subr.mxu0 0.0
    %8019 = vmatpush2.msra.mxu0 %v7752
    %8020 = vmatprep.subr.mxu0 0.0
    %8021 = vmatpush2.msra.mxu0 %v7751
    %8022 = vmatprep.subr.mxu0 0.0
    %8023 = vmatpush2.msra.mxu0 %v7750
    %8024 = vmatprep.subr.mxu0 0.0
    %8025 = vmatpush2.msra.mxu0 %v7749
    %8026 = vmatprep.subr.mxu0 0.0
    %8027 = vmatpush2.msra.mxu0 %v7748
    %8028 = vmatprep.subr.mxu0 0.0
    %8029 = vmatpush2.msra.mxu0 %v7747
    %8030 = vmatprep.subr.mxu0 0.0
    %8031 = vmatpush2.msra.mxu0 %v7746
    %8032 = vmatprep.mubr.f32.mxu0 %v7962
    %8033 = vmatmul.mubr.f32.gmra.mxu0 %v7961
    %v8034 = vpop.f32.mrf.mxu0
    %v8035 = vadd.f32 0.0, %v8034
    %v8036 = vpop.f32.mrf.mxu0
    %8037 = vdwg.mxu0
    %8038 = vmatprep.subr.mxu0 0.0
    %8039 = vmatpush1.msra.mxu0 0.0
    %8040 = vmatprep.subr.mxu0 0.0
    %8041 = vmatpush1.msra.mxu0 0.0
    %8042 = vmatprep.subr.mxu0 0.0
    %8043 = vmatpush1.msra.mxu0 0.0
    %8044 = vmatprep.subr.mxu0 0.0
    %8045 = vmatpush1.msra.mxu0 0.0
    %8046 = vmatprep.subr.mxu0 0.0
    %8047 = vmatpush1.msra.mxu0 0.0
    %8048 = vmatprep.subr.mxu0 0.0
    %8049 = vmatpush1.msra.mxu0 0.0
    %8050 = vmatprep.subr.mxu0 0.0
    %8051 = vmatpush1.msra.mxu0 0.0
    %8052 = vmatprep.subr.mxu0 0.0
    %8053 = vmatpush1.msra.mxu0 %v7791
    %8054 = vmatprep.subr.mxu0 0.0
    %8055 = vmatpush1.msra.mxu0 %v7769
    %8056 = vmatprep.subr.mxu0 0.0
    %8057 = vmatpush1.msra.mxu0 %v7768
    %8058 = vmatprep.subr.mxu0 0.0
    %8059 = vmatpush1.msra.mxu0 %v7767
    %8060 = vmatprep.subr.mxu0 0.0
    %8061 = vmatpush1.msra.mxu0 %v7766
    %8062 = vmatprep.subr.mxu0 0.0
    %8063 = vmatpush1.msra.mxu0 %v7765
    %8064 = vmatprep.subr.mxu0 0.0
    %8065 = vmatpush1.msra.mxu0 %v7764
    %8066 = vmatprep.subr.mxu0 0.0
    %8067 = vmatpush1.msra.mxu0 %v7763
    %8068 = vmatprep.subr.mxu0 0.0
    %8069 = vmatpush1.msra.mxu0 %v7762
    %8070 = vmatprep.subr.mxu0 0.0
    %8071 = vmatpush2.msra.mxu0 0.0
    %8072 = vmatprep.subr.mxu0 0.0
    %8073 = vmatpush2.msra.mxu0 0.0
    %8074 = vmatprep.subr.mxu0 0.0
    %8075 = vmatpush2.msra.mxu0 0.0
    %8076 = vmatprep.subr.mxu0 0.0
    %8077 = vmatpush2.msra.mxu0 0.0
    %8078 = vmatprep.subr.mxu0 0.0
    %8079 = vmatpush2.msra.mxu0 0.0
    %8080 = vmatprep.subr.mxu0 0.0
    %8081 = vmatpush2.msra.mxu0 0.0
    %8082 = vmatprep.subr.mxu0 0.0
    %8083 = vmatpush2.msra.mxu0 0.0
    %8084 = vmatprep.subr.mxu0 0.0
    %8085 = vmatpush2.msra.mxu0 0.0
    %8086 = vmatprep.subr.mxu0 0.0
    %8087 = vmatpush2.msra.mxu0 0.0
    %8088 = vmatprep.subr.mxu0 0.0
    %8089 = vmatpush2.msra.mxu0 0.0
    %8090 = vmatprep.subr.mxu0 0.0
    %8091 = vmatpush2.msra.mxu0 0.0
    %8092 = vmatprep.subr.mxu0 0.0
    %8093 = vmatpush2.msra.mxu0 0.0
    %8094 = vmatprep.subr.mxu0 0.0
    %8095 = vmatpush2.msra.mxu0 0.0
    %8096 = vmatprep.subr.mxu0 0.0
    %8097 = vmatpush2.msra.mxu0 0.0
    %8098 = vmatprep.subr.mxu0 0.0
    %8099 = vmatpush2.msra.mxu0 0.0
    %8100 = vmatprep.subr.mxu0 0.0
    %8101 = vmatpush2.msra.mxu0 0.0
    %8102 = vmatprep.mubr.f32.mxu0 0.0
    %8103 = vmatmul.mubr.f32.gmra.mxu0 %v7966
    %v8104 = vpop.f32.mrf.mxu0
    %v8105 = vadd.f32 %v8035, %v8104
    %v8106 = vpop.f32.mrf.mxu0
    %8107 = vdwg.mxu0
    %v8108 = vadd.f32 %v7728, %v8105
    %s8109 = scalar_lea.vmem [#allocation4], 2296
    %v8110 = vld [vmem:[%s8109] sm:$0xff]
    %v8111 = vld [vmem:[%s8109 + $0x8] sm:$0xff]
    %v8112 = vld [vmem:[%s8109 + $0x10] sm:$0xff]
    %v8113 = vld [vmem:[%s8109 + $0x18] sm:$0xff]
    %v8114 = vld [vmem:[%s8109 + $0x20] sm:$0xff]
    %v8115 = vld [vmem:[%s8109 + $0x28] sm:$0xff]
    %v8116 = vld [vmem:[%s8109 + $0x30] sm:$0xff]
    %v8117 = vld [vmem:[%s8109 + $0x38] sm:$0xff]
    %v8118 = vld [vmem:[%s8109 + $0x40] sm:$0xff]
    %v8119 = vld [vmem:[%s8109 + $0x48] sm:$0xff]
    %v8120 = vld [vmem:[%s8109 + $0x50] sm:$0xff]
    %v8121 = vld [vmem:[%s8109 + $0x58] sm:$0xff]
    %v8122 = vld [vmem:[%s8109 + $0x60] sm:$0xff]
    %v8123 = vld [vmem:[%s8109 + $0x68] sm:$0xff]
    %v8124 = vld [vmem:[%s8109 + $0x70] sm:$0xff]
    %v8125 = vld [vmem:[%s8109 + $0x78] sm:$0xff]
    %v8126 = vld [vmem:[%s8109 + $0x80] sm:$0xff]
    %v8127 = vld [vmem:[%s8109 + $0x88] sm:$0xff]
    %v8128 = vld [vmem:[%s8109 + $0x90] sm:$0xff]
    %v8129 = vld [vmem:[%s8109 + $0x98] sm:$0xff]
    %v8130 = vld [vmem:[%s8109 + $0xa0] sm:$0xff]
    %v8131 = vld [vmem:[%s8109 + $0xa8] sm:$0xff]
    %v8132 = vld [vmem:[%s8109 + $0xb0] sm:$0xff]
    %v8133 = vld [vmem:[%s8109 + $0xb8] sm:$0xff]
    %v8134 = vld [vmem:[%s8109 + $0xc0] sm:$0xff]
    %v8135 = vld [vmem:[%s8109 + $0xc8] sm:$0xff]
    %v8136 = vld [vmem:[%s8109 + $0xd0] sm:$0xff]
    %v8137 = vld [vmem:[%s8109 + $0xd8] sm:$0xff]
    %v8138 = vld [vmem:[%s8109 + $0xe0] sm:$0xff]
    %v8139 = vld [vmem:[%s8109 + $0xe8] sm:$0xff]
    %v8140 = vld [vmem:[%s8109 + $0xf0] sm:$0xff]
    %v8141 = vld [vmem:[%s8109 + $0xf8] sm:$0xff]
    %v8142 = vld [vmem:[%s8109 + $0x100] sm:$0xff]
    %v8143 = vld [vmem:[%s8109 + $0x108] sm:$0xff]
    %v8144 = vld [vmem:[%s8109 + $0x110] sm:$0xff]
    %v8145 = vld [vmem:[%s8109 + $0x118] sm:$0xff]
    %v8146 = vld [vmem:[%s8109 + $0x120] sm:$0xff]
    %v8147 = vld [vmem:[%s8109 + $0x128] sm:$0xff]
    %v8148 = vld [vmem:[%s8109 + $0x130] sm:$0xff]
    %v8149 = vld [vmem:[%s8109 + $0x138] sm:$0xff]
    %v8150 = vld [vmem:[%s8109 + $0x140] sm:$0xf]
    %s8151 = scalar_lea.vmem [#allocation3], 7
    %v8152 = vld [vmem:[%s8151] ss:$8 sm:$0x7]
    %v8154 = vlaneseq
    %v8155 = vshrl.u32 %v8154, 7
    %v8156 = vsub.s32 0, %v8155
    %v8157 = vrot.slane %v8152, %v8156
    %v8158 = vlaneseq
    %v8159 = vshrl.u32 %v8158, 7
    %v8160 = vsub.s32 1, %v8159
    %v8161 = vrot.slane %v8152, %v8160
    %v8162 = vlaneseq
    %v8163 = vshrl.u32 %v8162, 7
    %v8164 = vsub.s32 2, %v8163
    %v8165 = vrot.slane %v8152, %v8164
    %v8168 = vsel %vm5556, %v8165, 0
    %v8171 = vsel %vm789, %v8150, 0
    %8173 = vmatprep.subr.mxu0 0.0
    %8174 = vmatpush1.msra.mxu0 %v8125
    %8175 = vmatprep.subr.mxu0 0.0
    %8176 = vmatpush1.msra.mxu0 %v8124
    %8177 = vmatprep.subr.mxu0 0.0
    %8178 = vmatpush1.msra.mxu0 %v8123
    %8179 = vmatprep.subr.mxu0 0.0
    %8180 = vmatpush1.msra.mxu0 %v8122
    %8181 = vmatprep.subr.mxu0 0.0
    %8182 = vmatpush1.msra.mxu0 %v8121
    %8183 = vmatprep.subr.mxu0 0.0
    %8184 = vmatpush1.msra.mxu0 %v8120
    %8185 = vmatprep.subr.mxu0 0.0
    %8186 = vmatpush1.msra.mxu0 %v8119
    %8187 = vmatprep.subr.mxu0 0.0
    %8188 = vmatpush1.msra.mxu0 %v8118
    %8189 = vmatprep.subr.mxu0 0.0
    %8190 = vmatpush1.msra.mxu0 %v8117
    %8191 = vmatprep.subr.mxu0 0.0
    %8192 = vmatpush1.msra.mxu0 %v8116
    %8193 = vmatprep.subr.mxu0 0.0
    %8194 = vmatpush1.msra.mxu0 %v8115
    %8195 = vmatprep.subr.mxu0 0.0
    %8196 = vmatpush1.msra.mxu0 %v8114
    %8197 = vmatprep.subr.mxu0 0.0
    %8198 = vmatpush1.msra.mxu0 %v8113
    %8199 = vmatprep.subr.mxu0 0.0
    %8200 = vmatpush1.msra.mxu0 %v8112
    %8201 = vmatprep.subr.mxu0 0.0
    %8202 = vmatpush1.msra.mxu0 %v8111
    %8203 = vmatprep.subr.mxu0 0.0
    %8204 = vmatpush1.msra.mxu0 %v8110
    %8205 = vmatprep.subr.mxu0 0.0
    %8206 = vmatpush2.msra.mxu0 %v8141
    %8207 = vmatprep.subr.mxu0 0.0
    %8208 = vmatpush2.msra.mxu0 %v8140
    %8209 = vmatprep.subr.mxu0 0.0
    %8210 = vmatpush2.msra.mxu0 %v8139
    %8211 = vmatprep.subr.mxu0 0.0
    %8212 = vmatpush2.msra.mxu0 %v8138
    %8213 = vmatprep.subr.mxu0 0.0
    %8214 = vmatpush2.msra.mxu0 %v8137
    %8215 = vmatprep.subr.mxu0 0.0
    %8216 = vmatpush2.msra.mxu0 %v8136
    %8217 = vmatprep.subr.mxu0 0.0
    %8218 = vmatpush2.msra.mxu0 %v8135
    %8219 = vmatprep.subr.mxu0 0.0
    %8220 = vmatpush2.msra.mxu0 %v8134
    %8221 = vmatprep.subr.mxu0 0.0
    %8222 = vmatpush2.msra.mxu0 %v8133
    %8223 = vmatprep.subr.mxu0 0.0
    %8224 = vmatpush2.msra.mxu0 %v8132
    %8225 = vmatprep.subr.mxu0 0.0
    %8226 = vmatpush2.msra.mxu0 %v8131
    %8227 = vmatprep.subr.mxu0 0.0
    %8228 = vmatpush2.msra.mxu0 %v8130
    %8229 = vmatprep.subr.mxu0 0.0
    %8230 = vmatpush2.msra.mxu0 %v8129
    %8231 = vmatprep.subr.mxu0 0.0
    %8232 = vmatpush2.msra.mxu0 %v8128
    %8233 = vmatprep.subr.mxu0 0.0
    %8234 = vmatpush2.msra.mxu0 %v8127
    %8235 = vmatprep.subr.mxu0 0.0
    %8236 = vmatpush2.msra.mxu0 %v8126
    %8237 = vmatprep.mubr.f32.mxu0 %v8161
    %8238 = vmatmul.mubr.f32.gmra.mxu0 %v8157
    %v8239 = vpop.f32.mrf.mxu0
    %v8240 = vadd.f32 0.0, %v8239
    %v8241 = vpop.f32.mrf.mxu0
    %8242 = vdwg.mxu0
    %8243 = vmatprep.subr.mxu0 0.0
    %8244 = vmatpush1.msra.mxu0 0.0
    %8245 = vmatprep.subr.mxu0 0.0
    %8246 = vmatpush1.msra.mxu0 0.0
    %8247 = vmatprep.subr.mxu0 0.0
    %8248 = vmatpush1.msra.mxu0 0.0
    %8249 = vmatprep.subr.mxu0 0.0
    %8250 = vmatpush1.msra.mxu0 0.0
    %8251 = vmatprep.subr.mxu0 0.0
    %8252 = vmatpush1.msra.mxu0 0.0
    %8253 = vmatprep.subr.mxu0 0.0
    %8254 = vmatpush1.msra.mxu0 0.0
    %8255 = vmatprep.subr.mxu0 0.0
    %8256 = vmatpush1.msra.mxu0 0.0
    %8257 = vmatprep.subr.mxu0 0.0
    %8258 = vmatpush1.msra.mxu0 %v8171
    %8259 = vmatprep.subr.mxu0 0.0
    %8260 = vmatpush1.msra.mxu0 %v8149
    %8261 = vmatprep.subr.mxu0 0.0
    %8262 = vmatpush1.msra.mxu0 %v8148
    %8263 = vmatprep.subr.mxu0 0.0
    %8264 = vmatpush1.msra.mxu0 %v8147
    %8265 = vmatprep.subr.mxu0 0.0
    %8266 = vmatpush1.msra.mxu0 %v8146
    %8267 = vmatprep.subr.mxu0 0.0
    %8268 = vmatpush1.msra.mxu0 %v8145
    %8269 = vmatprep.subr.mxu0 0.0
    %8270 = vmatpush1.msra.mxu0 %v8144
    %8271 = vmatprep.subr.mxu0 0.0
    %8272 = vmatpush1.msra.mxu0 %v8143
    %8273 = vmatprep.subr.mxu0 0.0
    %8274 = vmatpush1.msra.mxu0 %v8142
    %8275 = vmatprep.subr.mxu0 0.0
    %8276 = vmatpush2.msra.mxu0 0.0
    %8277 = vmatprep.subr.mxu0 0.0
    %8278 = vmatpush2.msra.mxu0 0.0
    %8279 = vmatprep.subr.mxu0 0.0
    %8280 = vmatpush2.msra.mxu0 0.0
    %8281 = vmatprep.subr.mxu0 0.0
    %8282 = vmatpush2.msra.mxu0 0.0
    %8283 = vmatprep.subr.mxu0 0.0
    %8284 = vmatpush2.msra.mxu0 0.0
    %8285 = vmatprep.subr.mxu0 0.0
    %8286 = vmatpush2.msra.mxu0 0.0
    %8287 = vmatprep.subr.mxu0 0.0
    %8288 = vmatpush2.msra.mxu0 0.0
    %8289 = vmatprep.subr.mxu0 0.0
    %8290 = vmatpush2.msra.mxu0 0.0
    %8291 = vmatprep.subr.mxu0 0.0
    %8292 = vmatpush2.msra.mxu0 0.0
    %8293 = vmatprep.subr.mxu0 0.0
    %8294 = vmatpush2.msra.mxu0 0.0
    %8295 = vmatprep.subr.mxu0 0.0
    %8296 = vmatpush2.msra.mxu0 0.0
    %8297 = vmatprep.subr.mxu0 0.0
    %8298 = vmatpush2.msra.mxu0 0.0
    %8299 = vmatprep.subr.mxu0 0.0
    %8300 = vmatpush2.msra.mxu0 0.0
    %8301 = vmatprep.subr.mxu0 0.0
    %8302 = vmatpush2.msra.mxu0 0.0
    %8303 = vmatprep.subr.mxu0 0.0
    %8304 = vmatpush2.msra.mxu0 0.0
    %8305 = vmatprep.subr.mxu0 0.0
    %8306 = vmatpush2.msra.mxu0 0.0
    %8307 = vmatprep.mubr.f32.mxu0 0.0
    %8308 = vmatmul.mubr.f32.gmra.mxu0 %v8168
    %v8309 = vpop.f32.mrf.mxu0
    %v8310 = vadd.f32 %v8240, %v8309
    %v8311 = vpop.f32.mrf.mxu0
    %8312 = vdwg.mxu0
    %v8313 = vadd.f32 %v7933, %v8310
    %s8314 = scalar_lea.vmem [#allocation3], 23
    %v8315 = vld [vmem:[%s8314] ss:$8 sm:$0xf]
    %v8317 = vlaneseq
    %v8318 = vshrl.u32 %v8317, 7
    %v8319 = vsub.s32 0, %v8318
    %v8320 = vrot.slane %v8315, %v8319
    %v8321 = vlaneseq
    %v8322 = vshrl.u32 %v8321, 7
    %v8323 = vsub.s32 1, %v8322
    %v8324 = vrot.slane %v8315, %v8323
    %v8325 = vlaneseq
    %v8326 = vshrl.u32 %v8325, 7
    %v8327 = vsub.s32 2, %v8326
    %v8328 = vrot.slane %v8315, %v8327
    %v8329 = vlaneseq
    %v8330 = vshrl.u32 %v8329, 7
    %v8331 = vsub.s32 3, %v8330
    %v8332 = vrot.slane %v8315, %v8331
    %8333 = vrot.lane.b32.xlu0 %v8320, 60
    %v8334 = vpop.permute.xlu0 %8333
    %8335 = vrot.lane.b32.xlu0 %v8324, 60
    %v8336 = vpop.permute.xlu0 %8335
    %8337 = vrot.lane.b32.xlu0 %v8328, 60
    %v8338 = vpop.permute.xlu0 %8337
    %8339 = vrot.lane.b32.xlu0 %v8332, 60
    %v8340 = vpop.permute.xlu0 %8339
    %v8341 = vsel %vm5889, %v8334, %v8336
    %v8342 = vsel %vm5889, %v8336, %v8338
    %v8343 = vsel %vm5889, %v8338, %v8340
    %v8346 = vsel %vm5556, %v8343, 0
    %8348 = vmatprep.subr.mxu0 0.0
    %8349 = vmatpush1.msra.mxu0 %v8125
    %8350 = vmatprep.subr.mxu0 0.0
    %8351 = vmatpush1.msra.mxu0 %v8124
    %8352 = vmatprep.subr.mxu0 0.0
    %8353 = vmatpush1.msra.mxu0 %v8123
    %8354 = vmatprep.subr.mxu0 0.0
    %8355 = vmatpush1.msra.mxu0 %v8122
    %8356 = vmatprep.subr.mxu0 0.0
    %8357 = vmatpush1.msra.mxu0 %v8121
    %8358 = vmatprep.subr.mxu0 0.0
    %8359 = vmatpush1.msra.mxu0 %v8120
    %8360 = vmatprep.subr.mxu0 0.0
    %8361 = vmatpush1.msra.mxu0 %v8119
    %8362 = vmatprep.subr.mxu0 0.0
    %8363 = vmatpush1.msra.mxu0 %v8118
    %8364 = vmatprep.subr.mxu0 0.0
    %8365 = vmatpush1.msra.mxu0 %v8117
    %8366 = vmatprep.subr.mxu0 0.0
    %8367 = vmatpush1.msra.mxu0 %v8116
    %8368 = vmatprep.subr.mxu0 0.0
    %8369 = vmatpush1.msra.mxu0 %v8115
    %8370 = vmatprep.subr.mxu0 0.0
    %8371 = vmatpush1.msra.mxu0 %v8114
    %8372 = vmatprep.subr.mxu0 0.0
    %8373 = vmatpush1.msra.mxu0 %v8113
    %8374 = vmatprep.subr.mxu0 0.0
    %8375 = vmatpush1.msra.mxu0 %v8112
    %8376 = vmatprep.subr.mxu0 0.0
    %8377 = vmatpush1.msra.mxu0 %v8111
    %8378 = vmatprep.subr.mxu0 0.0
    %8379 = vmatpush1.msra.mxu0 %v8110
    %8380 = vmatprep.subr.mxu0 0.0
    %8381 = vmatpush2.msra.mxu0 %v8141
    %8382 = vmatprep.subr.mxu0 0.0
    %8383 = vmatpush2.msra.mxu0 %v8140
    %8384 = vmatprep.subr.mxu0 0.0
    %8385 = vmatpush2.msra.mxu0 %v8139
    %8386 = vmatprep.subr.mxu0 0.0
    %8387 = vmatpush2.msra.mxu0 %v8138
    %8388 = vmatprep.subr.mxu0 0.0
    %8389 = vmatpush2.msra.mxu0 %v8137
    %8390 = vmatprep.subr.mxu0 0.0
    %8391 = vmatpush2.msra.mxu0 %v8136
    %8392 = vmatprep.subr.mxu0 0.0
    %8393 = vmatpush2.msra.mxu0 %v8135
    %8394 = vmatprep.subr.mxu0 0.0
    %8395 = vmatpush2.msra.mxu0 %v8134
    %8396 = vmatprep.subr.mxu0 0.0
    %8397 = vmatpush2.msra.mxu0 %v8133
    %8398 = vmatprep.subr.mxu0 0.0
    %8399 = vmatpush2.msra.mxu0 %v8132
    %8400 = vmatprep.subr.mxu0 0.0
    %8401 = vmatpush2.msra.mxu0 %v8131
    %8402 = vmatprep.subr.mxu0 0.0
    %8403 = vmatpush2.msra.mxu0 %v8130
    %8404 = vmatprep.subr.mxu0 0.0
    %8405 = vmatpush2.msra.mxu0 %v8129
    %8406 = vmatprep.subr.mxu0 0.0
    %8407 = vmatpush2.msra.mxu0 %v8128
    %8408 = vmatprep.subr.mxu0 0.0
    %8409 = vmatpush2.msra.mxu0 %v8127
    %8410 = vmatprep.subr.mxu0 0.0
    %8411 = vmatpush2.msra.mxu0 %v8126
    %8412 = vmatprep.mubr.f32.mxu0 %v8342
    %8413 = vmatmul.mubr.f32.gmra.mxu0 %v8341
    %v8414 = vpop.f32.mrf.mxu0
    %v8415 = vadd.f32 0.0, %v8414
    %v8416 = vpop.f32.mrf.mxu0
    %8417 = vdwg.mxu0
    %8418 = vmatprep.subr.mxu0 0.0
    %8419 = vmatpush1.msra.mxu0 0.0
    %8420 = vmatprep.subr.mxu0 0.0
    %8421 = vmatpush1.msra.mxu0 0.0
    %8422 = vmatprep.subr.mxu0 0.0
    %8423 = vmatpush1.msra.mxu0 0.0
    %8424 = vmatprep.subr.mxu0 0.0
    %8425 = vmatpush1.msra.mxu0 0.0
    %8426 = vmatprep.subr.mxu0 0.0
    %8427 = vmatpush1.msra.mxu0 0.0
    %8428 = vmatprep.subr.mxu0 0.0
    %8429 = vmatpush1.msra.mxu0 0.0
    %8430 = vmatprep.subr.mxu0 0.0
    %8431 = vmatpush1.msra.mxu0 0.0
    %8432 = vmatprep.subr.mxu0 0.0
    %8433 = vmatpush1.msra.mxu0 %v8171
    %8434 = vmatprep.subr.mxu0 0.0
    %8435 = vmatpush1.msra.mxu0 %v8149
    %8436 = vmatprep.subr.mxu0 0.0
    %8437 = vmatpush1.msra.mxu0 %v8148
    %8438 = vmatprep.subr.mxu0 0.0
    %8439 = vmatpush1.msra.mxu0 %v8147
    %8440 = vmatprep.subr.mxu0 0.0
    %8441 = vmatpush1.msra.mxu0 %v8146
    %8442 = vmatprep.subr.mxu0 0.0
    %8443 = vmatpush1.msra.mxu0 %v8145
    %8444 = vmatprep.subr.mxu0 0.0
    %8445 = vmatpush1.msra.mxu0 %v8144
    %8446 = vmatprep.subr.mxu0 0.0
    %8447 = vmatpush1.msra.mxu0 %v8143
    %8448 = vmatprep.subr.mxu0 0.0
    %8449 = vmatpush1.msra.mxu0 %v8142
    %8450 = vmatprep.subr.mxu0 0.0
    %8451 = vmatpush2.msra.mxu0 0.0
    %8452 = vmatprep.subr.mxu0 0.0
    %8453 = vmatpush2.msra.mxu0 0.0
    %8454 = vmatprep.subr.mxu0 0.0
    %8455 = vmatpush2.msra.mxu0 0.0
    %8456 = vmatprep.subr.mxu0 0.0
    %8457 = vmatpush2.msra.mxu0 0.0
    %8458 = vmatprep.subr.mxu0 0.0
    %8459 = vmatpush2.msra.mxu0 0.0
    %8460 = vmatprep.subr.mxu0 0.0
    %8461 = vmatpush2.msra.mxu0 0.0
    %8462 = vmatprep.subr.mxu0 0.0
    %8463 = vmatpush2.msra.mxu0 0.0
    %8464 = vmatprep.subr.mxu0 0.0
    %8465 = vmatpush2.msra.mxu0 0.0
    %8466 = vmatprep.subr.mxu0 0.0
    %8467 = vmatpush2.msra.mxu0 0.0
    %8468 = vmatprep.subr.mxu0 0.0
    %8469 = vmatpush2.msra.mxu0 0.0
    %8470 = vmatprep.subr.mxu0 0.0
    %8471 = vmatpush2.msra.mxu0 0.0
    %8472 = vmatprep.subr.mxu0 0.0
    %8473 = vmatpush2.msra.mxu0 0.0
    %8474 = vmatprep.subr.mxu0 0.0
    %8475 = vmatpush2.msra.mxu0 0.0
    %8476 = vmatprep.subr.mxu0 0.0
    %8477 = vmatpush2.msra.mxu0 0.0
    %8478 = vmatprep.subr.mxu0 0.0
    %8479 = vmatpush2.msra.mxu0 0.0
    %8480 = vmatprep.subr.mxu0 0.0
    %8481 = vmatpush2.msra.mxu0 0.0
    %8482 = vmatprep.mubr.f32.mxu0 0.0
    %8483 = vmatmul.mubr.f32.gmra.mxu0 %v8346
    %v8484 = vpop.f32.mrf.mxu0
    %v8485 = vadd.f32 %v8415, %v8484
    %v8486 = vpop.f32.mrf.mxu0
    %8487 = vdwg.mxu0
    %v8488 = vadd.f32 %v8108, %v8485
    %v8489 = vld [vmem:[%s6] sm:$0x1]
    %v8490 = vadd.f32 %v8313, %v8489
    %vm8491 = vcmask 253952
    %8492 = vst.msk [vmem:[#allocation6] sm:$0x1] %vm8491, %v8490
    %v8493 = vld [vmem:[%s6] sm:$0x1]
    %v8494 = vadd.f32 %v8488, %v8493
    %8495 = vst.msk [vmem:[#allocation6 + $0x1] sm:$0x1] %vm8491, %v8494
    // Predicated region
    $region67: #{quant_model_forward.1} parent=1 // pred_check
      _
    $region68: #{quant_model_forward.1} parent=1 // pred_check_branch
      %8497 = sbr.rel (0) target = $region70
    $region69: #{quant_model_forward.1} parent=1 // pred_region
      %s8499 = ssub.s32 32, 32
      %8500 = vsyncadd [#allocation7], %s8499
      %s8502 = sshll.u32 [#allocation6], 4
      %s8503 = int_to_ptr.vmem [resolvable:$true] %s8502
      %8505 = dma.vmem_to_hbm [thread:$0]  %s8503, 32, %s8, [#allocation7]
    $region70: #{quant_model_forward.1} parent=1 // pred_fallthru
      _
    // Predicated region
    $region71: #{quant_model_forward.1} parent=1 // pred_check
      _
    $region72: #{quant_model_forward.1} parent=1 // pred_check_branch
      %8507 = sbr.rel (0) target = $region74
    $region73: #{quant_model_forward.1} parent=1 // pred_region
      %8508 = dma.done [#allocation7], 32
    $region74: #{quant_model_forward.1} parent=1 // pred_fallthru
      _
    %8509 = vsyncpa [#allocation7], 1
  %8510 = vsyncmov [#allocation5]
  %s8511 = vpop.sfrf %8510
  %p8512 = scmp.eq.s32.totalorder %s8511, 0
  %p8513 = pneg %p8512
  %8515 = shalt.err (%p8513)

</llo_original>
